<compile_context>
chip_gen: v7x
topology: tpu7x:2x2x1
jax: 0.10.0
libtpu: 0.0.40
codegen_flags: <defaults>
</compile_context>

<pallas_src>
import functools

import jax
import jax.numpy as jnp
from jax.experimental import pallas as pl
from jax.experimental.pallas import tpu as pltpu


# Geometry constants (CIFAR 3x32x32, fixed by the module).
_ROWS_IN = 33 * 32          # 1056 flattened NHWC rows / image (padded from 1024)
_FEAT = 6 * 8 * 32          # 1536 flattened features / image (w padded 6 -> 8)


# ----------------------------------------------------------------------------
# Host-side 0/1 selector for the 2x2 max-pool row compaction.
# mw[r] = max over the 2x2 window whose top-left conv row is r (r = h*row_w+w).
# Pooled row ph*(row_w//2)+pw selects source row 2*row_w*ph + 2*pw.
# ----------------------------------------------------------------------------
def _make_pool_selector(n_h_out, row_w):
    out_w = row_w // 2
    n_out = (n_h_out // 2) * out_w
    n_src = (n_h_out - 1) * row_w - 1
    r = jnp.arange(n_out)
    src = 2 * row_w * (r // out_w) + 2 * (r % out_w)
    return (jnp.arange(n_src)[None, :] == src[:, None]).astype(jnp.bfloat16)


# ----------------------------------------------------------------------------
# Kernel 1: conv1 -> ReLU -> pool -> BN1 -> conv2 -> ReLU -> pool -> BN2
# (TB images per grid step; geometry fixed to CIFAR 3x32x32)
# ----------------------------------------------------------------------------
def _features_kernel(x_ref, w1_ref, b1_ref, s1_ref, t1_ref, sel1_ref,
                     w2_ref, b2_ref, s2_ref, t2_ref, sel2_ref, o_ref, *, tb):
    f32 = jnp.float32
    bf16 = jnp.bfloat16
    for t in range(tb):                               # static unroll over images
        x = x_ref[t]                                  # (1056, 3) bf16

        # --- stage 1: conv1(3x3, valid) as ONE K=27 matmul (in-VMEM im2col)
        taps1 = jnp.concatenate(
            [x[i * 32 + j:i * 32 + j + 960, :]
             for i in range(3) for j in range(3)], axis=1)          # (960, 27)
        a1 = jnp.dot(taps1, w1_ref[...], preferred_element_type=f32) + b1_ref[...]
        a1 = jnp.maximum(a1, 0.0)                                    # bias+ReLU
        # 2x2 max-pool: H pairs, W pairs, then compaction via ONE bf16
        # selection matmul with the host-precomputed resident selector.
        m1 = jnp.maximum(a1[:928, :], a1[32:, :])
        mw1 = jnp.maximum(m1[:927, :], m1[1:, :]).astype(bf16)
        p1 = jnp.dot(sel1_ref[...], mw1, preferred_element_type=f32)  # (240,16)
        y1 = (p1 * s1_ref[...] + t1_ref[...]).astype(bf16)   # BatchRenorm1(eval)

        # --- stage 2: conv2(3x3, valid) as ONE K=144 matmul on the pooled map
        taps2 = jnp.concatenate(
            [y1[i * 16 + j:i * 16 + j + 192, :]
             for i in range(3) for j in range(3)], axis=1)          # (192, 144)
        a2 = jnp.dot(taps2, w2_ref[...], preferred_element_type=f32) + b2_ref[...]
        a2 = jnp.maximum(a2, 0.0)
        m2 = jnp.maximum(a2[:176, :], a2[16:, :])
        mw2 = jnp.maximum(m2[:175, :], m2[1:, :]).astype(bf16)
        p2 = jnp.dot(sel2_ref[...], mw2, preferred_element_type=f32)  # (48,32)
        y2 = p2 * s2_ref[...] + t2_ref[...]                   # BatchRenorm2(eval)

        o_ref[t] = y2.astype(o_ref.dtype)             # (48, 32), row = h*8 + w


def conv_features(xf, p):
    B = xf.shape[0]
    tb = 8 if B >= 16 else 1          # images per step; keeps >=2 steps (megacore)
    bp = pl.cdiv(B, tb) * tb
    if bp != B:
        xf = jnp.pad(xf, ((0, bp - B), (0, 0), (0, 0)))
    flops = bp * 2 * (960 * 27 * 16 + 240 * 927 * 16
                      + 192 * 144 * 32 + 48 * 175 * 32)
    bytes_acc = (bp * (_ROWS_IN * 3 + 48 * 32) * 2
                 + (27 * 16 + 144 * 32 + 240 * 927 + 48 * 175) * 2)
    out = pl.pallas_call(
        functools.partial(_features_kernel, tb=tb),
        out_shape=jax.ShapeDtypeStruct((bp, 48, 32), jnp.bfloat16),
        grid=(bp // tb,),
        in_specs=[
            pl.BlockSpec((tb, _ROWS_IN, 3), lambda i: (i, 0, 0)),  # images (bf16)
            pl.BlockSpec((27, 16), lambda i: (0, 0)),              # conv1 W (GEMM)
            pl.BlockSpec((1, 16), lambda i: (0, 0)),               # conv1 bias
            pl.BlockSpec((1, 16), lambda i: (0, 0)),               # BN1 scale
            pl.BlockSpec((1, 16), lambda i: (0, 0)),               # BN1 shift
            pl.BlockSpec((240, 927), lambda i: (0, 0)),            # pool1 selector
            pl.BlockSpec((144, 32), lambda i: (0, 0)),             # conv2 W (GEMM)
            pl.BlockSpec((1, 32), lambda i: (0, 0)),               # conv2 bias
            pl.BlockSpec((1, 32), lambda i: (0, 0)),               # BN2 scale
            pl.BlockSpec((1, 32), lambda i: (0, 0)),               # BN2 shift
            pl.BlockSpec((48, 175), lambda i: (0, 0)),             # pool2 selector
        ],
        out_specs=pl.BlockSpec((tb, 48, 32), lambda i: (i, 0, 0)),
        compiler_params=pltpu.CompilerParams(
            dimension_semantics=("parallel",),
            vmem_limit_bytes=32 * 1024 * 1024),
        cost_estimate=pl.CostEstimate(
            flops=flops, transcendentals=0, bytes_accessed=bytes_acc),
    )(xf, p["conv1_w"], p["conv1_b"], p["bn1_scale"], p["bn1_shift"], p["sel1"],
      p["conv2_w"], p["conv2_b"], p["bn2_scale"], p["bn2_shift"], p["sel2"])
    return out[:B] if bp != B else out


# ----------------------------------------------------------------------------
# Kernel 2: fused FC head  fc1+ReLU -> fc2+ReLU -> fc3+ReLU -> log_softmax
# ----------------------------------------------------------------------------
def _fc_head_kernel(x_ref, w1_ref, b1_ref, w2_ref, b2_ref, w3_ref, b3_ref,
                    o_ref):
    f32 = jnp.float32
    a = jnp.dot(x_ref[...], w1_ref[...], preferred_element_type=f32) + b1_ref[...]
    a = jnp.maximum(a, 0.0).astype(jnp.bfloat16)        # fc1 + ReLU (+dropout eval)
    a = jnp.dot(a, w2_ref[...], preferred_element_type=f32) + b2_ref[...]
    a = jnp.maximum(a, 0.0).astype(jnp.bfloat16)        # fc2 + ReLU (+dropout eval)
    z = jnp.dot(a, w3_ref[...], preferred_element_type=f32) + b3_ref[...]
    z = jnp.maximum(z, 0.0)                             # relu(fc3)
    zmax = jnp.max(z, axis=-1, keepdims=True)           # log_softmax(dim=1)
    lse = jnp.log(jnp.sum(jnp.exp(z - zmax), axis=-1, keepdims=True)) + zmax
    o_ref[...] = (z - lse).astype(o_ref.dtype)


def fc_head(feats, p):
    B, K = feats.shape
    n1, n2, n3 = 256, 512, 10
    if B >= 1024:
        tb = 512                                       # big resident-weight tiles
    elif B >= 16:
        tb = (pl.cdiv(B, 2) + 7) // 8 * 8              # >=2 grid steps (megacore)
    else:
        tb = B
    bp = pl.cdiv(B, tb) * tb
    if bp != B:
        feats = jnp.pad(feats, ((0, bp - B), (0, 0)))
    out = pl.pallas_call(
        _fc_head_kernel,
        out_shape=jax.ShapeDtypeStruct((bp, n3), jnp.float32),
        grid=(bp // tb,),
        in_specs=[
            pl.BlockSpec((tb, K), lambda i: (i, 0)),
            pl.BlockSpec((K, n1), lambda i: (0, 0)),
            pl.BlockSpec((1, n1), lambda i: (0, 0)),
            pl.BlockSpec((n1, n2), lambda i: (0, 0)),
            pl.BlockSpec((1, n2), lambda i: (0, 0)),
            pl.BlockSpec((n2, n3), lambda i: (0, 0)),
            pl.BlockSpec((1, n3), lambda i: (0, 0)),
        ],
        out_specs=pl.BlockSpec((tb, n3), lambda i: (i, 0)),
        compiler_params=pltpu.CompilerParams(
            dimension_semantics=("parallel",),
            vmem_limit_bytes=32 * 1024 * 1024),
        cost_estimate=pl.CostEstimate(
            flops=2 * bp * (K * n1 + n1 * n2 + n2 * n3),
            transcendentals=bp * (n3 + 1),
            bytes_accessed=(bp * K * 2 + (K * n1 + n1 * n2 + n2 * n3) * 2
                            + bp * n3 * 4)),
    )(feats, p["fc1_w"], p["fc1_b"], p["fc2_w"], p["fc2_b"],
      p["fc3_w"], p["fc3_b"])
    return out[:B] if bp != B else out


# ----------------------------------------------------------------------------
# Parameters: PyTorch-layout init + one-time kernel-layout preparation
# ----------------------------------------------------------------------------
def init_params(key):
    ks = jax.random.split(key, 18)

    def u(k, shape, fan_in):
        bound = 1.0 / (fan_in ** 0.5)
        return jax.random.uniform(k, shape, jnp.float32, -bound, bound)

    p = {}
    p["conv1_w"] = u(ks[0], (16, 3, 3, 3), 27)            # OIHW
    p["conv1_b"] = u(ks[1], (16,), 27)
    p["conv2_w"] = u(ks[2], (32, 16, 3, 3), 144)
    p["conv2_b"] = u(ks[3], (32,), 144)
    p["fc1_w"] = u(ks[4], (256, 32 * 6 * 6), 1152)        # (out, in) like torch
    p["fc1_b"] = u(ks[5], (256,), 1152)
    p["fc2_w"] = u(ks[6], (512, 256), 256)
    p["fc2_b"] = u(ks[7], (512,), 256)
    p["fc3_w"] = u(ks[8], (10, 512), 512)
    p["fc3_b"] = u(ks[9], (10,), 512)
    p["bn1_gamma"] = 0.5 + jax.random.uniform(ks[10], (16,), jnp.float32)
    p["bn1_beta"] = 0.1 * jax.random.normal(ks[11], (16,), jnp.float32)
    p["bn1_mean"] = 0.1 * jax.random.normal(ks[12], (16,), jnp.float32)
    p["bn1_var"] = 0.5 + jax.random.uniform(ks[13], (16,), jnp.float32)
    p["bn2_gamma"] = 0.5 + jax.random.uniform(ks[14], (32,), jnp.float32)
    p["bn2_beta"] = 0.1 * jax.random.normal(ks[15], (32,), jnp.float32)
    p["bn2_mean"] = 0.1 * jax.random.normal(ks[16], (32,), jnp.float32)
    p["bn2_var"] = 0.5 + jax.random.uniform(ks[17], (32,), jnp.float32)
    return p


def prepare_params(p, eps=1e-5):
    """All weight-layout work, hoisted out of forward() and done once."""
    bf16 = jnp.bfloat16
    q = {}
    # conv weights OIHW -> GEMM layout: row = (kh*3 + kw)*Cin + cin, bf16
    q["conv1_w"] = jnp.transpose(p["conv1_w"], (2, 3, 1, 0)).reshape(27, 16).astype(bf16)
    q["conv1_b"] = p["conv1_b"].reshape(1, 16).astype(jnp.float32)
    q["conv2_w"] = jnp.transpose(p["conv2_w"], (2, 3, 1, 0)).reshape(144, 32).astype(bf16)
    q["conv2_b"] = p["conv2_b"].reshape(1, 32).astype(jnp.float32)
    # 2x2-pool compaction selectors (bf16 0/1 matrices, resident in VMEM)
    q["sel1"] = _make_pool_selector(30, 32)               # (240, 927)
    q["sel2"] = _make_pool_selector(12, 16)               # (48, 175)
    # BatchRenorm(eval) folded to per-channel scale / shift (f32)
    for i, c in ((1, 16), (2, 32)):
        scale = p[f"bn{i}_gamma"] / jnp.sqrt(p[f"bn{i}_var"] + eps)
        shift = p[f"bn{i}_beta"] - p[f"bn{i}_mean"] * scale
        q[f"bn{i}_scale"] = scale.reshape(1, c).astype(jnp.float32)
        q[f"bn{i}_shift"] = shift.reshape(1, c).astype(jnp.float32)
    # fc1: fold PyTorch's (c, h, w) flatten order + the kernel's w padding (6->8)
    # into the weight (zero rows for padded w columns).  Rows = h*256 + w*32 + c.
    w1 = p["fc1_w"].reshape(256, 32, 6, 6)                # (out, c, h, w)
    w1 = jnp.transpose(w1, (2, 3, 1, 0))                  # (h, w, c, out)
    w1 = jnp.pad(w1, ((0, 0), (0, 2), (0, 0), (0, 0)))    # pad w 6 -> 8
    q["fc1_w"] = w1.reshape(_FEAT, 256).astype(bf16)
    q["fc1_b"] = p["fc1_b"].reshape(1, 256).astype(jnp.float32)
    q["fc2_w"] = p["fc2_w"].T.astype(bf16)                # (256, 512)
    q["fc2_b"] = p["fc2_b"].reshape(1, 512).astype(jnp.float32)
    q["fc3_w"] = p["fc3_w"].T.astype(bf16)                # (512, 10)
    q["fc3_b"] = p["fc3_b"].reshape(1, 10).astype(jnp.float32)
    return q


# ----------------------------------------------------------------------------
# Forward pass (matches CNNCifar_BRN_1.forward, eval mode)
# ----------------------------------------------------------------------------
@jax.jit
def forward(prep, x_nchw):
    B, C, H, W = x_nchw.shape
    assert (C, H, W) == (3, 32, 32), "CNNCifar_BRN_1 expects 3x32x32 inputs"
    x = jnp.transpose(x_nchw, (0, 2, 3, 1)).astype(jnp.bfloat16)   # NHWC, cast once
    xf = x.reshape(B, H * W, C)
    xf = jnp.pad(xf, ((0, 0), (0, _ROWS_IN - H * W), (0, 0)))      # (B, 1056, 3)
    feats = conv_features(xf, prep)                                # (B, 48, 32) bf16
    return fc_head(feats.reshape(B, _FEAT), prep)                  # (B, 10) f32


if __name__ == "__main__":
    key = jax.random.PRNGKey(0)
    pkey, xkey = jax.random.split(key)
    params = prepare_params(init_params(pkey))         # layout work done ONCE

    # small batch (per-image grid path)
    x = jax.random.normal(xkey, (2, 3, 32, 32), jnp.float32)       # NCHW input
    out = jax.block_until_ready(forward(params, x))
    assert out.shape == (2, 10)
    assert bool(jnp.all(jnp.abs(jnp.sum(jnp.exp(out), axis=1) - 1.0) < 1e-3))

    # larger batch exercises the 8-images-per-step blocked path; first two
    # images are identical to the small-batch run and must produce the same logits.
    x_more = jax.random.normal(jax.random.PRNGKey(1), (14, 3, 32, 32), jnp.float32)
    out16 = jax.block_until_ready(forward(params, jnp.concatenate([x, x_more], 0)))
    assert out16.shape == (16, 10)
    assert bool(jnp.all(jnp.abs(jnp.sum(jnp.exp(out16), axis=1) - 1.0) < 1e-3))
    assert bool(jnp.max(jnp.abs(out16[:2] - out)) < 1e-3)

    print("KERNEL_OK")
</pallas_src>

<mosaic_0001>
module attributes {stable_mosaic.version = 11 : i64} {
  func.func @_features_kernel(%arg0: i32, %arg1: memref<1x1056x3xbf16, #tpu.memory_space<vmem>>, %arg2: memref<27x16xbf16, #tpu.memory_space<vmem>>, %arg3: memref<1x16xf32, #tpu.memory_space<vmem>>, %arg4: memref<1x16xf32, #tpu.memory_space<vmem>>, %arg5: memref<1x16xf32, #tpu.memory_space<vmem>>, %arg6: memref<240x927xbf16, #tpu.memory_space<vmem>>, %arg7: memref<144x32xbf16, #tpu.memory_space<vmem>>, %arg8: memref<1x32xf32, #tpu.memory_space<vmem>>, %arg9: memref<1x32xf32, #tpu.memory_space<vmem>>, %arg10: memref<1x32xf32, #tpu.memory_space<vmem>>, %arg11: memref<48x175xbf16, #tpu.memory_space<vmem>>, %arg12: memref<1x48x32xbf16, #tpu.memory_space<vmem>>) attributes {dimension_semantics = [#tpu.dimension_semantics<parallel>], iteration_bounds = array<i64: 2>, scalar_prefetch = 0 : i64, scratch_operands = 0 : i64, tpu.core_type = #tpu.core_type<tc>, window_params = [{transform_indices = @transform_0, window_bounds = array<i64: 1, 1056, 3>}, {pipeline_mode = #tpu.pipeline_mode<synchronous>, transform_indices = @transform_1, window_bounds = array<i64: 27, 16>}, {pipeline_mode = #tpu.pipeline_mode<synchronous>, transform_indices = @transform_2, window_bounds = array<i64: 1, 16>}, {pipeline_mode = #tpu.pipeline_mode<synchronous>, transform_indices = @transform_3, window_bounds = array<i64: 1, 16>}, {pipeline_mode = #tpu.pipeline_mode<synchronous>, transform_indices = @transform_4, window_bounds = array<i64: 1, 16>}, {pipeline_mode = #tpu.pipeline_mode<synchronous>, transform_indices = @transform_5, window_bounds = array<i64: 240, 927>}, {pipeline_mode = #tpu.pipeline_mode<synchronous>, transform_indices = @transform_6, window_bounds = array<i64: 144, 32>}, {pipeline_mode = #tpu.pipeline_mode<synchronous>, transform_indices = @transform_7, window_bounds = array<i64: 1, 32>}, {pipeline_mode = #tpu.pipeline_mode<synchronous>, transform_indices = @transform_8, window_bounds = array<i64: 1, 32>}, {pipeline_mode = #tpu.pipeline_mode<synchronous>, transform_indices = @transform_9, window_bounds = array<i64: 1, 32>}, {pipeline_mode = #tpu.pipeline_mode<synchronous>, transform_indices = @transform_10, window_bounds = array<i64: 48, 175>}, {transform_indices = @transform_11, window_bounds = array<i64: 1, 48, 32>}]} {
    %c0 = arith.constant 0 : index
    %c0_0 = arith.constant 0 : index
    %c0_1 = arith.constant 0 : index
    %0 = vector.load %arg1[%c0, %c0_0, %c0_1] : memref<1x1056x3xbf16, #tpu.memory_space<vmem>>, vector<1x1056x3xbf16>
    %1 = vector.shape_cast %0 : vector<1x1056x3xbf16> to vector<1056x3xbf16>
    %2 = vector.extract_strided_slice %1 {offsets = [0, 0], sizes = [960, 3], strides = [1, 1]} : vector<1056x3xbf16> to vector<960x3xbf16>
    %3 = vector.extract_strided_slice %1 {offsets = [1, 0], sizes = [960, 3], strides = [1, 1]} : vector<1056x3xbf16> to vector<960x3xbf16>
    %4 = vector.extract_strided_slice %1 {offsets = [2, 0], sizes = [960, 3], strides = [1, 1]} : vector<1056x3xbf16> to vector<960x3xbf16>
    %5 = vector.extract_strided_slice %1 {offsets = [32, 0], sizes = [960, 3], strides = [1, 1]} : vector<1056x3xbf16> to vector<960x3xbf16>
    %6 = vector.extract_strided_slice %1 {offsets = [33, 0], sizes = [960, 3], strides = [1, 1]} : vector<1056x3xbf16> to vector<960x3xbf16>
    %7 = vector.extract_strided_slice %1 {offsets = [34, 0], sizes = [960, 3], strides = [1, 1]} : vector<1056x3xbf16> to vector<960x3xbf16>
    %8 = vector.extract_strided_slice %1 {offsets = [64, 0], sizes = [960, 3], strides = [1, 1]} : vector<1056x3xbf16> to vector<960x3xbf16>
    %9 = vector.extract_strided_slice %1 {offsets = [65, 0], sizes = [960, 3], strides = [1, 1]} : vector<1056x3xbf16> to vector<960x3xbf16>
    %10 = vector.extract_strided_slice %1 {offsets = [66, 0], sizes = [960, 3], strides = [1, 1]} : vector<1056x3xbf16> to vector<960x3xbf16>
    %11 = tpu.concatenate %2, %3, %4, %5, %6, %7, %8, %9, %10 in 1 : vector<960x3xbf16>, vector<960x3xbf16>, vector<960x3xbf16>, vector<960x3xbf16>, vector<960x3xbf16>, vector<960x3xbf16>, vector<960x3xbf16>, vector<960x3xbf16>, vector<960x3xbf16> -> vector<960x27xbf16>
    %c0_2 = arith.constant 0 : index
    %c0_3 = arith.constant 0 : index
    %12 = vector.load %arg2[%c0_2, %c0_3] : memref<27x16xbf16, #tpu.memory_space<vmem>>, vector<27x16xbf16>
    %cst = arith.constant dense<0.000000e+00> : vector<960x16xf32>
    %13 = tpu.matmul %11, %12, %cst {dimension_numbers = #tpu.dot_dimension_numbers<[1], [0], [0], [1], [0, 0, 1, 1], [], []>} : vector<960x27xbf16>, vector<27x16xbf16>, vector<960x16xf32> -> vector<960x16xf32>
    %c0_4 = arith.constant 0 : index
    %c0_5 = arith.constant 0 : index
    %14 = vector.load %arg3[%c0_4, %c0_5] : memref<1x16xf32, #tpu.memory_space<vmem>>, vector<1x16xf32>
    %15 = vector.broadcast %14 : vector<1x16xf32> to vector<960x16xf32>
    %16 = arith.addf %13, %15 : vector<960x16xf32>
    %cst_6 = arith.constant 0.000000e+00 : f32
    %17 = vector.broadcast %cst_6 : f32 to vector<960x16xf32>
    %18 = arith.maximumf %16, %17 : vector<960x16xf32>
    %19 = vector.extract_strided_slice %18 {offsets = [0, 0], sizes = [928, 16], strides = [1, 1]} : vector<960x16xf32> to vector<928x16xf32>
    %20 = vector.extract_strided_slice %18 {offsets = [32, 0], sizes = [928, 16], strides = [1, 1]} : vector<960x16xf32> to vector<928x16xf32>
    %21 = arith.maximumf %19, %20 : vector<928x16xf32>
    %22 = vector.extract_strided_slice %21 {offsets = [0, 0], sizes = [927, 16], strides = [1, 1]} : vector<928x16xf32> to vector<927x16xf32>
    %23 = vector.extract_strided_slice %21 {offsets = [1, 0], sizes = [927, 16], strides = [1, 1]} : vector<928x16xf32> to vector<927x16xf32>
    %24 = arith.maximumf %22, %23 : vector<927x16xf32>
    %25 = arith.truncf %24 : vector<927x16xf32> to vector<927x16xbf16>
    %c0_7 = arith.constant 0 : index
    %c0_8 = arith.constant 0 : index
    %26 = vector.load %arg6[%c0_7, %c0_8] : memref<240x927xbf16, #tpu.memory_space<vmem>>, vector<240x927xbf16>
    %cst_9 = arith.constant dense<0.000000e+00> : vector<240x16xf32>
    %27 = tpu.matmul %26, %25, %cst_9 {dimension_numbers = #tpu.dot_dimension_numbers<[1], [0], [0], [1], [0, 0, 1, 1], [], []>} : vector<240x927xbf16>, vector<927x16xbf16>, vector<240x16xf32> -> vector<240x16xf32>
    %c0_10 = arith.constant 0 : index
    %c0_11 = arith.constant 0 : index
    %28 = vector.load %arg4[%c0_10, %c0_11] : memref<1x16xf32, #tpu.memory_space<vmem>>, vector<1x16xf32>
    %29 = vector.broadcast %28 : vector<1x16xf32> to vector<240x16xf32>
    %30 = arith.mulf %27, %29 : vector<240x16xf32>
    %c0_12 = arith.constant 0 : index
    %c0_13 = arith.constant 0 : index
    %31 = vector.load %arg5[%c0_12, %c0_13] : memref<1x16xf32, #tpu.memory_space<vmem>>, vector<1x16xf32>
    %32 = vector.broadcast %31 : vector<1x16xf32> to vector<240x16xf32>
    %33 = arith.addf %30, %32 : vector<240x16xf32>
    %34 = arith.truncf %33 : vector<240x16xf32> to vector<240x16xbf16>
    %35 = vector.extract_strided_slice %34 {offsets = [0, 0], sizes = [192, 16], strides = [1, 1]} : vector<240x16xbf16> to vector<192x16xbf16>
    %36 = vector.extract_strided_slice %34 {offsets = [1, 0], sizes = [192, 16], strides = [1, 1]} : vector<240x16xbf16> to vector<192x16xbf16>
    %37 = vector.extract_strided_slice %34 {offsets = [2, 0], sizes = [192, 16], strides = [1, 1]} : vector<240x16xbf16> to vector<192x16xbf16>
    %38 = vector.extract_strided_slice %34 {offsets = [16, 0], sizes = [192, 16], strides = [1, 1]} : vector<240x16xbf16> to vector<192x16xbf16>
    %39 = vector.extract_strided_slice %34 {offsets = [17, 0], sizes = [192, 16], strides = [1, 1]} : vector<240x16xbf16> to vector<192x16xbf16>
    %40 = vector.extract_strided_slice %34 {offsets = [18, 0], sizes = [192, 16], strides = [1, 1]} : vector<240x16xbf16> to vector<192x16xbf16>
    %41 = vector.extract_strided_slice %34 {offsets = [32, 0], sizes = [192, 16], strides = [1, 1]} : vector<240x16xbf16> to vector<192x16xbf16>
    %42 = vector.extract_strided_slice %34 {offsets = [33, 0], sizes = [192, 16], strides = [1, 1]} : vector<240x16xbf16> to vector<192x16xbf16>
    %43 = vector.extract_strided_slice %34 {offsets = [34, 0], sizes = [192, 16], strides = [1, 1]} : vector<240x16xbf16> to vector<192x16xbf16>
    %44 = tpu.concatenate %35, %36, %37, %38, %39, %40, %41, %42, %43 in 1 : vector<192x16xbf16>, vector<192x16xbf16>, vector<192x16xbf16>, vector<192x16xbf16>, vector<192x16xbf16>, vector<192x16xbf16>, vector<192x16xbf16>, vector<192x16xbf16>, vector<192x16xbf16> -> vector<192x144xbf16>
    %c0_14 = arith.constant 0 : index
    %c0_15 = arith.constant 0 : index
    %45 = vector.load %arg7[%c0_14, %c0_15] : memref<144x32xbf16, #tpu.memory_space<vmem>>, vector<144x32xbf16>
    %cst_16 = arith.constant dense<0.000000e+00> : vector<192x32xf32>
    %46 = tpu.matmul %44, %45, %cst_16 {dimension_numbers = #tpu.dot_dimension_numbers<[1], [0], [0], [1], [0, 0, 1, 1], [], []>} : vector<192x144xbf16>, vector<144x32xbf16>, vector<192x32xf32> -> vector<192x32xf32>
    %c0_17 = arith.constant 0 : index
    %c0_18 = arith.constant 0 : index
    %47 = vector.load %arg8[%c0_17, %c0_18] : memref<1x32xf32, #tpu.memory_space<vmem>>, vector<1x32xf32>
    %48 = vector.broadcast %47 : vector<1x32xf32> to vector<192x32xf32>
    %49 = arith.addf %46, %48 : vector<192x32xf32>
    %cst_19 = arith.constant 0.000000e+00 : f32
    %50 = vector.broadcast %cst_19 : f32 to vector<192x32xf32>
    %51 = arith.maximumf %49, %50 : vector<192x32xf32>
    %52 = vector.extract_strided_slice %51 {offsets = [0, 0], sizes = [176, 32], strides = [1, 1]} : vector<192x32xf32> to vector<176x32xf32>
    %53 = vector.extract_strided_slice %51 {offsets = [16, 0], sizes = [176, 32], strides = [1, 1]} : vector<192x32xf32> to vector<176x32xf32>
    %54 = arith.maximumf %52, %53 : vector<176x32xf32>
    %55 = vector.extract_strided_slice %54 {offsets = [0, 0], sizes = [175, 32], strides = [1, 1]} : vector<176x32xf32> to vector<175x32xf32>
    %56 = vector.extract_strided_slice %54 {offsets = [1, 0], sizes = [175, 32], strides = [1, 1]} : vector<176x32xf32> to vector<175x32xf32>
    %57 = arith.maximumf %55, %56 : vector<175x32xf32>
    %58 = arith.truncf %57 : vector<175x32xf32> to vector<175x32xbf16>
    %c0_20 = arith.constant 0 : index
    %c0_21 = arith.constant 0 : index
    %59 = vector.load %arg11[%c0_20, %c0_21] : memref<48x175xbf16, #tpu.memory_space<vmem>>, vector<48x175xbf16>
    %cst_22 = arith.constant dense<0.000000e+00> : vector<48x32xf32>
    %60 = tpu.matmul %59, %58, %cst_22 {dimension_numbers = #tpu.dot_dimension_numbers<[1], [0], [0], [1], [0, 0, 1, 1], [], []>} : vector<48x175xbf16>, vector<175x32xbf16>, vector<48x32xf32> -> vector<48x32xf32>
    %c0_23 = arith.constant 0 : index
    %c0_24 = arith.constant 0 : index
    %61 = vector.load %arg9[%c0_23, %c0_24] : memref<1x32xf32, #tpu.memory_space<vmem>>, vector<1x32xf32>
    %62 = vector.broadcast %61 : vector<1x32xf32> to vector<48x32xf32>
    %63 = arith.mulf %60, %62 : vector<48x32xf32>
    %c0_25 = arith.constant 0 : index
    %c0_26 = arith.constant 0 : index
    %64 = vector.load %arg10[%c0_25, %c0_26] : memref<1x32xf32, #tpu.memory_space<vmem>>, vector<1x32xf32>
    %65 = vector.broadcast %64 : vector<1x32xf32> to vector<48x32xf32>
    %66 = arith.addf %63, %65 : vector<48x32xf32>
    %67 = arith.truncf %66 : vector<48x32xf32> to vector<48x32xbf16>
    %c0_27 = arith.constant 0 : index
    %c0_28 = arith.constant 0 : index
    %c0_29 = arith.constant 0 : index
    %68 = vector.load %arg12[%c0_27, %c0_28, %c0_29] : memref<1x48x32xbf16, #tpu.memory_space<vmem>>, vector<1x48x32xbf16>
    %69 = vector.shape_cast %68 : vector<1x48x32xbf16> to vector<48x32xbf16>
    %70 = vector.shape_cast %67 : vector<48x32xbf16> to vector<1x48x32xbf16>
    tpu.vector_store %arg12[%c0_27, %c0_28, %c0_29], %70 {strides = array<i32>} : memref<1x48x32xbf16, #tpu.memory_space<vmem>>, vector<1x48x32xbf16>,
    return
  }
  func.func @transform_0(%arg0: i32) -> (i32, i32, i32) {
    %c0_i32 = arith.constant 0 : i32
    %c0_i32_0 = arith.constant 0 : i32
    %c0_i32_1 = arith.constant 0 : i32
    return %arg0, %c0_i32, %c0_i32_0 : i32, i32, i32
  }
  func.func @transform_1(%arg0: i32) -> (i32, i32) {
    %c0_i32 = arith.constant 0 : i32
    %c0_i32_0 = arith.constant 0 : i32
    %c0_i32_1 = arith.constant 0 : i32
    return %c0_i32, %c0_i32_0 : i32, i32
  }
  func.func @transform_2(%arg0: i32) -> (i32, i32) {
    %c0_i32 = arith.constant 0 : i32
    %c0_i32_0 = arith.constant 0 : i32
    %c0_i32_1 = arith.constant 0 : i32
    return %c0_i32, %c0_i32_0 : i32, i32
  }
  func.func @transform_3(%arg0: i32) -> (i32, i32) {
    %c0_i32 = arith.constant 0 : i32
    %c0_i32_0 = arith.constant 0 : i32
    %c0_i32_1 = arith.constant 0 : i32
    return %c0_i32, %c0_i32_0 : i32, i32
  }
  func.func @transform_4(%arg0: i32) -> (i32, i32) {
    %c0_i32 = arith.constant 0 : i32
    %c0_i32_0 = arith.constant 0 : i32
    %c0_i32_1 = arith.constant 0 : i32
    return %c0_i32, %c0_i32_0 : i32, i32
  }
  func.func @transform_5(%arg0: i32) -> (i32, i32) {
    %c0_i32 = arith.constant 0 : i32
    %c0_i32_0 = arith.constant 0 : i32
    %c0_i32_1 = arith.constant 0 : i32
    return %c0_i32, %c0_i32_0 : i32, i32
  }
  func.func @transform_6(%arg0: i32) -> (i32, i32) {
    %c0_i32 = arith.constant 0 : i32
    %c0_i32_0 = arith.constant 0 : i32
    %c0_i32_1 = arith.constant 0 : i32
    return %c0_i32, %c0_i32_0 : i32, i32
  }
  func.func @transform_7(%arg0: i32) -> (i32, i32) {
    %c0_i32 = arith.constant 0 : i32
    %c0_i32_0 = arith.constant 0 : i32
    %c0_i32_1 = arith.constant 0 : i32
    return %c0_i32, %c0_i32_0 : i32, i32
  }
  func.func @transform_8(%arg0: i32) -> (i32, i32) {
    %c0_i32 = arith.constant 0 : i32
    %c0_i32_0 = arith.constant 0 : i32
    %c0_i32_1 = arith.constant 0 : i32
    return %c0_i32, %c0_i32_0 : i32, i32
  }
  func.func @transform_9(%arg0: i32) -> (i32, i32) {
    %c0_i32 = arith.constant 0 : i32
    %c0_i32_0 = arith.constant 0 : i32
    %c0_i32_1 = arith.constant 0 : i32
    return %c0_i32, %c0_i32_0 : i32, i32
  }
  func.func @transform_10(%arg0: i32) -> (i32, i32) {
    %c0_i32 = arith.constant 0 : i32
    %c0_i32_0 = arith.constant 0 : i32
    %c0_i32_1 = arith.constant 0 : i32
    return %c0_i32, %c0_i32_0 : i32, i32
  }
  func.func @transform_11(%arg0: i32) -> (i32, i32, i32) {
    %c0_i32 = arith.constant 0 : i32
    %c0_i32_0 = arith.constant 0 : i32
    %c0_i32_1 = arith.constant 0 : i32
    return %arg0, %c0_i32, %c0_i32_0 : i32, i32, i32
  }
}

module attributes {stable_mosaic.version = 11 : i64} {
  func.func @_fc_head_kernel(%arg0: i32, %arg1: memref<2x1536xbf16, #tpu.memory_space<vmem>>, %arg2: memref<1536x256xbf16, #tpu.memory_space<vmem>>, %arg3: memref<1x256xf32, #tpu.memory_space<vmem>>, %arg4: memref<256x512xbf16, #tpu.memory_space<vmem>>, %arg5: memref<1x512xf32, #tpu.memory_space<vmem>>, %arg6: memref<512x10xbf16, #tpu.memory_space<vmem>>, %arg7: memref<1x10xf32, #tpu.memory_space<vmem>>, %arg8: memref<2x10xf32, #tpu.memory_space<vmem>>) attributes {dimension_semantics = [#tpu.dimension_semantics<parallel>], iteration_bounds = array<i64: 1>, scalar_prefetch = 0 : i64, scratch_operands = 0 : i64, tpu.core_type = #tpu.core_type<tc>, window_params = [{transform_indices = @transform_0, window_bounds = array<i64: 2, 1536>}, {pipeline_mode = #tpu.pipeline_mode<synchronous>, transform_indices = @transform_1, window_bounds = array<i64: 1536, 256>}, {pipeline_mode = #tpu.pipeline_mode<synchronous>, transform_indices = @transform_2, window_bounds = array<i64: 1, 256>}, {pipeline_mode = #tpu.pipeline_mode<synchronous>, transform_indices = @transform_3, window_bounds = array<i64: 256, 512>}, {pipeline_mode = #tpu.pipeline_mode<synchronous>, transform_indices = @transform_4, window_bounds = array<i64: 1, 512>}, {pipeline_mode = #tpu.pipeline_mode<synchronous>, transform_indices = @transform_5, window_bounds = array<i64: 512, 10>}, {pipeline_mode = #tpu.pipeline_mode<synchronous>, transform_indices = @transform_6, window_bounds = array<i64: 1, 10>}, {transform_indices = @transform_7, window_bounds = array<i64: 2, 10>}]} {
    %c0 = arith.constant 0 : index
    %c0_0 = arith.constant 0 : index
    %0 = vector.load %arg1[%c0, %c0_0] : memref<2x1536xbf16, #tpu.memory_space<vmem>>, vector<2x1536xbf16>
    %c0_1 = arith.constant 0 : index
    %c0_2 = arith.constant 0 : index
    %1 = vector.load %arg2[%c0_1, %c0_2] : memref<1536x256xbf16, #tpu.memory_space<vmem>>, vector<1536x256xbf16>
    %cst = arith.constant dense<0.000000e+00> : vector<2x256xf32>
    %2 = tpu.matmul %0, %1, %cst {dimension_numbers = #tpu.dot_dimension_numbers<[1], [0], [0], [1], [0, 0, 1, 1], [], []>} : vector<2x1536xbf16>, vector<1536x256xbf16>, vector<2x256xf32> -> vector<2x256xf32>
    %c0_3 = arith.constant 0 : index
    %c0_4 = arith.constant 0 : index
    %3 = vector.load %arg3[%c0_3, %c0_4] : memref<1x256xf32, #tpu.memory_space<vmem>>, vector<1x256xf32>
    %4 = vector.broadcast %3 : vector<1x256xf32> to vector<2x256xf32>
    %5 = arith.addf %2, %4 : vector<2x256xf32>
    %cst_5 = arith.constant 0.000000e+00 : f32
    %6 = vector.broadcast %cst_5 : f32 to vector<2x256xf32>
    %7 = arith.maximumf %5, %6 : vector<2x256xf32>
    %8 = arith.truncf %7 : vector<2x256xf32> to vector<2x256xbf16>
    %c0_6 = arith.constant 0 : index
    %c0_7 = arith.constant 0 : index
    %9 = vector.load %arg4[%c0_6, %c0_7] : memref<256x512xbf16, #tpu.memory_space<vmem>>, vector<256x512xbf16>
    %cst_8 = arith.constant dense<0.000000e+00> : vector<2x512xf32>
    %10 = tpu.matmul %8, %9, %cst_8 {dimension_numbers = #tpu.dot_dimension_numbers<[1], [0], [0], [1], [0, 0, 1, 1], [], []>} : vector<2x256xbf16>, vector<256x512xbf16>, vector<2x512xf32> -> vector<2x512xf32>
    %c0_9 = arith.constant 0 : index
    %c0_10 = arith.constant 0 : index
    %11 = vector.load %arg5[%c0_9, %c0_10] : memref<1x512xf32, #tpu.memory_space<vmem>>, vector<1x512xf32>
    %12 = vector.broadcast %11 : vector<1x512xf32> to vector<2x512xf32>
    %13 = arith.addf %10, %12 : vector<2x512xf32>
    %cst_11 = arith.constant 0.000000e+00 : f32
    %14 = vector.broadcast %cst_11 : f32 to vector<2x512xf32>
    %15 = arith.maximumf %13, %14 : vector<2x512xf32>
    %16 = arith.truncf %15 : vector<2x512xf32> to vector<2x512xbf16>
    %c0_12 = arith.constant 0 : index
    %c0_13 = arith.constant 0 : index
    %17 = vector.load %arg6[%c0_12, %c0_13] : memref<512x10xbf16, #tpu.memory_space<vmem>>, vector<512x10xbf16>
    %cst_14 = arith.constant dense<0.000000e+00> : vector<2x10xf32>
    %18 = tpu.matmul %16, %17, %cst_14 {dimension_numbers = #tpu.dot_dimension_numbers<[1], [0], [0], [1], [0, 0, 1, 1], [], []>} : vector<2x512xbf16>, vector<512x10xbf16>, vector<2x10xf32> -> vector<2x10xf32>
    %c0_15 = arith.constant 0 : index
    %c0_16 = arith.constant 0 : index
    %19 = vector.load %arg7[%c0_15, %c0_16] : memref<1x10xf32, #tpu.memory_space<vmem>>, vector<1x10xf32>
    %20 = vector.broadcast %19 : vector<1x10xf32> to vector<2x10xf32>
    %21 = arith.addf %18, %20 : vector<2x10xf32>
    %cst_17 = arith.constant 0.000000e+00 : f32
    %22 = vector.broadcast %cst_17 : f32 to vector<2x10xf32>
    %23 = arith.maximumf %21, %22 : vector<2x10xf32>
    %cst_18 = arith.constant dense<0xFF800000> : vector<2xf32>
    %24 = vector.multi_reduction <maximumf>, %23, %cst_18 [1] : vector<2x10xf32> to vector<2xf32>
    %25 = vector.shape_cast %24 : vector<2xf32> to vector<2x1xf32>
    %26 = vector.broadcast %25 : vector<2x1xf32> to vector<2x10xf32>
    %27 = arith.subf %23, %26 : vector<2x10xf32>
    %28 = math.exp %27 : vector<2x10xf32>
    %cst_19 = arith.constant dense<0.000000e+00> : vector<2xf32>
    %29 = vector.multi_reduction <add>, %28, %cst_19 [1] : vector<2x10xf32> to vector<2xf32>
    %30 = vector.shape_cast %29 : vector<2xf32> to vector<2x1xf32>
    %31 = math.log %30 : vector<2x1xf32>
    %32 = arith.addf %31, %25 : vector<2x1xf32>
    %33 = vector.broadcast %32 : vector<2x1xf32> to vector<2x10xf32>
    %34 = arith.subf %23, %33 : vector<2x10xf32>
    %c0_20 = arith.constant 0 : index
    %c0_21 = arith.constant 0 : index
    %35 = vector.load %arg8[%c0_20, %c0_21] : memref<2x10xf32, #tpu.memory_space<vmem>>, vector<2x10xf32>
    tpu.vector_store %arg8[%c0_20, %c0_21], %34 {strides = array<i32>} : memref<2x10xf32, #tpu.memory_space<vmem>>, vector<2x10xf32>,
    return
  }
  func.func @transform_0(%arg0: i32) -> (i32, i32) {
    %c0_i32 = arith.constant 0 : i32
    %c0_i32_0 = arith.constant 0 : i32
    return %arg0, %c0_i32 : i32, i32
  }
  func.func @transform_1(%arg0: i32) -> (i32, i32) {
    %c0_i32 = arith.constant 0 : i32
    %c0_i32_0 = arith.constant 0 : i32
    %c0_i32_1 = arith.constant 0 : i32
    return %c0_i32, %c0_i32_0 : i32, i32
  }
  func.func @transform_2(%arg0: i32) -> (i32, i32) {
    %c0_i32 = arith.constant 0 : i32
    %c0_i32_0 = arith.constant 0 : i32
    %c0_i32_1 = arith.constant 0 : i32
    return %c0_i32, %c0_i32_0 : i32, i32
  }
  func.func @transform_3(%arg0: i32) -> (i32, i32) {
    %c0_i32 = arith.constant 0 : i32
    %c0_i32_0 = arith.constant 0 : i32
    %c0_i32_1 = arith.constant 0 : i32
    return %c0_i32, %c0_i32_0 : i32, i32
  }
  func.func @transform_4(%arg0: i32) -> (i32, i32) {
    %c0_i32 = arith.constant 0 : i32
    %c0_i32_0 = arith.constant 0 : i32
    %c0_i32_1 = arith.constant 0 : i32
    return %c0_i32, %c0_i32_0 : i32, i32
  }
  func.func @transform_5(%arg0: i32) -> (i32, i32) {
    %c0_i32 = arith.constant 0 : i32
    %c0_i32_0 = arith.constant 0 : i32
    %c0_i32_1 = arith.constant 0 : i32
    return %c0_i32, %c0_i32_0 : i32, i32
  }
  func.func @transform_6(%arg0: i32) -> (i32, i32) {
    %c0_i32 = arith.constant 0 : i32
    %c0_i32_0 = arith.constant 0 : i32
    %c0_i32_1 = arith.constant 0 : i32
    return %c0_i32, %c0_i32_0 : i32, i32
  }
  func.func @transform_7(%arg0: i32) -> (i32, i32) {
    %c0_i32 = arith.constant 0 : i32
    %c0_i32_0 = arith.constant 0 : i32
    return %arg0, %c0_i32 : i32, i32
  }
}

</mosaic_0001>

<llo_original>
// kernel: forward.3
$region0: #{forward.3}
  #allocation0 [shape = 'u32[]', space=smem, size = 0x4, offset = 0x4, fixed_abs, tag = 'smem constant byte address 0x4 - core index']
  #allocation1 [shape = 'u32[144,128]{1,0:T(1,128)}', space=vmem, size = 0x12000, scoped, tag = 'internal scratch']
  %s0 = inlined_call_operand.vmem [shape: bf16[2,1536], index: 0, kind: input, shape index: {}]
  %s1 = inlined_call_operand.vmem [shape: bf16[1536,256], index: 1, kind: input, shape index: {}]
  %s2 = inlined_call_operand.vmem [shape: f32[1,256], index: 2, kind: input, shape index: {}]
  %s3 = inlined_call_operand.vmem [shape: bf16[256,512], index: 3, kind: input, shape index: {}]
  %s4 = inlined_call_operand.vmem [shape: f32[1,512], index: 4, kind: input, shape index: {}]
  %s5 = inlined_call_operand.vmem [shape: bf16[512,10], index: 5, kind: input, shape index: {}]
  %s6 = inlined_call_operand.vmem [shape: f32[1,10], index: 6, kind: input, shape index: {}]
  %s7 = inlined_call_operand.hbm [shape: f32[2,10], index: 7, kind: output, shape index: {}]
  %s8 = sld [smem:[#allocation0]]
  $region38: #{forward.3} parent=0
    _
  %s10 = ssub.s32 1, %s8
  %s11 = scalar_select 0, %s10, %s8
  $region1: #{forward.3} parent=0
    #allocation2 [shape = 'u8[1024]{0}', space=vmem, size = 0x400, scoped, tag = 'output window, operand 0, single buffered']
    #allocation3 [shape = 's32[1]{0}', space=sflag, size = 0x4, scoped, tag = 'scoped memory for forward.3']
    %12 = vsyncpa [#allocation3], 0
    // Predicated region
    $region2: #{forward.3} parent=1 // pred_check
      _
    $region3: #{forward.3} parent=1 // pred_check_branch
      %14 = sbr.rel (0) target = $region5
    $region4: #{forward.3} parent=1 // pred_region
      _
    $region5: #{forward.3} parent=1 // pred_fallthru
      _
    // Predicated region
    $region6: #{forward.3} parent=1 // pred_check
      _
    $region7: #{forward.3} parent=1 // pred_check_branch
      %16 = sbr.rel (0) target = $region9
    $region8: #{forward.3} parent=1 // pred_region
      _
    $region9: #{forward.3} parent=1 // pred_fallthru
      _
    // Predicated region
    $region10: #{forward.3} parent=1 // pred_check
      _
    $region11: #{forward.3} parent=1 // pred_check_branch
      %18 = sbr.rel (0) target = $region13
    $region12: #{forward.3} parent=1 // pred_region
      _
    $region13: #{forward.3} parent=1 // pred_fallthru
      _
    // Predicated region
    $region14: #{forward.3} parent=1 // pred_check
      _
    $region15: #{forward.3} parent=1 // pred_check_branch
      %20 = sbr.rel (0) target = $region17
    $region16: #{forward.3} parent=1 // pred_region
      _
    $region17: #{forward.3} parent=1 // pred_fallthru
      _
    // Predicated region
    $region18: #{forward.3} parent=1 // pred_check
      _
    $region19: #{forward.3} parent=1 // pred_check_branch
      %22 = sbr.rel (0) target = $region21
    $region20: #{forward.3} parent=1 // pred_region
      _
    $region21: #{forward.3} parent=1 // pred_fallthru
      _
    // Predicated region
    $region22: #{forward.3} parent=1 // pred_check
      _
    $region23: #{forward.3} parent=1 // pred_check_branch
      %24 = sbr.rel (0) target = $region25
    $region24: #{forward.3} parent=1 // pred_region
      _
    $region25: #{forward.3} parent=1 // pred_fallthru
      _
    // Predicated region
    $region26: #{forward.3} parent=1 // pred_check
      _
    $region27: #{forward.3} parent=1 // pred_check_branch
      %26 = sbr.rel (0) target = $region29
    $region28: #{forward.3} parent=1 // pred_region
      _
    $region29: #{forward.3} parent=1 // pred_fallthru
      _
    %v28 = vld [vmem:[%s0] sm:$0xff]
    %v29 = vld [vmem:[%s0 + $0x8] sm:$0xf]
    %v30 = vld [vmem:[%s1] sm:$0xff]
    %v31 = vld [vmem:[%s1 + $0x8] sm:$0xff]
    %v32 = vld [vmem:[%s1 + $0x10] sm:$0xff]
    %v33 = vld [vmem:[%s1 + $0x18] sm:$0xff]
    %v34 = vld [vmem:[%s1 + $0x20] sm:$0xff]
    %v35 = vld [vmem:[%s1 + $0x28] sm:$0xff]
    %v36 = vld [vmem:[%s1 + $0x30] sm:$0xff]
    %v37 = vld [vmem:[%s1 + $0x38] sm:$0xff]
    %v38 = vld [vmem:[%s1 + $0x40] sm:$0xff]
    %v39 = vld [vmem:[%s1 + $0x48] sm:$0xff]
    %v40 = vld [vmem:[%s1 + $0x50] sm:$0xff]
    %v41 = vld [vmem:[%s1 + $0x58] sm:$0xff]
    %v42 = vld [vmem:[%s1 + $0x60] sm:$0xff]
    %v43 = vld [vmem:[%s1 + $0x68] sm:$0xff]
    %v44 = vld [vmem:[%s1 + $0x70] sm:$0xff]
    %v45 = vld [vmem:[%s1 + $0x78] sm:$0xff]
    %v46 = vld [vmem:[%s1 + $0x80] sm:$0xff]
    %v47 = vld [vmem:[%s1 + $0x88] sm:$0xff]
    %v48 = vld [vmem:[%s1 + $0x90] sm:$0xff]
    %v49 = vld [vmem:[%s1 + $0x98] sm:$0xff]
    %v50 = vld [vmem:[%s1 + $0xa0] sm:$0xff]
    %v51 = vld [vmem:[%s1 + $0xa8] sm:$0xff]
    %v52 = vld [vmem:[%s1 + $0xb0] sm:$0xff]
    %v53 = vld [vmem:[%s1 + $0xb8] sm:$0xff]
    %v54 = vld [vmem:[%s1 + $0xc0] sm:$0xff]
    %v55 = vld [vmem:[%s1 + $0xc8] sm:$0xff]
    %v56 = vld [vmem:[%s1 + $0xd0] sm:$0xff]
    %v57 = vld [vmem:[%s1 + $0xd8] sm:$0xff]
    %v58 = vld [vmem:[%s1 + $0xe0] sm:$0xff]
    %v59 = vld [vmem:[%s1 + $0xe8] sm:$0xff]
    %v60 = vld [vmem:[%s1 + $0xf0] sm:$0xff]
    %v61 = vld [vmem:[%s1 + $0xf8] sm:$0xff]
    %v62 = vld [vmem:[%s1 + $0x100] sm:$0xff]
    %v63 = vld [vmem:[%s1 + $0x108] sm:$0xff]
    %v64 = vld [vmem:[%s1 + $0x110] sm:$0xff]
    %v65 = vld [vmem:[%s1 + $0x118] sm:$0xff]
    %v66 = vld [vmem:[%s1 + $0x120] sm:$0xff]
    %v67 = vld [vmem:[%s1 + $0x128] sm:$0xff]
    %v68 = vld [vmem:[%s1 + $0x130] sm:$0xff]
    %v69 = vld [vmem:[%s1 + $0x138] sm:$0xff]
    %v70 = vld [vmem:[%s1 + $0x140] sm:$0xff]
    %v71 = vld [vmem:[%s1 + $0x148] sm:$0xff]
    %v72 = vld [vmem:[%s1 + $0x150] sm:$0xff]
    %v73 = vld [vmem:[%s1 + $0x158] sm:$0xff]
    %v74 = vld [vmem:[%s1 + $0x160] sm:$0xff]
    %v75 = vld [vmem:[%s1 + $0x168] sm:$0xff]
    %v76 = vld [vmem:[%s1 + $0x170] sm:$0xff]
    %v77 = vld [vmem:[%s1 + $0x178] sm:$0xff]
    %v78 = vld [vmem:[%s1 + $0x180] sm:$0xff]
    %v79 = vld [vmem:[%s1 + $0x188] sm:$0xff]
    %v80 = vld [vmem:[%s1 + $0x190] sm:$0xff]
    %v81 = vld [vmem:[%s1 + $0x198] sm:$0xff]
    %v82 = vld [vmem:[%s1 + $0x1a0] sm:$0xff]
    %v83 = vld [vmem:[%s1 + $0x1a8] sm:$0xff]
    %v84 = vld [vmem:[%s1 + $0x1b0] sm:$0xff]
    %v85 = vld [vmem:[%s1 + $0x1b8] sm:$0xff]
    %v86 = vld [vmem:[%s1 + $0x1c0] sm:$0xff]
    %v87 = vld [vmem:[%s1 + $0x1c8] sm:$0xff]
    %v88 = vld [vmem:[%s1 + $0x1d0] sm:$0xff]
    %v89 = vld [vmem:[%s1 + $0x1d8] sm:$0xff]
    %v90 = vld [vmem:[%s1 + $0x1e0] sm:$0xff]
    %v91 = vld [vmem:[%s1 + $0x1e8] sm:$0xff]
    %v92 = vld [vmem:[%s1 + $0x1f0] sm:$0xff]
    %v93 = vld [vmem:[%s1 + $0x1f8] sm:$0xff]
    %v94 = vld [vmem:[%s1 + $0x200] sm:$0xff]
    %v95 = vld [vmem:[%s1 + $0x208] sm:$0xff]
    %v96 = vld [vmem:[%s1 + $0x210] sm:$0xff]
    %v97 = vld [vmem:[%s1 + $0x218] sm:$0xff]
    %v98 = vld [vmem:[%s1 + $0x220] sm:$0xff]
    %v99 = vld [vmem:[%s1 + $0x228] sm:$0xff]
    %v100 = vld [vmem:[%s1 + $0x230] sm:$0xff]
    %v101 = vld [vmem:[%s1 + $0x238] sm:$0xff]
    %v102 = vld [vmem:[%s1 + $0x240] sm:$0xff]
    %v103 = vld [vmem:[%s1 + $0x248] sm:$0xff]
    %v104 = vld [vmem:[%s1 + $0x250] sm:$0xff]
    %v105 = vld [vmem:[%s1 + $0x258] sm:$0xff]
    %v106 = vld [vmem:[%s1 + $0x260] sm:$0xff]
    %v107 = vld [vmem:[%s1 + $0x268] sm:$0xff]
    %v108 = vld [vmem:[%s1 + $0x270] sm:$0xff]
    %v109 = vld [vmem:[%s1 + $0x278] sm:$0xff]
    %v110 = vld [vmem:[%s1 + $0x280] sm:$0xff]
    %v111 = vld [vmem:[%s1 + $0x288] sm:$0xff]
    %v112 = vld [vmem:[%s1 + $0x290] sm:$0xff]
    %v113 = vld [vmem:[%s1 + $0x298] sm:$0xff]
    %v114 = vld [vmem:[%s1 + $0x2a0] sm:$0xff]
    %v115 = vld [vmem:[%s1 + $0x2a8] sm:$0xff]
    %v116 = vld [vmem:[%s1 + $0x2b0] sm:$0xff]
    %v117 = vld [vmem:[%s1 + $0x2b8] sm:$0xff]
    %v118 = vld [vmem:[%s1 + $0x2c0] sm:$0xff]
    %v119 = vld [vmem:[%s1 + $0x2c8] sm:$0xff]
    %v120 = vld [vmem:[%s1 + $0x2d0] sm:$0xff]
    %v121 = vld [vmem:[%s1 + $0x2d8] sm:$0xff]
    %v122 = vld [vmem:[%s1 + $0x2e0] sm:$0xff]
    %v123 = vld [vmem:[%s1 + $0x2e8] sm:$0xff]
    %v124 = vld [vmem:[%s1 + $0x2f0] sm:$0xff]
    %v125 = vld [vmem:[%s1 + $0x2f8] sm:$0xff]
    %v126 = vld [vmem:[%s1 + $0x300] sm:$0xff]
    %v127 = vld [vmem:[%s1 + $0x308] sm:$0xff]
    %v128 = vld [vmem:[%s1 + $0x310] sm:$0xff]
    %v129 = vld [vmem:[%s1 + $0x318] sm:$0xff]
    %v130 = vld [vmem:[%s1 + $0x320] sm:$0xff]
    %v131 = vld [vmem:[%s1 + $0x328] sm:$0xff]
    %v132 = vld [vmem:[%s1 + $0x330] sm:$0xff]
    %v133 = vld [vmem:[%s1 + $0x338] sm:$0xff]
    %v134 = vld [vmem:[%s1 + $0x340] sm:$0xff]
    %v135 = vld [vmem:[%s1 + $0x348] sm:$0xff]
    %v136 = vld [vmem:[%s1 + $0x350] sm:$0xff]
    %v137 = vld [vmem:[%s1 + $0x358] sm:$0xff]
    %v138 = vld [vmem:[%s1 + $0x360] sm:$0xff]
    %v139 = vld [vmem:[%s1 + $0x368] sm:$0xff]
    %v140 = vld [vmem:[%s1 + $0x370] sm:$0xff]
    %v141 = vld [vmem:[%s1 + $0x378] sm:$0xff]
    %v142 = vld [vmem:[%s1 + $0x380] sm:$0xff]
    %v143 = vld [vmem:[%s1 + $0x388] sm:$0xff]
    %v144 = vld [vmem:[%s1 + $0x390] sm:$0xff]
    %v145 = vld [vmem:[%s1 + $0x398] sm:$0xff]
    %v146 = vld [vmem:[%s1 + $0x3a0] sm:$0xff]
    %v147 = vld [vmem:[%s1 + $0x3a8] sm:$0xff]
    %v148 = vld [vmem:[%s1 + $0x3b0] sm:$0xff]
    %v149 = vld [vmem:[%s1 + $0x3b8] sm:$0xff]
    %v150 = vld [vmem:[%s1 + $0x3c0] sm:$0xff]
    %v151 = vld [vmem:[%s1 + $0x3c8] sm:$0xff]
    %v152 = vld [vmem:[%s1 + $0x3d0] sm:$0xff]
    %v153 = vld [vmem:[%s1 + $0x3d8] sm:$0xff]
    %v154 = vld [vmem:[%s1 + $0x3e0] sm:$0xff]
    %v155 = vld [vmem:[%s1 + $0x3e8] sm:$0xff]
    %v156 = vld [vmem:[%s1 + $0x3f0] sm:$0xff]
    %v157 = vld [vmem:[%s1 + $0x3f8] sm:$0xff]
    %v158 = vld [vmem:[%s1 + $0x400] sm:$0xff]
    %v159 = vld [vmem:[%s1 + $0x408] sm:$0xff]
    %v160 = vld [vmem:[%s1 + $0x410] sm:$0xff]
    %v161 = vld [vmem:[%s1 + $0x418] sm:$0xff]
    %v162 = vld [vmem:[%s1 + $0x420] sm:$0xff]
    %v163 = vld [vmem:[%s1 + $0x428] sm:$0xff]
    %v164 = vld [vmem:[%s1 + $0x430] sm:$0xff]
    %v165 = vld [vmem:[%s1 + $0x438] sm:$0xff]
    %v166 = vld [vmem:[%s1 + $0x440] sm:$0xff]
    %v167 = vld [vmem:[%s1 + $0x448] sm:$0xff]
    %v168 = vld [vmem:[%s1 + $0x450] sm:$0xff]
    %v169 = vld [vmem:[%s1 + $0x458] sm:$0xff]
    %v170 = vld [vmem:[%s1 + $0x460] sm:$0xff]
    %v171 = vld [vmem:[%s1 + $0x468] sm:$0xff]
    %v172 = vld [vmem:[%s1 + $0x470] sm:$0xff]
    %v173 = vld [vmem:[%s1 + $0x478] sm:$0xff]
    %v174 = vld [vmem:[%s1 + $0x480] sm:$0xff]
    %v175 = vld [vmem:[%s1 + $0x488] sm:$0xff]
    %v176 = vld [vmem:[%s1 + $0x490] sm:$0xff]
    %v177 = vld [vmem:[%s1 + $0x498] sm:$0xff]
    %v178 = vld [vmem:[%s1 + $0x4a0] sm:$0xff]
    %v179 = vld [vmem:[%s1 + $0x4a8] sm:$0xff]
    %v180 = vld [vmem:[%s1 + $0x4b0] sm:$0xff]
    %v181 = vld [vmem:[%s1 + $0x4b8] sm:$0xff]
    %v182 = vld [vmem:[%s1 + $0x4c0] sm:$0xff]
    %v183 = vld [vmem:[%s1 + $0x4c8] sm:$0xff]
    %v184 = vld [vmem:[%s1 + $0x4d0] sm:$0xff]
    %v185 = vld [vmem:[%s1 + $0x4d8] sm:$0xff]
    %v186 = vld [vmem:[%s1 + $0x4e0] sm:$0xff]
    %v187 = vld [vmem:[%s1 + $0x4e8] sm:$0xff]
    %v188 = vld [vmem:[%s1 + $0x4f0] sm:$0xff]
    %v189 = vld [vmem:[%s1 + $0x4f8] sm:$0xff]
    %v190 = vld [vmem:[%s1 + $0x500] sm:$0xff]
    %v191 = vld [vmem:[%s1 + $0x508] sm:$0xff]
    %v192 = vld [vmem:[%s1 + $0x510] sm:$0xff]
    %v193 = vld [vmem:[%s1 + $0x518] sm:$0xff]
    %v194 = vld [vmem:[%s1 + $0x520] sm:$0xff]
    %v195 = vld [vmem:[%s1 + $0x528] sm:$0xff]
    %v196 = vld [vmem:[%s1 + $0x530] sm:$0xff]
    %v197 = vld [vmem:[%s1 + $0x538] sm:$0xff]
    %v198 = vld [vmem:[%s1 + $0x540] sm:$0xff]
    %v199 = vld [vmem:[%s1 + $0x548] sm:$0xff]
    %v200 = vld [vmem:[%s1 + $0x550] sm:$0xff]
    %v201 = vld [vmem:[%s1 + $0x558] sm:$0xff]
    %v202 = vld [vmem:[%s1 + $0x560] sm:$0xff]
    %v203 = vld [vmem:[%s1 + $0x568] sm:$0xff]
    %v204 = vld [vmem:[%s1 + $0x570] sm:$0xff]
    %v205 = vld [vmem:[%s1 + $0x578] sm:$0xff]
    %v206 = vld [vmem:[%s1 + $0x580] sm:$0xff]
    %v207 = vld [vmem:[%s1 + $0x588] sm:$0xff]
    %v208 = vld [vmem:[%s1 + $0x590] sm:$0xff]
    %v209 = vld [vmem:[%s1 + $0x598] sm:$0xff]
    %v210 = vld [vmem:[%s1 + $0x5a0] sm:$0xff]
    %v211 = vld [vmem:[%s1 + $0x5a8] sm:$0xff]
    %v212 = vld [vmem:[%s1 + $0x5b0] sm:$0xff]
    %v213 = vld [vmem:[%s1 + $0x5b8] sm:$0xff]
    %v214 = vld [vmem:[%s1 + $0x5c0] sm:$0xff]
    %v215 = vld [vmem:[%s1 + $0x5c8] sm:$0xff]
    %v216 = vld [vmem:[%s1 + $0x5d0] sm:$0xff]
    %v217 = vld [vmem:[%s1 + $0x5d8] sm:$0xff]
    %v218 = vld [vmem:[%s1 + $0x5e0] sm:$0xff]
    %v219 = vld [vmem:[%s1 + $0x5e8] sm:$0xff]
    %v220 = vld [vmem:[%s1 + $0x5f0] sm:$0xff]
    %v221 = vld [vmem:[%s1 + $0x5f8] sm:$0xff]
    %v222 = vld [vmem:[%s2] sm:$0x3]
    %v224 = vlaneseq
    %v225 = vshrl.u32 %v224, 7
    %v226 = vsub.s32 0, %v225
    %v227 = vrot.slane %v222, %v226
    %v228 = vlaneseq
    %v229 = vshrl.u32 %v228, 7
    %v230 = vsub.s32 1, %v229
    %v231 = vrot.slane %v222, %v230
    %v236 = vcombine.high %v28, %v28
    %v238 = vunpack.c.l.s4 1966171168
    %v239 = vunpack.c.0.s8 %v238
    %v240 = vlaneseq
    %v241 = vshrl.u32 %v240, 7
    %v242 = vsub.s32 %v239, %v241
    %v243 = vrot.slane %v28, %v242
    %v245 = vunpack.c.l.s4 1966171168
    %v246 = vunpack.c.0.s8 %v245
    %v247 = vlaneseq
    %v248 = vshrl.u32 %v247, 7
    %v249 = vsub.s32 %v246, %v248
    %v250 = vrot.slane %v236, %v249
    %v251 = vcombine.high %v243, %v243
    %v252 = vcombine.high %v250, %v250
    %v254 = vunpack.c.l.s4 1966171168
    %v255 = vunpack.c.0.s8 %v254
    %v256 = vlaneseq
    %v257 = vshrl.u32 %v256, 7
    %v258 = vsub.s32 %v255, %v257
    %v259 = vrot.slane %v243, %v258
    %v261 = vunpack.c.l.s4 1966171168
    %v262 = vunpack.c.0.s8 %v261
    %v263 = vlaneseq
    %v264 = vshrl.u32 %v263, 7
    %v265 = vsub.s32 %v262, %v264
    %v266 = vrot.slane %v250, %v265
    %v268 = vunpack.c.l.s4 1966171168
    %v269 = vunpack.c.0.s8 %v268
    %v270 = vlaneseq
    %v271 = vshrl.u32 %v270, 7
    %v272 = vsub.s32 %v269, %v271
    %v273 = vrot.slane %v251, %v272
    %v275 = vunpack.c.l.s4 1966171168
    %v276 = vunpack.c.0.s8 %v275
    %v277 = vlaneseq
    %v278 = vshrl.u32 %v277, 7
    %v279 = vsub.s32 %v276, %v278
    %v280 = vrot.slane %v252, %v279
    %v281 = vcombine.high %v259, %v259
    %v282 = vcombine.high %v266, %v266
    %v283 = vcombine.high %v273, %v273
    %v284 = vcombine.high %v280, %v280
    %v286 = vunpack.c.l.s4 1966171168
    %v287 = vunpack.c.0.s8 %v286
    %v288 = vlaneseq
    %v289 = vshrl.u32 %v288, 7
    %v290 = vsub.s32 %v287, %v289
    %v291 = vrot.slane %v29, %v290
    %v292 = vcombine.high %v291, %v291
    %v294 = vunpack.c.l.s4 1966171168
    %v295 = vunpack.c.0.s8 %v294
    %v296 = vlaneseq
    %v297 = vshrl.u32 %v296, 7
    %v298 = vsub.s32 %v295, %v297
    %v299 = vrot.slane %v291, %v298
    %v301 = vunpack.c.l.s4 1966171168
    %v302 = vunpack.c.0.s8 %v301
    %v303 = vlaneseq
    %v304 = vshrl.u32 %v303, 7
    %v305 = vsub.s32 %v302, %v304
    %v306 = vrot.slane %v292, %v305
    %v307 = vcombine.high %v299, %v299
    %v308 = vcombine.high %v306, %v306
    %v513 = vunpack.c.l.b16 %v30
    %v514 = vunpack.c.h.b16 %v30
    %v515 = vunpack.c.l.b16 %v31
    %v516 = vunpack.c.h.b16 %v31
    %v517 = vunpack.c.l.b16 %v32
    %v518 = vunpack.c.h.b16 %v32
    %v519 = vunpack.c.l.b16 %v33
    %v520 = vunpack.c.h.b16 %v33
    %v521 = vunpack.c.l.b16 %v34
    %v522 = vunpack.c.h.b16 %v34
    %v523 = vunpack.c.l.b16 %v35
    %v524 = vunpack.c.h.b16 %v35
    %v525 = vunpack.c.l.b16 %v36
    %v526 = vunpack.c.h.b16 %v36
    %v527 = vunpack.c.l.b16 %v37
    %v528 = vunpack.c.h.b16 %v37
    %v529 = vunpack.c.l.b16 %v38
    %v530 = vunpack.c.h.b16 %v38
    %v531 = vunpack.c.l.b16 %v39
    %v532 = vunpack.c.h.b16 %v39
    %v533 = vunpack.c.l.b16 %v40
    %v534 = vunpack.c.h.b16 %v40
    %v535 = vunpack.c.l.b16 %v41
    %v536 = vunpack.c.h.b16 %v41
    %v537 = vunpack.c.l.b16 %v42
    %v538 = vunpack.c.h.b16 %v42
    %v539 = vunpack.c.l.b16 %v43
    %v540 = vunpack.c.h.b16 %v43
    %v541 = vunpack.c.l.b16 %v44
    %v542 = vunpack.c.h.b16 %v44
    %v543 = vunpack.c.l.b16 %v45
    %v544 = vunpack.c.h.b16 %v45
    %v545 = vunpack.c.l.b16 %v46
    %v546 = vunpack.c.h.b16 %v46
    %v547 = vunpack.c.l.b16 %v47
    %v548 = vunpack.c.h.b16 %v47
    %v549 = vunpack.c.l.b16 %v48
    %v550 = vunpack.c.h.b16 %v48
    %v551 = vunpack.c.l.b16 %v49
    %v552 = vunpack.c.h.b16 %v49
    %v553 = vunpack.c.l.b16 %v50
    %v554 = vunpack.c.h.b16 %v50
    %v555 = vunpack.c.l.b16 %v51
    %v556 = vunpack.c.h.b16 %v51
    %v557 = vunpack.c.l.b16 %v52
    %v558 = vunpack.c.h.b16 %v52
    %v559 = vunpack.c.l.b16 %v53
    %v560 = vunpack.c.h.b16 %v53
    %v561 = vunpack.c.l.b16 %v54
    %v562 = vunpack.c.h.b16 %v54
    %v563 = vunpack.c.l.b16 %v55
    %v564 = vunpack.c.h.b16 %v55
    %v565 = vunpack.c.l.b16 %v56
    %v566 = vunpack.c.h.b16 %v56
    %v567 = vunpack.c.l.b16 %v57
    %v568 = vunpack.c.h.b16 %v57
    %v569 = vunpack.c.l.b16 %v58
    %v570 = vunpack.c.h.b16 %v58
    %v571 = vunpack.c.l.b16 %v59
    %v572 = vunpack.c.h.b16 %v59
    %v573 = vunpack.c.l.b16 %v60
    %v574 = vunpack.c.h.b16 %v60
    %v575 = vunpack.c.l.b16 %v61
    %v576 = vunpack.c.h.b16 %v61
    %v577 = vunpack.c.l.b16 %v62
    %v578 = vunpack.c.h.b16 %v62
    %v579 = vunpack.c.l.b16 %v63
    %v580 = vunpack.c.h.b16 %v63
    %v581 = vunpack.c.l.b16 %v64
    %v582 = vunpack.c.h.b16 %v64
    %v583 = vunpack.c.l.b16 %v65
    %v584 = vunpack.c.h.b16 %v65
    %v585 = vunpack.c.l.b16 %v66
    %v586 = vunpack.c.h.b16 %v66
    %v587 = vunpack.c.l.b16 %v67
    %v588 = vunpack.c.h.b16 %v67
    %v589 = vunpack.c.l.b16 %v68
    %v590 = vunpack.c.h.b16 %v68
    %v591 = vunpack.c.l.b16 %v69
    %v592 = vunpack.c.h.b16 %v69
    %v593 = vunpack.c.l.b16 %v70
    %v594 = vunpack.c.h.b16 %v70
    %v595 = vunpack.c.l.b16 %v71
    %v596 = vunpack.c.h.b16 %v71
    %v597 = vunpack.c.l.b16 %v72
    %v598 = vunpack.c.h.b16 %v72
    %v599 = vunpack.c.l.b16 %v73
    %v600 = vunpack.c.h.b16 %v73
    %v601 = vunpack.c.l.b16 %v74
    %v602 = vunpack.c.h.b16 %v74
    %v603 = vunpack.c.l.b16 %v75
    %v604 = vunpack.c.h.b16 %v75
    %v605 = vunpack.c.l.b16 %v76
    %v606 = vunpack.c.h.b16 %v76
    %v607 = vunpack.c.l.b16 %v77
    %v608 = vunpack.c.h.b16 %v77
    %v609 = vunpack.c.l.b16 %v78
    %v610 = vunpack.c.h.b16 %v78
    %v611 = vunpack.c.l.b16 %v79
    %v612 = vunpack.c.h.b16 %v79
    %v613 = vunpack.c.l.b16 %v80
    %v614 = vunpack.c.h.b16 %v80
    %v615 = vunpack.c.l.b16 %v81
    %v616 = vunpack.c.h.b16 %v81
    %v617 = vunpack.c.l.b16 %v82
    %v618 = vunpack.c.h.b16 %v82
    %v619 = vunpack.c.l.b16 %v83
    %v620 = vunpack.c.h.b16 %v83
    %v621 = vunpack.c.l.b16 %v84
    %v622 = vunpack.c.h.b16 %v84
    %v623 = vunpack.c.l.b16 %v85
    %v624 = vunpack.c.h.b16 %v85
    %v625 = vunpack.c.l.b16 %v86
    %v626 = vunpack.c.h.b16 %v86
    %v627 = vunpack.c.l.b16 %v87
    %v628 = vunpack.c.h.b16 %v87
    %v629 = vunpack.c.l.b16 %v88
    %v630 = vunpack.c.h.b16 %v88
    %v631 = vunpack.c.l.b16 %v89
    %v632 = vunpack.c.h.b16 %v89
    %v633 = vunpack.c.l.b16 %v90
    %v634 = vunpack.c.h.b16 %v90
    %v635 = vunpack.c.l.b16 %v91
    %v636 = vunpack.c.h.b16 %v91
    %v637 = vunpack.c.l.b16 %v92
    %v638 = vunpack.c.h.b16 %v92
    %v639 = vunpack.c.l.b16 %v93
    %v640 = vunpack.c.h.b16 %v93
    %v641 = vunpack.c.l.b16 %v94
    %v642 = vunpack.c.h.b16 %v94
    %v643 = vunpack.c.l.b16 %v95
    %v644 = vunpack.c.h.b16 %v95
    %v645 = vunpack.c.l.b16 %v96
    %v646 = vunpack.c.h.b16 %v96
    %v647 = vunpack.c.l.b16 %v97
    %v648 = vunpack.c.h.b16 %v97
    %v649 = vunpack.c.l.b16 %v98
    %v650 = vunpack.c.h.b16 %v98
    %v651 = vunpack.c.l.b16 %v99
    %v652 = vunpack.c.h.b16 %v99
    %v653 = vunpack.c.l.b16 %v100
    %v654 = vunpack.c.h.b16 %v100
    %v655 = vunpack.c.l.b16 %v101
    %v656 = vunpack.c.h.b16 %v101
    %v657 = vunpack.c.l.b16 %v102
    %v658 = vunpack.c.h.b16 %v102
    %v659 = vunpack.c.l.b16 %v103
    %v660 = vunpack.c.h.b16 %v103
    %v661 = vunpack.c.l.b16 %v104
    %v662 = vunpack.c.h.b16 %v104
    %v663 = vunpack.c.l.b16 %v105
    %v664 = vunpack.c.h.b16 %v105
    %v665 = vunpack.c.l.b16 %v106
    %v666 = vunpack.c.h.b16 %v106
    %v667 = vunpack.c.l.b16 %v107
    %v668 = vunpack.c.h.b16 %v107
    %v669 = vunpack.c.l.b16 %v108
    %v670 = vunpack.c.h.b16 %v108
    %v671 = vunpack.c.l.b16 %v109
    %v672 = vunpack.c.h.b16 %v109
    %v673 = vunpack.c.l.b16 %v110
    %v674 = vunpack.c.h.b16 %v110
    %v675 = vunpack.c.l.b16 %v111
    %v676 = vunpack.c.h.b16 %v111
    %v677 = vunpack.c.l.b16 %v112
    %v678 = vunpack.c.h.b16 %v112
    %v679 = vunpack.c.l.b16 %v113
    %v680 = vunpack.c.h.b16 %v113
    %v681 = vunpack.c.l.b16 %v114
    %v682 = vunpack.c.h.b16 %v114
    %v683 = vunpack.c.l.b16 %v115
    %v684 = vunpack.c.h.b16 %v115
    %v685 = vunpack.c.l.b16 %v116
    %v686 = vunpack.c.h.b16 %v116
    %v687 = vunpack.c.l.b16 %v117
    %v688 = vunpack.c.h.b16 %v117
    %v689 = vunpack.c.l.b16 %v118
    %v690 = vunpack.c.h.b16 %v118
    %v691 = vunpack.c.l.b16 %v119
    %v692 = vunpack.c.h.b16 %v119
    %v693 = vunpack.c.l.b16 %v120
    %v694 = vunpack.c.h.b16 %v120
    %v695 = vunpack.c.l.b16 %v121
    %v696 = vunpack.c.h.b16 %v121
    %v697 = vunpack.c.l.b16 %v122
    %v698 = vunpack.c.h.b16 %v122
    %v699 = vunpack.c.l.b16 %v123
    %v700 = vunpack.c.h.b16 %v123
    %v701 = vunpack.c.l.b16 %v124
    %v702 = vunpack.c.h.b16 %v124
    %v703 = vunpack.c.l.b16 %v125
    %v704 = vunpack.c.h.b16 %v125
    %v705 = vunpack.c.l.b16 %v126
    %v706 = vunpack.c.h.b16 %v126
    %v707 = vunpack.c.l.b16 %v127
    %v708 = vunpack.c.h.b16 %v127
    %v709 = vunpack.c.l.b16 %v128
    %v710 = vunpack.c.h.b16 %v128
    %v711 = vunpack.c.l.b16 %v129
    %v712 = vunpack.c.h.b16 %v129
    %v713 = vunpack.c.l.b16 %v130
    %v714 = vunpack.c.h.b16 %v130
    %v715 = vunpack.c.l.b16 %v131
    %v716 = vunpack.c.h.b16 %v131
    %v717 = vunpack.c.l.b16 %v132
    %v718 = vunpack.c.h.b16 %v132
    %v719 = vunpack.c.l.b16 %v133
    %v720 = vunpack.c.h.b16 %v133
    %v721 = vunpack.c.l.b16 %v134
    %v722 = vunpack.c.h.b16 %v134
    %v723 = vunpack.c.l.b16 %v135
    %v724 = vunpack.c.h.b16 %v135
    %v725 = vunpack.c.l.b16 %v136
    %v726 = vunpack.c.h.b16 %v136
    %v727 = vunpack.c.l.b16 %v137
    %v728 = vunpack.c.h.b16 %v137
    %v729 = vunpack.c.l.b16 %v138
    %v730 = vunpack.c.h.b16 %v138
    %v731 = vunpack.c.l.b16 %v139
    %v732 = vunpack.c.h.b16 %v139
    %v733 = vunpack.c.l.b16 %v140
    %v734 = vunpack.c.h.b16 %v140
    %v735 = vunpack.c.l.b16 %v141
    %v736 = vunpack.c.h.b16 %v141
    %v737 = vunpack.c.l.b16 %v142
    %v738 = vunpack.c.h.b16 %v142
    %v739 = vunpack.c.l.b16 %v143
    %v740 = vunpack.c.h.b16 %v143
    %v741 = vunpack.c.l.b16 %v144
    %v742 = vunpack.c.h.b16 %v144
    %v743 = vunpack.c.l.b16 %v145
    %v744 = vunpack.c.h.b16 %v145
    %v745 = vunpack.c.l.b16 %v146
    %v746 = vunpack.c.h.b16 %v146
    %v747 = vunpack.c.l.b16 %v147
    %v748 = vunpack.c.h.b16 %v147
    %v749 = vunpack.c.l.b16 %v148
    %v750 = vunpack.c.h.b16 %v148
    %v751 = vunpack.c.l.b16 %v149
    %v752 = vunpack.c.h.b16 %v149
    %v753 = vunpack.c.l.b16 %v150
    %v754 = vunpack.c.h.b16 %v150
    %v755 = vunpack.c.l.b16 %v151
    %v756 = vunpack.c.h.b16 %v151
    %v757 = vunpack.c.l.b16 %v152
    %v758 = vunpack.c.h.b16 %v152
    %v759 = vunpack.c.l.b16 %v153
    %v760 = vunpack.c.h.b16 %v153
    %v761 = vunpack.c.l.b16 %v154
    %v762 = vunpack.c.h.b16 %v154
    %v763 = vunpack.c.l.b16 %v155
    %v764 = vunpack.c.h.b16 %v155
    %v765 = vunpack.c.l.b16 %v156
    %v766 = vunpack.c.h.b16 %v156
    %v767 = vunpack.c.l.b16 %v157
    %v768 = vunpack.c.h.b16 %v157
    %v769 = vunpack.c.l.b16 %v158
    %v770 = vunpack.c.h.b16 %v158
    %v771 = vunpack.c.l.b16 %v159
    %v772 = vunpack.c.h.b16 %v159
    %v773 = vunpack.c.l.b16 %v160
    %v774 = vunpack.c.h.b16 %v160
    %v775 = vunpack.c.l.b16 %v161
    %v776 = vunpack.c.h.b16 %v161
    %v777 = vunpack.c.l.b16 %v162
    %v778 = vunpack.c.h.b16 %v162
    %v779 = vunpack.c.l.b16 %v163
    %v780 = vunpack.c.h.b16 %v163
    %v781 = vunpack.c.l.b16 %v164
    %v782 = vunpack.c.h.b16 %v164
    %v783 = vunpack.c.l.b16 %v165
    %v784 = vunpack.c.h.b16 %v165
    %v785 = vunpack.c.l.b16 %v166
    %v786 = vunpack.c.h.b16 %v166
    %v787 = vunpack.c.l.b16 %v167
    %v788 = vunpack.c.h.b16 %v167
    %v789 = vunpack.c.l.b16 %v168
    %v790 = vunpack.c.h.b16 %v168
    %v791 = vunpack.c.l.b16 %v169
    %v792 = vunpack.c.h.b16 %v169
    %v793 = vunpack.c.l.b16 %v170
    %v794 = vunpack.c.h.b16 %v170
    %v795 = vunpack.c.l.b16 %v171
    %v796 = vunpack.c.h.b16 %v171
    %v797 = vunpack.c.l.b16 %v172
    %v798 = vunpack.c.h.b16 %v172
    %v799 = vunpack.c.l.b16 %v173
    %v800 = vunpack.c.h.b16 %v173
    %v801 = vunpack.c.l.b16 %v174
    %v802 = vunpack.c.h.b16 %v174
    %v803 = vunpack.c.l.b16 %v175
    %v804 = vunpack.c.h.b16 %v175
    %v805 = vunpack.c.l.b16 %v176
    %v806 = vunpack.c.h.b16 %v176
    %v807 = vunpack.c.l.b16 %v177
    %v808 = vunpack.c.h.b16 %v177
    %v809 = vunpack.c.l.b16 %v178
    %v810 = vunpack.c.h.b16 %v178
    %v811 = vunpack.c.l.b16 %v179
    %v812 = vunpack.c.h.b16 %v179
    %v813 = vunpack.c.l.b16 %v180
    %v814 = vunpack.c.h.b16 %v180
    %v815 = vunpack.c.l.b16 %v181
    %v816 = vunpack.c.h.b16 %v181
    %v817 = vunpack.c.l.b16 %v182
    %v818 = vunpack.c.h.b16 %v182
    %v819 = vunpack.c.l.b16 %v183
    %v820 = vunpack.c.h.b16 %v183
    %v821 = vunpack.c.l.b16 %v184
    %v822 = vunpack.c.h.b16 %v184
    %v823 = vunpack.c.l.b16 %v185
    %v824 = vunpack.c.h.b16 %v185
    %v825 = vunpack.c.l.b16 %v186
    %v826 = vunpack.c.h.b16 %v186
    %v827 = vunpack.c.l.b16 %v187
    %v828 = vunpack.c.h.b16 %v187
    %v829 = vunpack.c.l.b16 %v188
    %v830 = vunpack.c.h.b16 %v188
    %v831 = vunpack.c.l.b16 %v189
    %v832 = vunpack.c.h.b16 %v189
    %v833 = vunpack.c.l.b16 %v190
    %v834 = vunpack.c.h.b16 %v190
    %v835 = vunpack.c.l.b16 %v191
    %v836 = vunpack.c.h.b16 %v191
    %v837 = vunpack.c.l.b16 %v192
    %v838 = vunpack.c.h.b16 %v192
    %v839 = vunpack.c.l.b16 %v193
    %v840 = vunpack.c.h.b16 %v193
    %v841 = vunpack.c.l.b16 %v194
    %v842 = vunpack.c.h.b16 %v194
    %v843 = vunpack.c.l.b16 %v195
    %v844 = vunpack.c.h.b16 %v195
    %v845 = vunpack.c.l.b16 %v196
    %v846 = vunpack.c.h.b16 %v196
    %v847 = vunpack.c.l.b16 %v197
    %v848 = vunpack.c.h.b16 %v197
    %v849 = vunpack.c.l.b16 %v198
    %v850 = vunpack.c.h.b16 %v198
    %v851 = vunpack.c.l.b16 %v199
    %v852 = vunpack.c.h.b16 %v199
    %v853 = vunpack.c.l.b16 %v200
    %v854 = vunpack.c.h.b16 %v200
    %v855 = vunpack.c.l.b16 %v201
    %v856 = vunpack.c.h.b16 %v201
    %v857 = vunpack.c.l.b16 %v202
    %v858 = vunpack.c.h.b16 %v202
    %v859 = vunpack.c.l.b16 %v203
    %v860 = vunpack.c.h.b16 %v203
    %v861 = vunpack.c.l.b16 %v204
    %v862 = vunpack.c.h.b16 %v204
    %v863 = vunpack.c.l.b16 %v205
    %v864 = vunpack.c.h.b16 %v205
    %v865 = vunpack.c.l.b16 %v206
    %v866 = vunpack.c.h.b16 %v206
    %v867 = vunpack.c.l.b16 %v207
    %v868 = vunpack.c.h.b16 %v207
    %v869 = vunpack.c.l.b16 %v208
    %v870 = vunpack.c.h.b16 %v208
    %v871 = vunpack.c.l.b16 %v209
    %v872 = vunpack.c.h.b16 %v209
    %v873 = vunpack.c.l.b16 %v210
    %v874 = vunpack.c.h.b16 %v210
    %v875 = vunpack.c.l.b16 %v211
    %v876 = vunpack.c.h.b16 %v211
    %v877 = vunpack.c.l.b16 %v212
    %v878 = vunpack.c.h.b16 %v212
    %v879 = vunpack.c.l.b16 %v213
    %v880 = vunpack.c.h.b16 %v213
    %v881 = vunpack.c.l.b16 %v214
    %v882 = vunpack.c.h.b16 %v214
    %v883 = vunpack.c.l.b16 %v215
    %v884 = vunpack.c.h.b16 %v215
    %v885 = vunpack.c.l.b16 %v216
    %v886 = vunpack.c.h.b16 %v216
    %v887 = vunpack.c.l.b16 %v217
    %v888 = vunpack.c.h.b16 %v217
    %v889 = vunpack.c.l.b16 %v218
    %v890 = vunpack.c.h.b16 %v218
    %v891 = vunpack.c.l.b16 %v219
    %v892 = vunpack.c.h.b16 %v219
    %v893 = vunpack.c.l.b16 %v220
    %v894 = vunpack.c.h.b16 %v220
    %v895 = vunpack.c.l.b16 %v221
    %v896 = vunpack.c.h.b16 %v221
    %v897 = vpack.c.b16 %v515, %v513
    %v898 = vpack.c.b16 %v516, %v514
    %v899 = vpack.c.b16 %v519, %v517
    %v900 = vpack.c.b16 %v520, %v518
    %v901 = vpack.c.b16 %v523, %v521
    %v902 = vpack.c.b16 %v524, %v522
    %v903 = vpack.c.b16 %v527, %v525
    %v904 = vpack.c.b16 %v528, %v526
    %v905 = vpack.c.b16 %v531, %v529
    %v906 = vpack.c.b16 %v532, %v530
    %v907 = vpack.c.b16 %v535, %v533
    %v908 = vpack.c.b16 %v536, %v534
    %v909 = vpack.c.b16 %v539, %v537
    %v910 = vpack.c.b16 %v540, %v538
    %v911 = vpack.c.b16 %v543, %v541
    %v912 = vpack.c.b16 %v544, %v542
    %v913 = vpack.c.b16 %v547, %v545
    %v914 = vpack.c.b16 %v548, %v546
    %v915 = vpack.c.b16 %v551, %v549
    %v916 = vpack.c.b16 %v552, %v550
    %v917 = vpack.c.b16 %v555, %v553
    %v918 = vpack.c.b16 %v556, %v554
    %v919 = vpack.c.b16 %v559, %v557
    %v920 = vpack.c.b16 %v560, %v558
    %v921 = vpack.c.b16 %v563, %v561
    %v922 = vpack.c.b16 %v564, %v562
    %v923 = vpack.c.b16 %v567, %v565
    %v924 = vpack.c.b16 %v568, %v566
    %v925 = vpack.c.b16 %v571, %v569
    %v926 = vpack.c.b16 %v572, %v570
    %v927 = vpack.c.b16 %v575, %v573
    %v928 = vpack.c.b16 %v576, %v574
    %v929 = vpack.c.b16 %v579, %v577
    %v930 = vpack.c.b16 %v580, %v578
    %v931 = vpack.c.b16 %v583, %v581
    %v932 = vpack.c.b16 %v584, %v582
    %v933 = vpack.c.b16 %v587, %v585
    %v934 = vpack.c.b16 %v588, %v586
    %v935 = vpack.c.b16 %v591, %v589
    %v936 = vpack.c.b16 %v592, %v590
    %v937 = vpack.c.b16 %v595, %v593
    %v938 = vpack.c.b16 %v596, %v594
    %v939 = vpack.c.b16 %v599, %v597
    %v940 = vpack.c.b16 %v600, %v598
    %v941 = vpack.c.b16 %v603, %v601
    %v942 = vpack.c.b16 %v604, %v602
    %v943 = vpack.c.b16 %v607, %v605
    %v944 = vpack.c.b16 %v608, %v606
    %v945 = vpack.c.b16 %v611, %v609
    %v946 = vpack.c.b16 %v612, %v610
    %v947 = vpack.c.b16 %v615, %v613
    %v948 = vpack.c.b16 %v616, %v614
    %v949 = vpack.c.b16 %v619, %v617
    %v950 = vpack.c.b16 %v620, %v618
    %v951 = vpack.c.b16 %v623, %v621
    %v952 = vpack.c.b16 %v624, %v622
    %v953 = vpack.c.b16 %v627, %v625
    %v954 = vpack.c.b16 %v628, %v626
    %v955 = vpack.c.b16 %v631, %v629
    %v956 = vpack.c.b16 %v632, %v630
    %v957 = vpack.c.b16 %v635, %v633
    %v958 = vpack.c.b16 %v636, %v634
    %v959 = vpack.c.b16 %v639, %v637
    %v960 = vpack.c.b16 %v640, %v638
    %v961 = vpack.c.b16 %v643, %v641
    %v962 = vpack.c.b16 %v644, %v642
    %v963 = vpack.c.b16 %v647, %v645
    %v964 = vpack.c.b16 %v648, %v646
    %v965 = vpack.c.b16 %v651, %v649
    %v966 = vpack.c.b16 %v652, %v650
    %v967 = vpack.c.b16 %v655, %v653
    %v968 = vpack.c.b16 %v656, %v654
    %v969 = vpack.c.b16 %v659, %v657
    %v970 = vpack.c.b16 %v660, %v658
    %v971 = vpack.c.b16 %v663, %v661
    %v972 = vpack.c.b16 %v664, %v662
    %v973 = vpack.c.b16 %v667, %v665
    %v974 = vpack.c.b16 %v668, %v666
    %v975 = vpack.c.b16 %v671, %v669
    %v976 = vpack.c.b16 %v672, %v670
    %v977 = vpack.c.b16 %v675, %v673
    %v978 = vpack.c.b16 %v676, %v674
    %v979 = vpack.c.b16 %v679, %v677
    %v980 = vpack.c.b16 %v680, %v678
    %v981 = vpack.c.b16 %v683, %v681
    %v982 = vpack.c.b16 %v684, %v682
    %v983 = vpack.c.b16 %v687, %v685
    %v984 = vpack.c.b16 %v688, %v686
    %v985 = vpack.c.b16 %v691, %v689
    %v986 = vpack.c.b16 %v692, %v690
    %v987 = vpack.c.b16 %v695, %v693
    %v988 = vpack.c.b16 %v696, %v694
    %v989 = vpack.c.b16 %v699, %v697
    %v990 = vpack.c.b16 %v700, %v698
    %v991 = vpack.c.b16 %v703, %v701
    %v992 = vpack.c.b16 %v704, %v702
    %v993 = vpack.c.b16 %v707, %v705
    %v994 = vpack.c.b16 %v708, %v706
    %v995 = vpack.c.b16 %v711, %v709
    %v996 = vpack.c.b16 %v712, %v710
    %v997 = vpack.c.b16 %v715, %v713
    %v998 = vpack.c.b16 %v716, %v714
    %v999 = vpack.c.b16 %v719, %v717
    %v1000 = vpack.c.b16 %v720, %v718
    %v1001 = vpack.c.b16 %v723, %v721
    %v1002 = vpack.c.b16 %v724, %v722
    %v1003 = vpack.c.b16 %v727, %v725
    %v1004 = vpack.c.b16 %v728, %v726
    %v1005 = vpack.c.b16 %v731, %v729
    %v1006 = vpack.c.b16 %v732, %v730
    %v1007 = vpack.c.b16 %v735, %v733
    %v1008 = vpack.c.b16 %v736, %v734
    %v1009 = vpack.c.b16 %v739, %v737
    %v1010 = vpack.c.b16 %v740, %v738
    %v1011 = vpack.c.b16 %v743, %v741
    %v1012 = vpack.c.b16 %v744, %v742
    %v1013 = vpack.c.b16 %v747, %v745
    %v1014 = vpack.c.b16 %v748, %v746
    %v1015 = vpack.c.b16 %v751, %v749
    %v1016 = vpack.c.b16 %v752, %v750
    %v1017 = vpack.c.b16 %v755, %v753
    %v1018 = vpack.c.b16 %v756, %v754
    %v1019 = vpack.c.b16 %v759, %v757
    %v1020 = vpack.c.b16 %v760, %v758
    %v1021 = vpack.c.b16 %v763, %v761
    %v1022 = vpack.c.b16 %v764, %v762
    %v1023 = vpack.c.b16 %v767, %v765
    %v1024 = vpack.c.b16 %v768, %v766
    %v1025 = vpack.c.b16 %v771, %v769
    %v1026 = vpack.c.b16 %v772, %v770
    %v1027 = vpack.c.b16 %v775, %v773
    %v1028 = vpack.c.b16 %v776, %v774
    %v1029 = vpack.c.b16 %v779, %v777
    %v1030 = vpack.c.b16 %v780, %v778
    %v1031 = vpack.c.b16 %v783, %v781
    %v1032 = vpack.c.b16 %v784, %v782
    %v1033 = vpack.c.b16 %v787, %v785
    %v1034 = vpack.c.b16 %v788, %v786
    %v1035 = vpack.c.b16 %v791, %v789
    %v1036 = vpack.c.b16 %v792, %v790
    %v1037 = vpack.c.b16 %v795, %v793
    %v1038 = vpack.c.b16 %v796, %v794
    %v1039 = vpack.c.b16 %v799, %v797
    %v1040 = vpack.c.b16 %v800, %v798
    %v1041 = vpack.c.b16 %v803, %v801
    %v1042 = vpack.c.b16 %v804, %v802
    %v1043 = vpack.c.b16 %v807, %v805
    %v1044 = vpack.c.b16 %v808, %v806
    %v1045 = vpack.c.b16 %v811, %v809
    %v1046 = vpack.c.b16 %v812, %v810
    %v1047 = vpack.c.b16 %v815, %v813
    %v1048 = vpack.c.b16 %v816, %v814
    %v1049 = vpack.c.b16 %v819, %v817
    %v1050 = vpack.c.b16 %v820, %v818
    %v1051 = vpack.c.b16 %v823, %v821
    %v1052 = vpack.c.b16 %v824, %v822
    %v1053 = vpack.c.b16 %v827, %v825
    %v1054 = vpack.c.b16 %v828, %v826
    %v1055 = vpack.c.b16 %v831, %v829
    %v1056 = vpack.c.b16 %v832, %v830
    %v1057 = vpack.c.b16 %v835, %v833
    %v1058 = vpack.c.b16 %v836, %v834
    %v1059 = vpack.c.b16 %v839, %v837
    %v1060 = vpack.c.b16 %v840, %v838
    %v1061 = vpack.c.b16 %v843, %v841
    %v1062 = vpack.c.b16 %v844, %v842
    %v1063 = vpack.c.b16 %v847, %v845
    %v1064 = vpack.c.b16 %v848, %v846
    %v1065 = vpack.c.b16 %v851, %v849
    %v1066 = vpack.c.b16 %v852, %v850
    %v1067 = vpack.c.b16 %v855, %v853
    %v1068 = vpack.c.b16 %v856, %v854
    %v1069 = vpack.c.b16 %v859, %v857
    %v1070 = vpack.c.b16 %v860, %v858
    %v1071 = vpack.c.b16 %v863, %v861
    %v1072 = vpack.c.b16 %v864, %v862
    %v1073 = vpack.c.b16 %v867, %v865
    %v1074 = vpack.c.b16 %v868, %v866
    %v1075 = vpack.c.b16 %v871, %v869
    %v1076 = vpack.c.b16 %v872, %v870
    %v1077 = vpack.c.b16 %v875, %v873
    %v1078 = vpack.c.b16 %v876, %v874
    %v1079 = vpack.c.b16 %v879, %v877
    %v1080 = vpack.c.b16 %v880, %v878
    %v1081 = vpack.c.b16 %v883, %v881
    %v1082 = vpack.c.b16 %v884, %v882
    %v1083 = vpack.c.b16 %v887, %v885
    %v1084 = vpack.c.b16 %v888, %v886
    %v1085 = vpack.c.b16 %v891, %v889
    %v1086 = vpack.c.b16 %v892, %v890
    %v1087 = vpack.c.b16 %v895, %v893
    %v1088 = vpack.c.b16 %v896, %v894
    %1281 = vmatprep.subr.bf16.mxu0 %v898
    %1282 = vmatpush1.bf16.msra.mxu0 %v897
    %1283 = vmatprep.subr.bf16.mxu0 %v900
    %1284 = vmatpush1.bf16.msra.mxu0 %v899
    %1285 = vmatprep.subr.bf16.mxu0 %v902
    %1286 = vmatpush1.bf16.msra.mxu0 %v901
    %1287 = vmatprep.subr.bf16.mxu0 %v904
    %1288 = vmatpush1.bf16.msra.mxu0 %v903
    %1289 = vmatprep.subr.bf16.mxu0 %v906
    %1290 = vmatpush1.bf16.msra.mxu0 %v905
    %1291 = vmatprep.subr.bf16.mxu0 %v908
    %1292 = vmatpush1.bf16.msra.mxu0 %v907
    %1293 = vmatprep.subr.bf16.mxu0 %v910
    %1294 = vmatpush1.bf16.msra.mxu0 %v909
    %1295 = vmatprep.subr.bf16.mxu0 %v912
    %1296 = vmatpush1.bf16.msra.mxu0 %v911
    %1297 = vmatprep.subr.bf16.mxu0 %v914
    %1298 = vmatpush1.bf16.msra.mxu0 %v913
    %1299 = vmatprep.subr.bf16.mxu0 %v916
    %1300 = vmatpush1.bf16.msra.mxu0 %v915
    %1301 = vmatprep.subr.bf16.mxu0 %v918
    %1302 = vmatpush1.bf16.msra.mxu0 %v917
    %1303 = vmatprep.subr.bf16.mxu0 %v920
    %1304 = vmatpush1.bf16.msra.mxu0 %v919
    %1305 = vmatprep.subr.bf16.mxu0 %v922
    %1306 = vmatpush1.bf16.msra.mxu0 %v921
    %1307 = vmatprep.subr.bf16.mxu0 %v924
    %1308 = vmatpush1.bf16.msra.mxu0 %v923
    %1309 = vmatprep.subr.bf16.mxu0 %v926
    %1310 = vmatpush1.bf16.msra.mxu0 %v925
    %1311 = vmatprep.subr.bf16.mxu0 %v928
    %1312 = vmatpush1.bf16.msra.mxu0 %v927
    %1313 = vmatprep.mubr.bf16.mxu0 %v273
    %1314 = vmatmul.mubr.bf16.gmra.mrb[0].mxu0 %v259
    %v1315 = vpop.f32.mrb[0].mxu0
    %v1316 = vadd.f32 %v227, %v1315
    %v1317 = vpop.f32.mrb[0].mxu0
    %v1318 = vadd.f32 %v231, %v1317
    %v1319 = vpop.f32.mrb[0].mxu0
    %v1320 = vpop.f32.mrb[0].mxu0
    %1321 = vdwg.mxu0
    %1322 = vmatprep.subr.bf16.mxu0 %v930
    %1323 = vmatpush1.bf16.msra.mxu0 %v929
    %1324 = vmatprep.subr.bf16.mxu0 %v932
    %1325 = vmatpush1.bf16.msra.mxu0 %v931
    %1326 = vmatprep.subr.bf16.mxu0 %v934
    %1327 = vmatpush1.bf16.msra.mxu0 %v933
    %1328 = vmatprep.subr.bf16.mxu0 %v936
    %1329 = vmatpush1.bf16.msra.mxu0 %v935
    %1330 = vmatprep.subr.bf16.mxu0 %v938
    %1331 = vmatpush1.bf16.msra.mxu0 %v937
    %1332 = vmatprep.subr.bf16.mxu0 %v940
    %1333 = vmatpush1.bf16.msra.mxu0 %v939
    %1334 = vmatprep.subr.bf16.mxu0 %v942
    %1335 = vmatpush1.bf16.msra.mxu0 %v941
    %1336 = vmatprep.subr.bf16.mxu0 %v944
    %1337 = vmatpush1.bf16.msra.mxu0 %v943
    %1338 = vmatprep.subr.bf16.mxu0 %v946
    %1339 = vmatpush1.bf16.msra.mxu0 %v945
    %1340 = vmatprep.subr.bf16.mxu0 %v948
    %1341 = vmatpush1.bf16.msra.mxu0 %v947
    %1342 = vmatprep.subr.bf16.mxu0 %v950
    %1343 = vmatpush1.bf16.msra.mxu0 %v949
    %1344 = vmatprep.subr.bf16.mxu0 %v952
    %1345 = vmatpush1.bf16.msra.mxu0 %v951
    %1346 = vmatprep.subr.bf16.mxu0 %v954
    %1347 = vmatpush1.bf16.msra.mxu0 %v953
    %1348 = vmatprep.subr.bf16.mxu0 %v956
    %1349 = vmatpush1.bf16.msra.mxu0 %v955
    %1350 = vmatprep.subr.bf16.mxu0 %v958
    %1351 = vmatpush1.bf16.msra.mxu0 %v957
    %1352 = vmatprep.subr.bf16.mxu0 %v960
    %1353 = vmatpush1.bf16.msra.mxu0 %v959
    %1354 = vmatprep.mubr.bf16.mxu0 %v283
    %1355 = vmatmul.mubr.bf16.gmra.mrb[0].mxu0 %v281
    %v1356 = vpop.f32.mrb[0].mxu0
    %v1357 = vadd.f32 %v1316, %v1356
    %v1358 = vpop.f32.mrb[0].mxu0
    %v1359 = vadd.f32 %v1318, %v1358
    %v1360 = vpop.f32.mrb[0].mxu0
    %v1361 = vpop.f32.mrb[0].mxu0
    %1362 = vdwg.mxu0
    %1363 = vmatprep.subr.bf16.mxu0 %v962
    %1364 = vmatpush1.bf16.msra.mxu0 %v961
    %1365 = vmatprep.subr.bf16.mxu0 %v964
    %1366 = vmatpush1.bf16.msra.mxu0 %v963
    %1367 = vmatprep.subr.bf16.mxu0 %v966
    %1368 = vmatpush1.bf16.msra.mxu0 %v965
    %1369 = vmatprep.subr.bf16.mxu0 %v968
    %1370 = vmatpush1.bf16.msra.mxu0 %v967
    %1371 = vmatprep.subr.bf16.mxu0 %v970
    %1372 = vmatpush1.bf16.msra.mxu0 %v969
    %1373 = vmatprep.subr.bf16.mxu0 %v972
    %1374 = vmatpush1.bf16.msra.mxu0 %v971
    %1375 = vmatprep.subr.bf16.mxu0 %v974
    %1376 = vmatpush1.bf16.msra.mxu0 %v973
    %1377 = vmatprep.subr.bf16.mxu0 %v976
    %1378 = vmatpush1.bf16.msra.mxu0 %v975
    %1379 = vmatprep.subr.bf16.mxu0 %v978
    %1380 = vmatpush1.bf16.msra.mxu0 %v977
    %1381 = vmatprep.subr.bf16.mxu0 %v980
    %1382 = vmatpush1.bf16.msra.mxu0 %v979
    %1383 = vmatprep.subr.bf16.mxu0 %v982
    %1384 = vmatpush1.bf16.msra.mxu0 %v981
    %1385 = vmatprep.subr.bf16.mxu0 %v984
    %1386 = vmatpush1.bf16.msra.mxu0 %v983
    %1387 = vmatprep.subr.bf16.mxu0 %v986
    %1388 = vmatpush1.bf16.msra.mxu0 %v985
    %1389 = vmatprep.subr.bf16.mxu0 %v988
    %1390 = vmatpush1.bf16.msra.mxu0 %v987
    %1391 = vmatprep.subr.bf16.mxu0 %v990
    %1392 = vmatpush1.bf16.msra.mxu0 %v989
    %1393 = vmatprep.subr.bf16.mxu0 %v992
    %1394 = vmatpush1.bf16.msra.mxu0 %v991
    %1395 = vmatprep.mubr.bf16.mxu0 %v280
    %1396 = vmatmul.mubr.bf16.gmra.mrb[0].mxu0 %v266
    %v1397 = vpop.f32.mrb[0].mxu0
    %v1398 = vadd.f32 %v1357, %v1397
    %v1399 = vpop.f32.mrb[0].mxu0
    %v1400 = vadd.f32 %v1359, %v1399
    %v1401 = vpop.f32.mrb[0].mxu0
    %v1402 = vpop.f32.mrb[0].mxu0
    %1403 = vdwg.mxu0
    %1404 = vmatprep.subr.bf16.mxu0 %v994
    %1405 = vmatpush1.bf16.msra.mxu0 %v993
    %1406 = vmatprep.subr.bf16.mxu0 %v996
    %1407 = vmatpush1.bf16.msra.mxu0 %v995
    %1408 = vmatprep.subr.bf16.mxu0 %v998
    %1409 = vmatpush1.bf16.msra.mxu0 %v997
    %1410 = vmatprep.subr.bf16.mxu0 %v1000
    %1411 = vmatpush1.bf16.msra.mxu0 %v999
    %1412 = vmatprep.subr.bf16.mxu0 %v1002
    %1413 = vmatpush1.bf16.msra.mxu0 %v1001
    %1414 = vmatprep.subr.bf16.mxu0 %v1004
    %1415 = vmatpush1.bf16.msra.mxu0 %v1003
    %1416 = vmatprep.subr.bf16.mxu0 %v1006
    %1417 = vmatpush1.bf16.msra.mxu0 %v1005
    %1418 = vmatprep.subr.bf16.mxu0 %v1008
    %1419 = vmatpush1.bf16.msra.mxu0 %v1007
    %1420 = vmatprep.subr.bf16.mxu0 %v1010
    %1421 = vmatpush1.bf16.msra.mxu0 %v1009
    %1422 = vmatprep.subr.bf16.mxu0 %v1012
    %1423 = vmatpush1.bf16.msra.mxu0 %v1011
    %1424 = vmatprep.subr.bf16.mxu0 %v1014
    %1425 = vmatpush1.bf16.msra.mxu0 %v1013
    %1426 = vmatprep.subr.bf16.mxu0 %v1016
    %1427 = vmatpush1.bf16.msra.mxu0 %v1015
    %1428 = vmatprep.subr.bf16.mxu0 %v1018
    %1429 = vmatpush1.bf16.msra.mxu0 %v1017
    %1430 = vmatprep.subr.bf16.mxu0 %v1020
    %1431 = vmatpush1.bf16.msra.mxu0 %v1019
    %1432 = vmatprep.subr.bf16.mxu0 %v1022
    %1433 = vmatpush1.bf16.msra.mxu0 %v1021
    %1434 = vmatprep.subr.bf16.mxu0 %v1024
    %1435 = vmatpush1.bf16.msra.mxu0 %v1023
    %1436 = vmatprep.mubr.bf16.mxu0 %v284
    %1437 = vmatmul.mubr.bf16.gmra.mrb[0].mxu0 %v282
    %v1438 = vpop.f32.mrb[0].mxu0
    %v1439 = vadd.f32 %v1398, %v1438
    %v1440 = vpop.f32.mrb[0].mxu0
    %v1441 = vadd.f32 %v1400, %v1440
    %v1442 = vpop.f32.mrb[0].mxu0
    %v1443 = vpop.f32.mrb[0].mxu0
    %1444 = vdwg.mxu0
    %1445 = vmatprep.subr.bf16.mxu0 %v1026
    %1446 = vmatpush1.bf16.msra.mxu0 %v1025
    %1447 = vmatprep.subr.bf16.mxu0 %v1028
    %1448 = vmatpush1.bf16.msra.mxu0 %v1027
    %1449 = vmatprep.subr.bf16.mxu0 %v1030
    %1450 = vmatpush1.bf16.msra.mxu0 %v1029
    %1451 = vmatprep.subr.bf16.mxu0 %v1032
    %1452 = vmatpush1.bf16.msra.mxu0 %v1031
    %1453 = vmatprep.subr.bf16.mxu0 %v1034
    %1454 = vmatpush1.bf16.msra.mxu0 %v1033
    %1455 = vmatprep.subr.bf16.mxu0 %v1036
    %1456 = vmatpush1.bf16.msra.mxu0 %v1035
    %1457 = vmatprep.subr.bf16.mxu0 %v1038
    %1458 = vmatpush1.bf16.msra.mxu0 %v1037
    %1459 = vmatprep.subr.bf16.mxu0 %v1040
    %1460 = vmatpush1.bf16.msra.mxu0 %v1039
    %1461 = vmatprep.subr.bf16.mxu0 %v1042
    %1462 = vmatpush1.bf16.msra.mxu0 %v1041
    %1463 = vmatprep.subr.bf16.mxu0 %v1044
    %1464 = vmatpush1.bf16.msra.mxu0 %v1043
    %1465 = vmatprep.subr.bf16.mxu0 %v1046
    %1466 = vmatpush1.bf16.msra.mxu0 %v1045
    %1467 = vmatprep.subr.bf16.mxu0 %v1048
    %1468 = vmatpush1.bf16.msra.mxu0 %v1047
    %1469 = vmatprep.subr.bf16.mxu0 %v1050
    %1470 = vmatpush1.bf16.msra.mxu0 %v1049
    %1471 = vmatprep.subr.bf16.mxu0 %v1052
    %1472 = vmatpush1.bf16.msra.mxu0 %v1051
    %1473 = vmatprep.subr.bf16.mxu0 %v1054
    %1474 = vmatpush1.bf16.msra.mxu0 %v1053
    %1475 = vmatprep.subr.bf16.mxu0 %v1056
    %1476 = vmatpush1.bf16.msra.mxu0 %v1055
    %1477 = vmatprep.mubr.bf16.mxu0 %v306
    %1478 = vmatmul.mubr.bf16.gmra.mrb[0].mxu0 %v299
    %v1479 = vpop.f32.mrb[0].mxu0
    %v1480 = vadd.f32 %v1439, %v1479
    %v1481 = vpop.f32.mrb[0].mxu0
    %v1482 = vadd.f32 %v1441, %v1481
    %v1483 = vpop.f32.mrb[0].mxu0
    %v1484 = vpop.f32.mrb[0].mxu0
    %1485 = vdwg.mxu0
    %1486 = vmatprep.subr.bf16.mxu0 %v1058
    %1487 = vmatpush1.bf16.msra.mxu0 %v1057
    %1488 = vmatprep.subr.bf16.mxu0 %v1060
    %1489 = vmatpush1.bf16.msra.mxu0 %v1059
    %1490 = vmatprep.subr.bf16.mxu0 %v1062
    %1491 = vmatpush1.bf16.msra.mxu0 %v1061
    %1492 = vmatprep.subr.bf16.mxu0 %v1064
    %1493 = vmatpush1.bf16.msra.mxu0 %v1063
    %1494 = vmatprep.subr.bf16.mxu0 %v1066
    %1495 = vmatpush1.bf16.msra.mxu0 %v1065
    %1496 = vmatprep.subr.bf16.mxu0 %v1068
    %1497 = vmatpush1.bf16.msra.mxu0 %v1067
    %1498 = vmatprep.subr.bf16.mxu0 %v1070
    %1499 = vmatpush1.bf16.msra.mxu0 %v1069
    %1500 = vmatprep.subr.bf16.mxu0 %v1072
    %1501 = vmatpush1.bf16.msra.mxu0 %v1071
    %1502 = vmatprep.subr.bf16.mxu0 %v1074
    %1503 = vmatpush1.bf16.msra.mxu0 %v1073
    %1504 = vmatprep.subr.bf16.mxu0 %v1076
    %1505 = vmatpush1.bf16.msra.mxu0 %v1075
    %1506 = vmatprep.subr.bf16.mxu0 %v1078
    %1507 = vmatpush1.bf16.msra.mxu0 %v1077
    %1508 = vmatprep.subr.bf16.mxu0 %v1080
    %1509 = vmatpush1.bf16.msra.mxu0 %v1079
    %1510 = vmatprep.subr.bf16.mxu0 %v1082
    %1511 = vmatpush1.bf16.msra.mxu0 %v1081
    %1512 = vmatprep.subr.bf16.mxu0 %v1084
    %1513 = vmatpush1.bf16.msra.mxu0 %v1083
    %1514 = vmatprep.subr.bf16.mxu0 %v1086
    %1515 = vmatpush1.bf16.msra.mxu0 %v1085
    %1516 = vmatprep.subr.bf16.mxu0 %v1088
    %1517 = vmatpush1.bf16.msra.mxu0 %v1087
    %1518 = vmatprep.mubr.bf16.mxu0 %v308
    %1519 = vmatmul.mubr.bf16.gmra.mrb[0].mxu0 %v307
    %v1520 = vpop.f32.mrb[0].mxu0
    %v1521 = vadd.f32 %v1480, %v1520
    %v1522 = vpop.f32.mrb[0].mxu0
    %v1523 = vadd.f32 %v1482, %v1522
    %v1524 = vpop.f32.mrb[0].mxu0
    %v1525 = vpop.f32.mrb[0].mxu0
    %1526 = vdwg.mxu0
    %v1527 = vmax.f32 %v1521, 0.0
    %v1528 = vmax.f32 %v1523, 0.0
    %v1529 = vpack.c.bf16 %v1527, %v1527
    %v1530 = vpack.c.bf16 %v1528, %v1528
    %v1531 = vld [vmem:[%s3] sm:$0xff]
    %v1532 = vld [vmem:[%s3 + $0x8] sm:$0xff]
    %v1533 = vld [vmem:[%s3 + $0x10] sm:$0xff]
    %v1534 = vld [vmem:[%s3 + $0x18] sm:$0xff]
    %v1535 = vld [vmem:[%s3 + $0x20] sm:$0xff]
    %v1536 = vld [vmem:[%s3 + $0x28] sm:$0xff]
    %v1537 = vld [vmem:[%s3 + $0x30] sm:$0xff]
    %v1538 = vld [vmem:[%s3 + $0x38] sm:$0xff]
    %v1539 = vld [vmem:[%s3 + $0x40] sm:$0xff]
    %v1540 = vld [vmem:[%s3 + $0x48] sm:$0xff]
    %v1541 = vld [vmem:[%s3 + $0x50] sm:$0xff]
    %v1542 = vld [vmem:[%s3 + $0x58] sm:$0xff]
    %v1543 = vld [vmem:[%s3 + $0x60] sm:$0xff]
    %v1544 = vld [vmem:[%s3 + $0x68] sm:$0xff]
    %v1545 = vld [vmem:[%s3 + $0x70] sm:$0xff]
    %v1546 = vld [vmem:[%s3 + $0x78] sm:$0xff]
    %v1547 = vld [vmem:[%s3 + $0x80] sm:$0xff]
    %v1548 = vld [vmem:[%s3 + $0x88] sm:$0xff]
    %v1549 = vld [vmem:[%s3 + $0x90] sm:$0xff]
    %v1550 = vld [vmem:[%s3 + $0x98] sm:$0xff]
    %v1551 = vld [vmem:[%s3 + $0xa0] sm:$0xff]
    %v1552 = vld [vmem:[%s3 + $0xa8] sm:$0xff]
    %v1553 = vld [vmem:[%s3 + $0xb0] sm:$0xff]
    %v1554 = vld [vmem:[%s3 + $0xb8] sm:$0xff]
    %v1555 = vld [vmem:[%s3 + $0xc0] sm:$0xff]
    %v1556 = vld [vmem:[%s3 + $0xc8] sm:$0xff]
    %v1557 = vld [vmem:[%s3 + $0xd0] sm:$0xff]
    %v1558 = vld [vmem:[%s3 + $0xd8] sm:$0xff]
    %v1559 = vld [vmem:[%s3 + $0xe0] sm:$0xff]
    %v1560 = vld [vmem:[%s3 + $0xe8] sm:$0xff]
    %v1561 = vld [vmem:[%s3 + $0xf0] sm:$0xff]
    %v1562 = vld [vmem:[%s3 + $0xf8] sm:$0xff]
    %v1563 = vld [vmem:[%s3 + $0x100] sm:$0xff]
    %v1564 = vld [vmem:[%s3 + $0x108] sm:$0xff]
    %v1565 = vld [vmem:[%s3 + $0x110] sm:$0xff]
    %v1566 = vld [vmem:[%s3 + $0x118] sm:$0xff]
    %v1567 = vld [vmem:[%s3 + $0x120] sm:$0xff]
    %v1568 = vld [vmem:[%s3 + $0x128] sm:$0xff]
    %v1569 = vld [vmem:[%s3 + $0x130] sm:$0xff]
    %v1570 = vld [vmem:[%s3 + $0x138] sm:$0xff]
    %v1571 = vld [vmem:[%s3 + $0x140] sm:$0xff]
    %v1572 = vld [vmem:[%s3 + $0x148] sm:$0xff]
    %v1573 = vld [vmem:[%s3 + $0x150] sm:$0xff]
    %v1574 = vld [vmem:[%s3 + $0x158] sm:$0xff]
    %v1575 = vld [vmem:[%s3 + $0x160] sm:$0xff]
    %v1576 = vld [vmem:[%s3 + $0x168] sm:$0xff]
    %v1577 = vld [vmem:[%s3 + $0x170] sm:$0xff]
    %v1578 = vld [vmem:[%s3 + $0x178] sm:$0xff]
    %v1579 = vld [vmem:[%s3 + $0x180] sm:$0xff]
    %v1580 = vld [vmem:[%s3 + $0x188] sm:$0xff]
    %v1581 = vld [vmem:[%s3 + $0x190] sm:$0xff]
    %v1582 = vld [vmem:[%s3 + $0x198] sm:$0xff]
    %v1583 = vld [vmem:[%s3 + $0x1a0] sm:$0xff]
    %v1584 = vld [vmem:[%s3 + $0x1a8] sm:$0xff]
    %v1585 = vld [vmem:[%s3 + $0x1b0] sm:$0xff]
    %v1586 = vld [vmem:[%s3 + $0x1b8] sm:$0xff]
    %v1587 = vld [vmem:[%s3 + $0x1c0] sm:$0xff]
    %v1588 = vld [vmem:[%s3 + $0x1c8] sm:$0xff]
    %v1589 = vld [vmem:[%s3 + $0x1d0] sm:$0xff]
    %v1590 = vld [vmem:[%s3 + $0x1d8] sm:$0xff]
    %v1591 = vld [vmem:[%s3 + $0x1e0] sm:$0xff]
    %v1592 = vld [vmem:[%s3 + $0x1e8] sm:$0xff]
    %v1593 = vld [vmem:[%s3 + $0x1f0] sm:$0xff]
    %v1594 = vld [vmem:[%s3 + $0x1f8] sm:$0xff]
    %v1595 = vld [vmem:[%s4] sm:$0xf]
    %v1597 = vlaneseq
    %v1598 = vshrl.u32 %v1597, 7
    %v1599 = vsub.s32 0, %v1598
    %v1600 = vrot.slane %v1595, %v1599
    %v1601 = vlaneseq
    %v1602 = vshrl.u32 %v1601, 7
    %v1603 = vsub.s32 1, %v1602
    %v1604 = vrot.slane %v1595, %v1603
    %v1605 = vlaneseq
    %v1606 = vshrl.u32 %v1605, 7
    %v1607 = vsub.s32 2, %v1606
    %v1608 = vrot.slane %v1595, %v1607
    %v1609 = vlaneseq
    %v1610 = vshrl.u32 %v1609, 7
    %v1611 = vsub.s32 3, %v1610
    %v1612 = vrot.slane %v1595, %v1611
    %v1681 = vunpack.c.l.b16 %v1531
    %v1682 = vunpack.c.h.b16 %v1531
    %v1683 = vunpack.c.l.b16 %v1532
    %v1684 = vunpack.c.h.b16 %v1532
    %v1685 = vunpack.c.l.b16 %v1533
    %v1686 = vunpack.c.h.b16 %v1533
    %v1687 = vunpack.c.l.b16 %v1534
    %v1688 = vunpack.c.h.b16 %v1534
    %v1689 = vunpack.c.l.b16 %v1535
    %v1690 = vunpack.c.h.b16 %v1535
    %v1691 = vunpack.c.l.b16 %v1536
    %v1692 = vunpack.c.h.b16 %v1536
    %v1693 = vunpack.c.l.b16 %v1537
    %v1694 = vunpack.c.h.b16 %v1537
    %v1695 = vunpack.c.l.b16 %v1538
    %v1696 = vunpack.c.h.b16 %v1538
    %v1697 = vunpack.c.l.b16 %v1539
    %v1698 = vunpack.c.h.b16 %v1539
    %v1699 = vunpack.c.l.b16 %v1540
    %v1700 = vunpack.c.h.b16 %v1540
    %v1701 = vunpack.c.l.b16 %v1541
    %v1702 = vunpack.c.h.b16 %v1541
    %v1703 = vunpack.c.l.b16 %v1542
    %v1704 = vunpack.c.h.b16 %v1542
    %v1705 = vunpack.c.l.b16 %v1543
    %v1706 = vunpack.c.h.b16 %v1543
    %v1707 = vunpack.c.l.b16 %v1544
    %v1708 = vunpack.c.h.b16 %v1544
    %v1709 = vunpack.c.l.b16 %v1545
    %v1710 = vunpack.c.h.b16 %v1545
    %v1711 = vunpack.c.l.b16 %v1546
    %v1712 = vunpack.c.h.b16 %v1546
    %v1713 = vunpack.c.l.b16 %v1547
    %v1714 = vunpack.c.h.b16 %v1547
    %v1715 = vunpack.c.l.b16 %v1548
    %v1716 = vunpack.c.h.b16 %v1548
    %v1717 = vunpack.c.l.b16 %v1549
    %v1718 = vunpack.c.h.b16 %v1549
    %v1719 = vunpack.c.l.b16 %v1550
    %v1720 = vunpack.c.h.b16 %v1550
    %v1721 = vunpack.c.l.b16 %v1551
    %v1722 = vunpack.c.h.b16 %v1551
    %v1723 = vunpack.c.l.b16 %v1552
    %v1724 = vunpack.c.h.b16 %v1552
    %v1725 = vunpack.c.l.b16 %v1553
    %v1726 = vunpack.c.h.b16 %v1553
    %v1727 = vunpack.c.l.b16 %v1554
    %v1728 = vunpack.c.h.b16 %v1554
    %v1729 = vunpack.c.l.b16 %v1555
    %v1730 = vunpack.c.h.b16 %v1555
    %v1731 = vunpack.c.l.b16 %v1556
    %v1732 = vunpack.c.h.b16 %v1556
    %v1733 = vunpack.c.l.b16 %v1557
    %v1734 = vunpack.c.h.b16 %v1557
    %v1735 = vunpack.c.l.b16 %v1558
    %v1736 = vunpack.c.h.b16 %v1558
    %v1737 = vunpack.c.l.b16 %v1559
    %v1738 = vunpack.c.h.b16 %v1559
    %v1739 = vunpack.c.l.b16 %v1560
    %v1740 = vunpack.c.h.b16 %v1560
    %v1741 = vunpack.c.l.b16 %v1561
    %v1742 = vunpack.c.h.b16 %v1561
    %v1743 = vunpack.c.l.b16 %v1562
    %v1744 = vunpack.c.h.b16 %v1562
    %v1745 = vunpack.c.l.b16 %v1563
    %v1746 = vunpack.c.h.b16 %v1563
    %v1747 = vunpack.c.l.b16 %v1564
    %v1748 = vunpack.c.h.b16 %v1564
    %v1749 = vunpack.c.l.b16 %v1565
    %v1750 = vunpack.c.h.b16 %v1565
    %v1751 = vunpack.c.l.b16 %v1566
    %v1752 = vunpack.c.h.b16 %v1566
    %v1753 = vunpack.c.l.b16 %v1567
    %v1754 = vunpack.c.h.b16 %v1567
    %v1755 = vunpack.c.l.b16 %v1568
    %v1756 = vunpack.c.h.b16 %v1568
    %v1757 = vunpack.c.l.b16 %v1569
    %v1758 = vunpack.c.h.b16 %v1569
    %v1759 = vunpack.c.l.b16 %v1570
    %v1760 = vunpack.c.h.b16 %v1570
    %v1761 = vunpack.c.l.b16 %v1571
    %v1762 = vunpack.c.h.b16 %v1571
    %v1763 = vunpack.c.l.b16 %v1572
    %v1764 = vunpack.c.h.b16 %v1572
    %v1765 = vunpack.c.l.b16 %v1573
    %v1766 = vunpack.c.h.b16 %v1573
    %v1767 = vunpack.c.l.b16 %v1574
    %v1768 = vunpack.c.h.b16 %v1574
    %v1769 = vunpack.c.l.b16 %v1575
    %v1770 = vunpack.c.h.b16 %v1575
    %v1771 = vunpack.c.l.b16 %v1576
    %v1772 = vunpack.c.h.b16 %v1576
    %v1773 = vunpack.c.l.b16 %v1577
    %v1774 = vunpack.c.h.b16 %v1577
    %v1775 = vunpack.c.l.b16 %v1578
    %v1776 = vunpack.c.h.b16 %v1578
    %v1777 = vunpack.c.l.b16 %v1579
    %v1778 = vunpack.c.h.b16 %v1579
    %v1779 = vunpack.c.l.b16 %v1580
    %v1780 = vunpack.c.h.b16 %v1580
    %v1781 = vunpack.c.l.b16 %v1581
    %v1782 = vunpack.c.h.b16 %v1581
    %v1783 = vunpack.c.l.b16 %v1582
    %v1784 = vunpack.c.h.b16 %v1582
    %v1785 = vunpack.c.l.b16 %v1583
    %v1786 = vunpack.c.h.b16 %v1583
    %v1787 = vunpack.c.l.b16 %v1584
    %v1788 = vunpack.c.h.b16 %v1584
    %v1789 = vunpack.c.l.b16 %v1585
    %v1790 = vunpack.c.h.b16 %v1585
    %v1791 = vunpack.c.l.b16 %v1586
    %v1792 = vunpack.c.h.b16 %v1586
    %v1793 = vunpack.c.l.b16 %v1587
    %v1794 = vunpack.c.h.b16 %v1587
    %v1795 = vunpack.c.l.b16 %v1588
    %v1796 = vunpack.c.h.b16 %v1588
    %v1797 = vunpack.c.l.b16 %v1589
    %v1798 = vunpack.c.h.b16 %v1589
    %v1799 = vunpack.c.l.b16 %v1590
    %v1800 = vunpack.c.h.b16 %v1590
    %v1801 = vunpack.c.l.b16 %v1591
    %v1802 = vunpack.c.h.b16 %v1591
    %v1803 = vunpack.c.l.b16 %v1592
    %v1804 = vunpack.c.h.b16 %v1592
    %v1805 = vunpack.c.l.b16 %v1593
    %v1806 = vunpack.c.h.b16 %v1593
    %v1807 = vunpack.c.l.b16 %v1594
    %v1808 = vunpack.c.h.b16 %v1594
    %v1809 = vpack.c.b16 %v1685, %v1681
    %v1810 = vpack.c.b16 %v1686, %v1682
    %v1811 = vpack.c.b16 %v1687, %v1683
    %v1812 = vpack.c.b16 %v1688, %v1684
    %v1813 = vpack.c.b16 %v1693, %v1689
    %v1814 = vpack.c.b16 %v1694, %v1690
    %v1815 = vpack.c.b16 %v1695, %v1691
    %v1816 = vpack.c.b16 %v1696, %v1692
    %v1817 = vpack.c.b16 %v1701, %v1697
    %v1818 = vpack.c.b16 %v1702, %v1698
    %v1819 = vpack.c.b16 %v1703, %v1699
    %v1820 = vpack.c.b16 %v1704, %v1700
    %v1821 = vpack.c.b16 %v1709, %v1705
    %v1822 = vpack.c.b16 %v1710, %v1706
    %v1823 = vpack.c.b16 %v1711, %v1707
    %v1824 = vpack.c.b16 %v1712, %v1708
    %v1825 = vpack.c.b16 %v1717, %v1713
    %v1826 = vpack.c.b16 %v1718, %v1714
    %v1827 = vpack.c.b16 %v1719, %v1715
    %v1828 = vpack.c.b16 %v1720, %v1716
    %v1829 = vpack.c.b16 %v1725, %v1721
    %v1830 = vpack.c.b16 %v1726, %v1722
    %v1831 = vpack.c.b16 %v1727, %v1723
    %v1832 = vpack.c.b16 %v1728, %v1724
    %v1833 = vpack.c.b16 %v1733, %v1729
    %v1834 = vpack.c.b16 %v1734, %v1730
    %v1835 = vpack.c.b16 %v1735, %v1731
    %v1836 = vpack.c.b16 %v1736, %v1732
    %v1837 = vpack.c.b16 %v1741, %v1737
    %v1838 = vpack.c.b16 %v1742, %v1738
    %v1839 = vpack.c.b16 %v1743, %v1739
    %v1840 = vpack.c.b16 %v1744, %v1740
    %v1841 = vpack.c.b16 %v1749, %v1745
    %v1842 = vpack.c.b16 %v1750, %v1746
    %v1843 = vpack.c.b16 %v1751, %v1747
    %v1844 = vpack.c.b16 %v1752, %v1748
    %v1845 = vpack.c.b16 %v1757, %v1753
    %v1846 = vpack.c.b16 %v1758, %v1754
    %v1847 = vpack.c.b16 %v1759, %v1755
    %v1848 = vpack.c.b16 %v1760, %v1756
    %v1849 = vpack.c.b16 %v1765, %v1761
    %v1850 = vpack.c.b16 %v1766, %v1762
    %v1851 = vpack.c.b16 %v1767, %v1763
    %v1852 = vpack.c.b16 %v1768, %v1764
    %v1853 = vpack.c.b16 %v1773, %v1769
    %v1854 = vpack.c.b16 %v1774, %v1770
    %v1855 = vpack.c.b16 %v1775, %v1771
    %v1856 = vpack.c.b16 %v1776, %v1772
    %v1857 = vpack.c.b16 %v1781, %v1777
    %v1858 = vpack.c.b16 %v1782, %v1778
    %v1859 = vpack.c.b16 %v1783, %v1779
    %v1860 = vpack.c.b16 %v1784, %v1780
    %v1861 = vpack.c.b16 %v1789, %v1785
    %v1862 = vpack.c.b16 %v1790, %v1786
    %v1863 = vpack.c.b16 %v1791, %v1787
    %v1864 = vpack.c.b16 %v1792, %v1788
    %v1865 = vpack.c.b16 %v1797, %v1793
    %v1866 = vpack.c.b16 %v1798, %v1794
    %v1867 = vpack.c.b16 %v1799, %v1795
    %v1868 = vpack.c.b16 %v1800, %v1796
    %v1869 = vpack.c.b16 %v1805, %v1801
    %v1870 = vpack.c.b16 %v1806, %v1802
    %v1871 = vpack.c.b16 %v1807, %v1803
    %v1872 = vpack.c.b16 %v1808, %v1804
    %1937 = vmatprep.subr.bf16.mxu0 %v1810
    %1938 = vmatpush1.bf16.msra.mxu0 %v1809
    %1939 = vmatprep.subr.bf16.mxu0 %v1814
    %1940 = vmatpush1.bf16.msra.mxu0 %v1813
    %1941 = vmatprep.subr.bf16.mxu0 %v1818
    %1942 = vmatpush1.bf16.msra.mxu0 %v1817
    %1943 = vmatprep.subr.bf16.mxu0 %v1822
    %1944 = vmatpush1.bf16.msra.mxu0 %v1821
    %1945 = vmatprep.subr.bf16.mxu0 %v1826
    %1946 = vmatpush1.bf16.msra.mxu0 %v1825
    %1947 = vmatprep.subr.bf16.mxu0 %v1830
    %1948 = vmatpush1.bf16.msra.mxu0 %v1829
    %1949 = vmatprep.subr.bf16.mxu0 %v1834
    %1950 = vmatpush1.bf16.msra.mxu0 %v1833
    %1951 = vmatprep.subr.bf16.mxu0 %v1838
    %1952 = vmatpush1.bf16.msra.mxu0 %v1837
    %1953 = vmatprep.subr.bf16.mxu0 %v1842
    %1954 = vmatpush1.bf16.msra.mxu0 %v1841
    %1955 = vmatprep.subr.bf16.mxu0 %v1846
    %1956 = vmatpush1.bf16.msra.mxu0 %v1845
    %1957 = vmatprep.subr.bf16.mxu0 %v1850
    %1958 = vmatpush1.bf16.msra.mxu0 %v1849
    %1959 = vmatprep.subr.bf16.mxu0 %v1854
    %1960 = vmatpush1.bf16.msra.mxu0 %v1853
    %1961 = vmatprep.subr.bf16.mxu0 %v1858
    %1962 = vmatpush1.bf16.msra.mxu0 %v1857
    %1963 = vmatprep.subr.bf16.mxu0 %v1862
    %1964 = vmatpush1.bf16.msra.mxu0 %v1861
    %1965 = vmatprep.subr.bf16.mxu0 %v1866
    %1966 = vmatpush1.bf16.msra.mxu0 %v1865
    %1967 = vmatprep.subr.bf16.mxu0 %v1870
    %1968 = vmatpush1.bf16.msra.mxu0 %v1869
    %1969 = vmatprep.mubr.bf16.mxu0 %v1530
    %1970 = vmatmul.mubr.bf16.gmra.mrb[0].mxu0 %v1529
    %v1971 = vpop.f32.mrb[0].mxu0
    %v1972 = vadd.f32 %v1600, %v1971
    %v1973 = vpop.f32.mrb[0].mxu0
    %v1974 = vadd.f32 %v1604, %v1973
    %v1975 = vpop.f32.mrb[0].mxu0
    %v1976 = vpop.f32.mrb[0].mxu0
    %1977 = vdwg.mxu0
    %1978 = vmatprep.subr.bf16.mxu0 %v1812
    %1979 = vmatpush1.bf16.msra.mxu0 %v1811
    %1980 = vmatprep.subr.bf16.mxu0 %v1816
    %1981 = vmatpush1.bf16.msra.mxu0 %v1815
    %1982 = vmatprep.subr.bf16.mxu0 %v1820
    %1983 = vmatpush1.bf16.msra.mxu0 %v1819
    %1984 = vmatprep.subr.bf16.mxu0 %v1824
    %1985 = vmatpush1.bf16.msra.mxu0 %v1823
    %1986 = vmatprep.subr.bf16.mxu0 %v1828
    %1987 = vmatpush1.bf16.msra.mxu0 %v1827
    %1988 = vmatprep.subr.bf16.mxu0 %v1832
    %1989 = vmatpush1.bf16.msra.mxu0 %v1831
    %1990 = vmatprep.subr.bf16.mxu0 %v1836
    %1991 = vmatpush1.bf16.msra.mxu0 %v1835
    %1992 = vmatprep.subr.bf16.mxu0 %v1840
    %1993 = vmatpush1.bf16.msra.mxu0 %v1839
    %1994 = vmatprep.subr.bf16.mxu0 %v1844
    %1995 = vmatpush1.bf16.msra.mxu0 %v1843
    %1996 = vmatprep.subr.bf16.mxu0 %v1848
    %1997 = vmatpush1.bf16.msra.mxu0 %v1847
    %1998 = vmatprep.subr.bf16.mxu0 %v1852
    %1999 = vmatpush1.bf16.msra.mxu0 %v1851
    %2000 = vmatprep.subr.bf16.mxu0 %v1856
    %2001 = vmatpush1.bf16.msra.mxu0 %v1855
    %2002 = vmatprep.subr.bf16.mxu0 %v1860
    %2003 = vmatpush1.bf16.msra.mxu0 %v1859
    %2004 = vmatprep.subr.bf16.mxu0 %v1864
    %2005 = vmatpush1.bf16.msra.mxu0 %v1863
    %2006 = vmatprep.subr.bf16.mxu0 %v1868
    %2007 = vmatpush1.bf16.msra.mxu0 %v1867
    %2008 = vmatprep.subr.bf16.mxu0 %v1872
    %2009 = vmatpush1.bf16.msra.mxu0 %v1871
    %2010 = vmatprep.mubr.bf16.mxu0 %v1530
    %2011 = vmatmul.mubr.bf16.gmra.mrb[0].mxu0 %v1529
    %v2012 = vpop.f32.mrb[0].mxu0
    %v2013 = vadd.f32 %v1608, %v2012
    %v2014 = vpop.f32.mrb[0].mxu0
    %v2015 = vadd.f32 %v1612, %v2014
    %v2016 = vpop.f32.mrb[0].mxu0
    %v2017 = vpop.f32.mrb[0].mxu0
    %2018 = vdwg.mxu0
    %v2019 = vmax.f32 %v1972, 0.0
    %v2020 = vmax.f32 %v1974, 0.0
    %v2021 = vmax.f32 %v2013, 0.0
    %v2022 = vmax.f32 %v2015, 0.0
    %v2023 = vpack.c.bf16 %v2019, %v2019
    %v2024 = vpack.c.bf16 %v2020, %v2020
    %v2025 = vpack.c.bf16 %v2021, %v2021
    %v2026 = vpack.c.bf16 %v2022, %v2022
    %v2027 = vld [vmem:[%s5] sm:$0xf]
    %v2028 = vld [vmem:[%s5 + $0x4] sm:$0xf]
    %v2029 = vld [vmem:[%s5 + $0x8] sm:$0xf]
    %v2030 = vld [vmem:[%s5 + $0xc] sm:$0xf]
    %v2031 = vld [vmem:[%s5 + $0x10] sm:$0xf]
    %v2032 = vld [vmem:[%s5 + $0x14] sm:$0xf]
    %v2033 = vld [vmem:[%s5 + $0x18] sm:$0xf]
    %v2034 = vld [vmem:[%s5 + $0x1c] sm:$0xf]
    %v2035 = vld [vmem:[%s5 + $0x20] sm:$0xf]
    %v2036 = vld [vmem:[%s5 + $0x24] sm:$0xf]
    %v2037 = vld [vmem:[%s5 + $0x28] sm:$0xf]
    %v2038 = vld [vmem:[%s5 + $0x2c] sm:$0xf]
    %v2039 = vld [vmem:[%s5 + $0x30] sm:$0xf]
    %v2040 = vld [vmem:[%s5 + $0x34] sm:$0xf]
    %v2041 = vld [vmem:[%s5 + $0x38] sm:$0xf]
    %v2042 = vld [vmem:[%s5 + $0x3c] sm:$0xf]
    %v2043 = vld [vmem:[%s5 + $0x40] sm:$0xf]
    %v2044 = vld [vmem:[%s5 + $0x44] sm:$0xf]
    %v2045 = vld [vmem:[%s5 + $0x48] sm:$0xf]
    %v2046 = vld [vmem:[%s5 + $0x4c] sm:$0xf]
    %v2047 = vld [vmem:[%s5 + $0x50] sm:$0xf]
    %v2048 = vld [vmem:[%s5 + $0x54] sm:$0xf]
    %v2049 = vld [vmem:[%s5 + $0x58] sm:$0xf]
    %v2050 = vld [vmem:[%s5 + $0x5c] sm:$0xf]
    %v2051 = vld [vmem:[%s5 + $0x60] sm:$0xf]
    %v2052 = vld [vmem:[%s5 + $0x64] sm:$0xf]
    %v2053 = vld [vmem:[%s5 + $0x68] sm:$0xf]
    %v2054 = vld [vmem:[%s5 + $0x6c] sm:$0xf]
    %v2055 = vld [vmem:[%s5 + $0x70] sm:$0xf]
    %v2056 = vld [vmem:[%s5 + $0x74] sm:$0xf]
    %v2057 = vld [vmem:[%s5 + $0x78] sm:$0xf]
    %v2058 = vld [vmem:[%s5 + $0x7c] sm:$0xf]
    %v2059 = vld [vmem:[%s5 + $0x80] sm:$0xf]
    %v2060 = vld [vmem:[%s5 + $0x84] sm:$0xf]
    %v2061 = vld [vmem:[%s5 + $0x88] sm:$0xf]
    %v2062 = vld [vmem:[%s5 + $0x8c] sm:$0xf]
    %v2063 = vld [vmem:[%s5 + $0x90] sm:$0xf]
    %v2064 = vld [vmem:[%s5 + $0x94] sm:$0xf]
    %v2065 = vld [vmem:[%s5 + $0x98] sm:$0xf]
    %v2066 = vld [vmem:[%s5 + $0x9c] sm:$0xf]
    %v2067 = vld [vmem:[%s5 + $0xa0] sm:$0xf]
    %v2068 = vld [vmem:[%s5 + $0xa4] sm:$0xf]
    %v2069 = vld [vmem:[%s5 + $0xa8] sm:$0xf]
    %v2070 = vld [vmem:[%s5 + $0xac] sm:$0xf]
    %v2071 = vld [vmem:[%s5 + $0xb0] sm:$0xf]
    %v2072 = vld [vmem:[%s5 + $0xb4] sm:$0xf]
    %v2073 = vld [vmem:[%s5 + $0xb8] sm:$0xf]
    %v2074 = vld [vmem:[%s5 + $0xbc] sm:$0xf]
    %v2075 = vld [vmem:[%s5 + $0xc0] sm:$0xf]
    %v2076 = vld [vmem:[%s5 + $0xc4] sm:$0xf]
    %v2077 = vld [vmem:[%s5 + $0xc8] sm:$0xf]
    %v2078 = vld [vmem:[%s5 + $0xcc] sm:$0xf]
    %v2079 = vld [vmem:[%s5 + $0xd0] sm:$0xf]
    %v2080 = vld [vmem:[%s5 + $0xd4] sm:$0xf]
    %v2081 = vld [vmem:[%s5 + $0xd8] sm:$0xf]
    %v2082 = vld [vmem:[%s5 + $0xdc] sm:$0xf]
    %v2083 = vld [vmem:[%s5 + $0xe0] sm:$0xf]
    %v2084 = vld [vmem:[%s5 + $0xe4] sm:$0xf]
    %v2085 = vld [vmem:[%s5 + $0xe8] sm:$0xf]
    %v2086 = vld [vmem:[%s5 + $0xec] sm:$0xf]
    %v2087 = vld [vmem:[%s5 + $0xf0] sm:$0xf]
    %v2088 = vld [vmem:[%s5 + $0xf4] sm:$0xf]
    %v2089 = vld [vmem:[%s5 + $0xf8] sm:$0xf]
    %v2090 = vld [vmem:[%s5 + $0xfc] sm:$0xf]
    %v2091 = vld [vmem:[%s6] sm:$0x1]
    %v2093 = vlaneseq
    %v2094 = vshrl.u32 %v2093, 7
    %v2095 = vsub.s32 0, %v2094
    %v2096 = vrot.slane %v2091, %v2095
    %v2162 = vunpack.c.l.b16 %v2027
    %v2163 = vunpack.c.l.b16 %v2028
    %v2164 = vunpack.c.l.b16 %v2029
    %v2165 = vunpack.c.l.b16 %v2030
    %v2166 = vunpack.c.l.b16 %v2031
    %v2167 = vunpack.c.l.b16 %v2032
    %v2168 = vunpack.c.l.b16 %v2033
    %v2169 = vunpack.c.l.b16 %v2034
    %v2170 = vunpack.c.l.b16 %v2035
    %v2171 = vunpack.c.l.b16 %v2036
    %v2172 = vunpack.c.l.b16 %v2037
    %v2173 = vunpack.c.l.b16 %v2038
    %v2174 = vunpack.c.l.b16 %v2039
    %v2175 = vunpack.c.l.b16 %v2040
    %v2176 = vunpack.c.l.b16 %v2041
    %v2177 = vunpack.c.l.b16 %v2042
    %v2178 = vunpack.c.l.b16 %v2043
    %v2179 = vunpack.c.l.b16 %v2044
    %v2180 = vunpack.c.l.b16 %v2045
    %v2181 = vunpack.c.l.b16 %v2046
    %v2182 = vunpack.c.l.b16 %v2047
    %v2183 = vunpack.c.l.b16 %v2048
    %v2184 = vunpack.c.l.b16 %v2049
    %v2185 = vunpack.c.l.b16 %v2050
    %v2186 = vunpack.c.l.b16 %v2051
    %v2187 = vunpack.c.l.b16 %v2052
    %v2188 = vunpack.c.l.b16 %v2053
    %v2189 = vunpack.c.l.b16 %v2054
    %v2190 = vunpack.c.l.b16 %v2055
    %v2191 = vunpack.c.l.b16 %v2056
    %v2192 = vunpack.c.l.b16 %v2057
    %v2193 = vunpack.c.l.b16 %v2058
    %v2194 = vunpack.c.l.b16 %v2059
    %v2195 = vunpack.c.l.b16 %v2060
    %v2196 = vunpack.c.l.b16 %v2061
    %v2197 = vunpack.c.l.b16 %v2062
    %v2198 = vunpack.c.l.b16 %v2063
    %v2199 = vunpack.c.l.b16 %v2064
    %v2200 = vunpack.c.l.b16 %v2065
    %v2201 = vunpack.c.l.b16 %v2066
    %v2202 = vunpack.c.l.b16 %v2067
    %v2203 = vunpack.c.l.b16 %v2068
    %v2204 = vunpack.c.l.b16 %v2069
    %v2205 = vunpack.c.l.b16 %v2070
    %v2206 = vunpack.c.l.b16 %v2071
    %v2207 = vunpack.c.l.b16 %v2072
    %v2208 = vunpack.c.l.b16 %v2073
    %v2209 = vunpack.c.l.b16 %v2074
    %v2210 = vunpack.c.l.b16 %v2075
    %v2211 = vunpack.c.l.b16 %v2076
    %v2212 = vunpack.c.l.b16 %v2077
    %v2213 = vunpack.c.l.b16 %v2078
    %v2214 = vunpack.c.l.b16 %v2079
    %v2215 = vunpack.c.l.b16 %v2080
    %v2216 = vunpack.c.l.b16 %v2081
    %v2217 = vunpack.c.l.b16 %v2082
    %v2218 = vunpack.c.l.b16 %v2083
    %v2219 = vunpack.c.l.b16 %v2084
    %v2220 = vunpack.c.l.b16 %v2085
    %v2221 = vunpack.c.l.b16 %v2086
    %v2222 = vunpack.c.l.b16 %v2087
    %v2223 = vunpack.c.l.b16 %v2088
    %v2224 = vunpack.c.l.b16 %v2089
    %v2225 = vunpack.c.l.b16 %v2090
    %v2226 = vpack.c.b16 %v2163, %v2162
    %v2227 = vpack.c.b16 %v2165, %v2164
    %v2228 = vpack.c.b16 %v2167, %v2166
    %v2229 = vpack.c.b16 %v2169, %v2168
    %v2230 = vpack.c.b16 %v2171, %v2170
    %v2231 = vpack.c.b16 %v2173, %v2172
    %v2232 = vpack.c.b16 %v2175, %v2174
    %v2233 = vpack.c.b16 %v2177, %v2176
    %v2234 = vpack.c.b16 %v2179, %v2178
    %v2235 = vpack.c.b16 %v2181, %v2180
    %v2236 = vpack.c.b16 %v2183, %v2182
    %v2237 = vpack.c.b16 %v2185, %v2184
    %v2238 = vpack.c.b16 %v2187, %v2186
    %v2239 = vpack.c.b16 %v2189, %v2188
    %v2240 = vpack.c.b16 %v2191, %v2190
    %v2241 = vpack.c.b16 %v2193, %v2192
    %v2242 = vpack.c.b16 %v2195, %v2194
    %v2243 = vpack.c.b16 %v2197, %v2196
    %v2244 = vpack.c.b16 %v2199, %v2198
    %v2245 = vpack.c.b16 %v2201, %v2200
    %v2246 = vpack.c.b16 %v2203, %v2202
    %v2247 = vpack.c.b16 %v2205, %v2204
    %v2248 = vpack.c.b16 %v2207, %v2206
    %v2249 = vpack.c.b16 %v2209, %v2208
    %v2250 = vpack.c.b16 %v2211, %v2210
    %v2251 = vpack.c.b16 %v2213, %v2212
    %v2252 = vpack.c.b16 %v2215, %v2214
    %v2253 = vpack.c.b16 %v2217, %v2216
    %v2254 = vpack.c.b16 %v2219, %v2218
    %v2255 = vpack.c.b16 %v2221, %v2220
    %v2256 = vpack.c.b16 %v2223, %v2222
    %v2257 = vpack.c.b16 %v2225, %v2224
    %2290 = vmatprep.subr.bf16.mxu0 0
    %2291 = vmatpush1.bf16.msra.mxu0 %v2226
    %2292 = vmatprep.subr.bf16.mxu0 0
    %2293 = vmatpush1.bf16.msra.mxu0 %v2227
    %2294 = vmatprep.subr.bf16.mxu0 0
    %2295 = vmatpush1.bf16.msra.mxu0 %v2228
    %2296 = vmatprep.subr.bf16.mxu0 0
    %2297 = vmatpush1.bf16.msra.mxu0 %v2229
    %2298 = vmatprep.subr.bf16.mxu0 0
    %2299 = vmatpush1.bf16.msra.mxu0 %v2230
    %2300 = vmatprep.subr.bf16.mxu0 0
    %2301 = vmatpush1.bf16.msra.mxu0 %v2231
    %2302 = vmatprep.subr.bf16.mxu0 0
    %2303 = vmatpush1.bf16.msra.mxu0 %v2232
    %2304 = vmatprep.subr.bf16.mxu0 0
    %2305 = vmatpush1.bf16.msra.mxu0 %v2233
    %2306 = vmatprep.subr.bf16.mxu0 0
    %2307 = vmatpush1.bf16.msra.mxu0 %v2234
    %2308 = vmatprep.subr.bf16.mxu0 0
    %2309 = vmatpush1.bf16.msra.mxu0 %v2235
    %2310 = vmatprep.subr.bf16.mxu0 0
    %2311 = vmatpush1.bf16.msra.mxu0 %v2236
    %2312 = vmatprep.subr.bf16.mxu0 0
    %2313 = vmatpush1.bf16.msra.mxu0 %v2237
    %2314 = vmatprep.subr.bf16.mxu0 0
    %2315 = vmatpush1.bf16.msra.mxu0 %v2238
    %2316 = vmatprep.subr.bf16.mxu0 0
    %2317 = vmatpush1.bf16.msra.mxu0 %v2239
    %2318 = vmatprep.subr.bf16.mxu0 0
    %2319 = vmatpush1.bf16.msra.mxu0 %v2240
    %2320 = vmatprep.subr.bf16.mxu0 0
    %2321 = vmatpush1.bf16.msra.mxu0 %v2241
    %2322 = vmatprep.mubr.bf16.mxu0 %v2024
    %2323 = vmatmul.mubr.bf16.gmra.mrb[0].mxu0 %v2023
    %v2324 = vpop.f32.mrb[0].mxu0
    %v2325 = vadd.f32 %v2096, %v2324
    %v2326 = vpop.f32.mrb[0].mxu0
    %v2327 = vpop.f32.mrb[0].mxu0
    %v2328 = vpop.f32.mrb[0].mxu0
    %2329 = vdwg.mxu0
    %2330 = vmatprep.subr.bf16.mxu0 0
    %2331 = vmatpush1.bf16.msra.mxu0 %v2242
    %2332 = vmatprep.subr.bf16.mxu0 0
    %2333 = vmatpush1.bf16.msra.mxu0 %v2243
    %2334 = vmatprep.subr.bf16.mxu0 0
    %2335 = vmatpush1.bf16.msra.mxu0 %v2244
    %2336 = vmatprep.subr.bf16.mxu0 0
    %2337 = vmatpush1.bf16.msra.mxu0 %v2245
    %2338 = vmatprep.subr.bf16.mxu0 0
    %2339 = vmatpush1.bf16.msra.mxu0 %v2246
    %2340 = vmatprep.subr.bf16.mxu0 0
    %2341 = vmatpush1.bf16.msra.mxu0 %v2247
    %2342 = vmatprep.subr.bf16.mxu0 0
    %2343 = vmatpush1.bf16.msra.mxu0 %v2248
    %2344 = vmatprep.subr.bf16.mxu0 0
    %2345 = vmatpush1.bf16.msra.mxu0 %v2249
    %2346 = vmatprep.subr.bf16.mxu0 0
    %2347 = vmatpush1.bf16.msra.mxu0 %v2250
    %2348 = vmatprep.subr.bf16.mxu0 0
    %2349 = vmatpush1.bf16.msra.mxu0 %v2251
    %2350 = vmatprep.subr.bf16.mxu0 0
    %2351 = vmatpush1.bf16.msra.mxu0 %v2252
    %2352 = vmatprep.subr.bf16.mxu0 0
    %2353 = vmatpush1.bf16.msra.mxu0 %v2253
    %2354 = vmatprep.subr.bf16.mxu0 0
    %2355 = vmatpush1.bf16.msra.mxu0 %v2254
    %2356 = vmatprep.subr.bf16.mxu0 0
    %2357 = vmatpush1.bf16.msra.mxu0 %v2255
    %2358 = vmatprep.subr.bf16.mxu0 0
    %2359 = vmatpush1.bf16.msra.mxu0 %v2256
    %2360 = vmatprep.subr.bf16.mxu0 0
    %2361 = vmatpush1.bf16.msra.mxu0 %v2257
    %2362 = vmatprep.mubr.bf16.mxu0 %v2026
    %2363 = vmatmul.mubr.bf16.gmra.mrb[0].mxu0 %v2025
    %v2364 = vpop.f32.mrb[0].mxu0
    %v2365 = vadd.f32 %v2325, %v2364
    %v2366 = vpop.f32.mrb[0].mxu0
    %v2367 = vpop.f32.mrb[0].mxu0
    %v2368 = vpop.f32.mrb[0].mxu0
    %2369 = vdwg.mxu0
    %v2370 = vmax.f32 %v2365, 0.0
    %vm2371 = vcmask 74752
    %v2372 = vsel %vm2371, %v2370, -inf
    %2373 = vmax.xlane.f32.xlu0 %v2372
    %v2374 = vpop.xlane.xlu0 %2373
    %v2375 = vsub.f32 %v2370, %v2374
    %v2376 = vmul.f32 %v2375, 1.442695
    %v2377 = vpow.pop %v2376
    %v2378 = vsel %vm2371, %v2377, 0.0
    %2379 = vadd.xlane.f32.xlu0 %v2378
    %v2380 = vpop.xlane.xlu0 %2379
    %v2381 = vlog2.pop %v2380
    %v2382 = vmul.f32 %v2381, 0.6931472
    %v2383 = vadd.f32 %v2382, %v2374
    %v2384 = vsub.f32 %v2370, %v2383
    %2385 = vst.msk [vmem:[#allocation2] sm:$0x3] %vm2371, %v2384
    // Predicated region
    $region30: #{forward.3} parent=1 // pred_check
      _
    $region31: #{forward.3} parent=1 // pred_check_branch
      %2387 = sbr.rel (0) target = $region33
    $region32: #{forward.3} parent=1 // pred_region
      %s2389 = ssub.s32 32, 32
      %2390 = vsyncadd [#allocation3], %s2389
      %s2392 = sshll.u32 [#allocation2], 4
      %s2393 = int_to_ptr.vmem [resolvable:$true] %s2392
      %2395 = dma.vmem_to_hbm [thread:$0]  %s2393, 32, %s7, [#allocation3]
    $region33: #{forward.3} parent=1 // pred_fallthru
      _
    // Predicated region
    $region34: #{forward.3} parent=1 // pred_check
      _
    $region35: #{forward.3} parent=1 // pred_check_branch
      %2397 = sbr.rel (0) target = $region37
    $region36: #{forward.3} parent=1 // pred_region
      %2398 = dma.done [#allocation3], 32
    $region37: #{forward.3} parent=1 // pred_fallthru
      _
    %2399 = vsyncpa [#allocation3], 1

// kernel: forward.2
$region0: #{forward.2}
  #allocation0 [shape = 'u32[]', space=smem, size = 0x4, offset = 0x4, fixed_abs, tag = 'smem constant byte address 0x4 - core index']
  #allocation1 [shape = 'u32[144,128]{1,0:T(1,128)}', space=vmem, size = 0x12000, scoped, tag = 'internal scratch']
  %s0 = inlined_call_operand.vmem [shape: bf16[2,1056,3], index: 0, kind: input, shape index: {}]
  %s1 = inlined_call_operand.vmem [shape: bf16[27,16], index: 1, kind: input, shape index: {}]
  %s2 = inlined_call_operand.vmem [shape: f32[1,16], index: 2, kind: input, shape index: {}]
  %s3 = inlined_call_operand.vmem [shape: f32[1,16], index: 3, kind: input, shape index: {}]
  %s4 = inlined_call_operand.vmem [shape: f32[1,16], index: 4, kind: input, shape index: {}]
  %s5 = inlined_call_operand.vmem [shape: bf16[240,927], index: 5, kind: input, shape index: {}]
  %s6 = inlined_call_operand.vmem [shape: bf16[144,32], index: 6, kind: input, shape index: {}]
  %s7 = inlined_call_operand.vmem [shape: f32[1,32], index: 7, kind: input, shape index: {}]
  %s8 = inlined_call_operand.vmem [shape: f32[1,32], index: 8, kind: input, shape index: {}]
  %s9 = inlined_call_operand.vmem [shape: f32[1,32], index: 9, kind: input, shape index: {}]
  %s10 = inlined_call_operand.vmem [shape: bf16[48,175], index: 10, kind: input, shape index: {}]
  %s11 = inlined_call_operand.vmem [shape: bf16[2,48,32], index: 11, kind: output, shape index: {}]
  %s12 = sld [smem:[#allocation0]]
  $region77: #{forward.2} parent=0
    _
  %s14 = ssub.s32 1, %s12
  %s15 = scalar_select 0, %s14, %s12
  loop: start=0, step=1, limit=4
  $region2: #{forward.2} parent=0 // loop_pre_header
    _
  $region3: #{forward.2} parent=0 // loop_header
    %s17 = sphi 0, %s21
    %p18 = scmp.ge.s32.totalorder %s17, 4
    %s27 = sphi 0, %s29
    %s30 = sphi 0, %s27
    %s31 = sphi 0, %s30
    %s47 = sphi 0, %s31
    %s51 = sphi 0, %s51
    %s53 = sphi 0, %s51
    %s54 = sphi 0, %s53
    %s68 = sphi 0, %s54
    %s72 = sphi 0, %s72
    %s74 = sphi 0, %s72
    %s75 = sphi 0, %s74
    %s89 = sphi 0, %s75
    %s93 = sphi 0, %s93
    %s95 = sphi 0, %s93
    %s96 = sphi 0, %s95
    %s110 = sphi 0, %s96
    %s114 = sphi 0, %s114
    %s116 = sphi 0, %s114
    %s117 = sphi 0, %s116
    %s131 = sphi 0, %s117
    %s135 = sphi 0, %s135
    %s137 = sphi 0, %s135
    %s138 = sphi 0, %s137
    %s152 = sphi 0, %s138
    %s156 = sphi 0, %s156
    %s158 = sphi 0, %s156
    %s159 = sphi 0, %s158
    %s173 = sphi 0, %s159
    %s177 = sphi 0, %s177
    %s179 = sphi 0, %s177
    %s180 = sphi 0, %s179
    %s194 = sphi 0, %s180
    %s198 = sphi 0, %s198
    %s200 = sphi 0, %s198
    %s201 = sphi 0, %s200
    %s215 = sphi 0, %s201
    %s219 = sphi 0, %s219
    %s221 = sphi 0, %s219
    %s222 = sphi 0, %s221
    %s236 = sphi 0, %s222
    %s240 = sphi 0, %s240
    %s242 = sphi 0, %s240
    %s243 = sphi 0, %s242
    %s257 = sphi 0, %s243
    %s263 = sphi 0, %s265
    %s266 = sphi 0, %s263
    %s267 = sphi 0, %s266
    %s283 = sphi 0, %s267
  $region4: #{forward.2} parent=0 // loop_header_branch
    %20 = sbr.rel (%p18) target = $region8
  $region5: #{forward.2} parent=0 // loop_body
    %s22 = ssub.s32 %s17, 1
    %s23 = ssub.s32 %s17, 2
    %s24 = sadd.s32 %s17, 1
    %s25 = ssub.s32 %s17, %s24
    %p26 = scmp.eq.s32.totalorder %s25, 0
    %s28 = sadd.s32 %s27, 1
    %s29 = scalar_select %p26, %s27, %s28
    %p32 = pneg %p26
    %p33 = scmp.eq.s32.totalorder %s17, 1
    %p34 = por %p32, %p33
    %p35 = scmp.ne.s32.totalorder %s27, %s30
    %p36 = scmp.eq.s32.totalorder %s17, 0
    %p37 = por %p35, %p36
    %p38 = scmp.ne.s32.totalorder %s27, %s30
    %p39 = scmp.eq.s32.totalorder %s22, 1
    %p40 = por %p38, %p39
    %p41 = scmp.ne.s32.totalorder %s30, %s31
    %p42 = scmp.eq.s32.totalorder %s22, 0
    %p43 = por %p41, %p42
    %p44 = scmp.ne.s32.totalorder %s30, %s31
    %p45 = scmp.eq.s32.totalorder %s23, 1
    %p46 = por %p44, %p45
    %p48 = scmp.ne.s32.totalorder %s31, %s47
    %p49 = scmp.eq.s32.totalorder %s23, 0
    %p50 = por %p48, %p49
    %s52 = sadd.s32 %s51, 1
    %p55 = scmp.eq.s32.totalorder %s17, 1
    %p56 = scmp.ne.s32.totalorder %s51, %s53
    %p57 = scmp.eq.s32.totalorder %s17, 0
    %p58 = por %p56, %p57
    %p59 = scmp.ne.s32.totalorder %s51, %s53
    %p60 = scmp.eq.s32.totalorder %s22, 1
    %p61 = por %p59, %p60
    %p62 = scmp.ne.s32.totalorder %s53, %s54
    %p63 = scmp.eq.s32.totalorder %s22, 0
    %p64 = por %p62, %p63
    %p65 = scmp.ne.s32.totalorder %s53, %s54
    %p66 = scmp.eq.s32.totalorder %s23, 1
    %p67 = por %p65, %p66
    %p69 = scmp.ne.s32.totalorder %s54, %s68
    %p70 = scmp.eq.s32.totalorder %s23, 0
    %p71 = por %p69, %p70
    %s73 = sadd.s32 %s72, 1
    %p76 = scmp.eq.s32.totalorder %s17, 1
    %p77 = scmp.ne.s32.totalorder %s72, %s74
    %p78 = scmp.eq.s32.totalorder %s17, 0
    %p79 = por %p77, %p78
    %p80 = scmp.ne.s32.totalorder %s72, %s74
    %p81 = scmp.eq.s32.totalorder %s22, 1
    %p82 = por %p80, %p81
    %p83 = scmp.ne.s32.totalorder %s74, %s75
    %p84 = scmp.eq.s32.totalorder %s22, 0
    %p85 = por %p83, %p84
    %p86 = scmp.ne.s32.totalorder %s74, %s75
    %p87 = scmp.eq.s32.totalorder %s23, 1
    %p88 = por %p86, %p87
    %p90 = scmp.ne.s32.totalorder %s75, %s89
    %p91 = scmp.eq.s32.totalorder %s23, 0
    %p92 = por %p90, %p91
    %s94 = sadd.s32 %s93, 1
    %p97 = scmp.eq.s32.totalorder %s17, 1
    %p98 = scmp.ne.s32.totalorder %s93, %s95
    %p99 = scmp.eq.s32.totalorder %s17, 0
    %p100 = por %p98, %p99
    %p101 = scmp.ne.s32.totalorder %s93, %s95
    %p102 = scmp.eq.s32.totalorder %s22, 1
    %p103 = por %p101, %p102
    %p104 = scmp.ne.s32.totalorder %s95, %s96
    %p105 = scmp.eq.s32.totalorder %s22, 0
    %p106 = por %p104, %p105
    %p107 = scmp.ne.s32.totalorder %s95, %s96
    %p108 = scmp.eq.s32.totalorder %s23, 1
    %p109 = por %p107, %p108
    %p111 = scmp.ne.s32.totalorder %s96, %s110
    %p112 = scmp.eq.s32.totalorder %s23, 0
    %p113 = por %p111, %p112
    %s115 = sadd.s32 %s114, 1
    %p118 = scmp.eq.s32.totalorder %s17, 1
    %p119 = scmp.ne.s32.totalorder %s114, %s116
    %p120 = scmp.eq.s32.totalorder %s17, 0
    %p121 = por %p119, %p120
    %p122 = scmp.ne.s32.totalorder %s114, %s116
    %p123 = scmp.eq.s32.totalorder %s22, 1
    %p124 = por %p122, %p123
    %p125 = scmp.ne.s32.totalorder %s116, %s117
    %p126 = scmp.eq.s32.totalorder %s22, 0
    %p127 = por %p125, %p126
    %p128 = scmp.ne.s32.totalorder %s116, %s117
    %p129 = scmp.eq.s32.totalorder %s23, 1
    %p130 = por %p128, %p129
    %p132 = scmp.ne.s32.totalorder %s117, %s131
    %p133 = scmp.eq.s32.totalorder %s23, 0
    %p134 = por %p132, %p133
    %s136 = sadd.s32 %s135, 1
    %p139 = scmp.eq.s32.totalorder %s17, 1
    %p140 = scmp.ne.s32.totalorder %s135, %s137
    %p141 = scmp.eq.s32.totalorder %s17, 0
    %p142 = por %p140, %p141
    %p143 = scmp.ne.s32.totalorder %s135, %s137
    %p144 = scmp.eq.s32.totalorder %s22, 1
    %p145 = por %p143, %p144
    %p146 = scmp.ne.s32.totalorder %s137, %s138
    %p147 = scmp.eq.s32.totalorder %s22, 0
    %p148 = por %p146, %p147
    %p149 = scmp.ne.s32.totalorder %s137, %s138
    %p150 = scmp.eq.s32.totalorder %s23, 1
    %p151 = por %p149, %p150
    %p153 = scmp.ne.s32.totalorder %s138, %s152
    %p154 = scmp.eq.s32.totalorder %s23, 0
    %p155 = por %p153, %p154
    %s157 = sadd.s32 %s156, 1
    %p160 = scmp.eq.s32.totalorder %s17, 1
    %p161 = scmp.ne.s32.totalorder %s156, %s158
    %p162 = scmp.eq.s32.totalorder %s17, 0
    %p163 = por %p161, %p162
    %p164 = scmp.ne.s32.totalorder %s156, %s158
    %p165 = scmp.eq.s32.totalorder %s22, 1
    %p166 = por %p164, %p165
    %p167 = scmp.ne.s32.totalorder %s158, %s159
    %p168 = scmp.eq.s32.totalorder %s22, 0
    %p169 = por %p167, %p168
    %p170 = scmp.ne.s32.totalorder %s158, %s159
    %p171 = scmp.eq.s32.totalorder %s23, 1
    %p172 = por %p170, %p171
    %p174 = scmp.ne.s32.totalorder %s159, %s173
    %p175 = scmp.eq.s32.totalorder %s23, 0
    %p176 = por %p174, %p175
    %s178 = sadd.s32 %s177, 1
    %p181 = scmp.eq.s32.totalorder %s17, 1
    %p182 = scmp.ne.s32.totalorder %s177, %s179
    %p183 = scmp.eq.s32.totalorder %s17, 0
    %p184 = por %p182, %p183
    %p185 = scmp.ne.s32.totalorder %s177, %s179
    %p186 = scmp.eq.s32.totalorder %s22, 1
    %p187 = por %p185, %p186
    %p188 = scmp.ne.s32.totalorder %s179, %s180
    %p189 = scmp.eq.s32.totalorder %s22, 0
    %p190 = por %p188, %p189
    %p191 = scmp.ne.s32.totalorder %s179, %s180
    %p192 = scmp.eq.s32.totalorder %s23, 1
    %p193 = por %p191, %p192
    %p195 = scmp.ne.s32.totalorder %s180, %s194
    %p196 = scmp.eq.s32.totalorder %s23, 0
    %p197 = por %p195, %p196
    %s199 = sadd.s32 %s198, 1
    %p202 = scmp.eq.s32.totalorder %s17, 1
    %p203 = scmp.ne.s32.totalorder %s198, %s200
    %p204 = scmp.eq.s32.totalorder %s17, 0
    %p205 = por %p203, %p204
    %p206 = scmp.ne.s32.totalorder %s198, %s200
    %p207 = scmp.eq.s32.totalorder %s22, 1
    %p208 = por %p206, %p207
    %p209 = scmp.ne.s32.totalorder %s200, %s201
    %p210 = scmp.eq.s32.totalorder %s22, 0
    %p211 = por %p209, %p210
    %p212 = scmp.ne.s32.totalorder %s200, %s201
    %p213 = scmp.eq.s32.totalorder %s23, 1
    %p214 = por %p212, %p213
    %p216 = scmp.ne.s32.totalorder %s201, %s215
    %p217 = scmp.eq.s32.totalorder %s23, 0
    %p218 = por %p216, %p217
    %s220 = sadd.s32 %s219, 1
    %p223 = scmp.eq.s32.totalorder %s17, 1
    %p224 = scmp.ne.s32.totalorder %s219, %s221
    %p225 = scmp.eq.s32.totalorder %s17, 0
    %p226 = por %p224, %p225
    %p227 = scmp.ne.s32.totalorder %s219, %s221
    %p228 = scmp.eq.s32.totalorder %s22, 1
    %p229 = por %p227, %p228
    %p230 = scmp.ne.s32.totalorder %s221, %s222
    %p231 = scmp.eq.s32.totalorder %s22, 0
    %p232 = por %p230, %p231
    %p233 = scmp.ne.s32.totalorder %s221, %s222
    %p234 = scmp.eq.s32.totalorder %s23, 1
    %p235 = por %p233, %p234
    %p237 = scmp.ne.s32.totalorder %s222, %s236
    %p238 = scmp.eq.s32.totalorder %s23, 0
    %p239 = por %p237, %p238
    %s241 = sadd.s32 %s240, 1
    %p244 = scmp.eq.s32.totalorder %s17, 1
    %p245 = scmp.ne.s32.totalorder %s240, %s242
    %p246 = scmp.eq.s32.totalorder %s17, 0
    %p247 = por %p245, %p246
    %p248 = scmp.ne.s32.totalorder %s240, %s242
    %p249 = scmp.eq.s32.totalorder %s22, 1
    %p250 = por %p248, %p249
    %p251 = scmp.ne.s32.totalorder %s242, %s243
    %p252 = scmp.eq.s32.totalorder %s22, 0
    %p253 = por %p251, %p252
    %p254 = scmp.ne.s32.totalorder %s242, %s243
    %p255 = scmp.eq.s32.totalorder %s23, 1
    %p256 = por %p254, %p255
    %p258 = scmp.ne.s32.totalorder %s243, %s257
    %p259 = scmp.eq.s32.totalorder %s23, 0
    %p260 = por %p258, %p259
    %s261 = ssub.s32 %s17, %s24
    %p262 = scmp.eq.s32.totalorder %s261, 0
    %s264 = sadd.s32 %s263, 1
    %s265 = scalar_select %p262, %s263, %s264
    %p268 = pneg %p262
    %p269 = scmp.eq.s32.totalorder %s17, 1
    %p270 = por %p268, %p269
    %p271 = scmp.ne.s32.totalorder %s263, %s266
    %p272 = scmp.eq.s32.totalorder %s17, 0
    %p273 = por %p271, %p272
    %p274 = scmp.ne.s32.totalorder %s263, %s266
    %p275 = scmp.eq.s32.totalorder %s22, 1
    %p276 = por %p274, %p275
    %p277 = scmp.ne.s32.totalorder %s266, %s267
    %p278 = scmp.eq.s32.totalorder %s22, 0
    %p279 = por %p277, %p278
    %p280 = scmp.ne.s32.totalorder %s266, %s267
    %p281 = scmp.eq.s32.totalorder %s23, 1
    %p282 = por %p280, %p281
    %p284 = scmp.ne.s32.totalorder %s267, %s283
    %p285 = scmp.eq.s32.totalorder %s23, 0
    %p286 = por %p284, %p285
    %p287 = scmp.le.s32.totalorder 1, %s17
    %p288 = scmp.lt.s32.totalorder %s17, 3
    %p289 = pnand %p287, %p288
    %p290 = pneg %p289
    // Predicated region
    $region9: #{forward.2} parent=5 // pred_check
      _
    $region10: #{forward.2} parent=5 // pred_check_branch
      %292 = sbr.rel (%p289) target = $region12
    $region11: #{forward.2} parent=5 // pred_region
      %s293 = ssub.s32 %s17, 1
      // Predicated region
      $region13: #{forward.2} parent=11 // pred_check
        %p294 = pneg %p64
      $region14: #{forward.2} parent=11 // pred_check_branch
        %296 = sbr.rel (%p294) target = $region16
      $region15: #{forward.2} parent=11 // pred_region
        _
      $region16: #{forward.2} parent=11 // pred_fallthru
        _
      // Predicated region
      $region17: #{forward.2} parent=11 // pred_check
        %p297 = pneg %p85
      $region18: #{forward.2} parent=11 // pred_check_branch
        %299 = sbr.rel (%p297) target = $region20
      $region19: #{forward.2} parent=11 // pred_region
        _
      $region20: #{forward.2} parent=11 // pred_fallthru
        _
      // Predicated region
      $region21: #{forward.2} parent=11 // pred_check
        %p300 = pneg %p106
      $region22: #{forward.2} parent=11 // pred_check_branch
        %302 = sbr.rel (%p300) target = $region24
      $region23: #{forward.2} parent=11 // pred_region
        _
      $region24: #{forward.2} parent=11 // pred_fallthru
        _
      // Predicated region
      $region25: #{forward.2} parent=11 // pred_check
        %p303 = pneg %p127
      $region26: #{forward.2} parent=11 // pred_check_branch
        %305 = sbr.rel (%p303) target = $region28
      $region27: #{forward.2} parent=11 // pred_region
        _
      $region28: #{forward.2} parent=11 // pred_fallthru
        _
      // Predicated region
      $region29: #{forward.2} parent=11 // pred_check
        %p306 = pneg %p148
      $region30: #{forward.2} parent=11 // pred_check_branch
        %308 = sbr.rel (%p306) target = $region32
      $region31: #{forward.2} parent=11 // pred_region
        _
      $region32: #{forward.2} parent=11 // pred_fallthru
        _
      // Predicated region
      $region33: #{forward.2} parent=11 // pred_check
        %p309 = pneg %p169
      $region34: #{forward.2} parent=11 // pred_check_branch
        %311 = sbr.rel (%p309) target = $region36
      $region35: #{forward.2} parent=11 // pred_region
        _
      $region36: #{forward.2} parent=11 // pred_fallthru
        _
      // Predicated region
      $region37: #{forward.2} parent=11 // pred_check
        %p312 = pneg %p190
      $region38: #{forward.2} parent=11 // pred_check_branch
        %314 = sbr.rel (%p312) target = $region40
      $region39: #{forward.2} parent=11 // pred_region
        _
      $region40: #{forward.2} parent=11 // pred_fallthru
        _
      // Predicated region
      $region41: #{forward.2} parent=11 // pred_check
        %p315 = pneg %p211
      $region42: #{forward.2} parent=11 // pred_check_branch
        %317 = sbr.rel (%p315) target = $region44
      $region43: #{forward.2} parent=11 // pred_region
        _
      $region44: #{forward.2} parent=11 // pred_fallthru
        _
      // Predicated region
      $region45: #{forward.2} parent=11 // pred_check
        %p318 = pneg %p232
      $region46: #{forward.2} parent=11 // pred_check_branch
        %320 = sbr.rel (%p318) target = $region48
      $region47: #{forward.2} parent=11 // pred_region
        _
      $region48: #{forward.2} parent=11 // pred_fallthru
        _
      // Predicated region
      $region49: #{forward.2} parent=11 // pred_check
        %p321 = pneg %p253
      $region50: #{forward.2} parent=11 // pred_check_branch
        %323 = sbr.rel (%p321) target = $region52
      $region51: #{forward.2} parent=11 // pred_region
        _
      $region52: #{forward.2} parent=11 // pred_fallthru
        _
    $region12: #{forward.2} parent=5 // pred_fallthru
      _
    %p324 = scmp.lt.s32.totalorder %s17, 2
    // Predicated region
    $region53: #{forward.2} parent=5 // pred_check
      %p325 = pneg %p324
    $region54: #{forward.2} parent=5 // pred_check_branch
      %327 = sbr.rel (%p325) target = $region56
    $region55: #{forward.2} parent=5 // pred_region
      // Predicated region
      $region57: #{forward.2} parent=55 // pred_check
        %p328 = pneg %p37
      $region58: #{forward.2} parent=55 // pred_check_branch
        %330 = sbr.rel (%p328) target = $region60
      $region59: #{forward.2} parent=55 // pred_region
        %p331 = scmp.lt.s32.totalorder %s17, 1
        %s332 = scalar_select %p331, %s17, 1
        %s333 = smul.addr %s332, 132
        %s334 = smul.addr %s333, 4
        %s335 = scalar_lea.vmem %s0, %s334
      $region60: #{forward.2} parent=55 // pred_fallthru
        _
    $region56: #{forward.2} parent=5 // pred_fallthru
      _
    %p336 = scmp.le.s32.totalorder 1, %s17
    %p337 = scmp.lt.s32.totalorder %s17, 3
    %p338 = pnand %p336, %p337
    %p339 = pneg %p338
    // Predicated region
    $region61: #{forward.2} parent=5 // pred_check
      _
    $region62: #{forward.2} parent=5 // pred_check_branch
      %341 = sbr.rel (%p338) target = $region64
    $region63: #{forward.2} parent=5 // pred_region
      %s342 = ssub.s32 %s17, 1
      %p343 = scmp.lt.s32.totalorder %s22, 1
      %s344 = scalar_select %p343, %s22, 1
      %s345 = smul.addr %s344, 132
      %s346 = smul.addr %s345, 4
      %s347 = scalar_lea.vmem %s0, %s346
      %p348 = pneg %p43
      %p349 = pneg %p40
      %p350 = pneg %p64
      %p351 = pneg %p61
      %p352 = pneg %p85
      %p353 = pneg %p82
      %p354 = pneg %p106
      %p355 = pneg %p103
      %p356 = pneg %p127
      %p357 = pneg %p124
      %p358 = pneg %p148
      %p359 = pneg %p145
      %p360 = pneg %p169
      %p361 = pneg %p166
      %p362 = pneg %p190
      %p363 = pneg %p187
      %p364 = pneg %p211
      %p365 = pneg %p208
      %p366 = pneg %p232
      %p367 = pneg %p229
      %p368 = pneg %p253
      %p369 = pneg %p250
      %p370 = pneg %p279
      %p371 = pneg %p276
      %p372 = scmp.lt.s32.totalorder %s22, 1
      %s373 = scalar_select %p372, %s22, 1
      %s374 = smul.addr %s373, 6
      %s375 = smul.addr %s374, 4
      %s376 = scalar_lea.vmem %s11, %s375
      %p377 = scmp.lt.s32.totalorder %s22, 1
      %s378 = scalar_select %p377, %s22, 1
      %s379 = smul.addr %s378, 132
      %s380 = smul.addr %s379, 4
      %s381 = scalar_lea.vmem %s0, %s380
      %p382 = scmp.lt.s32.totalorder %s22, 1
      %s383 = scalar_select %p382, %s22, 1
      %s384 = smul.addr %s383, 6
      %s385 = smul.addr %s384, 4
      %s386 = scalar_lea.vmem %s11, %s385
      %v388 = vld [vmem:[%s381] sm:$0xf]
      %v389 = vld [vmem:[%s381 + $0x4] sm:$0xf]
      %v390 = vld [vmem:[%s381 + $0x8] sm:$0xf]
      %v391 = vld [vmem:[%s381 + $0xc] sm:$0xf]
      %v392 = vld [vmem:[%s381 + $0x10] sm:$0xf]
      %v393 = vld [vmem:[%s381 + $0x14] sm:$0xf]
      %v394 = vld [vmem:[%s381 + $0x18] sm:$0xf]
      %v395 = vld [vmem:[%s381 + $0x1c] sm:$0xf]
      %v396 = vld [vmem:[%s381 + $0x20] sm:$0xf]
      %v397 = vld [vmem:[%s381 + $0x24] sm:$0xf]
      %v398 = vld [vmem:[%s381 + $0x28] sm:$0xf]
      %v399 = vld [vmem:[%s381 + $0x2c] sm:$0xf]
      %v400 = vld [vmem:[%s381 + $0x30] sm:$0xf]
      %v401 = vld [vmem:[%s381 + $0x34] sm:$0xf]
      %v402 = vld [vmem:[%s381 + $0x38] sm:$0xf]
      %v403 = vld [vmem:[%s381 + $0x3c] sm:$0xf]
      %v404 = vld [vmem:[%s381 + $0x40] sm:$0xf]
      %v405 = vld [vmem:[%s381 + $0x44] sm:$0xf]
      %v406 = vld [vmem:[%s381 + $0x48] sm:$0xf]
      %v407 = vld [vmem:[%s381 + $0x4c] sm:$0xf]
      %v408 = vld [vmem:[%s381 + $0x50] sm:$0xf]
      %v409 = vld [vmem:[%s381 + $0x54] sm:$0xf]
      %v410 = vld [vmem:[%s381 + $0x58] sm:$0xf]
      %v411 = vld [vmem:[%s381 + $0x5c] sm:$0xf]
      %v412 = vld [vmem:[%s381 + $0x60] sm:$0xf]
      %v413 = vld [vmem:[%s381 + $0x64] sm:$0xf]
      %v414 = vld [vmem:[%s381 + $0x68] sm:$0xf]
      %v415 = vld [vmem:[%s381 + $0x6c] sm:$0xf]
      %v416 = vld [vmem:[%s381 + $0x70] sm:$0xf]
      %v417 = vld [vmem:[%s381 + $0x74] sm:$0xf]
      %v418 = vld [vmem:[%s381 + $0x78] sm:$0xf]
      %v419 = vld [vmem:[%s381 + $0x7c] sm:$0xf]
      %v420 = vld [vmem:[%s381 + $0x80] sm:$0xf]
      %v421 = vld [vmem:[%s381 + $0x84] sm:$0xf]
      %v422 = vld [vmem:[%s381 + $0x88] sm:$0xf]
      %v423 = vld [vmem:[%s381 + $0x8c] sm:$0xf]
      %v424 = vld [vmem:[%s381 + $0x90] sm:$0xf]
      %v425 = vld [vmem:[%s381 + $0x94] sm:$0xf]
      %v426 = vld [vmem:[%s381 + $0x98] sm:$0xf]
      %v427 = vld [vmem:[%s381 + $0x9c] sm:$0xf]
      %v428 = vld [vmem:[%s381 + $0xa0] sm:$0xf]
      %v429 = vld [vmem:[%s381 + $0xa4] sm:$0xf]
      %v430 = vld [vmem:[%s381 + $0xa8] sm:$0xf]
      %v431 = vld [vmem:[%s381 + $0xac] sm:$0xf]
      %v432 = vld [vmem:[%s381 + $0xb0] sm:$0xf]
      %v433 = vld [vmem:[%s381 + $0xb4] sm:$0xf]
      %v434 = vld [vmem:[%s381 + $0xb8] sm:$0xf]
      %v435 = vld [vmem:[%s381 + $0xbc] sm:$0xf]
      %v436 = vld [vmem:[%s381 + $0xc0] sm:$0xf]
      %v437 = vld [vmem:[%s381 + $0xc4] sm:$0xf]
      %v438 = vld [vmem:[%s381 + $0xc8] sm:$0xf]
      %v439 = vld [vmem:[%s381 + $0xcc] sm:$0xf]
      %v440 = vld [vmem:[%s381 + $0xd0] sm:$0xf]
      %v441 = vld [vmem:[%s381 + $0xd4] sm:$0xf]
      %v442 = vld [vmem:[%s381 + $0xd8] sm:$0xf]
      %v443 = vld [vmem:[%s381 + $0xdc] sm:$0xf]
      %v444 = vld [vmem:[%s381 + $0xe0] sm:$0xf]
      %v445 = vld [vmem:[%s381 + $0xe4] sm:$0xf]
      %v446 = vld [vmem:[%s381 + $0xe8] sm:$0xf]
      %v447 = vld [vmem:[%s381 + $0xec] sm:$0xf]
      %v448 = vld [vmem:[%s381 + $0xf0] sm:$0xf]
      %v449 = vld [vmem:[%s381 + $0xf4] sm:$0xf]
      %v450 = vld [vmem:[%s381 + $0xf8] sm:$0xf]
      %v451 = vld [vmem:[%s381 + $0xfc] sm:$0xf]
      %v452 = vld [vmem:[%s381 + $0x100] sm:$0xf]
      %v453 = vld [vmem:[%s381 + $0x104] sm:$0xf]
      %v454 = vld [vmem:[%s381 + $0x108] sm:$0xf]
      %v455 = vld [vmem:[%s381 + $0x10c] sm:$0xf]
      %v456 = vld [vmem:[%s381 + $0x110] sm:$0xf]
      %v457 = vld [vmem:[%s381 + $0x114] sm:$0xf]
      %v458 = vld [vmem:[%s381 + $0x118] sm:$0xf]
      %v459 = vld [vmem:[%s381 + $0x11c] sm:$0xf]
      %v460 = vld [vmem:[%s381 + $0x120] sm:$0xf]
      %v461 = vld [vmem:[%s381 + $0x124] sm:$0xf]
      %v462 = vld [vmem:[%s381 + $0x128] sm:$0xf]
      %v463 = vld [vmem:[%s381 + $0x12c] sm:$0xf]
      %v464 = vld [vmem:[%s381 + $0x130] sm:$0xf]
      %v465 = vld [vmem:[%s381 + $0x134] sm:$0xf]
      %v466 = vld [vmem:[%s381 + $0x138] sm:$0xf]
      %v467 = vld [vmem:[%s381 + $0x13c] sm:$0xf]
      %v468 = vld [vmem:[%s381 + $0x140] sm:$0xf]
      %v469 = vld [vmem:[%s381 + $0x144] sm:$0xf]
      %v470 = vld [vmem:[%s381 + $0x148] sm:$0xf]
      %v471 = vld [vmem:[%s381 + $0x14c] sm:$0xf]
      %v472 = vld [vmem:[%s381 + $0x150] sm:$0xf]
      %v473 = vld [vmem:[%s381 + $0x154] sm:$0xf]
      %v474 = vld [vmem:[%s381 + $0x158] sm:$0xf]
      %v475 = vld [vmem:[%s381 + $0x15c] sm:$0xf]
      %v476 = vld [vmem:[%s381 + $0x160] sm:$0xf]
      %v477 = vld [vmem:[%s381 + $0x164] sm:$0xf]
      %v478 = vld [vmem:[%s381 + $0x168] sm:$0xf]
      %v479 = vld [vmem:[%s381 + $0x16c] sm:$0xf]
      %v480 = vld [vmem:[%s381 + $0x170] sm:$0xf]
      %v481 = vld [vmem:[%s381 + $0x174] sm:$0xf]
      %v482 = vld [vmem:[%s381 + $0x178] sm:$0xf]
      %v483 = vld [vmem:[%s381 + $0x17c] sm:$0xf]
      %v484 = vld [vmem:[%s381 + $0x180] sm:$0xf]
      %v485 = vld [vmem:[%s381 + $0x184] sm:$0xf]
      %v486 = vld [vmem:[%s381 + $0x188] sm:$0xf]
      %v487 = vld [vmem:[%s381 + $0x18c] sm:$0xf]
      %v488 = vld [vmem:[%s381 + $0x190] sm:$0xf]
      %v489 = vld [vmem:[%s381 + $0x194] sm:$0xf]
      %v490 = vld [vmem:[%s381 + $0x198] sm:$0xf]
      %v491 = vld [vmem:[%s381 + $0x19c] sm:$0xf]
      %v492 = vld [vmem:[%s381 + $0x1a0] sm:$0xf]
      %v493 = vld [vmem:[%s381 + $0x1a4] sm:$0xf]
      %v494 = vld [vmem:[%s381 + $0x1a8] sm:$0xf]
      %v495 = vld [vmem:[%s381 + $0x1ac] sm:$0xf]
      %v496 = vld [vmem:[%s381 + $0x1b0] sm:$0xf]
      %v497 = vld [vmem:[%s381 + $0x1b4] sm:$0xf]
      %v498 = vld [vmem:[%s381 + $0x1b8] sm:$0xf]
      %v499 = vld [vmem:[%s381 + $0x1bc] sm:$0xf]
      %v500 = vld [vmem:[%s381 + $0x1c0] sm:$0xf]
      %v501 = vld [vmem:[%s381 + $0x1c4] sm:$0xf]
      %v502 = vld [vmem:[%s381 + $0x1c8] sm:$0xf]
      %v503 = vld [vmem:[%s381 + $0x1cc] sm:$0xf]
      %v504 = vld [vmem:[%s381 + $0x1d0] sm:$0xf]
      %v505 = vld [vmem:[%s381 + $0x1d4] sm:$0xf]
      %v506 = vld [vmem:[%s381 + $0x1d8] sm:$0xf]
      %v507 = vld [vmem:[%s381 + $0x1dc] sm:$0xf]
      %v508 = vld [vmem:[%s381 + $0x1e0] sm:$0xf]
      %v509 = vld [vmem:[%s381 + $0x1e4] sm:$0xf]
      %v510 = vld [vmem:[%s381 + $0x1e8] sm:$0xf]
      %v511 = vld [vmem:[%s381 + $0x1ec] sm:$0xf]
      %v512 = vld [vmem:[%s381 + $0x1f0] sm:$0xf]
      %v513 = vld [vmem:[%s381 + $0x1f4] sm:$0xf]
      %v514 = vld [vmem:[%s381 + $0x1f8] sm:$0xf]
      %v515 = vld [vmem:[%s381 + $0x1fc] sm:$0xf]
      %v516 = vld [vmem:[%s381 + $0x200] sm:$0xf]
      %v637 = vunpack.c.l.b16 %v388
      %v638 = vunpack.c.l.b16 %v389
      %v639 = vunpack.c.l.b16 %v390
      %v640 = vunpack.c.l.b16 %v391
      %v641 = vunpack.c.l.b16 %v392
      %v642 = vunpack.c.l.b16 %v393
      %v643 = vunpack.c.l.b16 %v394
      %v644 = vunpack.c.l.b16 %v395
      %v645 = vunpack.c.l.b16 %v396
      %v646 = vunpack.c.l.b16 %v397
      %v647 = vunpack.c.l.b16 %v398
      %v648 = vunpack.c.l.b16 %v399
      %v649 = vunpack.c.l.b16 %v400
      %v650 = vunpack.c.l.b16 %v401
      %v651 = vunpack.c.l.b16 %v402
      %v652 = vunpack.c.l.b16 %v403
      %v653 = vunpack.c.l.b16 %v404
      %v654 = vunpack.c.l.b16 %v405
      %v655 = vunpack.c.l.b16 %v406
      %v656 = vunpack.c.l.b16 %v407
      %v657 = vunpack.c.l.b16 %v408
      %v658 = vunpack.c.l.b16 %v409
      %v659 = vunpack.c.l.b16 %v410
      %v660 = vunpack.c.l.b16 %v411
      %v661 = vunpack.c.l.b16 %v412
      %v662 = vunpack.c.l.b16 %v413
      %v663 = vunpack.c.l.b16 %v414
      %v664 = vunpack.c.l.b16 %v415
      %v665 = vunpack.c.l.b16 %v416
      %v666 = vunpack.c.l.b16 %v417
      %v667 = vunpack.c.l.b16 %v418
      %v668 = vunpack.c.l.b16 %v419
      %v669 = vunpack.c.l.b16 %v420
      %v670 = vunpack.c.l.b16 %v421
      %v671 = vunpack.c.l.b16 %v422
      %v672 = vunpack.c.l.b16 %v423
      %v673 = vunpack.c.l.b16 %v424
      %v674 = vunpack.c.l.b16 %v425
      %v675 = vunpack.c.l.b16 %v426
      %v676 = vunpack.c.l.b16 %v427
      %v677 = vunpack.c.l.b16 %v428
      %v678 = vunpack.c.l.b16 %v429
      %v679 = vunpack.c.l.b16 %v430
      %v680 = vunpack.c.l.b16 %v431
      %v681 = vunpack.c.l.b16 %v432
      %v682 = vunpack.c.l.b16 %v433
      %v683 = vunpack.c.l.b16 %v434
      %v684 = vunpack.c.l.b16 %v435
      %v685 = vunpack.c.l.b16 %v436
      %v686 = vunpack.c.l.b16 %v437
      %v687 = vunpack.c.l.b16 %v438
      %v688 = vunpack.c.l.b16 %v439
      %v689 = vunpack.c.l.b16 %v440
      %v690 = vunpack.c.l.b16 %v441
      %v691 = vunpack.c.l.b16 %v442
      %v692 = vunpack.c.l.b16 %v443
      %v693 = vunpack.c.l.b16 %v444
      %v694 = vunpack.c.l.b16 %v445
      %v695 = vunpack.c.l.b16 %v446
      %v696 = vunpack.c.l.b16 %v447
      %v697 = vunpack.c.l.b16 %v448
      %v698 = vunpack.c.l.b16 %v449
      %v699 = vunpack.c.l.b16 %v450
      %v700 = vunpack.c.l.b16 %v451
      %v701 = vunpack.c.l.b16 %v452
      %v702 = vunpack.c.l.b16 %v453
      %v703 = vunpack.c.l.b16 %v454
      %v704 = vunpack.c.l.b16 %v455
      %v705 = vunpack.c.l.b16 %v456
      %v706 = vunpack.c.l.b16 %v457
      %v707 = vunpack.c.l.b16 %v458
      %v708 = vunpack.c.l.b16 %v459
      %v709 = vunpack.c.l.b16 %v460
      %v710 = vunpack.c.l.b16 %v461
      %v711 = vunpack.c.l.b16 %v462
      %v712 = vunpack.c.l.b16 %v463
      %v713 = vunpack.c.l.b16 %v464
      %v714 = vunpack.c.l.b16 %v465
      %v715 = vunpack.c.l.b16 %v466
      %v716 = vunpack.c.l.b16 %v467
      %v717 = vunpack.c.l.b16 %v468
      %v718 = vunpack.c.l.b16 %v469
      %v719 = vunpack.c.l.b16 %v470
      %v720 = vunpack.c.l.b16 %v471
      %v721 = vunpack.c.l.b16 %v472
      %v722 = vunpack.c.l.b16 %v473
      %v723 = vunpack.c.l.b16 %v474
      %v724 = vunpack.c.l.b16 %v475
      %v725 = vunpack.c.l.b16 %v476
      %v726 = vunpack.c.l.b16 %v477
      %v727 = vunpack.c.l.b16 %v478
      %v728 = vunpack.c.l.b16 %v479
      %v729 = vunpack.c.l.b16 %v480
      %v730 = vunpack.c.l.b16 %v481
      %v731 = vunpack.c.l.b16 %v482
      %v732 = vunpack.c.l.b16 %v483
      %v733 = vunpack.c.l.b16 %v484
      %v734 = vunpack.c.l.b16 %v485
      %v735 = vunpack.c.l.b16 %v486
      %v736 = vunpack.c.l.b16 %v487
      %v737 = vunpack.c.l.b16 %v488
      %v738 = vunpack.c.l.b16 %v489
      %v739 = vunpack.c.l.b16 %v490
      %v740 = vunpack.c.l.b16 %v491
      %v741 = vunpack.c.l.b16 %v492
      %v742 = vunpack.c.l.b16 %v493
      %v743 = vunpack.c.l.b16 %v494
      %v744 = vunpack.c.l.b16 %v495
      %v745 = vunpack.c.l.b16 %v496
      %v746 = vunpack.c.l.b16 %v497
      %v747 = vunpack.c.l.b16 %v498
      %v748 = vunpack.c.l.b16 %v499
      %v749 = vunpack.c.l.b16 %v500
      %v750 = vunpack.c.l.b16 %v501
      %v751 = vunpack.c.l.b16 %v502
      %v752 = vunpack.c.l.b16 %v503
      %v753 = vunpack.c.l.b16 %v504
      %v754 = vunpack.c.l.b16 %v505
      %v755 = vunpack.c.l.b16 %v506
      %v756 = vunpack.c.l.b16 %v507
      %v757 = vpack.c.b16 %v638, %v637
      %v758 = vpack.c.b16 %v640, %v639
      %v759 = vpack.c.b16 %v642, %v641
      %v760 = vpack.c.b16 %v644, %v643
      %v761 = vpack.c.b16 %v646, %v645
      %v762 = vpack.c.b16 %v648, %v647
      %v763 = vpack.c.b16 %v650, %v649
      %v764 = vpack.c.b16 %v652, %v651
      %v765 = vpack.c.b16 %v654, %v653
      %v766 = vpack.c.b16 %v656, %v655
      %v767 = vpack.c.b16 %v658, %v657
      %v768 = vpack.c.b16 %v660, %v659
      %v769 = vpack.c.b16 %v662, %v661
      %v770 = vpack.c.b16 %v664, %v663
      %v771 = vpack.c.b16 %v666, %v665
      %v772 = vpack.c.b16 %v668, %v667
      %v773 = vpack.c.b16 %v670, %v669
      %v774 = vpack.c.b16 %v672, %v671
      %v775 = vpack.c.b16 %v674, %v673
      %v776 = vpack.c.b16 %v676, %v675
      %v777 = vpack.c.b16 %v678, %v677
      %v778 = vpack.c.b16 %v680, %v679
      %v779 = vpack.c.b16 %v682, %v681
      %v780 = vpack.c.b16 %v684, %v683
      %v781 = vpack.c.b16 %v686, %v685
      %v782 = vpack.c.b16 %v688, %v687
      %v783 = vpack.c.b16 %v690, %v689
      %v784 = vpack.c.b16 %v692, %v691
      %v785 = vpack.c.b16 %v694, %v693
      %v786 = vpack.c.b16 %v696, %v695
      %v787 = vpack.c.b16 %v698, %v697
      %v788 = vpack.c.b16 %v700, %v699
      %v789 = vpack.c.b16 %v702, %v701
      %v790 = vpack.c.b16 %v704, %v703
      %v791 = vpack.c.b16 %v706, %v705
      %v792 = vpack.c.b16 %v708, %v707
      %v793 = vpack.c.b16 %v710, %v709
      %v794 = vpack.c.b16 %v712, %v711
      %v795 = vpack.c.b16 %v714, %v713
      %v796 = vpack.c.b16 %v716, %v715
      %v797 = vpack.c.b16 %v718, %v717
      %v798 = vpack.c.b16 %v720, %v719
      %v799 = vpack.c.b16 %v722, %v721
      %v800 = vpack.c.b16 %v724, %v723
      %v801 = vpack.c.b16 %v726, %v725
      %v802 = vpack.c.b16 %v728, %v727
      %v803 = vpack.c.b16 %v730, %v729
      %v804 = vpack.c.b16 %v732, %v731
      %v805 = vpack.c.b16 %v734, %v733
      %v806 = vpack.c.b16 %v736, %v735
      %v807 = vpack.c.b16 %v738, %v737
      %v808 = vpack.c.b16 %v740, %v739
      %v809 = vpack.c.b16 %v742, %v741
      %v810 = vpack.c.b16 %v744, %v743
      %v811 = vpack.c.b16 %v746, %v745
      %v812 = vpack.c.b16 %v748, %v747
      %v813 = vpack.c.b16 %v750, %v749
      %v814 = vpack.c.b16 %v752, %v751
      %v815 = vpack.c.b16 %v754, %v753
      %v816 = vpack.c.b16 %v756, %v755
      %v818 = vunpack.c.l.b16 %v508
      %v819 = vpack.c.b16 %v818, %v818
      %vm820 = vsmask.f32 7424
      %v822 = vshrl.u32 %v757, 16
      %v824 = vshll.u32 %v757, 16
      %v826 = vrot.slane %v824, 1
      %v827 = vor.u32 %v822, %v826
      %v829 = vshll.u32 %v758, 16
      %v831 = vrot.slane %v829, 1
      %v832 = vsel %vm820, %v827, %v831
      %v833 = vshrl.u32 %v758, 16
      %v835 = vor.u32 %v833, %v831
      %v837 = vshll.u32 %v759, 16
      %v839 = vrot.slane %v837, 1
      %v840 = vsel %vm820, %v835, %v839
      %v841 = vshrl.u32 %v759, 16
      %v843 = vor.u32 %v841, %v839
      %v845 = vshll.u32 %v760, 16
      %v847 = vrot.slane %v845, 1
      %v848 = vsel %vm820, %v843, %v847
      %v849 = vshrl.u32 %v760, 16
      %v851 = vor.u32 %v849, %v847
      %v853 = vshll.u32 %v761, 16
      %v855 = vrot.slane %v853, 1
      %v856 = vsel %vm820, %v851, %v855
      %v857 = vshrl.u32 %v761, 16
      %v859 = vor.u32 %v857, %v855
      %v861 = vshll.u32 %v762, 16
      %v863 = vrot.slane %v861, 1
      %v864 = vsel %vm820, %v859, %v863
      %v865 = vshrl.u32 %v762, 16
      %v867 = vor.u32 %v865, %v863
      %v869 = vshll.u32 %v763, 16
      %v871 = vrot.slane %v869, 1
      %v872 = vsel %vm820, %v867, %v871
      %v873 = vshrl.u32 %v763, 16
      %v875 = vor.u32 %v873, %v871
      %v877 = vshll.u32 %v764, 16
      %v879 = vrot.slane %v877, 1
      %v880 = vsel %vm820, %v875, %v879
      %v881 = vshrl.u32 %v764, 16
      %v883 = vor.u32 %v881, %v879
      %v885 = vshll.u32 %v765, 16
      %v887 = vrot.slane %v885, 1
      %v888 = vsel %vm820, %v883, %v887
      %v889 = vshrl.u32 %v765, 16
      %v891 = vor.u32 %v889, %v887
      %v893 = vshll.u32 %v766, 16
      %v895 = vrot.slane %v893, 1
      %v896 = vsel %vm820, %v891, %v895
      %v897 = vshrl.u32 %v766, 16
      %v899 = vor.u32 %v897, %v895
      %v901 = vshll.u32 %v767, 16
      %v903 = vrot.slane %v901, 1
      %v904 = vsel %vm820, %v899, %v903
      %v905 = vshrl.u32 %v767, 16
      %v907 = vor.u32 %v905, %v903
      %v909 = vshll.u32 %v768, 16
      %v911 = vrot.slane %v909, 1
      %v912 = vsel %vm820, %v907, %v911
      %v913 = vshrl.u32 %v768, 16
      %v915 = vor.u32 %v913, %v911
      %v917 = vshll.u32 %v769, 16
      %v919 = vrot.slane %v917, 1
      %v920 = vsel %vm820, %v915, %v919
      %v921 = vshrl.u32 %v769, 16
      %v923 = vor.u32 %v921, %v919
      %v925 = vshll.u32 %v770, 16
      %v927 = vrot.slane %v925, 1
      %v928 = vsel %vm820, %v923, %v927
      %v929 = vshrl.u32 %v770, 16
      %v931 = vor.u32 %v929, %v927
      %v933 = vshll.u32 %v771, 16
      %v935 = vrot.slane %v933, 1
      %v936 = vsel %vm820, %v931, %v935
      %v937 = vshrl.u32 %v771, 16
      %v939 = vor.u32 %v937, %v935
      %v941 = vshll.u32 %v772, 16
      %v943 = vrot.slane %v941, 1
      %v944 = vsel %vm820, %v939, %v943
      %v945 = vshrl.u32 %v772, 16
      %v947 = vor.u32 %v945, %v943
      %v949 = vshll.u32 %v773, 16
      %v951 = vrot.slane %v949, 1
      %v952 = vsel %vm820, %v947, %v951
      %v953 = vshrl.u32 %v773, 16
      %v955 = vor.u32 %v953, %v951
      %v957 = vshll.u32 %v774, 16
      %v959 = vrot.slane %v957, 1
      %v960 = vsel %vm820, %v955, %v959
      %v961 = vshrl.u32 %v774, 16
      %v963 = vor.u32 %v961, %v959
      %v965 = vshll.u32 %v775, 16
      %v967 = vrot.slane %v965, 1
      %v968 = vsel %vm820, %v963, %v967
      %v969 = vshrl.u32 %v775, 16
      %v971 = vor.u32 %v969, %v967
      %v973 = vshll.u32 %v776, 16
      %v975 = vrot.slane %v973, 1
      %v976 = vsel %vm820, %v971, %v975
      %v977 = vshrl.u32 %v776, 16
      %v979 = vor.u32 %v977, %v975
      %v981 = vshll.u32 %v777, 16
      %v983 = vrot.slane %v981, 1
      %v984 = vsel %vm820, %v979, %v983
      %v985 = vshrl.u32 %v777, 16
      %v987 = vor.u32 %v985, %v983
      %v989 = vshll.u32 %v778, 16
      %v991 = vrot.slane %v989, 1
      %v992 = vsel %vm820, %v987, %v991
      %v993 = vshrl.u32 %v778, 16
      %v995 = vor.u32 %v993, %v991
      %v997 = vshll.u32 %v779, 16
      %v999 = vrot.slane %v997, 1
      %v1000 = vsel %vm820, %v995, %v999
      %v1001 = vshrl.u32 %v779, 16
      %v1003 = vor.u32 %v1001, %v999
      %v1005 = vshll.u32 %v780, 16
      %v1007 = vrot.slane %v1005, 1
      %v1008 = vsel %vm820, %v1003, %v1007
      %v1009 = vshrl.u32 %v780, 16
      %v1011 = vor.u32 %v1009, %v1007
      %v1013 = vshll.u32 %v781, 16
      %v1015 = vrot.slane %v1013, 1
      %v1016 = vsel %vm820, %v1011, %v1015
      %v1017 = vshrl.u32 %v781, 16
      %v1019 = vor.u32 %v1017, %v1015
      %v1021 = vshll.u32 %v782, 16
      %v1023 = vrot.slane %v1021, 1
      %v1024 = vsel %vm820, %v1019, %v1023
      %v1025 = vshrl.u32 %v782, 16
      %v1027 = vor.u32 %v1025, %v1023
      %v1029 = vshll.u32 %v783, 16
      %v1031 = vrot.slane %v1029, 1
      %v1032 = vsel %vm820, %v1027, %v1031
      %v1033 = vshrl.u32 %v783, 16
      %v1035 = vor.u32 %v1033, %v1031
      %v1037 = vshll.u32 %v784, 16
      %v1039 = vrot.slane %v1037, 1
      %v1040 = vsel %vm820, %v1035, %v1039
      %v1041 = vshrl.u32 %v784, 16
      %v1043 = vor.u32 %v1041, %v1039
      %v1045 = vshll.u32 %v785, 16
      %v1047 = vrot.slane %v1045, 1
      %v1048 = vsel %vm820, %v1043, %v1047
      %v1049 = vshrl.u32 %v785, 16
      %v1051 = vor.u32 %v1049, %v1047
      %v1053 = vshll.u32 %v786, 16
      %v1055 = vrot.slane %v1053, 1
      %v1056 = vsel %vm820, %v1051, %v1055
      %v1057 = vshrl.u32 %v786, 16
      %v1059 = vor.u32 %v1057, %v1055
      %v1061 = vshll.u32 %v787, 16
      %v1063 = vrot.slane %v1061, 1
      %v1064 = vsel %vm820, %v1059, %v1063
      %v1065 = vshrl.u32 %v787, 16
      %v1067 = vor.u32 %v1065, %v1063
      %v1069 = vshll.u32 %v788, 16
      %v1071 = vrot.slane %v1069, 1
      %v1072 = vsel %vm820, %v1067, %v1071
      %v1073 = vshrl.u32 %v788, 16
      %v1075 = vor.u32 %v1073, %v1071
      %v1077 = vshll.u32 %v789, 16
      %v1079 = vrot.slane %v1077, 1
      %v1080 = vsel %vm820, %v1075, %v1079
      %v1081 = vshrl.u32 %v789, 16
      %v1083 = vor.u32 %v1081, %v1079
      %v1085 = vshll.u32 %v790, 16
      %v1087 = vrot.slane %v1085, 1
      %v1088 = vsel %vm820, %v1083, %v1087
      %v1089 = vshrl.u32 %v790, 16
      %v1091 = vor.u32 %v1089, %v1087
      %v1093 = vshll.u32 %v791, 16
      %v1095 = vrot.slane %v1093, 1
      %v1096 = vsel %vm820, %v1091, %v1095
      %v1097 = vshrl.u32 %v791, 16
      %v1099 = vor.u32 %v1097, %v1095
      %v1101 = vshll.u32 %v792, 16
      %v1103 = vrot.slane %v1101, 1
      %v1104 = vsel %vm820, %v1099, %v1103
      %v1105 = vshrl.u32 %v792, 16
      %v1107 = vor.u32 %v1105, %v1103
      %v1109 = vshll.u32 %v793, 16
      %v1111 = vrot.slane %v1109, 1
      %v1112 = vsel %vm820, %v1107, %v1111
      %v1113 = vshrl.u32 %v793, 16
      %v1115 = vor.u32 %v1113, %v1111
      %v1117 = vshll.u32 %v794, 16
      %v1119 = vrot.slane %v1117, 1
      %v1120 = vsel %vm820, %v1115, %v1119
      %v1121 = vshrl.u32 %v794, 16
      %v1123 = vor.u32 %v1121, %v1119
      %v1125 = vshll.u32 %v795, 16
      %v1127 = vrot.slane %v1125, 1
      %v1128 = vsel %vm820, %v1123, %v1127
      %v1129 = vshrl.u32 %v795, 16
      %v1131 = vor.u32 %v1129, %v1127
      %v1133 = vshll.u32 %v796, 16
      %v1135 = vrot.slane %v1133, 1
      %v1136 = vsel %vm820, %v1131, %v1135
      %v1137 = vshrl.u32 %v796, 16
      %v1139 = vor.u32 %v1137, %v1135
      %v1141 = vshll.u32 %v797, 16
      %v1143 = vrot.slane %v1141, 1
      %v1144 = vsel %vm820, %v1139, %v1143
      %v1145 = vshrl.u32 %v797, 16
      %v1147 = vor.u32 %v1145, %v1143
      %v1149 = vshll.u32 %v798, 16
      %v1151 = vrot.slane %v1149, 1
      %v1152 = vsel %vm820, %v1147, %v1151
      %v1153 = vshrl.u32 %v798, 16
      %v1155 = vor.u32 %v1153, %v1151
      %v1157 = vshll.u32 %v799, 16
      %v1159 = vrot.slane %v1157, 1
      %v1160 = vsel %vm820, %v1155, %v1159
      %v1161 = vshrl.u32 %v799, 16
      %v1163 = vor.u32 %v1161, %v1159
      %v1165 = vshll.u32 %v800, 16
      %v1167 = vrot.slane %v1165, 1
      %v1168 = vsel %vm820, %v1163, %v1167
      %v1169 = vshrl.u32 %v800, 16
      %v1171 = vor.u32 %v1169, %v1167
      %v1173 = vshll.u32 %v801, 16
      %v1175 = vrot.slane %v1173, 1
      %v1176 = vsel %vm820, %v1171, %v1175
      %v1177 = vshrl.u32 %v801, 16
      %v1179 = vor.u32 %v1177, %v1175
      %v1181 = vshll.u32 %v802, 16
      %v1183 = vrot.slane %v1181, 1
      %v1184 = vsel %vm820, %v1179, %v1183
      %v1185 = vshrl.u32 %v802, 16
      %v1187 = vor.u32 %v1185, %v1183
      %v1189 = vshll.u32 %v803, 16
      %v1191 = vrot.slane %v1189, 1
      %v1192 = vsel %vm820, %v1187, %v1191
      %v1193 = vshrl.u32 %v803, 16
      %v1195 = vor.u32 %v1193, %v1191
      %v1197 = vshll.u32 %v804, 16
      %v1199 = vrot.slane %v1197, 1
      %v1200 = vsel %vm820, %v1195, %v1199
      %v1201 = vshrl.u32 %v804, 16
      %v1203 = vor.u32 %v1201, %v1199
      %v1205 = vshll.u32 %v805, 16
      %v1207 = vrot.slane %v1205, 1
      %v1208 = vsel %vm820, %v1203, %v1207
      %v1209 = vshrl.u32 %v805, 16
      %v1211 = vor.u32 %v1209, %v1207
      %v1213 = vshll.u32 %v806, 16
      %v1215 = vrot.slane %v1213, 1
      %v1216 = vsel %vm820, %v1211, %v1215
      %v1217 = vshrl.u32 %v806, 16
      %v1219 = vor.u32 %v1217, %v1215
      %v1221 = vshll.u32 %v807, 16
      %v1223 = vrot.slane %v1221, 1
      %v1224 = vsel %vm820, %v1219, %v1223
      %v1225 = vshrl.u32 %v807, 16
      %v1227 = vor.u32 %v1225, %v1223
      %v1229 = vshll.u32 %v808, 16
      %v1231 = vrot.slane %v1229, 1
      %v1232 = vsel %vm820, %v1227, %v1231
      %v1233 = vshrl.u32 %v808, 16
      %v1235 = vor.u32 %v1233, %v1231
      %v1237 = vshll.u32 %v809, 16
      %v1239 = vrot.slane %v1237, 1
      %v1240 = vsel %vm820, %v1235, %v1239
      %v1241 = vshrl.u32 %v809, 16
      %v1243 = vor.u32 %v1241, %v1239
      %v1245 = vshll.u32 %v810, 16
      %v1247 = vrot.slane %v1245, 1
      %v1248 = vsel %vm820, %v1243, %v1247
      %v1249 = vshrl.u32 %v810, 16
      %v1251 = vor.u32 %v1249, %v1247
      %v1253 = vshll.u32 %v811, 16
      %v1255 = vrot.slane %v1253, 1
      %v1256 = vsel %vm820, %v1251, %v1255
      %v1257 = vshrl.u32 %v811, 16
      %v1259 = vor.u32 %v1257, %v1255
      %v1261 = vshll.u32 %v812, 16
      %v1263 = vrot.slane %v1261, 1
      %v1264 = vsel %vm820, %v1259, %v1263
      %v1265 = vshrl.u32 %v812, 16
      %v1267 = vor.u32 %v1265, %v1263
      %v1269 = vshll.u32 %v813, 16
      %v1271 = vrot.slane %v1269, 1
      %v1272 = vsel %vm820, %v1267, %v1271
      %v1273 = vshrl.u32 %v813, 16
      %v1275 = vor.u32 %v1273, %v1271
      %v1277 = vshll.u32 %v814, 16
      %v1279 = vrot.slane %v1277, 1
      %v1280 = vsel %vm820, %v1275, %v1279
      %v1281 = vshrl.u32 %v814, 16
      %v1283 = vor.u32 %v1281, %v1279
      %v1285 = vshll.u32 %v815, 16
      %v1287 = vrot.slane %v1285, 1
      %v1288 = vsel %vm820, %v1283, %v1287
      %v1289 = vshrl.u32 %v815, 16
      %v1291 = vor.u32 %v1289, %v1287
      %v1293 = vshll.u32 %v816, 16
      %v1295 = vrot.slane %v1293, 1
      %v1296 = vsel %vm820, %v1291, %v1295
      %v1297 = vshrl.u32 %v816, 16
      %v1299 = vor.u32 %v1297, %v1295
      %v1301 = vshll.u32 %v819, 16
      %v1303 = vrot.slane %v1301, 1
      %v1304 = vsel %vm820, %v1299, %v1303
      %1305 = vrot.lane.b32.xlu0 %v832, 3
      %v1306 = vpop.permute.xlu0 %1305
      %1307 = vrot.lane.b32.xlu0 %v840, 3
      %v1308 = vpop.permute.xlu0 %1307
      %1309 = vrot.lane.b32.xlu0 %v848, 3
      %v1310 = vpop.permute.xlu0 %1309
      %1311 = vrot.lane.b32.xlu0 %v856, 3
      %v1312 = vpop.permute.xlu0 %1311
      %1313 = vrot.lane.b32.xlu0 %v864, 3
      %v1314 = vpop.permute.xlu0 %1313
      %1315 = vrot.lane.b32.xlu0 %v872, 3
      %v1316 = vpop.permute.xlu0 %1315
      %1317 = vrot.lane.b32.xlu0 %v880, 3
      %v1318 = vpop.permute.xlu0 %1317
      %1319 = vrot.lane.b32.xlu0 %v888, 3
      %v1320 = vpop.permute.xlu0 %1319
      %1321 = vrot.lane.b32.xlu0 %v896, 3
      %v1322 = vpop.permute.xlu0 %1321
      %1323 = vrot.lane.b32.xlu0 %v904, 3
      %v1324 = vpop.permute.xlu0 %1323
      %1325 = vrot.lane.b32.xlu0 %v912, 3
      %v1326 = vpop.permute.xlu0 %1325
      %1327 = vrot.lane.b32.xlu0 %v920, 3
      %v1328 = vpop.permute.xlu0 %1327
      %1329 = vrot.lane.b32.xlu0 %v928, 3
      %v1330 = vpop.permute.xlu0 %1329
      %1331 = vrot.lane.b32.xlu0 %v936, 3
      %v1332 = vpop.permute.xlu0 %1331
      %1333 = vrot.lane.b32.xlu0 %v944, 3
      %v1334 = vpop.permute.xlu0 %1333
      %1335 = vrot.lane.b32.xlu0 %v952, 3
      %v1336 = vpop.permute.xlu0 %1335
      %1337 = vrot.lane.b32.xlu0 %v960, 3
      %v1338 = vpop.permute.xlu0 %1337
      %1339 = vrot.lane.b32.xlu0 %v968, 3
      %v1340 = vpop.permute.xlu0 %1339
      %1341 = vrot.lane.b32.xlu0 %v976, 3
      %v1342 = vpop.permute.xlu0 %1341
      %1343 = vrot.lane.b32.xlu0 %v984, 3
      %v1344 = vpop.permute.xlu0 %1343
      %1345 = vrot.lane.b32.xlu0 %v992, 3
      %v1346 = vpop.permute.xlu0 %1345
      %1347 = vrot.lane.b32.xlu0 %v1000, 3
      %v1348 = vpop.permute.xlu0 %1347
      %1349 = vrot.lane.b32.xlu0 %v1008, 3
      %v1350 = vpop.permute.xlu0 %1349
      %1351 = vrot.lane.b32.xlu0 %v1016, 3
      %v1352 = vpop.permute.xlu0 %1351
      %1353 = vrot.lane.b32.xlu0 %v1024, 3
      %v1354 = vpop.permute.xlu0 %1353
      %1355 = vrot.lane.b32.xlu0 %v1032, 3
      %v1356 = vpop.permute.xlu0 %1355
      %1357 = vrot.lane.b32.xlu0 %v1040, 3
      %v1358 = vpop.permute.xlu0 %1357
      %1359 = vrot.lane.b32.xlu0 %v1048, 3
      %v1360 = vpop.permute.xlu0 %1359
      %1361 = vrot.lane.b32.xlu0 %v1056, 3
      %v1362 = vpop.permute.xlu0 %1361
      %1363 = vrot.lane.b32.xlu0 %v1064, 3
      %v1364 = vpop.permute.xlu0 %1363
      %1365 = vrot.lane.b32.xlu0 %v1072, 3
      %v1366 = vpop.permute.xlu0 %1365
      %1367 = vrot.lane.b32.xlu0 %v1080, 3
      %v1368 = vpop.permute.xlu0 %1367
      %1369 = vrot.lane.b32.xlu0 %v1088, 3
      %v1370 = vpop.permute.xlu0 %1369
      %1371 = vrot.lane.b32.xlu0 %v1096, 3
      %v1372 = vpop.permute.xlu0 %1371
      %1373 = vrot.lane.b32.xlu0 %v1104, 3
      %v1374 = vpop.permute.xlu0 %1373
      %1375 = vrot.lane.b32.xlu0 %v1112, 3
      %v1376 = vpop.permute.xlu0 %1375
      %1377 = vrot.lane.b32.xlu0 %v1120, 3
      %v1378 = vpop.permute.xlu0 %1377
      %1379 = vrot.lane.b32.xlu0 %v1128, 3
      %v1380 = vpop.permute.xlu0 %1379
      %1381 = vrot.lane.b32.xlu0 %v1136, 3
      %v1382 = vpop.permute.xlu0 %1381
      %1383 = vrot.lane.b32.xlu0 %v1144, 3
      %v1384 = vpop.permute.xlu0 %1383
      %1385 = vrot.lane.b32.xlu0 %v1152, 3
      %v1386 = vpop.permute.xlu0 %1385
      %1387 = vrot.lane.b32.xlu0 %v1160, 3
      %v1388 = vpop.permute.xlu0 %1387
      %1389 = vrot.lane.b32.xlu0 %v1168, 3
      %v1390 = vpop.permute.xlu0 %1389
      %1391 = vrot.lane.b32.xlu0 %v1176, 3
      %v1392 = vpop.permute.xlu0 %1391
      %1393 = vrot.lane.b32.xlu0 %v1184, 3
      %v1394 = vpop.permute.xlu0 %1393
      %1395 = vrot.lane.b32.xlu0 %v1192, 3
      %v1396 = vpop.permute.xlu0 %1395
      %1397 = vrot.lane.b32.xlu0 %v1200, 3
      %v1398 = vpop.permute.xlu0 %1397
      %1399 = vrot.lane.b32.xlu0 %v1208, 3
      %v1400 = vpop.permute.xlu0 %1399
      %1401 = vrot.lane.b32.xlu0 %v1216, 3
      %v1402 = vpop.permute.xlu0 %1401
      %1403 = vrot.lane.b32.xlu0 %v1224, 3
      %v1404 = vpop.permute.xlu0 %1403
      %1405 = vrot.lane.b32.xlu0 %v1232, 3
      %v1406 = vpop.permute.xlu0 %1405
      %1407 = vrot.lane.b32.xlu0 %v1240, 3
      %v1408 = vpop.permute.xlu0 %1407
      %1409 = vrot.lane.b32.xlu0 %v1248, 3
      %v1410 = vpop.permute.xlu0 %1409
      %1411 = vrot.lane.b32.xlu0 %v1256, 3
      %v1412 = vpop.permute.xlu0 %1411
      %1413 = vrot.lane.b32.xlu0 %v1264, 3
      %v1414 = vpop.permute.xlu0 %1413
      %1415 = vrot.lane.b32.xlu0 %v1272, 3
      %v1416 = vpop.permute.xlu0 %1415
      %1417 = vrot.lane.b32.xlu0 %v1280, 3
      %v1418 = vpop.permute.xlu0 %1417
      %1419 = vrot.lane.b32.xlu0 %v1288, 3
      %v1420 = vpop.permute.xlu0 %1419
      %1421 = vrot.lane.b32.xlu0 %v1296, 3
      %v1422 = vpop.permute.xlu0 %1421
      %1423 = vrot.lane.b32.xlu0 %v1304, 3
      %v1424 = vpop.permute.xlu0 %1423
      %vm1425 = vcmask 1046528
      %v1426 = vrot.slane %v757, 1
      %v1427 = vrot.slane %v758, 1
      %v1428 = vsel %vm1425, %v1426, %v1427
      %v1429 = vrot.slane %v759, 1
      %v1430 = vsel %vm1425, %v1427, %v1429
      %v1431 = vrot.slane %v760, 1
      %v1432 = vsel %vm1425, %v1429, %v1431
      %v1433 = vrot.slane %v761, 1
      %v1434 = vsel %vm1425, %v1431, %v1433
      %v1435 = vrot.slane %v762, 1
      %v1436 = vsel %vm1425, %v1433, %v1435
      %v1437 = vrot.slane %v763, 1
      %v1438 = vsel %vm1425, %v1435, %v1437
      %v1439 = vrot.slane %v764, 1
      %v1440 = vsel %vm1425, %v1437, %v1439
      %v1441 = vrot.slane %v765, 1
      %v1442 = vsel %vm1425, %v1439, %v1441
      %v1443 = vrot.slane %v766, 1
      %v1444 = vsel %vm1425, %v1441, %v1443
      %v1445 = vrot.slane %v767, 1
      %v1446 = vsel %vm1425, %v1443, %v1445
      %v1447 = vrot.slane %v768, 1
      %v1448 = vsel %vm1425, %v1445, %v1447
      %v1449 = vrot.slane %v769, 1
      %v1450 = vsel %vm1425, %v1447, %v1449
      %v1451 = vrot.slane %v770, 1
      %v1452 = vsel %vm1425, %v1449, %v1451
      %v1453 = vrot.slane %v771, 1
      %v1454 = vsel %vm1425, %v1451, %v1453
      %v1455 = vrot.slane %v772, 1
      %v1456 = vsel %vm1425, %v1453, %v1455
      %v1457 = vrot.slane %v773, 1
      %v1458 = vsel %vm1425, %v1455, %v1457
      %v1459 = vrot.slane %v774, 1
      %v1460 = vsel %vm1425, %v1457, %v1459
      %v1461 = vrot.slane %v775, 1
      %v1462 = vsel %vm1425, %v1459, %v1461
      %v1463 = vrot.slane %v776, 1
      %v1464 = vsel %vm1425, %v1461, %v1463
      %v1465 = vrot.slane %v777, 1
      %v1466 = vsel %vm1425, %v1463, %v1465
      %v1467 = vrot.slane %v778, 1
      %v1468 = vsel %vm1425, %v1465, %v1467
      %v1469 = vrot.slane %v779, 1
      %v1470 = vsel %vm1425, %v1467, %v1469
      %v1471 = vrot.slane %v780, 1
      %v1472 = vsel %vm1425, %v1469, %v1471
      %v1473 = vrot.slane %v781, 1
      %v1474 = vsel %vm1425, %v1471, %v1473
      %v1475 = vrot.slane %v782, 1
      %v1476 = vsel %vm1425, %v1473, %v1475
      %v1477 = vrot.slane %v783, 1
      %v1478 = vsel %vm1425, %v1475, %v1477
      %v1479 = vrot.slane %v784, 1
      %v1480 = vsel %vm1425, %v1477, %v1479
      %v1481 = vrot.slane %v785, 1
      %v1482 = vsel %vm1425, %v1479, %v1481
      %v1483 = vrot.slane %v786, 1
      %v1484 = vsel %vm1425, %v1481, %v1483
      %v1485 = vrot.slane %v787, 1
      %v1486 = vsel %vm1425, %v1483, %v1485
      %v1487 = vrot.slane %v788, 1
      %v1488 = vsel %vm1425, %v1485, %v1487
      %v1489 = vrot.slane %v789, 1
      %v1490 = vsel %vm1425, %v1487, %v1489
      %v1491 = vrot.slane %v790, 1
      %v1492 = vsel %vm1425, %v1489, %v1491
      %v1493 = vrot.slane %v791, 1
      %v1494 = vsel %vm1425, %v1491, %v1493
      %v1495 = vrot.slane %v792, 1
      %v1496 = vsel %vm1425, %v1493, %v1495
      %v1497 = vrot.slane %v793, 1
      %v1498 = vsel %vm1425, %v1495, %v1497
      %v1499 = vrot.slane %v794, 1
      %v1500 = vsel %vm1425, %v1497, %v1499
      %v1501 = vrot.slane %v795, 1
      %v1502 = vsel %vm1425, %v1499, %v1501
      %v1503 = vrot.slane %v796, 1
      %v1504 = vsel %vm1425, %v1501, %v1503
      %v1505 = vrot.slane %v797, 1
      %v1506 = vsel %vm1425, %v1503, %v1505
      %v1507 = vrot.slane %v798, 1
      %v1508 = vsel %vm1425, %v1505, %v1507
      %v1509 = vrot.slane %v799, 1
      %v1510 = vsel %vm1425, %v1507, %v1509
      %v1511 = vrot.slane %v800, 1
      %v1512 = vsel %vm1425, %v1509, %v1511
      %v1513 = vrot.slane %v801, 1
      %v1514 = vsel %vm1425, %v1511, %v1513
      %v1515 = vrot.slane %v802, 1
      %v1516 = vsel %vm1425, %v1513, %v1515
      %v1517 = vrot.slane %v803, 1
      %v1518 = vsel %vm1425, %v1515, %v1517
      %v1519 = vrot.slane %v804, 1
      %v1520 = vsel %vm1425, %v1517, %v1519
      %v1521 = vrot.slane %v805, 1
      %v1522 = vsel %vm1425, %v1519, %v1521
      %v1523 = vrot.slane %v806, 1
      %v1524 = vsel %vm1425, %v1521, %v1523
      %v1525 = vrot.slane %v807, 1
      %v1526 = vsel %vm1425, %v1523, %v1525
      %v1527 = vrot.slane %v808, 1
      %v1528 = vsel %vm1425, %v1525, %v1527
      %v1529 = vrot.slane %v809, 1
      %v1530 = vsel %vm1425, %v1527, %v1529
      %v1531 = vrot.slane %v810, 1
      %v1532 = vsel %vm1425, %v1529, %v1531
      %v1533 = vrot.slane %v811, 1
      %v1534 = vsel %vm1425, %v1531, %v1533
      %v1535 = vrot.slane %v812, 1
      %v1536 = vsel %vm1425, %v1533, %v1535
      %v1537 = vrot.slane %v813, 1
      %v1538 = vsel %vm1425, %v1535, %v1537
      %v1539 = vrot.slane %v814, 1
      %v1540 = vsel %vm1425, %v1537, %v1539
      %v1541 = vrot.slane %v815, 1
      %v1542 = vsel %vm1425, %v1539, %v1541
      %v1543 = vrot.slane %v816, 1
      %v1544 = vsel %vm1425, %v1541, %v1543
      %v1545 = vrot.slane %v819, 1
      %v1546 = vsel %vm1425, %v1543, %v1545
      %1547 = vrot.lane.b32.xlu0 %v1428, 6
      %v1548 = vpop.permute.xlu0 %1547
      %1549 = vrot.lane.b32.xlu0 %v1430, 6
      %v1550 = vpop.permute.xlu0 %1549
      %1551 = vrot.lane.b32.xlu0 %v1432, 6
      %v1552 = vpop.permute.xlu0 %1551
      %1553 = vrot.lane.b32.xlu0 %v1434, 6
      %v1554 = vpop.permute.xlu0 %1553
      %1555 = vrot.lane.b32.xlu0 %v1436, 6
      %v1556 = vpop.permute.xlu0 %1555
      %1557 = vrot.lane.b32.xlu0 %v1438, 6
      %v1558 = vpop.permute.xlu0 %1557
      %1559 = vrot.lane.b32.xlu0 %v1440, 6
      %v1560 = vpop.permute.xlu0 %1559
      %1561 = vrot.lane.b32.xlu0 %v1442, 6
      %v1562 = vpop.permute.xlu0 %1561
      %1563 = vrot.lane.b32.xlu0 %v1444, 6
      %v1564 = vpop.permute.xlu0 %1563
      %1565 = vrot.lane.b32.xlu0 %v1446, 6
      %v1566 = vpop.permute.xlu0 %1565
      %1567 = vrot.lane.b32.xlu0 %v1448, 6
      %v1568 = vpop.permute.xlu0 %1567
      %1569 = vrot.lane.b32.xlu0 %v1450, 6
      %v1570 = vpop.permute.xlu0 %1569
      %1571 = vrot.lane.b32.xlu0 %v1452, 6
      %v1572 = vpop.permute.xlu0 %1571
      %1573 = vrot.lane.b32.xlu0 %v1454, 6
      %v1574 = vpop.permute.xlu0 %1573
      %1575 = vrot.lane.b32.xlu0 %v1456, 6
      %v1576 = vpop.permute.xlu0 %1575
      %1577 = vrot.lane.b32.xlu0 %v1458, 6
      %v1578 = vpop.permute.xlu0 %1577
      %1579 = vrot.lane.b32.xlu0 %v1460, 6
      %v1580 = vpop.permute.xlu0 %1579
      %1581 = vrot.lane.b32.xlu0 %v1462, 6
      %v1582 = vpop.permute.xlu0 %1581
      %1583 = vrot.lane.b32.xlu0 %v1464, 6
      %v1584 = vpop.permute.xlu0 %1583
      %1585 = vrot.lane.b32.xlu0 %v1466, 6
      %v1586 = vpop.permute.xlu0 %1585
      %1587 = vrot.lane.b32.xlu0 %v1468, 6
      %v1588 = vpop.permute.xlu0 %1587
      %1589 = vrot.lane.b32.xlu0 %v1470, 6
      %v1590 = vpop.permute.xlu0 %1589
      %1591 = vrot.lane.b32.xlu0 %v1472, 6
      %v1592 = vpop.permute.xlu0 %1591
      %1593 = vrot.lane.b32.xlu0 %v1474, 6
      %v1594 = vpop.permute.xlu0 %1593
      %1595 = vrot.lane.b32.xlu0 %v1476, 6
      %v1596 = vpop.permute.xlu0 %1595
      %1597 = vrot.lane.b32.xlu0 %v1478, 6
      %v1598 = vpop.permute.xlu0 %1597
      %1599 = vrot.lane.b32.xlu0 %v1480, 6
      %v1600 = vpop.permute.xlu0 %1599
      %1601 = vrot.lane.b32.xlu0 %v1482, 6
      %v1602 = vpop.permute.xlu0 %1601
      %1603 = vrot.lane.b32.xlu0 %v1484, 6
      %v1604 = vpop.permute.xlu0 %1603
      %1605 = vrot.lane.b32.xlu0 %v1486, 6
      %v1606 = vpop.permute.xlu0 %1605
      %1607 = vrot.lane.b32.xlu0 %v1488, 6
      %v1608 = vpop.permute.xlu0 %1607
      %1609 = vrot.lane.b32.xlu0 %v1490, 6
      %v1610 = vpop.permute.xlu0 %1609
      %1611 = vrot.lane.b32.xlu0 %v1492, 6
      %v1612 = vpop.permute.xlu0 %1611
      %1613 = vrot.lane.b32.xlu0 %v1494, 6
      %v1614 = vpop.permute.xlu0 %1613
      %1615 = vrot.lane.b32.xlu0 %v1496, 6
      %v1616 = vpop.permute.xlu0 %1615
      %1617 = vrot.lane.b32.xlu0 %v1498, 6
      %v1618 = vpop.permute.xlu0 %1617
      %1619 = vrot.lane.b32.xlu0 %v1500, 6
      %v1620 = vpop.permute.xlu0 %1619
      %1621 = vrot.lane.b32.xlu0 %v1502, 6
      %v1622 = vpop.permute.xlu0 %1621
      %1623 = vrot.lane.b32.xlu0 %v1504, 6
      %v1624 = vpop.permute.xlu0 %1623
      %1625 = vrot.lane.b32.xlu0 %v1506, 6
      %v1626 = vpop.permute.xlu0 %1625
      %1627 = vrot.lane.b32.xlu0 %v1508, 6
      %v1628 = vpop.permute.xlu0 %1627
      %1629 = vrot.lane.b32.xlu0 %v1510, 6
      %v1630 = vpop.permute.xlu0 %1629
      %1631 = vrot.lane.b32.xlu0 %v1512, 6
      %v1632 = vpop.permute.xlu0 %1631
      %1633 = vrot.lane.b32.xlu0 %v1514, 6
      %v1634 = vpop.permute.xlu0 %1633
      %1635 = vrot.lane.b32.xlu0 %v1516, 6
      %v1636 = vpop.permute.xlu0 %1635
      %1637 = vrot.lane.b32.xlu0 %v1518, 6
      %v1638 = vpop.permute.xlu0 %1637
      %1639 = vrot.lane.b32.xlu0 %v1520, 6
      %v1640 = vpop.permute.xlu0 %1639
      %1641 = vrot.lane.b32.xlu0 %v1522, 6
      %v1642 = vpop.permute.xlu0 %1641
      %1643 = vrot.lane.b32.xlu0 %v1524, 6
      %v1644 = vpop.permute.xlu0 %1643
      %1645 = vrot.lane.b32.xlu0 %v1526, 6
      %v1646 = vpop.permute.xlu0 %1645
      %1647 = vrot.lane.b32.xlu0 %v1528, 6
      %v1648 = vpop.permute.xlu0 %1647
      %1649 = vrot.lane.b32.xlu0 %v1530, 6
      %v1650 = vpop.permute.xlu0 %1649
      %1651 = vrot.lane.b32.xlu0 %v1532, 6
      %v1652 = vpop.permute.xlu0 %1651
      %1653 = vrot.lane.b32.xlu0 %v1534, 6
      %v1654 = vpop.permute.xlu0 %1653
      %1655 = vrot.lane.b32.xlu0 %v1536, 6
      %v1656 = vpop.permute.xlu0 %1655
      %1657 = vrot.lane.b32.xlu0 %v1538, 6
      %v1658 = vpop.permute.xlu0 %1657
      %1659 = vrot.lane.b32.xlu0 %v1540, 6
      %v1660 = vpop.permute.xlu0 %1659
      %1661 = vrot.lane.b32.xlu0 %v1542, 6
      %v1662 = vpop.permute.xlu0 %1661
      %1663 = vrot.lane.b32.xlu0 %v1544, 6
      %v1664 = vpop.permute.xlu0 %1663
      %1665 = vrot.lane.b32.xlu0 %v1546, 6
      %v1666 = vpop.permute.xlu0 %1665
      %v1670 = vunpack.c.l.b16 %v509
      %v1671 = vunpack.c.l.b16 %v510
      %v1672 = vunpack.c.l.b16 %v511
      %v1673 = vpack.c.b16 %v1670, %v818
      %v1674 = vpack.c.b16 %v1672, %v1671
      %1675 = vrot.lane.b32.xlu0 %v759, 9
      %v1676 = vpop.permute.xlu0 %1675
      %1677 = vrot.lane.b32.xlu0 %v760, 9
      %v1678 = vpop.permute.xlu0 %1677
      %1679 = vrot.lane.b32.xlu0 %v761, 9
      %v1680 = vpop.permute.xlu0 %1679
      %1681 = vrot.lane.b32.xlu0 %v762, 9
      %v1682 = vpop.permute.xlu0 %1681
      %1683 = vrot.lane.b32.xlu0 %v763, 9
      %v1684 = vpop.permute.xlu0 %1683
      %1685 = vrot.lane.b32.xlu0 %v764, 9
      %v1686 = vpop.permute.xlu0 %1685
      %1687 = vrot.lane.b32.xlu0 %v765, 9
      %v1688 = vpop.permute.xlu0 %1687
      %1689 = vrot.lane.b32.xlu0 %v766, 9
      %v1690 = vpop.permute.xlu0 %1689
      %1691 = vrot.lane.b32.xlu0 %v767, 9
      %v1692 = vpop.permute.xlu0 %1691
      %1693 = vrot.lane.b32.xlu0 %v768, 9
      %v1694 = vpop.permute.xlu0 %1693
      %1695 = vrot.lane.b32.xlu0 %v769, 9
      %v1696 = vpop.permute.xlu0 %1695
      %1697 = vrot.lane.b32.xlu0 %v770, 9
      %v1698 = vpop.permute.xlu0 %1697
      %1699 = vrot.lane.b32.xlu0 %v771, 9
      %v1700 = vpop.permute.xlu0 %1699
      %1701 = vrot.lane.b32.xlu0 %v772, 9
      %v1702 = vpop.permute.xlu0 %1701
      %1703 = vrot.lane.b32.xlu0 %v773, 9
      %v1704 = vpop.permute.xlu0 %1703
      %1705 = vrot.lane.b32.xlu0 %v774, 9
      %v1706 = vpop.permute.xlu0 %1705
      %1707 = vrot.lane.b32.xlu0 %v775, 9
      %v1708 = vpop.permute.xlu0 %1707
      %1709 = vrot.lane.b32.xlu0 %v776, 9
      %v1710 = vpop.permute.xlu0 %1709
      %1711 = vrot.lane.b32.xlu0 %v777, 9
      %v1712 = vpop.permute.xlu0 %1711
      %1713 = vrot.lane.b32.xlu0 %v778, 9
      %v1714 = vpop.permute.xlu0 %1713
      %1715 = vrot.lane.b32.xlu0 %v779, 9
      %v1716 = vpop.permute.xlu0 %1715
      %1717 = vrot.lane.b32.xlu0 %v780, 9
      %v1718 = vpop.permute.xlu0 %1717
      %1719 = vrot.lane.b32.xlu0 %v781, 9
      %v1720 = vpop.permute.xlu0 %1719
      %1721 = vrot.lane.b32.xlu0 %v782, 9
      %v1722 = vpop.permute.xlu0 %1721
      %1723 = vrot.lane.b32.xlu0 %v783, 9
      %v1724 = vpop.permute.xlu0 %1723
      %1725 = vrot.lane.b32.xlu0 %v784, 9
      %v1726 = vpop.permute.xlu0 %1725
      %1727 = vrot.lane.b32.xlu0 %v785, 9
      %v1728 = vpop.permute.xlu0 %1727
      %1729 = vrot.lane.b32.xlu0 %v786, 9
      %v1730 = vpop.permute.xlu0 %1729
      %1731 = vrot.lane.b32.xlu0 %v787, 9
      %v1732 = vpop.permute.xlu0 %1731
      %1733 = vrot.lane.b32.xlu0 %v788, 9
      %v1734 = vpop.permute.xlu0 %1733
      %1735 = vrot.lane.b32.xlu0 %v789, 9
      %v1736 = vpop.permute.xlu0 %1735
      %1737 = vrot.lane.b32.xlu0 %v790, 9
      %v1738 = vpop.permute.xlu0 %1737
      %1739 = vrot.lane.b32.xlu0 %v791, 9
      %v1740 = vpop.permute.xlu0 %1739
      %1741 = vrot.lane.b32.xlu0 %v792, 9
      %v1742 = vpop.permute.xlu0 %1741
      %1743 = vrot.lane.b32.xlu0 %v793, 9
      %v1744 = vpop.permute.xlu0 %1743
      %1745 = vrot.lane.b32.xlu0 %v794, 9
      %v1746 = vpop.permute.xlu0 %1745
      %1747 = vrot.lane.b32.xlu0 %v795, 9
      %v1748 = vpop.permute.xlu0 %1747
      %1749 = vrot.lane.b32.xlu0 %v796, 9
      %v1750 = vpop.permute.xlu0 %1749
      %1751 = vrot.lane.b32.xlu0 %v797, 9
      %v1752 = vpop.permute.xlu0 %1751
      %1753 = vrot.lane.b32.xlu0 %v798, 9
      %v1754 = vpop.permute.xlu0 %1753
      %1755 = vrot.lane.b32.xlu0 %v799, 9
      %v1756 = vpop.permute.xlu0 %1755
      %1757 = vrot.lane.b32.xlu0 %v800, 9
      %v1758 = vpop.permute.xlu0 %1757
      %1759 = vrot.lane.b32.xlu0 %v801, 9
      %v1760 = vpop.permute.xlu0 %1759
      %1761 = vrot.lane.b32.xlu0 %v802, 9
      %v1762 = vpop.permute.xlu0 %1761
      %1763 = vrot.lane.b32.xlu0 %v803, 9
      %v1764 = vpop.permute.xlu0 %1763
      %1765 = vrot.lane.b32.xlu0 %v804, 9
      %v1766 = vpop.permute.xlu0 %1765
      %1767 = vrot.lane.b32.xlu0 %v805, 9
      %v1768 = vpop.permute.xlu0 %1767
      %1769 = vrot.lane.b32.xlu0 %v806, 9
      %v1770 = vpop.permute.xlu0 %1769
      %1771 = vrot.lane.b32.xlu0 %v807, 9
      %v1772 = vpop.permute.xlu0 %1771
      %1773 = vrot.lane.b32.xlu0 %v808, 9
      %v1774 = vpop.permute.xlu0 %1773
      %1775 = vrot.lane.b32.xlu0 %v809, 9
      %v1776 = vpop.permute.xlu0 %1775
      %1777 = vrot.lane.b32.xlu0 %v810, 9
      %v1778 = vpop.permute.xlu0 %1777
      %1779 = vrot.lane.b32.xlu0 %v811, 9
      %v1780 = vpop.permute.xlu0 %1779
      %1781 = vrot.lane.b32.xlu0 %v812, 9
      %v1782 = vpop.permute.xlu0 %1781
      %1783 = vrot.lane.b32.xlu0 %v813, 9
      %v1784 = vpop.permute.xlu0 %1783
      %1785 = vrot.lane.b32.xlu0 %v814, 9
      %v1786 = vpop.permute.xlu0 %1785
      %1787 = vrot.lane.b32.xlu0 %v815, 9
      %v1788 = vpop.permute.xlu0 %1787
      %1789 = vrot.lane.b32.xlu0 %v816, 9
      %v1790 = vpop.permute.xlu0 %1789
      %1791 = vrot.lane.b32.xlu0 %v1673, 9
      %v1792 = vpop.permute.xlu0 %1791
      %1793 = vrot.lane.b32.xlu0 %v1674, 9
      %v1794 = vpop.permute.xlu0 %1793
      %v1796 = vunpack.c.l.b16 %v512
      %v1797 = vpack.c.b16 %v1796, %v1796
      %v1799 = vshll.u32 %v1673, 16
      %v1801 = vrot.slane %v1799, 1
      %v1802 = vsel %vm820, %v1299, %v1801
      %v1803 = vshrl.u32 %v1673, 16
      %v1805 = vor.u32 %v1803, %v1801
      %v1807 = vshll.u32 %v1674, 16
      %v1809 = vrot.slane %v1807, 1
      %v1810 = vsel %vm820, %v1805, %v1809
      %v1811 = vshrl.u32 %v1674, 16
      %v1813 = vor.u32 %v1811, %v1809
      %v1815 = vshll.u32 %v1797, 16
      %v1817 = vrot.slane %v1815, 1
      %v1818 = vsel %vm820, %v1813, %v1817
      %1819 = vrot.lane.b32.xlu0 %v848, 12
      %v1820 = vpop.permute.xlu0 %1819
      %1821 = vrot.lane.b32.xlu0 %v856, 12
      %v1822 = vpop.permute.xlu0 %1821
      %1823 = vrot.lane.b32.xlu0 %v864, 12
      %v1824 = vpop.permute.xlu0 %1823
      %1825 = vrot.lane.b32.xlu0 %v872, 12
      %v1826 = vpop.permute.xlu0 %1825
      %1827 = vrot.lane.b32.xlu0 %v880, 12
      %v1828 = vpop.permute.xlu0 %1827
      %1829 = vrot.lane.b32.xlu0 %v888, 12
      %v1830 = vpop.permute.xlu0 %1829
      %1831 = vrot.lane.b32.xlu0 %v896, 12
      %v1832 = vpop.permute.xlu0 %1831
      %1833 = vrot.lane.b32.xlu0 %v904, 12
      %v1834 = vpop.permute.xlu0 %1833
      %1835 = vrot.lane.b32.xlu0 %v912, 12
      %v1836 = vpop.permute.xlu0 %1835
      %1837 = vrot.lane.b32.xlu0 %v920, 12
      %v1838 = vpop.permute.xlu0 %1837
      %1839 = vrot.lane.b32.xlu0 %v928, 12
      %v1840 = vpop.permute.xlu0 %1839
      %1841 = vrot.lane.b32.xlu0 %v936, 12
      %v1842 = vpop.permute.xlu0 %1841
      %1843 = vrot.lane.b32.xlu0 %v944, 12
      %v1844 = vpop.permute.xlu0 %1843
      %1845 = vrot.lane.b32.xlu0 %v952, 12
      %v1846 = vpop.permute.xlu0 %1845
      %1847 = vrot.lane.b32.xlu0 %v960, 12
      %v1848 = vpop.permute.xlu0 %1847
      %1849 = vrot.lane.b32.xlu0 %v968, 12
      %v1850 = vpop.permute.xlu0 %1849
      %1851 = vrot.lane.b32.xlu0 %v976, 12
      %v1852 = vpop.permute.xlu0 %1851
      %1853 = vrot.lane.b32.xlu0 %v984, 12
      %v1854 = vpop.permute.xlu0 %1853
      %1855 = vrot.lane.b32.xlu0 %v992, 12
      %v1856 = vpop.permute.xlu0 %1855
      %1857 = vrot.lane.b32.xlu0 %v1000, 12
      %v1858 = vpop.permute.xlu0 %1857
      %1859 = vrot.lane.b32.xlu0 %v1008, 12
      %v1860 = vpop.permute.xlu0 %1859
      %1861 = vrot.lane.b32.xlu0 %v1016, 12
      %v1862 = vpop.permute.xlu0 %1861
      %1863 = vrot.lane.b32.xlu0 %v1024, 12
      %v1864 = vpop.permute.xlu0 %1863
      %1865 = vrot.lane.b32.xlu0 %v1032, 12
      %v1866 = vpop.permute.xlu0 %1865
      %1867 = vrot.lane.b32.xlu0 %v1040, 12
      %v1868 = vpop.permute.xlu0 %1867
      %1869 = vrot.lane.b32.xlu0 %v1048, 12
      %v1870 = vpop.permute.xlu0 %1869
      %1871 = vrot.lane.b32.xlu0 %v1056, 12
      %v1872 = vpop.permute.xlu0 %1871
      %1873 = vrot.lane.b32.xlu0 %v1064, 12
      %v1874 = vpop.permute.xlu0 %1873
      %1875 = vrot.lane.b32.xlu0 %v1072, 12
      %v1876 = vpop.permute.xlu0 %1875
      %1877 = vrot.lane.b32.xlu0 %v1080, 12
      %v1878 = vpop.permute.xlu0 %1877
      %1879 = vrot.lane.b32.xlu0 %v1088, 12
      %v1880 = vpop.permute.xlu0 %1879
      %1881 = vrot.lane.b32.xlu0 %v1096, 12
      %v1882 = vpop.permute.xlu0 %1881
      %1883 = vrot.lane.b32.xlu0 %v1104, 12
      %v1884 = vpop.permute.xlu0 %1883
      %1885 = vrot.lane.b32.xlu0 %v1112, 12
      %v1886 = vpop.permute.xlu0 %1885
      %1887 = vrot.lane.b32.xlu0 %v1120, 12
      %v1888 = vpop.permute.xlu0 %1887
      %1889 = vrot.lane.b32.xlu0 %v1128, 12
      %v1890 = vpop.permute.xlu0 %1889
      %1891 = vrot.lane.b32.xlu0 %v1136, 12
      %v1892 = vpop.permute.xlu0 %1891
      %1893 = vrot.lane.b32.xlu0 %v1144, 12
      %v1894 = vpop.permute.xlu0 %1893
      %1895 = vrot.lane.b32.xlu0 %v1152, 12
      %v1896 = vpop.permute.xlu0 %1895
      %1897 = vrot.lane.b32.xlu0 %v1160, 12
      %v1898 = vpop.permute.xlu0 %1897
      %1899 = vrot.lane.b32.xlu0 %v1168, 12
      %v1900 = vpop.permute.xlu0 %1899
      %1901 = vrot.lane.b32.xlu0 %v1176, 12
      %v1902 = vpop.permute.xlu0 %1901
      %1903 = vrot.lane.b32.xlu0 %v1184, 12
      %v1904 = vpop.permute.xlu0 %1903
      %1905 = vrot.lane.b32.xlu0 %v1192, 12
      %v1906 = vpop.permute.xlu0 %1905
      %1907 = vrot.lane.b32.xlu0 %v1200, 12
      %v1908 = vpop.permute.xlu0 %1907
      %1909 = vrot.lane.b32.xlu0 %v1208, 12
      %v1910 = vpop.permute.xlu0 %1909
      %1911 = vrot.lane.b32.xlu0 %v1216, 12
      %v1912 = vpop.permute.xlu0 %1911
      %1913 = vrot.lane.b32.xlu0 %v1224, 12
      %v1914 = vpop.permute.xlu0 %1913
      %1915 = vrot.lane.b32.xlu0 %v1232, 12
      %v1916 = vpop.permute.xlu0 %1915
      %1917 = vrot.lane.b32.xlu0 %v1240, 12
      %v1918 = vpop.permute.xlu0 %1917
      %1919 = vrot.lane.b32.xlu0 %v1248, 12
      %v1920 = vpop.permute.xlu0 %1919
      %1921 = vrot.lane.b32.xlu0 %v1256, 12
      %v1922 = vpop.permute.xlu0 %1921
      %1923 = vrot.lane.b32.xlu0 %v1264, 12
      %v1924 = vpop.permute.xlu0 %1923
      %1925 = vrot.lane.b32.xlu0 %v1272, 12
      %v1926 = vpop.permute.xlu0 %1925
      %1927 = vrot.lane.b32.xlu0 %v1280, 12
      %v1928 = vpop.permute.xlu0 %1927
      %1929 = vrot.lane.b32.xlu0 %v1288, 12
      %v1930 = vpop.permute.xlu0 %1929
      %1931 = vrot.lane.b32.xlu0 %v1296, 12
      %v1932 = vpop.permute.xlu0 %1931
      %1933 = vrot.lane.b32.xlu0 %v1802, 12
      %v1934 = vpop.permute.xlu0 %1933
      %1935 = vrot.lane.b32.xlu0 %v1810, 12
      %v1936 = vpop.permute.xlu0 %1935
      %1937 = vrot.lane.b32.xlu0 %v1818, 12
      %v1938 = vpop.permute.xlu0 %1937
      %v1939 = vrot.slane %v1673, 1
      %v1940 = vsel %vm1425, %v1543, %v1939
      %v1941 = vrot.slane %v1674, 1
      %v1942 = vsel %vm1425, %v1939, %v1941
      %v1943 = vrot.slane %v1797, 1
      %v1944 = vsel %vm1425, %v1941, %v1943
      %1945 = vrot.lane.b32.xlu0 %v1432, 15
      %v1946 = vpop.permute.xlu0 %1945
      %1947 = vrot.lane.b32.xlu0 %v1434, 15
      %v1948 = vpop.permute.xlu0 %1947
      %1949 = vrot.lane.b32.xlu0 %v1436, 15
      %v1950 = vpop.permute.xlu0 %1949
      %1951 = vrot.lane.b32.xlu0 %v1438, 15
      %v1952 = vpop.permute.xlu0 %1951
      %1953 = vrot.lane.b32.xlu0 %v1440, 15
      %v1954 = vpop.permute.xlu0 %1953
      %1955 = vrot.lane.b32.xlu0 %v1442, 15
      %v1956 = vpop.permute.xlu0 %1955
      %1957 = vrot.lane.b32.xlu0 %v1444, 15
      %v1958 = vpop.permute.xlu0 %1957
      %1959 = vrot.lane.b32.xlu0 %v1446, 15
      %v1960 = vpop.permute.xlu0 %1959
      %1961 = vrot.lane.b32.xlu0 %v1448, 15
      %v1962 = vpop.permute.xlu0 %1961
      %1963 = vrot.lane.b32.xlu0 %v1450, 15
      %v1964 = vpop.permute.xlu0 %1963
      %1965 = vrot.lane.b32.xlu0 %v1452, 15
      %v1966 = vpop.permute.xlu0 %1965
      %1967 = vrot.lane.b32.xlu0 %v1454, 15
      %v1968 = vpop.permute.xlu0 %1967
      %1969 = vrot.lane.b32.xlu0 %v1456, 15
      %v1970 = vpop.permute.xlu0 %1969
      %1971 = vrot.lane.b32.xlu0 %v1458, 15
      %v1972 = vpop.permute.xlu0 %1971
      %1973 = vrot.lane.b32.xlu0 %v1460, 15
      %v1974 = vpop.permute.xlu0 %1973
      %1975 = vrot.lane.b32.xlu0 %v1462, 15
      %v1976 = vpop.permute.xlu0 %1975
      %1977 = vrot.lane.b32.xlu0 %v1464, 15
      %v1978 = vpop.permute.xlu0 %1977
      %1979 = vrot.lane.b32.xlu0 %v1466, 15
      %v1980 = vpop.permute.xlu0 %1979
      %1981 = vrot.lane.b32.xlu0 %v1468, 15
      %v1982 = vpop.permute.xlu0 %1981
      %1983 = vrot.lane.b32.xlu0 %v1470, 15
      %v1984 = vpop.permute.xlu0 %1983
      %1985 = vrot.lane.b32.xlu0 %v1472, 15
      %v1986 = vpop.permute.xlu0 %1985
      %1987 = vrot.lane.b32.xlu0 %v1474, 15
      %v1988 = vpop.permute.xlu0 %1987
      %1989 = vrot.lane.b32.xlu0 %v1476, 15
      %v1990 = vpop.permute.xlu0 %1989
      %1991 = vrot.lane.b32.xlu0 %v1478, 15
      %v1992 = vpop.permute.xlu0 %1991
      %1993 = vrot.lane.b32.xlu0 %v1480, 15
      %v1994 = vpop.permute.xlu0 %1993
      %1995 = vrot.lane.b32.xlu0 %v1482, 15
      %v1996 = vpop.permute.xlu0 %1995
      %1997 = vrot.lane.b32.xlu0 %v1484, 15
      %v1998 = vpop.permute.xlu0 %1997
      %1999 = vrot.lane.b32.xlu0 %v1486, 15
      %v2000 = vpop.permute.xlu0 %1999
      %2001 = vrot.lane.b32.xlu0 %v1488, 15
      %v2002 = vpop.permute.xlu0 %2001
      %2003 = vrot.lane.b32.xlu0 %v1490, 15
      %v2004 = vpop.permute.xlu0 %2003
      %2005 = vrot.lane.b32.xlu0 %v1492, 15
      %v2006 = vpop.permute.xlu0 %2005
      %2007 = vrot.lane.b32.xlu0 %v1494, 15
      %v2008 = vpop.permute.xlu0 %2007
      %2009 = vrot.lane.b32.xlu0 %v1496, 15
      %v2010 = vpop.permute.xlu0 %2009
      %2011 = vrot.lane.b32.xlu0 %v1498, 15
      %v2012 = vpop.permute.xlu0 %2011
      %2013 = vrot.lane.b32.xlu0 %v1500, 15
      %v2014 = vpop.permute.xlu0 %2013
      %2015 = vrot.lane.b32.xlu0 %v1502, 15
      %v2016 = vpop.permute.xlu0 %2015
      %2017 = vrot.lane.b32.xlu0 %v1504, 15
      %v2018 = vpop.permute.xlu0 %2017
      %2019 = vrot.lane.b32.xlu0 %v1506, 15
      %v2020 = vpop.permute.xlu0 %2019
      %2021 = vrot.lane.b32.xlu0 %v1508, 15
      %v2022 = vpop.permute.xlu0 %2021
      %2023 = vrot.lane.b32.xlu0 %v1510, 15
      %v2024 = vpop.permute.xlu0 %2023
      %2025 = vrot.lane.b32.xlu0 %v1512, 15
      %v2026 = vpop.permute.xlu0 %2025
      %2027 = vrot.lane.b32.xlu0 %v1514, 15
      %v2028 = vpop.permute.xlu0 %2027
      %2029 = vrot.lane.b32.xlu0 %v1516, 15
      %v2030 = vpop.permute.xlu0 %2029
      %2031 = vrot.lane.b32.xlu0 %v1518, 15
      %v2032 = vpop.permute.xlu0 %2031
      %2033 = vrot.lane.b32.xlu0 %v1520, 15
      %v2034 = vpop.permute.xlu0 %2033
      %2035 = vrot.lane.b32.xlu0 %v1522, 15
      %v2036 = vpop.permute.xlu0 %2035
      %2037 = vrot.lane.b32.xlu0 %v1524, 15
      %v2038 = vpop.permute.xlu0 %2037
      %2039 = vrot.lane.b32.xlu0 %v1526, 15
      %v2040 = vpop.permute.xlu0 %2039
      %2041 = vrot.lane.b32.xlu0 %v1528, 15
      %v2042 = vpop.permute.xlu0 %2041
      %2043 = vrot.lane.b32.xlu0 %v1530, 15
      %v2044 = vpop.permute.xlu0 %2043
      %2045 = vrot.lane.b32.xlu0 %v1532, 15
      %v2046 = vpop.permute.xlu0 %2045
      %2047 = vrot.lane.b32.xlu0 %v1534, 15
      %v2048 = vpop.permute.xlu0 %2047
      %2049 = vrot.lane.b32.xlu0 %v1536, 15
      %v2050 = vpop.permute.xlu0 %2049
      %2051 = vrot.lane.b32.xlu0 %v1538, 15
      %v2052 = vpop.permute.xlu0 %2051
      %2053 = vrot.lane.b32.xlu0 %v1540, 15
      %v2054 = vpop.permute.xlu0 %2053
      %2055 = vrot.lane.b32.xlu0 %v1542, 15
      %v2056 = vpop.permute.xlu0 %2055
      %2057 = vrot.lane.b32.xlu0 %v1544, 15
      %v2058 = vpop.permute.xlu0 %2057
      %2059 = vrot.lane.b32.xlu0 %v1940, 15
      %v2060 = vpop.permute.xlu0 %2059
      %2061 = vrot.lane.b32.xlu0 %v1942, 15
      %v2062 = vpop.permute.xlu0 %2061
      %2063 = vrot.lane.b32.xlu0 %v1944, 15
      %v2064 = vpop.permute.xlu0 %2063
      %v2068 = vunpack.c.l.b16 %v513
      %v2069 = vunpack.c.l.b16 %v514
      %v2070 = vunpack.c.l.b16 %v515
      %v2071 = vpack.c.b16 %v2068, %v1796
      %v2072 = vpack.c.b16 %v2070, %v2069
      %2073 = vrot.lane.b32.xlu0 %v761, 18
      %v2074 = vpop.permute.xlu0 %2073
      %2075 = vrot.lane.b32.xlu0 %v762, 18
      %v2076 = vpop.permute.xlu0 %2075
      %2077 = vrot.lane.b32.xlu0 %v763, 18
      %v2078 = vpop.permute.xlu0 %2077
      %2079 = vrot.lane.b32.xlu0 %v764, 18
      %v2080 = vpop.permute.xlu0 %2079
      %2081 = vrot.lane.b32.xlu0 %v765, 18
      %v2082 = vpop.permute.xlu0 %2081
      %2083 = vrot.lane.b32.xlu0 %v766, 18
      %v2084 = vpop.permute.xlu0 %2083
      %2085 = vrot.lane.b32.xlu0 %v767, 18
      %v2086 = vpop.permute.xlu0 %2085
      %2087 = vrot.lane.b32.xlu0 %v768, 18
      %v2088 = vpop.permute.xlu0 %2087
      %2089 = vrot.lane.b32.xlu0 %v769, 18
      %v2090 = vpop.permute.xlu0 %2089
      %2091 = vrot.lane.b32.xlu0 %v770, 18
      %v2092 = vpop.permute.xlu0 %2091
      %2093 = vrot.lane.b32.xlu0 %v771, 18
      %v2094 = vpop.permute.xlu0 %2093
      %2095 = vrot.lane.b32.xlu0 %v772, 18
      %v2096 = vpop.permute.xlu0 %2095
      %2097 = vrot.lane.b32.xlu0 %v773, 18
      %v2098 = vpop.permute.xlu0 %2097
      %2099 = vrot.lane.b32.xlu0 %v774, 18
      %v2100 = vpop.permute.xlu0 %2099
      %2101 = vrot.lane.b32.xlu0 %v775, 18
      %v2102 = vpop.permute.xlu0 %2101
      %2103 = vrot.lane.b32.xlu0 %v776, 18
      %v2104 = vpop.permute.xlu0 %2103
      %2105 = vrot.lane.b32.xlu0 %v777, 18
      %v2106 = vpop.permute.xlu0 %2105
      %2107 = vrot.lane.b32.xlu0 %v778, 18
      %v2108 = vpop.permute.xlu0 %2107
      %2109 = vrot.lane.b32.xlu0 %v779, 18
      %v2110 = vpop.permute.xlu0 %2109
      %2111 = vrot.lane.b32.xlu0 %v780, 18
      %v2112 = vpop.permute.xlu0 %2111
      %2113 = vrot.lane.b32.xlu0 %v781, 18
      %v2114 = vpop.permute.xlu0 %2113
      %2115 = vrot.lane.b32.xlu0 %v782, 18
      %v2116 = vpop.permute.xlu0 %2115
      %2117 = vrot.lane.b32.xlu0 %v783, 18
      %v2118 = vpop.permute.xlu0 %2117
      %2119 = vrot.lane.b32.xlu0 %v784, 18
      %v2120 = vpop.permute.xlu0 %2119
      %2121 = vrot.lane.b32.xlu0 %v785, 18
      %v2122 = vpop.permute.xlu0 %2121
      %2123 = vrot.lane.b32.xlu0 %v786, 18
      %v2124 = vpop.permute.xlu0 %2123
      %2125 = vrot.lane.b32.xlu0 %v787, 18
      %v2126 = vpop.permute.xlu0 %2125
      %2127 = vrot.lane.b32.xlu0 %v788, 18
      %v2128 = vpop.permute.xlu0 %2127
      %2129 = vrot.lane.b32.xlu0 %v789, 18
      %v2130 = vpop.permute.xlu0 %2129
      %2131 = vrot.lane.b32.xlu0 %v790, 18
      %v2132 = vpop.permute.xlu0 %2131
      %2133 = vrot.lane.b32.xlu0 %v791, 18
      %v2134 = vpop.permute.xlu0 %2133
      %2135 = vrot.lane.b32.xlu0 %v792, 18
      %v2136 = vpop.permute.xlu0 %2135
      %2137 = vrot.lane.b32.xlu0 %v793, 18
      %v2138 = vpop.permute.xlu0 %2137
      %2139 = vrot.lane.b32.xlu0 %v794, 18
      %v2140 = vpop.permute.xlu0 %2139
      %2141 = vrot.lane.b32.xlu0 %v795, 18
      %v2142 = vpop.permute.xlu0 %2141
      %2143 = vrot.lane.b32.xlu0 %v796, 18
      %v2144 = vpop.permute.xlu0 %2143
      %2145 = vrot.lane.b32.xlu0 %v797, 18
      %v2146 = vpop.permute.xlu0 %2145
      %2147 = vrot.lane.b32.xlu0 %v798, 18
      %v2148 = vpop.permute.xlu0 %2147
      %2149 = vrot.lane.b32.xlu0 %v799, 18
      %v2150 = vpop.permute.xlu0 %2149
      %2151 = vrot.lane.b32.xlu0 %v800, 18
      %v2152 = vpop.permute.xlu0 %2151
      %2153 = vrot.lane.b32.xlu0 %v801, 18
      %v2154 = vpop.permute.xlu0 %2153
      %2155 = vrot.lane.b32.xlu0 %v802, 18
      %v2156 = vpop.permute.xlu0 %2155
      %2157 = vrot.lane.b32.xlu0 %v803, 18
      %v2158 = vpop.permute.xlu0 %2157
      %2159 = vrot.lane.b32.xlu0 %v804, 18
      %v2160 = vpop.permute.xlu0 %2159
      %2161 = vrot.lane.b32.xlu0 %v805, 18
      %v2162 = vpop.permute.xlu0 %2161
      %2163 = vrot.lane.b32.xlu0 %v806, 18
      %v2164 = vpop.permute.xlu0 %2163
      %2165 = vrot.lane.b32.xlu0 %v807, 18
      %v2166 = vpop.permute.xlu0 %2165
      %2167 = vrot.lane.b32.xlu0 %v808, 18
      %v2168 = vpop.permute.xlu0 %2167
      %2169 = vrot.lane.b32.xlu0 %v809, 18
      %v2170 = vpop.permute.xlu0 %2169
      %2171 = vrot.lane.b32.xlu0 %v810, 18
      %v2172 = vpop.permute.xlu0 %2171
      %2173 = vrot.lane.b32.xlu0 %v811, 18
      %v2174 = vpop.permute.xlu0 %2173
      %2175 = vrot.lane.b32.xlu0 %v812, 18
      %v2176 = vpop.permute.xlu0 %2175
      %2177 = vrot.lane.b32.xlu0 %v813, 18
      %v2178 = vpop.permute.xlu0 %2177
      %2179 = vrot.lane.b32.xlu0 %v814, 18
      %v2180 = vpop.permute.xlu0 %2179
      %2181 = vrot.lane.b32.xlu0 %v815, 18
      %v2182 = vpop.permute.xlu0 %2181
      %2183 = vrot.lane.b32.xlu0 %v816, 18
      %v2184 = vpop.permute.xlu0 %2183
      %2185 = vrot.lane.b32.xlu0 %v1673, 18
      %v2186 = vpop.permute.xlu0 %2185
      %2187 = vrot.lane.b32.xlu0 %v1674, 18
      %v2188 = vpop.permute.xlu0 %2187
      %2189 = vrot.lane.b32.xlu0 %v2071, 18
      %v2190 = vpop.permute.xlu0 %2189
      %2191 = vrot.lane.b32.xlu0 %v2072, 18
      %v2192 = vpop.permute.xlu0 %2191
      %v2194 = vunpack.c.l.b16 %v516
      %v2195 = vpack.c.b16 %v2194, %v2194
      %v2197 = vshll.u32 %v2071, 16
      %v2199 = vrot.slane %v2197, 1
      %v2200 = vsel %vm820, %v1813, %v2199
      %v2201 = vshrl.u32 %v2071, 16
      %v2203 = vor.u32 %v2201, %v2199
      %v2205 = vshll.u32 %v2072, 16
      %v2207 = vrot.slane %v2205, 1
      %v2208 = vsel %vm820, %v2203, %v2207
      %v2209 = vshrl.u32 %v2072, 16
      %v2211 = vor.u32 %v2209, %v2207
      %v2213 = vshll.u32 %v2195, 16
      %v2215 = vrot.slane %v2213, 1
      %v2216 = vsel %vm820, %v2211, %v2215
      %2217 = vrot.lane.b32.xlu0 %v864, 21
      %v2218 = vpop.permute.xlu0 %2217
      %2219 = vrot.lane.b32.xlu0 %v872, 21
      %v2220 = vpop.permute.xlu0 %2219
      %2221 = vrot.lane.b32.xlu0 %v880, 21
      %v2222 = vpop.permute.xlu0 %2221
      %2223 = vrot.lane.b32.xlu0 %v888, 21
      %v2224 = vpop.permute.xlu0 %2223
      %2225 = vrot.lane.b32.xlu0 %v896, 21
      %v2226 = vpop.permute.xlu0 %2225
      %2227 = vrot.lane.b32.xlu0 %v904, 21
      %v2228 = vpop.permute.xlu0 %2227
      %2229 = vrot.lane.b32.xlu0 %v912, 21
      %v2230 = vpop.permute.xlu0 %2229
      %2231 = vrot.lane.b32.xlu0 %v920, 21
      %v2232 = vpop.permute.xlu0 %2231
      %2233 = vrot.lane.b32.xlu0 %v928, 21
      %v2234 = vpop.permute.xlu0 %2233
      %2235 = vrot.lane.b32.xlu0 %v936, 21
      %v2236 = vpop.permute.xlu0 %2235
      %2237 = vrot.lane.b32.xlu0 %v944, 21
      %v2238 = vpop.permute.xlu0 %2237
      %2239 = vrot.lane.b32.xlu0 %v952, 21
      %v2240 = vpop.permute.xlu0 %2239
      %2241 = vrot.lane.b32.xlu0 %v960, 21
      %v2242 = vpop.permute.xlu0 %2241
      %2243 = vrot.lane.b32.xlu0 %v968, 21
      %v2244 = vpop.permute.xlu0 %2243
      %2245 = vrot.lane.b32.xlu0 %v976, 21
      %v2246 = vpop.permute.xlu0 %2245
      %2247 = vrot.lane.b32.xlu0 %v984, 21
      %v2248 = vpop.permute.xlu0 %2247
      %2249 = vrot.lane.b32.xlu0 %v992, 21
      %v2250 = vpop.permute.xlu0 %2249
      %2251 = vrot.lane.b32.xlu0 %v1000, 21
      %v2252 = vpop.permute.xlu0 %2251
      %2253 = vrot.lane.b32.xlu0 %v1008, 21
      %v2254 = vpop.permute.xlu0 %2253
      %2255 = vrot.lane.b32.xlu0 %v1016, 21
      %v2256 = vpop.permute.xlu0 %2255
      %2257 = vrot.lane.b32.xlu0 %v1024, 21
      %v2258 = vpop.permute.xlu0 %2257
      %2259 = vrot.lane.b32.xlu0 %v1032, 21
      %v2260 = vpop.permute.xlu0 %2259
      %2261 = vrot.lane.b32.xlu0 %v1040, 21
      %v2262 = vpop.permute.xlu0 %2261
      %2263 = vrot.lane.b32.xlu0 %v1048, 21
      %v2264 = vpop.permute.xlu0 %2263
      %2265 = vrot.lane.b32.xlu0 %v1056, 21
      %v2266 = vpop.permute.xlu0 %2265
      %2267 = vrot.lane.b32.xlu0 %v1064, 21
      %v2268 = vpop.permute.xlu0 %2267
      %2269 = vrot.lane.b32.xlu0 %v1072, 21
      %v2270 = vpop.permute.xlu0 %2269
      %2271 = vrot.lane.b32.xlu0 %v1080, 21
      %v2272 = vpop.permute.xlu0 %2271
      %2273 = vrot.lane.b32.xlu0 %v1088, 21
      %v2274 = vpop.permute.xlu0 %2273
      %2275 = vrot.lane.b32.xlu0 %v1096, 21
      %v2276 = vpop.permute.xlu0 %2275
      %2277 = vrot.lane.b32.xlu0 %v1104, 21
      %v2278 = vpop.permute.xlu0 %2277
      %2279 = vrot.lane.b32.xlu0 %v1112, 21
      %v2280 = vpop.permute.xlu0 %2279
      %2281 = vrot.lane.b32.xlu0 %v1120, 21
      %v2282 = vpop.permute.xlu0 %2281
      %2283 = vrot.lane.b32.xlu0 %v1128, 21
      %v2284 = vpop.permute.xlu0 %2283
      %2285 = vrot.lane.b32.xlu0 %v1136, 21
      %v2286 = vpop.permute.xlu0 %2285
      %2287 = vrot.lane.b32.xlu0 %v1144, 21
      %v2288 = vpop.permute.xlu0 %2287
      %2289 = vrot.lane.b32.xlu0 %v1152, 21
      %v2290 = vpop.permute.xlu0 %2289
      %2291 = vrot.lane.b32.xlu0 %v1160, 21
      %v2292 = vpop.permute.xlu0 %2291
      %2293 = vrot.lane.b32.xlu0 %v1168, 21
      %v2294 = vpop.permute.xlu0 %2293
      %2295 = vrot.lane.b32.xlu0 %v1176, 21
      %v2296 = vpop.permute.xlu0 %2295
      %2297 = vrot.lane.b32.xlu0 %v1184, 21
      %v2298 = vpop.permute.xlu0 %2297
      %2299 = vrot.lane.b32.xlu0 %v1192, 21
      %v2300 = vpop.permute.xlu0 %2299
      %2301 = vrot.lane.b32.xlu0 %v1200, 21
      %v2302 = vpop.permute.xlu0 %2301
      %2303 = vrot.lane.b32.xlu0 %v1208, 21
      %v2304 = vpop.permute.xlu0 %2303
      %2305 = vrot.lane.b32.xlu0 %v1216, 21
      %v2306 = vpop.permute.xlu0 %2305
      %2307 = vrot.lane.b32.xlu0 %v1224, 21
      %v2308 = vpop.permute.xlu0 %2307
      %2309 = vrot.lane.b32.xlu0 %v1232, 21
      %v2310 = vpop.permute.xlu0 %2309
      %2311 = vrot.lane.b32.xlu0 %v1240, 21
      %v2312 = vpop.permute.xlu0 %2311
      %2313 = vrot.lane.b32.xlu0 %v1248, 21
      %v2314 = vpop.permute.xlu0 %2313
      %2315 = vrot.lane.b32.xlu0 %v1256, 21
      %v2316 = vpop.permute.xlu0 %2315
      %2317 = vrot.lane.b32.xlu0 %v1264, 21
      %v2318 = vpop.permute.xlu0 %2317
      %2319 = vrot.lane.b32.xlu0 %v1272, 21
      %v2320 = vpop.permute.xlu0 %2319
      %2321 = vrot.lane.b32.xlu0 %v1280, 21
      %v2322 = vpop.permute.xlu0 %2321
      %2323 = vrot.lane.b32.xlu0 %v1288, 21
      %v2324 = vpop.permute.xlu0 %2323
      %2325 = vrot.lane.b32.xlu0 %v1296, 21
      %v2326 = vpop.permute.xlu0 %2325
      %2327 = vrot.lane.b32.xlu0 %v1802, 21
      %v2328 = vpop.permute.xlu0 %2327
      %2329 = vrot.lane.b32.xlu0 %v1810, 21
      %v2330 = vpop.permute.xlu0 %2329
      %2331 = vrot.lane.b32.xlu0 %v2200, 21
      %v2332 = vpop.permute.xlu0 %2331
      %2333 = vrot.lane.b32.xlu0 %v2208, 21
      %v2334 = vpop.permute.xlu0 %2333
      %2335 = vrot.lane.b32.xlu0 %v2216, 21
      %v2336 = vpop.permute.xlu0 %2335
      %v2337 = vrot.slane %v2071, 1
      %v2338 = vsel %vm1425, %v1941, %v2337
      %v2339 = vrot.slane %v2072, 1
      %v2340 = vsel %vm1425, %v2337, %v2339
      %v2341 = vrot.slane %v2195, 1
      %v2342 = vsel %vm1425, %v2339, %v2341
      %2343 = vrot.lane.b32.xlu0 %v1436, 24
      %v2344 = vpop.permute.xlu0 %2343
      %2345 = vrot.lane.b32.xlu0 %v1438, 24
      %v2346 = vpop.permute.xlu0 %2345
      %2347 = vrot.lane.b32.xlu0 %v1440, 24
      %v2348 = vpop.permute.xlu0 %2347
      %2349 = vrot.lane.b32.xlu0 %v1442, 24
      %v2350 = vpop.permute.xlu0 %2349
      %2351 = vrot.lane.b32.xlu0 %v1444, 24
      %v2352 = vpop.permute.xlu0 %2351
      %2353 = vrot.lane.b32.xlu0 %v1446, 24
      %v2354 = vpop.permute.xlu0 %2353
      %2355 = vrot.lane.b32.xlu0 %v1448, 24
      %v2356 = vpop.permute.xlu0 %2355
      %2357 = vrot.lane.b32.xlu0 %v1450, 24
      %v2358 = vpop.permute.xlu0 %2357
      %2359 = vrot.lane.b32.xlu0 %v1452, 24
      %v2360 = vpop.permute.xlu0 %2359
      %2361 = vrot.lane.b32.xlu0 %v1454, 24
      %v2362 = vpop.permute.xlu0 %2361
      %2363 = vrot.lane.b32.xlu0 %v1456, 24
      %v2364 = vpop.permute.xlu0 %2363
      %2365 = vrot.lane.b32.xlu0 %v1458, 24
      %v2366 = vpop.permute.xlu0 %2365
      %2367 = vrot.lane.b32.xlu0 %v1460, 24
      %v2368 = vpop.permute.xlu0 %2367
      %2369 = vrot.lane.b32.xlu0 %v1462, 24
      %v2370 = vpop.permute.xlu0 %2369
      %2371 = vrot.lane.b32.xlu0 %v1464, 24
      %v2372 = vpop.permute.xlu0 %2371
      %2373 = vrot.lane.b32.xlu0 %v1466, 24
      %v2374 = vpop.permute.xlu0 %2373
      %2375 = vrot.lane.b32.xlu0 %v1468, 24
      %v2376 = vpop.permute.xlu0 %2375
      %2377 = vrot.lane.b32.xlu0 %v1470, 24
      %v2378 = vpop.permute.xlu0 %2377
      %2379 = vrot.lane.b32.xlu0 %v1472, 24
      %v2380 = vpop.permute.xlu0 %2379
      %2381 = vrot.lane.b32.xlu0 %v1474, 24
      %v2382 = vpop.permute.xlu0 %2381
      %2383 = vrot.lane.b32.xlu0 %v1476, 24
      %v2384 = vpop.permute.xlu0 %2383
      %2385 = vrot.lane.b32.xlu0 %v1478, 24
      %v2386 = vpop.permute.xlu0 %2385
      %2387 = vrot.lane.b32.xlu0 %v1480, 24
      %v2388 = vpop.permute.xlu0 %2387
      %2389 = vrot.lane.b32.xlu0 %v1482, 24
      %v2390 = vpop.permute.xlu0 %2389
      %2391 = vrot.lane.b32.xlu0 %v1484, 24
      %v2392 = vpop.permute.xlu0 %2391
      %2393 = vrot.lane.b32.xlu0 %v1486, 24
      %v2394 = vpop.permute.xlu0 %2393
      %2395 = vrot.lane.b32.xlu0 %v1488, 24
      %v2396 = vpop.permute.xlu0 %2395
      %2397 = vrot.lane.b32.xlu0 %v1490, 24
      %v2398 = vpop.permute.xlu0 %2397
      %2399 = vrot.lane.b32.xlu0 %v1492, 24
      %v2400 = vpop.permute.xlu0 %2399
      %2401 = vrot.lane.b32.xlu0 %v1494, 24
      %v2402 = vpop.permute.xlu0 %2401
      %2403 = vrot.lane.b32.xlu0 %v1496, 24
      %v2404 = vpop.permute.xlu0 %2403
      %2405 = vrot.lane.b32.xlu0 %v1498, 24
      %v2406 = vpop.permute.xlu0 %2405
      %2407 = vrot.lane.b32.xlu0 %v1500, 24
      %v2408 = vpop.permute.xlu0 %2407
      %2409 = vrot.lane.b32.xlu0 %v1502, 24
      %v2410 = vpop.permute.xlu0 %2409
      %2411 = vrot.lane.b32.xlu0 %v1504, 24
      %v2412 = vpop.permute.xlu0 %2411
      %2413 = vrot.lane.b32.xlu0 %v1506, 24
      %v2414 = vpop.permute.xlu0 %2413
      %2415 = vrot.lane.b32.xlu0 %v1508, 24
      %v2416 = vpop.permute.xlu0 %2415
      %2417 = vrot.lane.b32.xlu0 %v1510, 24
      %v2418 = vpop.permute.xlu0 %2417
      %2419 = vrot.lane.b32.xlu0 %v1512, 24
      %v2420 = vpop.permute.xlu0 %2419
      %2421 = vrot.lane.b32.xlu0 %v1514, 24
      %v2422 = vpop.permute.xlu0 %2421
      %2423 = vrot.lane.b32.xlu0 %v1516, 24
      %v2424 = vpop.permute.xlu0 %2423
      %2425 = vrot.lane.b32.xlu0 %v1518, 24
      %v2426 = vpop.permute.xlu0 %2425
      %2427 = vrot.lane.b32.xlu0 %v1520, 24
      %v2428 = vpop.permute.xlu0 %2427
      %2429 = vrot.lane.b32.xlu0 %v1522, 24
      %v2430 = vpop.permute.xlu0 %2429
      %2431 = vrot.lane.b32.xlu0 %v1524, 24
      %v2432 = vpop.permute.xlu0 %2431
      %2433 = vrot.lane.b32.xlu0 %v1526, 24
      %v2434 = vpop.permute.xlu0 %2433
      %2435 = vrot.lane.b32.xlu0 %v1528, 24
      %v2436 = vpop.permute.xlu0 %2435
      %2437 = vrot.lane.b32.xlu0 %v1530, 24
      %v2438 = vpop.permute.xlu0 %2437
      %2439 = vrot.lane.b32.xlu0 %v1532, 24
      %v2440 = vpop.permute.xlu0 %2439
      %2441 = vrot.lane.b32.xlu0 %v1534, 24
      %v2442 = vpop.permute.xlu0 %2441
      %2443 = vrot.lane.b32.xlu0 %v1536, 24
      %v2444 = vpop.permute.xlu0 %2443
      %2445 = vrot.lane.b32.xlu0 %v1538, 24
      %v2446 = vpop.permute.xlu0 %2445
      %2447 = vrot.lane.b32.xlu0 %v1540, 24
      %v2448 = vpop.permute.xlu0 %2447
      %2449 = vrot.lane.b32.xlu0 %v1542, 24
      %v2450 = vpop.permute.xlu0 %2449
      %2451 = vrot.lane.b32.xlu0 %v1544, 24
      %v2452 = vpop.permute.xlu0 %2451
      %2453 = vrot.lane.b32.xlu0 %v1940, 24
      %v2454 = vpop.permute.xlu0 %2453
      %2455 = vrot.lane.b32.xlu0 %v1942, 24
      %v2456 = vpop.permute.xlu0 %2455
      %2457 = vrot.lane.b32.xlu0 %v2338, 24
      %v2458 = vpop.permute.xlu0 %2457
      %2459 = vrot.lane.b32.xlu0 %v2340, 24
      %v2460 = vpop.permute.xlu0 %2459
      %2461 = vrot.lane.b32.xlu0 %v2342, 24
      %v2462 = vpop.permute.xlu0 %2461
      %vm2463 = vcmask 23552
      %v2465 = vsel %vm2463, %v757, %v1306
      %v2467 = vsel %vm2463, %v758, %v1308
      %v2469 = vsel %vm2463, %v759, %v1310
      %v2471 = vsel %vm2463, %v760, %v1312
      %v2473 = vsel %vm2463, %v761, %v1314
      %v2475 = vsel %vm2463, %v762, %v1316
      %v2477 = vsel %vm2463, %v763, %v1318
      %v2479 = vsel %vm2463, %v764, %v1320
      %v2481 = vsel %vm2463, %v765, %v1322
      %v2483 = vsel %vm2463, %v766, %v1324
      %v2485 = vsel %vm2463, %v767, %v1326
      %v2487 = vsel %vm2463, %v768, %v1328
      %v2489 = vsel %vm2463, %v769, %v1330
      %v2491 = vsel %vm2463, %v770, %v1332
      %v2493 = vsel %vm2463, %v771, %v1334
      %v2495 = vsel %vm2463, %v772, %v1336
      %v2497 = vsel %vm2463, %v773, %v1338
      %v2499 = vsel %vm2463, %v774, %v1340
      %v2501 = vsel %vm2463, %v775, %v1342
      %v2503 = vsel %vm2463, %v776, %v1344
      %v2505 = vsel %vm2463, %v777, %v1346
      %v2507 = vsel %vm2463, %v778, %v1348
      %v2509 = vsel %vm2463, %v779, %v1350
      %v2511 = vsel %vm2463, %v780, %v1352
      %v2513 = vsel %vm2463, %v781, %v1354
      %v2515 = vsel %vm2463, %v782, %v1356
      %v2517 = vsel %vm2463, %v783, %v1358
      %v2519 = vsel %vm2463, %v784, %v1360
      %v2521 = vsel %vm2463, %v785, %v1362
      %v2523 = vsel %vm2463, %v786, %v1364
      %v2525 = vsel %vm2463, %v787, %v1366
      %v2527 = vsel %vm2463, %v788, %v1368
      %v2529 = vsel %vm2463, %v789, %v1370
      %v2531 = vsel %vm2463, %v790, %v1372
      %v2533 = vsel %vm2463, %v791, %v1374
      %v2535 = vsel %vm2463, %v792, %v1376
      %v2537 = vsel %vm2463, %v793, %v1378
      %v2539 = vsel %vm2463, %v794, %v1380
      %v2541 = vsel %vm2463, %v795, %v1382
      %v2543 = vsel %vm2463, %v796, %v1384
      %v2545 = vsel %vm2463, %v797, %v1386
      %v2547 = vsel %vm2463, %v798, %v1388
      %v2549 = vsel %vm2463, %v799, %v1390
      %v2551 = vsel %vm2463, %v800, %v1392
      %v2553 = vsel %vm2463, %v801, %v1394
      %v2555 = vsel %vm2463, %v802, %v1396
      %v2557 = vsel %vm2463, %v803, %v1398
      %v2559 = vsel %vm2463, %v804, %v1400
      %v2561 = vsel %vm2463, %v805, %v1402
      %v2563 = vsel %vm2463, %v806, %v1404
      %v2565 = vsel %vm2463, %v807, %v1406
      %v2567 = vsel %vm2463, %v808, %v1408
      %v2569 = vsel %vm2463, %v809, %v1410
      %v2571 = vsel %vm2463, %v810, %v1412
      %v2573 = vsel %vm2463, %v811, %v1414
      %v2575 = vsel %vm2463, %v812, %v1416
      %v2577 = vsel %vm2463, %v813, %v1418
      %v2579 = vsel %vm2463, %v814, %v1420
      %v2581 = vsel %vm2463, %v815, %v1422
      %v2583 = vsel %vm2463, %v816, %v1424
      %vm2584 = vcmask 48128
      %v2586 = vsel %vm2584, %v2465, %v1548
      %v2588 = vsel %vm2584, %v2467, %v1550
      %v2590 = vsel %vm2584, %v2469, %v1552
      %v2592 = vsel %vm2584, %v2471, %v1554
      %v2594 = vsel %vm2584, %v2473, %v1556
      %v2596 = vsel %vm2584, %v2475, %v1558
      %v2598 = vsel %vm2584, %v2477, %v1560
      %v2600 = vsel %vm2584, %v2479, %v1562
      %v2602 = vsel %vm2584, %v2481, %v1564
      %v2604 = vsel %vm2584, %v2483, %v1566
      %v2606 = vsel %vm2584, %v2485, %v1568
      %v2608 = vsel %vm2584, %v2487, %v1570
      %v2610 = vsel %vm2584, %v2489, %v1572
      %v2612 = vsel %vm2584, %v2491, %v1574
      %v2614 = vsel %vm2584, %v2493, %v1576
      %v2616 = vsel %vm2584, %v2495, %v1578
      %v2618 = vsel %vm2584, %v2497, %v1580
      %v2620 = vsel %vm2584, %v2499, %v1582
      %v2622 = vsel %vm2584, %v2501, %v1584
      %v2624 = vsel %vm2584, %v2503, %v1586
      %v2626 = vsel %vm2584, %v2505, %v1588
      %v2628 = vsel %vm2584, %v2507, %v1590
      %v2630 = vsel %vm2584, %v2509, %v1592
      %v2632 = vsel %vm2584, %v2511, %v1594
      %v2634 = vsel %vm2584, %v2513, %v1596
      %v2636 = vsel %vm2584, %v2515, %v1598
      %v2638 = vsel %vm2584, %v2517, %v1600
      %v2640 = vsel %vm2584, %v2519, %v1602
      %v2642 = vsel %vm2584, %v2521, %v1604
      %v2644 = vsel %vm2584, %v2523, %v1606
      %v2646 = vsel %vm2584, %v2525, %v1608
      %v2648 = vsel %vm2584, %v2527, %v1610
      %v2650 = vsel %vm2584, %v2529, %v1612
      %v2652 = vsel %vm2584, %v2531, %v1614
      %v2654 = vsel %vm2584, %v2533, %v1616
      %v2656 = vsel %vm2584, %v2535, %v1618
      %v2658 = vsel %vm2584, %v2537, %v1620
      %v2660 = vsel %vm2584, %v2539, %v1622
      %v2662 = vsel %vm2584, %v2541, %v1624
      %v2664 = vsel %vm2584, %v2543, %v1626
      %v2666 = vsel %vm2584, %v2545, %v1628
      %v2668 = vsel %vm2584, %v2547, %v1630
      %v2670 = vsel %vm2584, %v2549, %v1632
      %v2672 = vsel %vm2584, %v2551, %v1634
      %v2674 = vsel %vm2584, %v2553, %v1636
      %v2676 = vsel %vm2584, %v2555, %v1638
      %v2678 = vsel %vm2584, %v2557, %v1640
      %v2680 = vsel %vm2584, %v2559, %v1642
      %v2682 = vsel %vm2584, %v2561, %v1644
      %v2684 = vsel %vm2584, %v2563, %v1646
      %v2686 = vsel %vm2584, %v2565, %v1648
      %v2688 = vsel %vm2584, %v2567, %v1650
      %v2690 = vsel %vm2584, %v2569, %v1652
      %v2692 = vsel %vm2584, %v2571, %v1654
      %v2694 = vsel %vm2584, %v2573, %v1656
      %v2696 = vsel %vm2584, %v2575, %v1658
      %v2698 = vsel %vm2584, %v2577, %v1660
      %v2700 = vsel %vm2584, %v2579, %v1662
      %v2702 = vsel %vm2584, %v2581, %v1664
      %v2704 = vsel %vm2584, %v2583, %v1666
      %vm2705 = vcmask 72704
      %v2707 = vsel %vm2705, %v2586, %v1676
      %v2709 = vsel %vm2705, %v2588, %v1678
      %v2711 = vsel %vm2705, %v2590, %v1680
      %v2713 = vsel %vm2705, %v2592, %v1682
      %v2715 = vsel %vm2705, %v2594, %v1684
      %v2717 = vsel %vm2705, %v2596, %v1686
      %v2719 = vsel %vm2705, %v2598, %v1688
      %v2721 = vsel %vm2705, %v2600, %v1690
      %v2723 = vsel %vm2705, %v2602, %v1692
      %v2725 = vsel %vm2705, %v2604, %v1694
      %v2727 = vsel %vm2705, %v2606, %v1696
      %v2729 = vsel %vm2705, %v2608, %v1698
      %v2731 = vsel %vm2705, %v2610, %v1700
      %v2733 = vsel %vm2705, %v2612, %v1702
      %v2735 = vsel %vm2705, %v2614, %v1704
      %v2737 = vsel %vm2705, %v2616, %v1706
      %v2739 = vsel %vm2705, %v2618, %v1708
      %v2741 = vsel %vm2705, %v2620, %v1710
      %v2743 = vsel %vm2705, %v2622, %v1712
      %v2745 = vsel %vm2705, %v2624, %v1714
      %v2747 = vsel %vm2705, %v2626, %v1716
      %v2749 = vsel %vm2705, %v2628, %v1718
      %v2751 = vsel %vm2705, %v2630, %v1720
      %v2753 = vsel %vm2705, %v2632, %v1722
      %v2755 = vsel %vm2705, %v2634, %v1724
      %v2757 = vsel %vm2705, %v2636, %v1726
      %v2759 = vsel %vm2705, %v2638, %v1728
      %v2761 = vsel %vm2705, %v2640, %v1730
      %v2763 = vsel %vm2705, %v2642, %v1732
      %v2765 = vsel %vm2705, %v2644, %v1734
      %v2767 = vsel %vm2705, %v2646, %v1736
      %v2769 = vsel %vm2705, %v2648, %v1738
      %v2771 = vsel %vm2705, %v2650, %v1740
      %v2773 = vsel %vm2705, %v2652, %v1742
      %v2775 = vsel %vm2705, %v2654, %v1744
      %v2777 = vsel %vm2705, %v2656, %v1746
      %v2779 = vsel %vm2705, %v2658, %v1748
      %v2781 = vsel %vm2705, %v2660, %v1750
      %v2783 = vsel %vm2705, %v2662, %v1752
      %v2785 = vsel %vm2705, %v2664, %v1754
      %v2787 = vsel %vm2705, %v2666, %v1756
      %v2789 = vsel %vm2705, %v2668, %v1758
      %v2791 = vsel %vm2705, %v2670, %v1760
      %v2793 = vsel %vm2705, %v2672, %v1762
      %v2795 = vsel %vm2705, %v2674, %v1764
      %v2797 = vsel %vm2705, %v2676, %v1766
      %v2799 = vsel %vm2705, %v2678, %v1768
      %v2801 = vsel %vm2705, %v2680, %v1770
      %v2803 = vsel %vm2705, %v2682, %v1772
      %v2805 = vsel %vm2705, %v2684, %v1774
      %v2807 = vsel %vm2705, %v2686, %v1776
      %v2809 = vsel %vm2705, %v2688, %v1778
      %v2811 = vsel %vm2705, %v2690, %v1780
      %v2813 = vsel %vm2705, %v2692, %v1782
      %v2815 = vsel %vm2705, %v2694, %v1784
      %v2817 = vsel %vm2705, %v2696, %v1786
      %v2819 = vsel %vm2705, %v2698, %v1788
      %v2821 = vsel %vm2705, %v2700, %v1790
      %v2823 = vsel %vm2705, %v2702, %v1792
      %v2825 = vsel %vm2705, %v2704, %v1794
      %vm2826 = vcmask 97280
      %v2828 = vsel %vm2826, %v2707, %v1820
      %v2830 = vsel %vm2826, %v2709, %v1822
      %v2832 = vsel %vm2826, %v2711, %v1824
      %v2834 = vsel %vm2826, %v2713, %v1826
      %v2836 = vsel %vm2826, %v2715, %v1828
      %v2838 = vsel %vm2826, %v2717, %v1830
      %v2840 = vsel %vm2826, %v2719, %v1832
      %v2842 = vsel %vm2826, %v2721, %v1834
      %v2844 = vsel %vm2826, %v2723, %v1836
      %v2846 = vsel %vm2826, %v2725, %v1838
      %v2848 = vsel %vm2826, %v2727, %v1840
      %v2850 = vsel %vm2826, %v2729, %v1842
      %v2852 = vsel %vm2826, %v2731, %v1844
      %v2854 = vsel %vm2826, %v2733, %v1846
      %v2856 = vsel %vm2826, %v2735, %v1848
      %v2858 = vsel %vm2826, %v2737, %v1850
      %v2860 = vsel %vm2826, %v2739, %v1852
      %v2862 = vsel %vm2826, %v2741, %v1854
      %v2864 = vsel %vm2826, %v2743, %v1856
      %v2866 = vsel %vm2826, %v2745, %v1858
      %v2868 = vsel %vm2826, %v2747, %v1860
      %v2870 = vsel %vm2826, %v2749, %v1862
      %v2872 = vsel %vm2826, %v2751, %v1864
      %v2874 = vsel %vm2826, %v2753, %v1866
      %v2876 = vsel %vm2826, %v2755, %v1868
      %v2878 = vsel %vm2826, %v2757, %v1870
      %v2880 = vsel %vm2826, %v2759, %v1872
      %v2882 = vsel %vm2826, %v2761, %v1874
      %v2884 = vsel %vm2826, %v2763, %v1876
      %v2886 = vsel %vm2826, %v2765, %v1878
      %v2888 = vsel %vm2826, %v2767, %v1880
      %v2890 = vsel %vm2826, %v2769, %v1882
      %v2892 = vsel %vm2826, %v2771, %v1884
      %v2894 = vsel %vm2826, %v2773, %v1886
      %v2896 = vsel %vm2826, %v2775, %v1888
      %v2898 = vsel %vm2826, %v2777, %v1890
      %v2900 = vsel %vm2826, %v2779, %v1892
      %v2902 = vsel %vm2826, %v2781, %v1894
      %v2904 = vsel %vm2826, %v2783, %v1896
      %v2906 = vsel %vm2826, %v2785, %v1898
      %v2908 = vsel %vm2826, %v2787, %v1900
      %v2910 = vsel %vm2826, %v2789, %v1902
      %v2912 = vsel %vm2826, %v2791, %v1904
      %v2914 = vsel %vm2826, %v2793, %v1906
      %v2916 = vsel %vm2826, %v2795, %v1908
      %v2918 = vsel %vm2826, %v2797, %v1910
      %v2920 = vsel %vm2826, %v2799, %v1912
      %v2922 = vsel %vm2826, %v2801, %v1914
      %v2924 = vsel %vm2826, %v2803, %v1916
      %v2926 = vsel %vm2826, %v2805, %v1918
      %v2928 = vsel %vm2826, %v2807, %v1920
      %v2930 = vsel %vm2826, %v2809, %v1922
      %v2932 = vsel %vm2826, %v2811, %v1924
      %v2934 = vsel %vm2826, %v2813, %v1926
      %v2936 = vsel %vm2826, %v2815, %v1928
      %v2938 = vsel %vm2826, %v2817, %v1930
      %v2940 = vsel %vm2826, %v2819, %v1932
      %v2942 = vsel %vm2826, %v2821, %v1934
      %v2944 = vsel %vm2826, %v2823, %v1936
      %v2946 = vsel %vm2826, %v2825, %v1938
      %vm2947 = vcmask 121856
      %v2949 = vsel %vm2947, %v2828, %v1946
      %v2951 = vsel %vm2947, %v2830, %v1948
      %v2953 = vsel %vm2947, %v2832, %v1950
      %v2955 = vsel %vm2947, %v2834, %v1952
      %v2957 = vsel %vm2947, %v2836, %v1954
      %v2959 = vsel %vm2947, %v2838, %v1956
      %v2961 = vsel %vm2947, %v2840, %v1958
      %v2963 = vsel %vm2947, %v2842, %v1960
      %v2965 = vsel %vm2947, %v2844, %v1962
      %v2967 = vsel %vm2947, %v2846, %v1964
      %v2969 = vsel %vm2947, %v2848, %v1966
      %v2971 = vsel %vm2947, %v2850, %v1968
      %v2973 = vsel %vm2947, %v2852, %v1970
      %v2975 = vsel %vm2947, %v2854, %v1972
      %v2977 = vsel %vm2947, %v2856, %v1974
      %v2979 = vsel %vm2947, %v2858, %v1976
      %v2981 = vsel %vm2947, %v2860, %v1978
      %v2983 = vsel %vm2947, %v2862, %v1980
      %v2985 = vsel %vm2947, %v2864, %v1982
      %v2987 = vsel %vm2947, %v2866, %v1984
      %v2989 = vsel %vm2947, %v2868, %v1986
      %v2991 = vsel %vm2947, %v2870, %v1988
      %v2993 = vsel %vm2947, %v2872, %v1990
      %v2995 = vsel %vm2947, %v2874, %v1992
      %v2997 = vsel %vm2947, %v2876, %v1994
      %v2999 = vsel %vm2947, %v2878, %v1996
      %v3001 = vsel %vm2947, %v2880, %v1998
      %v3003 = vsel %vm2947, %v2882, %v2000
      %v3005 = vsel %vm2947, %v2884, %v2002
      %v3007 = vsel %vm2947, %v2886, %v2004
      %v3009 = vsel %vm2947, %v2888, %v2006
      %v3011 = vsel %vm2947, %v2890, %v2008
      %v3013 = vsel %vm2947, %v2892, %v2010
      %v3015 = vsel %vm2947, %v2894, %v2012
      %v3017 = vsel %vm2947, %v2896, %v2014
      %v3019 = vsel %vm2947, %v2898, %v2016
      %v3021 = vsel %vm2947, %v2900, %v2018
      %v3023 = vsel %vm2947, %v2902, %v2020
      %v3025 = vsel %vm2947, %v2904, %v2022
      %v3027 = vsel %vm2947, %v2906, %v2024
      %v3029 = vsel %vm2947, %v2908, %v2026
      %v3031 = vsel %vm2947, %v2910, %v2028
      %v3033 = vsel %vm2947, %v2912, %v2030
      %v3035 = vsel %vm2947, %v2914, %v2032
      %v3037 = vsel %vm2947, %v2916, %v2034
      %v3039 = vsel %vm2947, %v2918, %v2036
      %v3041 = vsel %vm2947, %v2920, %v2038
      %v3043 = vsel %vm2947, %v2922, %v2040
      %v3045 = vsel %vm2947, %v2924, %v2042
      %v3047 = vsel %vm2947, %v2926, %v2044
      %v3049 = vsel %vm2947, %v2928, %v2046
      %v3051 = vsel %vm2947, %v2930, %v2048
      %v3053 = vsel %vm2947, %v2932, %v2050
      %v3055 = vsel %vm2947, %v2934, %v2052
      %v3057 = vsel %vm2947, %v2936, %v2054
      %v3059 = vsel %vm2947, %v2938, %v2056
      %v3061 = vsel %vm2947, %v2940, %v2058
      %v3063 = vsel %vm2947, %v2942, %v2060
      %v3065 = vsel %vm2947, %v2944, %v2062
      %v3067 = vsel %vm2947, %v2946, %v2064
      %vm3068 = vcmask 146432
      %v3070 = vsel %vm3068, %v2949, %v2074
      %v3072 = vsel %vm3068, %v2951, %v2076
      %v3074 = vsel %vm3068, %v2953, %v2078
      %v3076 = vsel %vm3068, %v2955, %v2080
      %v3078 = vsel %vm3068, %v2957, %v2082
      %v3080 = vsel %vm3068, %v2959, %v2084
      %v3082 = vsel %vm3068, %v2961, %v2086
      %v3084 = vsel %vm3068, %v2963, %v2088
      %v3086 = vsel %vm3068, %v2965, %v2090
      %v3088 = vsel %vm3068, %v2967, %v2092
      %v3090 = vsel %vm3068, %v2969, %v2094
      %v3092 = vsel %vm3068, %v2971, %v2096
      %v3094 = vsel %vm3068, %v2973, %v2098
      %v3096 = vsel %vm3068, %v2975, %v2100
      %v3098 = vsel %vm3068, %v2977, %v2102
      %v3100 = vsel %vm3068, %v2979, %v2104
      %v3102 = vsel %vm3068, %v2981, %v2106
      %v3104 = vsel %vm3068, %v2983, %v2108
      %v3106 = vsel %vm3068, %v2985, %v2110
      %v3108 = vsel %vm3068, %v2987, %v2112
      %v3110 = vsel %vm3068, %v2989, %v2114
      %v3112 = vsel %vm3068, %v2991, %v2116
      %v3114 = vsel %vm3068, %v2993, %v2118
      %v3116 = vsel %vm3068, %v2995, %v2120
      %v3118 = vsel %vm3068, %v2997, %v2122
      %v3120 = vsel %vm3068, %v2999, %v2124
      %v3122 = vsel %vm3068, %v3001, %v2126
      %v3124 = vsel %vm3068, %v3003, %v2128
      %v3126 = vsel %vm3068, %v3005, %v2130
      %v3128 = vsel %vm3068, %v3007, %v2132
      %v3130 = vsel %vm3068, %v3009, %v2134
      %v3132 = vsel %vm3068, %v3011, %v2136
      %v3134 = vsel %vm3068, %v3013, %v2138
      %v3136 = vsel %vm3068, %v3015, %v2140
      %v3138 = vsel %vm3068, %v3017, %v2142
      %v3140 = vsel %vm3068, %v3019, %v2144
      %v3142 = vsel %vm3068, %v3021, %v2146
      %v3144 = vsel %vm3068, %v3023, %v2148
      %v3146 = vsel %vm3068, %v3025, %v2150
      %v3148 = vsel %vm3068, %v3027, %v2152
      %v3150 = vsel %vm3068, %v3029, %v2154
      %v3152 = vsel %vm3068, %v3031, %v2156
      %v3154 = vsel %vm3068, %v3033, %v2158
      %v3156 = vsel %vm3068, %v3035, %v2160
      %v3158 = vsel %vm3068, %v3037, %v2162
      %v3160 = vsel %vm3068, %v3039, %v2164
      %v3162 = vsel %vm3068, %v3041, %v2166
      %v3164 = vsel %vm3068, %v3043, %v2168
      %v3166 = vsel %vm3068, %v3045, %v2170
      %v3168 = vsel %vm3068, %v3047, %v2172
      %v3170 = vsel %vm3068, %v3049, %v2174
      %v3172 = vsel %vm3068, %v3051, %v2176
      %v3174 = vsel %vm3068, %v3053, %v2178
      %v3176 = vsel %vm3068, %v3055, %v2180
      %v3178 = vsel %vm3068, %v3057, %v2182
      %v3180 = vsel %vm3068, %v3059, %v2184
      %v3182 = vsel %vm3068, %v3061, %v2186
      %v3184 = vsel %vm3068, %v3063, %v2188
      %v3186 = vsel %vm3068, %v3065, %v2190
      %v3188 = vsel %vm3068, %v3067, %v2192
      %vm3189 = vcmask 171008
      %v3191 = vsel %vm3189, %v3070, %v2218
      %v3193 = vsel %vm3189, %v3072, %v2220
      %v3195 = vsel %vm3189, %v3074, %v2222
      %v3197 = vsel %vm3189, %v3076, %v2224
      %v3199 = vsel %vm3189, %v3078, %v2226
      %v3201 = vsel %vm3189, %v3080, %v2228
      %v3203 = vsel %vm3189, %v3082, %v2230
      %v3205 = vsel %vm3189, %v3084, %v2232
      %v3207 = vsel %vm3189, %v3086, %v2234
      %v3209 = vsel %vm3189, %v3088, %v2236
      %v3211 = vsel %vm3189, %v3090, %v2238
      %v3213 = vsel %vm3189, %v3092, %v2240
      %v3215 = vsel %vm3189, %v3094, %v2242
      %v3217 = vsel %vm3189, %v3096, %v2244
      %v3219 = vsel %vm3189, %v3098, %v2246
      %v3221 = vsel %vm3189, %v3100, %v2248
      %v3223 = vsel %vm3189, %v3102, %v2250
      %v3225 = vsel %vm3189, %v3104, %v2252
      %v3227 = vsel %vm3189, %v3106, %v2254
      %v3229 = vsel %vm3189, %v3108, %v2256
      %v3231 = vsel %vm3189, %v3110, %v2258
      %v3233 = vsel %vm3189, %v3112, %v2260
      %v3235 = vsel %vm3189, %v3114, %v2262
      %v3237 = vsel %vm3189, %v3116, %v2264
      %v3239 = vsel %vm3189, %v3118, %v2266
      %v3241 = vsel %vm3189, %v3120, %v2268
      %v3243 = vsel %vm3189, %v3122, %v2270
      %v3245 = vsel %vm3189, %v3124, %v2272
      %v3247 = vsel %vm3189, %v3126, %v2274
      %v3249 = vsel %vm3189, %v3128, %v2276
      %v3251 = vsel %vm3189, %v3130, %v2278
      %v3253 = vsel %vm3189, %v3132, %v2280
      %v3255 = vsel %vm3189, %v3134, %v2282
      %v3257 = vsel %vm3189, %v3136, %v2284
      %v3259 = vsel %vm3189, %v3138, %v2286
      %v3261 = vsel %vm3189, %v3140, %v2288
      %v3263 = vsel %vm3189, %v3142, %v2290
      %v3265 = vsel %vm3189, %v3144, %v2292
      %v3267 = vsel %vm3189, %v3146, %v2294
      %v3269 = vsel %vm3189, %v3148, %v2296
      %v3271 = vsel %vm3189, %v3150, %v2298
      %v3273 = vsel %vm3189, %v3152, %v2300
      %v3275 = vsel %vm3189, %v3154, %v2302
      %v3277 = vsel %vm3189, %v3156, %v2304
      %v3279 = vsel %vm3189, %v3158, %v2306
      %v3281 = vsel %vm3189, %v3160, %v2308
      %v3283 = vsel %vm3189, %v3162, %v2310
      %v3285 = vsel %vm3189, %v3164, %v2312
      %v3287 = vsel %vm3189, %v3166, %v2314
      %v3289 = vsel %vm3189, %v3168, %v2316
      %v3291 = vsel %vm3189, %v3170, %v2318
      %v3293 = vsel %vm3189, %v3172, %v2320
      %v3295 = vsel %vm3189, %v3174, %v2322
      %v3297 = vsel %vm3189, %v3176, %v2324
      %v3299 = vsel %vm3189, %v3178, %v2326
      %v3301 = vsel %vm3189, %v3180, %v2328
      %v3303 = vsel %vm3189, %v3182, %v2330
      %v3305 = vsel %vm3189, %v3184, %v2332
      %v3307 = vsel %vm3189, %v3186, %v2334
      %v3309 = vsel %vm3189, %v3188, %v2336
      %vm3310 = vcmask 195584
      %v3312 = vsel %vm3310, %v3191, %v2344
      %v3314 = vsel %vm3310, %v3193, %v2346
      %v3316 = vsel %vm3310, %v3195, %v2348
      %v3318 = vsel %vm3310, %v3197, %v2350
      %v3320 = vsel %vm3310, %v3199, %v2352
      %v3322 = vsel %vm3310, %v3201, %v2354
      %v3324 = vsel %vm3310, %v3203, %v2356
      %v3326 = vsel %vm3310, %v3205, %v2358
      %v3328 = vsel %vm3310, %v3207, %v2360
      %v3330 = vsel %vm3310, %v3209, %v2362
      %v3332 = vsel %vm3310, %v3211, %v2364
      %v3334 = vsel %vm3310, %v3213, %v2366
      %v3336 = vsel %vm3310, %v3215, %v2368
      %v3338 = vsel %vm3310, %v3217, %v2370
      %v3340 = vsel %vm3310, %v3219, %v2372
      %v3342 = vsel %vm3310, %v3221, %v2374
      %v3344 = vsel %vm3310, %v3223, %v2376
      %v3346 = vsel %vm3310, %v3225, %v2378
      %v3348 = vsel %vm3310, %v3227, %v2380
      %v3350 = vsel %vm3310, %v3229, %v2382
      %v3352 = vsel %vm3310, %v3231, %v2384
      %v3354 = vsel %vm3310, %v3233, %v2386
      %v3356 = vsel %vm3310, %v3235, %v2388
      %v3358 = vsel %vm3310, %v3237, %v2390
      %v3360 = vsel %vm3310, %v3239, %v2392
      %v3362 = vsel %vm3310, %v3241, %v2394
      %v3364 = vsel %vm3310, %v3243, %v2396
      %v3366 = vsel %vm3310, %v3245, %v2398
      %v3368 = vsel %vm3310, %v3247, %v2400
      %v3370 = vsel %vm3310, %v3249, %v2402
      %v3372 = vsel %vm3310, %v3251, %v2404
      %v3374 = vsel %vm3310, %v3253, %v2406
      %v3376 = vsel %vm3310, %v3255, %v2408
      %v3378 = vsel %vm3310, %v3257, %v2410
      %v3380 = vsel %vm3310, %v3259, %v2412
      %v3382 = vsel %vm3310, %v3261, %v2414
      %v3384 = vsel %vm3310, %v3263, %v2416
      %v3386 = vsel %vm3310, %v3265, %v2418
      %v3388 = vsel %vm3310, %v3267, %v2420
      %v3390 = vsel %vm3310, %v3269, %v2422
      %v3392 = vsel %vm3310, %v3271, %v2424
      %v3394 = vsel %vm3310, %v3273, %v2426
      %v3396 = vsel %vm3310, %v3275, %v2428
      %v3398 = vsel %vm3310, %v3277, %v2430
      %v3400 = vsel %vm3310, %v3279, %v2432
      %v3402 = vsel %vm3310, %v3281, %v2434
      %v3404 = vsel %vm3310, %v3283, %v2436
      %v3406 = vsel %vm3310, %v3285, %v2438
      %v3408 = vsel %vm3310, %v3287, %v2440
      %v3410 = vsel %vm3310, %v3289, %v2442
      %v3412 = vsel %vm3310, %v3291, %v2444
      %v3414 = vsel %vm3310, %v3293, %v2446
      %v3416 = vsel %vm3310, %v3295, %v2448
      %v3418 = vsel %vm3310, %v3297, %v2450
      %v3420 = vsel %vm3310, %v3299, %v2452
      %v3422 = vsel %vm3310, %v3301, %v2454
      %v3424 = vsel %vm3310, %v3303, %v2456
      %v3426 = vsel %vm3310, %v3305, %v2458
      %v3428 = vsel %vm3310, %v3307, %v2460
      %v3430 = vsel %vm3310, %v3309, %v2462
      %v3431 = vld [vmem:[%s1] sm:$0xf]
      %v3432 = vld [vmem:[%s1 + $0x4] sm:$0xf]
      %v3433 = vld [vmem:[%s1 + $0x8] sm:$0xf]
      %v3434 = vld [vmem:[%s1 + $0xc] sm:$0x3]
      %v3435 = vld [vmem:[%s2] sm:$0x1]
      %v3437 = vlaneseq
      %v3438 = vshrl.u32 %v3437, 7
      %v3439 = vsub.s32 0, %v3438
      %v3440 = vrot.slane %v3435, %v3439
      %v3446 = vunpack.c.l.b16 %v3431
      %v3447 = vunpack.c.l.b16 %v3432
      %v3448 = vunpack.c.l.b16 %v3433
      %v3449 = vunpack.c.l.b16 %v3434
      %v3450 = vpack.c.b16 %v3447, %v3446
      %v3451 = vpack.c.b16 %v3449, %v3448
      %vm3453 = vcmask 220160
      %v3454 = vsel %vm3453, %v3312, 0
      %v3456 = vsel %vm3453, %v3314, 0
      %v3458 = vsel %vm3453, %v3316, 0
      %v3460 = vsel %vm3453, %v3318, 0
      %v3462 = vsel %vm3453, %v3320, 0
      %v3464 = vsel %vm3453, %v3322, 0
      %v3466 = vsel %vm3453, %v3324, 0
      %v3468 = vsel %vm3453, %v3326, 0
      %v3470 = vsel %vm3453, %v3328, 0
      %v3472 = vsel %vm3453, %v3330, 0
      %v3474 = vsel %vm3453, %v3332, 0
      %v3476 = vsel %vm3453, %v3334, 0
      %v3478 = vsel %vm3453, %v3336, 0
      %v3480 = vsel %vm3453, %v3338, 0
      %v3482 = vsel %vm3453, %v3340, 0
      %v3484 = vsel %vm3453, %v3342, 0
      %v3486 = vsel %vm3453, %v3344, 0
      %v3488 = vsel %vm3453, %v3346, 0
      %v3490 = vsel %vm3453, %v3348, 0
      %v3492 = vsel %vm3453, %v3350, 0
      %v3494 = vsel %vm3453, %v3352, 0
      %v3496 = vsel %vm3453, %v3354, 0
      %v3498 = vsel %vm3453, %v3356, 0
      %v3500 = vsel %vm3453, %v3358, 0
      %v3502 = vsel %vm3453, %v3360, 0
      %v3504 = vsel %vm3453, %v3362, 0
      %v3506 = vsel %vm3453, %v3364, 0
      %v3508 = vsel %vm3453, %v3366, 0
      %v3510 = vsel %vm3453, %v3368, 0
      %v3512 = vsel %vm3453, %v3370, 0
      %v3514 = vsel %vm3453, %v3372, 0
      %v3516 = vsel %vm3453, %v3374, 0
      %v3518 = vsel %vm3453, %v3376, 0
      %v3520 = vsel %vm3453, %v3378, 0
      %v3522 = vsel %vm3453, %v3380, 0
      %v3524 = vsel %vm3453, %v3382, 0
      %v3526 = vsel %vm3453, %v3384, 0
      %v3528 = vsel %vm3453, %v3386, 0
      %v3530 = vsel %vm3453, %v3388, 0
      %v3532 = vsel %vm3453, %v3390, 0
      %v3534 = vsel %vm3453, %v3392, 0
      %v3536 = vsel %vm3453, %v3394, 0
      %v3538 = vsel %vm3453, %v3396, 0
      %v3540 = vsel %vm3453, %v3398, 0
      %v3542 = vsel %vm3453, %v3400, 0
      %v3544 = vsel %vm3453, %v3402, 0
      %v3546 = vsel %vm3453, %v3404, 0
      %v3548 = vsel %vm3453, %v3406, 0
      %v3550 = vsel %vm3453, %v3408, 0
      %v3552 = vsel %vm3453, %v3410, 0
      %v3554 = vsel %vm3453, %v3412, 0
      %v3556 = vsel %vm3453, %v3414, 0
      %v3558 = vsel %vm3453, %v3416, 0
      %v3560 = vsel %vm3453, %v3418, 0
      %v3562 = vsel %vm3453, %v3420, 0
      %v3564 = vsel %vm3453, %v3422, 0
      %v3566 = vsel %vm3453, %v3424, 0
      %v3568 = vsel %vm3453, %v3426, 0
      %v3570 = vsel %vm3453, %v3428, 0
      %v3572 = vsel %vm3453, %v3430, 0
      %vm3574 = vcmask 1044480
      %vm3575 = vcmask 1045504
      %v3576 = vsel %vm3574, 4294967295, 65535
      %v3577 = vsel %vm3575, %v3576, 0
      %v3579 = vand.u32 %v3451, %v3577
      %3581 = vmatprep.subr.bf16.mxu0 0
      %3582 = vmatpush1.bf16.msra.mxu0 %v3450
      %3583 = vmatprep.subr.bf16.mxu0 0
      %3584 = vmatpush1.bf16.msra.mxu0 %v3579
      %3585 = vmatprep.subr.bf16.mxu0 0
      %3586 = vmatpush1.bf16.msra.mxu0 0
      %3587 = vmatprep.subr.bf16.mxu0 0
      %3588 = vmatpush1.bf16.msra.mxu0 0
      %3589 = vmatprep.subr.bf16.mxu0 0
      %3590 = vmatpush1.bf16.msra.mxu0 0
      %3591 = vmatprep.subr.bf16.mxu0 0
      %3592 = vmatpush1.bf16.msra.mxu0 0
      %3593 = vmatprep.subr.bf16.mxu0 0
      %3594 = vmatpush1.bf16.msra.mxu0 0
      %3595 = vmatprep.subr.bf16.mxu0 0
      %3596 = vmatpush1.bf16.msra.mxu0 0
      %3597 = vmatprep.subr.bf16.mxu0 0
      %3598 = vmatpush1.bf16.msra.mxu0 0
      %3599 = vmatprep.subr.bf16.mxu0 0
      %3600 = vmatpush1.bf16.msra.mxu0 0
      %3601 = vmatprep.subr.bf16.mxu0 0
      %3602 = vmatpush1.bf16.msra.mxu0 0
      %3603 = vmatprep.subr.bf16.mxu0 0
      %3604 = vmatpush1.bf16.msra.mxu0 0
      %3605 = vmatprep.subr.bf16.mxu0 0
      %3606 = vmatpush1.bf16.msra.mxu0 0
      %3607 = vmatprep.subr.bf16.mxu0 0
      %3608 = vmatpush1.bf16.msra.mxu0 0
      %3609 = vmatprep.subr.bf16.mxu0 0
      %3610 = vmatpush1.bf16.msra.mxu0 0
      %3611 = vmatprep.subr.bf16.mxu0 0
      %3612 = vmatpush1.bf16.msra.mxu0 0
      %3613 = vmatprep.mubr.bf16.mxu0 0
      %3614 = vmatmul.mubr.bf16.gmra.mrb[0].mxu0 %v3454
      %v3615 = vpop.f32.mrb[0].mxu0
      %v3616 = vadd.f32 %v3440, %v3615
      %v3617 = vpop.f32.mrb[0].mxu0
      %v3618 = vpop.f32.mrb[0].mxu0
      %v3619 = vadd.f32 %v3440, %v3618
      %v3620 = vpop.f32.mrb[0].mxu0
      %3621 = vmatprep.mubr.bf16.mxu0 0
      %3622 = vmatmul.mubr.bf16.gmra.mrb[0].mxu0 %v3456
      %v3623 = vpop.f32.mrb[0].mxu0
      %v3624 = vadd.f32 %v3440, %v3623
      %v3625 = vpop.f32.mrb[0].mxu0
      %v3626 = vpop.f32.mrb[0].mxu0
      %v3627 = vadd.f32 %v3440, %v3626
      %v3628 = vpop.f32.mrb[0].mxu0
      %3629 = vmatprep.mubr.bf16.mxu0 0
      %3630 = vmatmul.mubr.bf16.gmra.mrb[0].mxu0 %v3458
      %v3631 = vpop.f32.mrb[0].mxu0
      %v3632 = vadd.f32 %v3440, %v3631
      %v3633 = vpop.f32.mrb[0].mxu0
      %v3634 = vpop.f32.mrb[0].mxu0
      %v3635 = vadd.f32 %v3440, %v3634
      %v3636 = vpop.f32.mrb[0].mxu0
      %3637 = vmatprep.mubr.bf16.mxu0 0
      %3638 = vmatmul.mubr.bf16.gmra.mrb[0].mxu0 %v3460
      %v3639 = vpop.f32.mrb[0].mxu0
      %v3640 = vadd.f32 %v3440, %v3639
      %v3641 = vpop.f32.mrb[0].mxu0
      %v3642 = vpop.f32.mrb[0].mxu0
      %v3643 = vadd.f32 %v3440, %v3642
      %v3644 = vpop.f32.mrb[0].mxu0
      %3645 = vmatprep.mubr.bf16.mxu0 0
      %3646 = vmatmul.mubr.bf16.gmra.mrb[0].mxu0 %v3462
      %v3647 = vpop.f32.mrb[0].mxu0
      %v3648 = vadd.f32 %v3440, %v3647
      %v3649 = vpop.f32.mrb[0].mxu0
      %v3650 = vpop.f32.mrb[0].mxu0
      %v3651 = vadd.f32 %v3440, %v3650
      %v3652 = vpop.f32.mrb[0].mxu0
      %3653 = vmatprep.mubr.bf16.mxu0 0
      %3654 = vmatmul.mubr.bf16.gmra.mrb[0].mxu0 %v3464
      %v3655 = vpop.f32.mrb[0].mxu0
      %v3656 = vadd.f32 %v3440, %v3655
      %v3657 = vpop.f32.mrb[0].mxu0
      %v3658 = vpop.f32.mrb[0].mxu0
      %v3659 = vadd.f32 %v3440, %v3658
      %v3660 = vpop.f32.mrb[0].mxu0
      %3661 = vmatprep.mubr.bf16.mxu0 0
      %3662 = vmatmul.mubr.bf16.gmra.mrb[0].mxu0 %v3466
      %v3663 = vpop.f32.mrb[0].mxu0
      %v3664 = vadd.f32 %v3440, %v3663
      %v3665 = vpop.f32.mrb[0].mxu0
      %v3666 = vpop.f32.mrb[0].mxu0
      %v3667 = vadd.f32 %v3440, %v3666
      %v3668 = vpop.f32.mrb[0].mxu0
      %3669 = vmatprep.mubr.bf16.mxu0 0
      %3670 = vmatmul.mubr.bf16.gmra.mrb[0].mxu0 %v3468
      %v3671 = vpop.f32.mrb[0].mxu0
      %v3672 = vadd.f32 %v3440, %v3671
      %v3673 = vpop.f32.mrb[0].mxu0
      %v3674 = vpop.f32.mrb[0].mxu0
      %v3675 = vadd.f32 %v3440, %v3674
      %v3676 = vpop.f32.mrb[0].mxu0
      %3677 = vmatprep.mubr.bf16.mxu0 0
      %3678 = vmatmul.mubr.bf16.gmra.mrb[0].mxu0 %v3470
      %v3679 = vpop.f32.mrb[0].mxu0
      %v3680 = vadd.f32 %v3440, %v3679
      %v3681 = vpop.f32.mrb[0].mxu0
      %v3682 = vpop.f32.mrb[0].mxu0
      %v3683 = vadd.f32 %v3440, %v3682
      %v3684 = vpop.f32.mrb[0].mxu0
      %3685 = vmatprep.mubr.bf16.mxu0 0
      %3686 = vmatmul.mubr.bf16.gmra.mrb[0].mxu0 %v3472
      %v3687 = vpop.f32.mrb[0].mxu0
      %v3688 = vadd.f32 %v3440, %v3687
      %v3689 = vpop.f32.mrb[0].mxu0
      %v3690 = vpop.f32.mrb[0].mxu0
      %v3691 = vadd.f32 %v3440, %v3690
      %v3692 = vpop.f32.mrb[0].mxu0
      %3693 = vmatprep.mubr.bf16.mxu0 0
      %3694 = vmatmul.mubr.bf16.gmra.mrb[0].mxu0 %v3474
      %v3695 = vpop.f32.mrb[0].mxu0
      %v3696 = vadd.f32 %v3440, %v3695
      %v3697 = vpop.f32.mrb[0].mxu0
      %v3698 = vpop.f32.mrb[0].mxu0
      %v3699 = vadd.f32 %v3440, %v3698
      %v3700 = vpop.f32.mrb[0].mxu0
      %3701 = vmatprep.mubr.bf16.mxu0 0
      %3702 = vmatmul.mubr.bf16.gmra.mrb[0].mxu0 %v3476
      %v3703 = vpop.f32.mrb[0].mxu0
      %v3704 = vadd.f32 %v3440, %v3703
      %v3705 = vpop.f32.mrb[0].mxu0
      %v3706 = vpop.f32.mrb[0].mxu0
      %v3707 = vadd.f32 %v3440, %v3706
      %v3708 = vpop.f32.mrb[0].mxu0
      %3709 = vmatprep.mubr.bf16.mxu0 0
      %3710 = vmatmul.mubr.bf16.gmra.mrb[0].mxu0 %v3478
      %v3711 = vpop.f32.mrb[0].mxu0
      %v3712 = vadd.f32 %v3440, %v3711
      %v3713 = vpop.f32.mrb[0].mxu0
      %v3714 = vpop.f32.mrb[0].mxu0
      %v3715 = vadd.f32 %v3440, %v3714
      %v3716 = vpop.f32.mrb[0].mxu0
      %3717 = vmatprep.mubr.bf16.mxu0 0
      %3718 = vmatmul.mubr.bf16.gmra.mrb[0].mxu0 %v3480
      %v3719 = vpop.f32.mrb[0].mxu0
      %v3720 = vadd.f32 %v3440, %v3719
      %v3721 = vpop.f32.mrb[0].mxu0
      %v3722 = vpop.f32.mrb[0].mxu0
      %v3723 = vadd.f32 %v3440, %v3722
      %v3724 = vpop.f32.mrb[0].mxu0
      %3725 = vmatprep.mubr.bf16.mxu0 0
      %3726 = vmatmul.mubr.bf16.gmra.mrb[0].mxu0 %v3482
      %v3727 = vpop.f32.mrb[0].mxu0
      %v3728 = vadd.f32 %v3440, %v3727
      %v3729 = vpop.f32.mrb[0].mxu0
      %v3730 = vpop.f32.mrb[0].mxu0
      %v3731 = vadd.f32 %v3440, %v3730
      %v3732 = vpop.f32.mrb[0].mxu0
      %3733 = vmatprep.mubr.bf16.mxu0 0
      %3734 = vmatmul.mubr.bf16.gmra.mrb[0].mxu0 %v3484
      %v3735 = vpop.f32.mrb[0].mxu0
      %v3736 = vadd.f32 %v3440, %v3735
      %v3737 = vpop.f32.mrb[0].mxu0
      %v3738 = vpop.f32.mrb[0].mxu0
      %v3739 = vadd.f32 %v3440, %v3738
      %v3740 = vpop.f32.mrb[0].mxu0
      %3741 = vmatprep.mubr.bf16.mxu0 0
      %3742 = vmatmul.mubr.bf16.gmra.mrb[0].mxu0 %v3486
      %v3743 = vpop.f32.mrb[0].mxu0
      %v3744 = vadd.f32 %v3440, %v3743
      %v3745 = vpop.f32.mrb[0].mxu0
      %v3746 = vpop.f32.mrb[0].mxu0
      %v3747 = vadd.f32 %v3440, %v3746
      %v3748 = vpop.f32.mrb[0].mxu0
      %3749 = vmatprep.mubr.bf16.mxu0 0
      %3750 = vmatmul.mubr.bf16.gmra.mrb[0].mxu0 %v3488
      %v3751 = vpop.f32.mrb[0].mxu0
      %v3752 = vadd.f32 %v3440, %v3751
      %v3753 = vpop.f32.mrb[0].mxu0
      %v3754 = vpop.f32.mrb[0].mxu0
      %v3755 = vadd.f32 %v3440, %v3754
      %v3756 = vpop.f32.mrb[0].mxu0
      %3757 = vmatprep.mubr.bf16.mxu0 0
      %3758 = vmatmul.mubr.bf16.gmra.mrb[0].mxu0 %v3490
      %v3759 = vpop.f32.mrb[0].mxu0
      %v3760 = vadd.f32 %v3440, %v3759
      %v3761 = vpop.f32.mrb[0].mxu0
      %v3762 = vpop.f32.mrb[0].mxu0
      %v3763 = vadd.f32 %v3440, %v3762
      %v3764 = vpop.f32.mrb[0].mxu0
      %3765 = vmatprep.mubr.bf16.mxu0 0
      %3766 = vmatmul.mubr.bf16.gmra.mrb[0].mxu0 %v3492
      %v3767 = vpop.f32.mrb[0].mxu0
      %v3768 = vadd.f32 %v3440, %v3767
      %v3769 = vpop.f32.mrb[0].mxu0
      %v3770 = vpop.f32.mrb[0].mxu0
      %v3771 = vadd.f32 %v3440, %v3770
      %v3772 = vpop.f32.mrb[0].mxu0
      %3773 = vmatprep.mubr.bf16.mxu0 0
      %3774 = vmatmul.mubr.bf16.gmra.mrb[0].mxu0 %v3494
      %v3775 = vpop.f32.mrb[0].mxu0
      %v3776 = vadd.f32 %v3440, %v3775
      %v3777 = vpop.f32.mrb[0].mxu0
      %v3778 = vpop.f32.mrb[0].mxu0
      %v3779 = vadd.f32 %v3440, %v3778
      %v3780 = vpop.f32.mrb[0].mxu0
      %3781 = vmatprep.mubr.bf16.mxu0 0
      %3782 = vmatmul.mubr.bf16.gmra.mrb[0].mxu0 %v3496
      %v3783 = vpop.f32.mrb[0].mxu0
      %v3784 = vadd.f32 %v3440, %v3783
      %v3785 = vpop.f32.mrb[0].mxu0
      %v3786 = vpop.f32.mrb[0].mxu0
      %v3787 = vadd.f32 %v3440, %v3786
      %v3788 = vpop.f32.mrb[0].mxu0
      %3789 = vmatprep.mubr.bf16.mxu0 0
      %3790 = vmatmul.mubr.bf16.gmra.mrb[0].mxu0 %v3498
      %v3791 = vpop.f32.mrb[0].mxu0
      %v3792 = vadd.f32 %v3440, %v3791
      %v3793 = vpop.f32.mrb[0].mxu0
      %v3794 = vpop.f32.mrb[0].mxu0
      %v3795 = vadd.f32 %v3440, %v3794
      %v3796 = vpop.f32.mrb[0].mxu0
      %3797 = vmatprep.mubr.bf16.mxu0 0
      %3798 = vmatmul.mubr.bf16.gmra.mrb[0].mxu0 %v3500
      %v3799 = vpop.f32.mrb[0].mxu0
      %v3800 = vadd.f32 %v3440, %v3799
      %v3801 = vpop.f32.mrb[0].mxu0
      %v3802 = vpop.f32.mrb[0].mxu0
      %v3803 = vadd.f32 %v3440, %v3802
      %v3804 = vpop.f32.mrb[0].mxu0
      %3805 = vmatprep.mubr.bf16.mxu0 0
      %3806 = vmatmul.mubr.bf16.gmra.mrb[0].mxu0 %v3502
      %v3807 = vpop.f32.mrb[0].mxu0
      %v3808 = vadd.f32 %v3440, %v3807
      %v3809 = vpop.f32.mrb[0].mxu0
      %v3810 = vpop.f32.mrb[0].mxu0
      %v3811 = vadd.f32 %v3440, %v3810
      %v3812 = vpop.f32.mrb[0].mxu0
      %3813 = vmatprep.mubr.bf16.mxu0 0
      %3814 = vmatmul.mubr.bf16.gmra.mrb[0].mxu0 %v3504
      %v3815 = vpop.f32.mrb[0].mxu0
      %v3816 = vadd.f32 %v3440, %v3815
      %v3817 = vpop.f32.mrb[0].mxu0
      %v3818 = vpop.f32.mrb[0].mxu0
      %v3819 = vadd.f32 %v3440, %v3818
      %v3820 = vpop.f32.mrb[0].mxu0
      %3821 = vmatprep.mubr.bf16.mxu0 0
      %3822 = vmatmul.mubr.bf16.gmra.mrb[0].mxu0 %v3506
      %v3823 = vpop.f32.mrb[0].mxu0
      %v3824 = vadd.f32 %v3440, %v3823
      %v3825 = vpop.f32.mrb[0].mxu0
      %v3826 = vpop.f32.mrb[0].mxu0
      %v3827 = vadd.f32 %v3440, %v3826
      %v3828 = vpop.f32.mrb[0].mxu0
      %3829 = vmatprep.mubr.bf16.mxu0 0
      %3830 = vmatmul.mubr.bf16.gmra.mrb[0].mxu0 %v3508
      %v3831 = vpop.f32.mrb[0].mxu0
      %v3832 = vadd.f32 %v3440, %v3831
      %v3833 = vpop.f32.mrb[0].mxu0
      %v3834 = vpop.f32.mrb[0].mxu0
      %v3835 = vadd.f32 %v3440, %v3834
      %v3836 = vpop.f32.mrb[0].mxu0
      %3837 = vmatprep.mubr.bf16.mxu0 0
      %3838 = vmatmul.mubr.bf16.gmra.mrb[0].mxu0 %v3510
      %v3839 = vpop.f32.mrb[0].mxu0
      %v3840 = vadd.f32 %v3440, %v3839
      %v3841 = vpop.f32.mrb[0].mxu0
      %v3842 = vpop.f32.mrb[0].mxu0
      %v3843 = vadd.f32 %v3440, %v3842
      %v3844 = vpop.f32.mrb[0].mxu0
      %3845 = vmatprep.mubr.bf16.mxu0 0
      %3846 = vmatmul.mubr.bf16.gmra.mrb[0].mxu0 %v3512
      %v3847 = vpop.f32.mrb[0].mxu0
      %v3848 = vadd.f32 %v3440, %v3847
      %v3849 = vpop.f32.mrb[0].mxu0
      %v3850 = vpop.f32.mrb[0].mxu0
      %v3851 = vadd.f32 %v3440, %v3850
      %v3852 = vpop.f32.mrb[0].mxu0
      %3853 = vmatprep.mubr.bf16.mxu0 0
      %3854 = vmatmul.mubr.bf16.gmra.mrb[0].mxu0 %v3514
      %v3855 = vpop.f32.mrb[0].mxu0
      %v3856 = vadd.f32 %v3440, %v3855
      %v3857 = vpop.f32.mrb[0].mxu0
      %v3858 = vpop.f32.mrb[0].mxu0
      %v3859 = vadd.f32 %v3440, %v3858
      %v3860 = vpop.f32.mrb[0].mxu0
      %3861 = vmatprep.mubr.bf16.mxu0 0
      %3862 = vmatmul.mubr.bf16.gmra.mrb[0].mxu0 %v3516
      %v3863 = vpop.f32.mrb[0].mxu0
      %v3864 = vadd.f32 %v3440, %v3863
      %v3865 = vpop.f32.mrb[0].mxu0
      %v3866 = vpop.f32.mrb[0].mxu0
      %v3867 = vadd.f32 %v3440, %v3866
      %v3868 = vpop.f32.mrb[0].mxu0
      %3869 = vmatprep.mubr.bf16.mxu0 0
      %3870 = vmatmul.mubr.bf16.gmra.mrb[0].mxu0 %v3518
      %v3871 = vpop.f32.mrb[0].mxu0
      %v3872 = vadd.f32 %v3440, %v3871
      %v3873 = vpop.f32.mrb[0].mxu0
      %v3874 = vpop.f32.mrb[0].mxu0
      %v3875 = vadd.f32 %v3440, %v3874
      %v3876 = vpop.f32.mrb[0].mxu0
      %3877 = vmatprep.mubr.bf16.mxu0 0
      %3878 = vmatmul.mubr.bf16.gmra.mrb[0].mxu0 %v3520
      %v3879 = vpop.f32.mrb[0].mxu0
      %v3880 = vadd.f32 %v3440, %v3879
      %v3881 = vpop.f32.mrb[0].mxu0
      %v3882 = vpop.f32.mrb[0].mxu0
      %v3883 = vadd.f32 %v3440, %v3882
      %v3884 = vpop.f32.mrb[0].mxu0
      %3885 = vmatprep.mubr.bf16.mxu0 0
      %3886 = vmatmul.mubr.bf16.gmra.mrb[0].mxu0 %v3522
      %v3887 = vpop.f32.mrb[0].mxu0
      %v3888 = vadd.f32 %v3440, %v3887
      %v3889 = vpop.f32.mrb[0].mxu0
      %v3890 = vpop.f32.mrb[0].mxu0
      %v3891 = vadd.f32 %v3440, %v3890
      %v3892 = vpop.f32.mrb[0].mxu0
      %3893 = vmatprep.mubr.bf16.mxu0 0
      %3894 = vmatmul.mubr.bf16.gmra.mrb[0].mxu0 %v3524
      %v3895 = vpop.f32.mrb[0].mxu0
      %v3896 = vadd.f32 %v3440, %v3895
      %v3897 = vpop.f32.mrb[0].mxu0
      %v3898 = vpop.f32.mrb[0].mxu0
      %v3899 = vadd.f32 %v3440, %v3898
      %v3900 = vpop.f32.mrb[0].mxu0
      %3901 = vmatprep.mubr.bf16.mxu0 0
      %3902 = vmatmul.mubr.bf16.gmra.mrb[0].mxu0 %v3526
      %v3903 = vpop.f32.mrb[0].mxu0
      %v3904 = vadd.f32 %v3440, %v3903
      %v3905 = vpop.f32.mrb[0].mxu0
      %v3906 = vpop.f32.mrb[0].mxu0
      %v3907 = vadd.f32 %v3440, %v3906
      %v3908 = vpop.f32.mrb[0].mxu0
      %3909 = vmatprep.mubr.bf16.mxu0 0
      %3910 = vmatmul.mubr.bf16.gmra.mrb[0].mxu0 %v3528
      %v3911 = vpop.f32.mrb[0].mxu0
      %v3912 = vadd.f32 %v3440, %v3911
      %v3913 = vpop.f32.mrb[0].mxu0
      %v3914 = vpop.f32.mrb[0].mxu0
      %v3915 = vadd.f32 %v3440, %v3914
      %v3916 = vpop.f32.mrb[0].mxu0
      %3917 = vmatprep.mubr.bf16.mxu0 0
      %3918 = vmatmul.mubr.bf16.gmra.mrb[0].mxu0 %v3530
      %v3919 = vpop.f32.mrb[0].mxu0
      %v3920 = vadd.f32 %v3440, %v3919
      %v3921 = vpop.f32.mrb[0].mxu0
      %v3922 = vpop.f32.mrb[0].mxu0
      %v3923 = vadd.f32 %v3440, %v3922
      %v3924 = vpop.f32.mrb[0].mxu0
      %3925 = vmatprep.mubr.bf16.mxu0 0
      %3926 = vmatmul.mubr.bf16.gmra.mrb[0].mxu0 %v3532
      %v3927 = vpop.f32.mrb[0].mxu0
      %v3928 = vadd.f32 %v3440, %v3927
      %v3929 = vpop.f32.mrb[0].mxu0
      %v3930 = vpop.f32.mrb[0].mxu0
      %v3931 = vadd.f32 %v3440, %v3930
      %v3932 = vpop.f32.mrb[0].mxu0
      %3933 = vmatprep.mubr.bf16.mxu0 0
      %3934 = vmatmul.mubr.bf16.gmra.mrb[0].mxu0 %v3534
      %v3935 = vpop.f32.mrb[0].mxu0
      %v3936 = vadd.f32 %v3440, %v3935
      %v3937 = vpop.f32.mrb[0].mxu0
      %v3938 = vpop.f32.mrb[0].mxu0
      %v3939 = vadd.f32 %v3440, %v3938
      %v3940 = vpop.f32.mrb[0].mxu0
      %3941 = vmatprep.mubr.bf16.mxu0 0
      %3942 = vmatmul.mubr.bf16.gmra.mrb[0].mxu0 %v3536
      %v3943 = vpop.f32.mrb[0].mxu0
      %v3944 = vadd.f32 %v3440, %v3943
      %v3945 = vpop.f32.mrb[0].mxu0
      %v3946 = vpop.f32.mrb[0].mxu0
      %v3947 = vadd.f32 %v3440, %v3946
      %v3948 = vpop.f32.mrb[0].mxu0
      %3949 = vmatprep.mubr.bf16.mxu0 0
      %3950 = vmatmul.mubr.bf16.gmra.mrb[0].mxu0 %v3538
      %v3951 = vpop.f32.mrb[0].mxu0
      %v3952 = vadd.f32 %v3440, %v3951
      %v3953 = vpop.f32.mrb[0].mxu0
      %v3954 = vpop.f32.mrb[0].mxu0
      %v3955 = vadd.f32 %v3440, %v3954
      %v3956 = vpop.f32.mrb[0].mxu0
      %3957 = vmatprep.mubr.bf16.mxu0 0
      %3958 = vmatmul.mubr.bf16.gmra.mrb[0].mxu0 %v3540
      %v3959 = vpop.f32.mrb[0].mxu0
      %v3960 = vadd.f32 %v3440, %v3959
      %v3961 = vpop.f32.mrb[0].mxu0
      %v3962 = vpop.f32.mrb[0].mxu0
      %v3963 = vadd.f32 %v3440, %v3962
      %v3964 = vpop.f32.mrb[0].mxu0
      %3965 = vmatprep.mubr.bf16.mxu0 0
      %3966 = vmatmul.mubr.bf16.gmra.mrb[0].mxu0 %v3542
      %v3967 = vpop.f32.mrb[0].mxu0
      %v3968 = vadd.f32 %v3440, %v3967
      %v3969 = vpop.f32.mrb[0].mxu0
      %v3970 = vpop.f32.mrb[0].mxu0
      %v3971 = vadd.f32 %v3440, %v3970
      %v3972 = vpop.f32.mrb[0].mxu0
      %3973 = vmatprep.mubr.bf16.mxu0 0
      %3974 = vmatmul.mubr.bf16.gmra.mrb[0].mxu0 %v3544
      %v3975 = vpop.f32.mrb[0].mxu0
      %v3976 = vadd.f32 %v3440, %v3975
      %v3977 = vpop.f32.mrb[0].mxu0
      %v3978 = vpop.f32.mrb[0].mxu0
      %v3979 = vadd.f32 %v3440, %v3978
      %v3980 = vpop.f32.mrb[0].mxu0
      %3981 = vmatprep.mubr.bf16.mxu0 0
      %3982 = vmatmul.mubr.bf16.gmra.mrb[0].mxu0 %v3546
      %v3983 = vpop.f32.mrb[0].mxu0
      %v3984 = vadd.f32 %v3440, %v3983
      %v3985 = vpop.f32.mrb[0].mxu0
      %v3986 = vpop.f32.mrb[0].mxu0
      %v3987 = vadd.f32 %v3440, %v3986
      %v3988 = vpop.f32.mrb[0].mxu0
      %3989 = vmatprep.mubr.bf16.mxu0 0
      %3990 = vmatmul.mubr.bf16.gmra.mrb[0].mxu0 %v3548
      %v3991 = vpop.f32.mrb[0].mxu0
      %v3992 = vadd.f32 %v3440, %v3991
      %v3993 = vpop.f32.mrb[0].mxu0
      %v3994 = vpop.f32.mrb[0].mxu0
      %v3995 = vadd.f32 %v3440, %v3994
      %v3996 = vpop.f32.mrb[0].mxu0
      %3997 = vmatprep.mubr.bf16.mxu0 0
      %3998 = vmatmul.mubr.bf16.gmra.mrb[0].mxu0 %v3550
      %v3999 = vpop.f32.mrb[0].mxu0
      %v4000 = vadd.f32 %v3440, %v3999
      %v4001 = vpop.f32.mrb[0].mxu0
      %v4002 = vpop.f32.mrb[0].mxu0
      %v4003 = vadd.f32 %v3440, %v4002
      %v4004 = vpop.f32.mrb[0].mxu0
      %4005 = vmatprep.mubr.bf16.mxu0 0
      %4006 = vmatmul.mubr.bf16.gmra.mrb[0].mxu0 %v3552
      %v4007 = vpop.f32.mrb[0].mxu0
      %v4008 = vadd.f32 %v3440, %v4007
      %v4009 = vpop.f32.mrb[0].mxu0
      %v4010 = vpop.f32.mrb[0].mxu0
      %v4011 = vadd.f32 %v3440, %v4010
      %v4012 = vpop.f32.mrb[0].mxu0
      %4013 = vmatprep.mubr.bf16.mxu0 0
      %4014 = vmatmul.mubr.bf16.gmra.mrb[0].mxu0 %v3554
      %v4015 = vpop.f32.mrb[0].mxu0
      %v4016 = vadd.f32 %v3440, %v4015
      %v4017 = vpop.f32.mrb[0].mxu0
      %v4018 = vpop.f32.mrb[0].mxu0
      %v4019 = vadd.f32 %v3440, %v4018
      %v4020 = vpop.f32.mrb[0].mxu0
      %4021 = vmatprep.mubr.bf16.mxu0 0
      %4022 = vmatmul.mubr.bf16.gmra.mrb[0].mxu0 %v3556
      %v4023 = vpop.f32.mrb[0].mxu0
      %v4024 = vadd.f32 %v3440, %v4023
      %v4025 = vpop.f32.mrb[0].mxu0
      %v4026 = vpop.f32.mrb[0].mxu0
      %v4027 = vadd.f32 %v3440, %v4026
      %v4028 = vpop.f32.mrb[0].mxu0
      %4029 = vmatprep.mubr.bf16.mxu0 0
      %4030 = vmatmul.mubr.bf16.gmra.mrb[0].mxu0 %v3558
      %v4031 = vpop.f32.mrb[0].mxu0
      %v4032 = vadd.f32 %v3440, %v4031
      %v4033 = vpop.f32.mrb[0].mxu0
      %v4034 = vpop.f32.mrb[0].mxu0
      %v4035 = vadd.f32 %v3440, %v4034
      %v4036 = vpop.f32.mrb[0].mxu0
      %4037 = vmatprep.mubr.bf16.mxu0 0
      %4038 = vmatmul.mubr.bf16.gmra.mrb[0].mxu0 %v3560
      %v4039 = vpop.f32.mrb[0].mxu0
      %v4040 = vadd.f32 %v3440, %v4039
      %v4041 = vpop.f32.mrb[0].mxu0
      %v4042 = vpop.f32.mrb[0].mxu0
      %v4043 = vadd.f32 %v3440, %v4042
      %v4044 = vpop.f32.mrb[0].mxu0
      %4045 = vmatprep.mubr.bf16.mxu0 0
      %4046 = vmatmul.mubr.bf16.gmra.mrb[0].mxu0 %v3562
      %v4047 = vpop.f32.mrb[0].mxu0
      %v4048 = vadd.f32 %v3440, %v4047
      %v4049 = vpop.f32.mrb[0].mxu0
      %v4050 = vpop.f32.mrb[0].mxu0
      %v4051 = vadd.f32 %v3440, %v4050
      %v4052 = vpop.f32.mrb[0].mxu0
      %4053 = vmatprep.mubr.bf16.mxu0 0
      %4054 = vmatmul.mubr.bf16.gmra.mrb[0].mxu0 %v3564
      %v4055 = vpop.f32.mrb[0].mxu0
      %v4056 = vadd.f32 %v3440, %v4055
      %v4057 = vpop.f32.mrb[0].mxu0
      %v4058 = vpop.f32.mrb[0].mxu0
      %v4059 = vadd.f32 %v3440, %v4058
      %v4060 = vpop.f32.mrb[0].mxu0
      %4061 = vmatprep.mubr.bf16.mxu0 0
      %4062 = vmatmul.mubr.bf16.gmra.mrb[0].mxu0 %v3566
      %v4063 = vpop.f32.mrb[0].mxu0
      %v4064 = vadd.f32 %v3440, %v4063
      %v4065 = vpop.f32.mrb[0].mxu0
      %v4066 = vpop.f32.mrb[0].mxu0
      %v4067 = vadd.f32 %v3440, %v4066
      %v4068 = vpop.f32.mrb[0].mxu0
      %4069 = vmatprep.mubr.bf16.mxu0 0
      %4070 = vmatmul.mubr.bf16.gmra.mrb[0].mxu0 %v3568
      %v4071 = vpop.f32.mrb[0].mxu0
      %v4072 = vadd.f32 %v3440, %v4071
      %v4073 = vpop.f32.mrb[0].mxu0
      %v4074 = vpop.f32.mrb[0].mxu0
      %v4075 = vadd.f32 %v3440, %v4074
      %v4076 = vpop.f32.mrb[0].mxu0
      %4077 = vmatprep.mubr.bf16.mxu0 0
      %4078 = vmatmul.mubr.bf16.gmra.mrb[0].mxu0 %v3570
      %v4079 = vpop.f32.mrb[0].mxu0
      %v4080 = vadd.f32 %v3440, %v4079
      %v4081 = vpop.f32.mrb[0].mxu0
      %v4082 = vpop.f32.mrb[0].mxu0
      %v4083 = vadd.f32 %v3440, %v4082
      %v4084 = vpop.f32.mrb[0].mxu0
      %4085 = vmatprep.mubr.bf16.mxu0 0
      %4086 = vmatmul.mubr.bf16.gmra.mrb[0].mxu0 %v3572
      %v4087 = vpop.f32.mrb[0].mxu0
      %v4088 = vadd.f32 %v3440, %v4087
      %v4089 = vpop.f32.mrb[0].mxu0
      %v4090 = vpop.f32.mrb[0].mxu0
      %v4091 = vadd.f32 %v3440, %v4090
      %v4092 = vpop.f32.mrb[0].mxu0
      %4093 = vdwg.mxu0
      %v4094 = vmax.f32 %v3616, 0.0
      %v4095 = vmax.f32 %v3619, 0.0
      %v4096 = vmax.f32 %v3624, 0.0
      %v4097 = vmax.f32 %v3627, 0.0
      %v4098 = vmax.f32 %v3632, 0.0
      %v4099 = vmax.f32 %v3635, 0.0
      %v4100 = vmax.f32 %v3640, 0.0
      %v4101 = vmax.f32 %v3643, 0.0
      %v4102 = vmax.f32 %v3648, 0.0
      %v4103 = vmax.f32 %v3651, 0.0
      %v4104 = vmax.f32 %v3656, 0.0
      %v4105 = vmax.f32 %v3659, 0.0
      %v4106 = vmax.f32 %v3664, 0.0
      %v4107 = vmax.f32 %v3667, 0.0
      %v4108 = vmax.f32 %v3672, 0.0
      %v4109 = vmax.f32 %v3675, 0.0
      %v4110 = vmax.f32 %v3680, 0.0
      %v4111 = vmax.f32 %v3683, 0.0
      %v4112 = vmax.f32 %v3688, 0.0
      %v4113 = vmax.f32 %v3691, 0.0
      %v4114 = vmax.f32 %v3696, 0.0
      %v4115 = vmax.f32 %v3699, 0.0
      %v4116 = vmax.f32 %v3704, 0.0
      %v4117 = vmax.f32 %v3707, 0.0
      %v4118 = vmax.f32 %v3712, 0.0
      %v4119 = vmax.f32 %v3715, 0.0
      %v4120 = vmax.f32 %v3720, 0.0
      %v4121 = vmax.f32 %v3723, 0.0
      %v4122 = vmax.f32 %v3728, 0.0
      %v4123 = vmax.f32 %v3731, 0.0
      %v4124 = vmax.f32 %v3736, 0.0
      %v4125 = vmax.f32 %v3739, 0.0
      %v4126 = vmax.f32 %v3744, 0.0
      %v4127 = vmax.f32 %v3747, 0.0
      %v4128 = vmax.f32 %v3752, 0.0
      %v4129 = vmax.f32 %v3755, 0.0
      %v4130 = vmax.f32 %v3760, 0.0
      %v4131 = vmax.f32 %v3763, 0.0
      %v4132 = vmax.f32 %v3768, 0.0
      %v4133 = vmax.f32 %v3771, 0.0
      %v4134 = vmax.f32 %v3776, 0.0
      %v4135 = vmax.f32 %v3779, 0.0
      %v4136 = vmax.f32 %v3784, 0.0
      %v4137 = vmax.f32 %v3787, 0.0
      %v4138 = vmax.f32 %v3792, 0.0
      %v4139 = vmax.f32 %v3795, 0.0
      %v4140 = vmax.f32 %v3800, 0.0
      %v4141 = vmax.f32 %v3803, 0.0
      %v4142 = vmax.f32 %v3808, 0.0
      %v4143 = vmax.f32 %v3811, 0.0
      %v4144 = vmax.f32 %v3816, 0.0
      %v4145 = vmax.f32 %v3819, 0.0
      %v4146 = vmax.f32 %v3824, 0.0
      %v4147 = vmax.f32 %v3827, 0.0
      %v4148 = vmax.f32 %v3832, 0.0
      %v4149 = vmax.f32 %v3835, 0.0
      %v4150 = vmax.f32 %v3840, 0.0
      %v4151 = vmax.f32 %v3843, 0.0
      %v4152 = vmax.f32 %v3848, 0.0
      %v4153 = vmax.f32 %v3851, 0.0
      %v4154 = vmax.f32 %v3856, 0.0
      %v4155 = vmax.f32 %v3859, 0.0
      %v4156 = vmax.f32 %v3864, 0.0
      %v4157 = vmax.f32 %v3867, 0.0
      %v4158 = vmax.f32 %v3872, 0.0
      %v4159 = vmax.f32 %v3875, 0.0
      %v4160 = vmax.f32 %v3880, 0.0
      %v4161 = vmax.f32 %v3883, 0.0
      %v4162 = vmax.f32 %v3888, 0.0
      %v4163 = vmax.f32 %v3891, 0.0
      %v4164 = vmax.f32 %v3896, 0.0
      %v4165 = vmax.f32 %v3899, 0.0
      %v4166 = vmax.f32 %v3904, 0.0
      %v4167 = vmax.f32 %v3907, 0.0
      %v4168 = vmax.f32 %v3912, 0.0
      %v4169 = vmax.f32 %v3915, 0.0
      %v4170 = vmax.f32 %v3920, 0.0
      %v4171 = vmax.f32 %v3923, 0.0
      %v4172 = vmax.f32 %v3928, 0.0
      %v4173 = vmax.f32 %v3931, 0.0
      %v4174 = vmax.f32 %v3936, 0.0
      %v4175 = vmax.f32 %v3939, 0.0
      %v4176 = vmax.f32 %v3944, 0.0
      %v4177 = vmax.f32 %v3947, 0.0
      %v4178 = vmax.f32 %v3952, 0.0
      %v4179 = vmax.f32 %v3955, 0.0
      %v4180 = vmax.f32 %v3960, 0.0
      %v4181 = vmax.f32 %v3963, 0.0
      %v4182 = vmax.f32 %v3968, 0.0
      %v4183 = vmax.f32 %v3971, 0.0
      %v4184 = vmax.f32 %v3976, 0.0
      %v4185 = vmax.f32 %v3979, 0.0
      %v4186 = vmax.f32 %v3984, 0.0
      %v4187 = vmax.f32 %v3987, 0.0
      %v4188 = vmax.f32 %v3992, 0.0
      %v4189 = vmax.f32 %v3995, 0.0
      %v4190 = vmax.f32 %v4000, 0.0
      %v4191 = vmax.f32 %v4003, 0.0
      %v4192 = vmax.f32 %v4008, 0.0
      %v4193 = vmax.f32 %v4011, 0.0
      %v4194 = vmax.f32 %v4016, 0.0
      %v4195 = vmax.f32 %v4019, 0.0
      %v4196 = vmax.f32 %v4024, 0.0
      %v4197 = vmax.f32 %v4027, 0.0
      %v4198 = vmax.f32 %v4032, 0.0
      %v4199 = vmax.f32 %v4035, 0.0
      %v4200 = vmax.f32 %v4040, 0.0
      %v4201 = vmax.f32 %v4043, 0.0
      %v4202 = vmax.f32 %v4048, 0.0
      %v4203 = vmax.f32 %v4051, 0.0
      %v4204 = vmax.f32 %v4056, 0.0
      %v4205 = vmax.f32 %v4059, 0.0
      %v4206 = vmax.f32 %v4064, 0.0
      %v4207 = vmax.f32 %v4067, 0.0
      %v4208 = vmax.f32 %v4072, 0.0
      %v4209 = vmax.f32 %v4075, 0.0
      %v4210 = vmax.f32 %v4080, 0.0
      %v4211 = vmax.f32 %v4083, 0.0
      %v4212 = vmax.f32 %v4088, 0.0
      %v4213 = vmax.f32 %v4091, 0.0
      %v4214 = vmax.f32 %v4094, %v4098
      %v4215 = vmax.f32 %v4095, %v4099
      %v4216 = vmax.f32 %v4096, %v4100
      %v4217 = vmax.f32 %v4097, %v4101
      %v4218 = vmax.f32 %v4098, %v4102
      %v4219 = vmax.f32 %v4099, %v4103
      %v4220 = vmax.f32 %v4100, %v4104
      %v4221 = vmax.f32 %v4101, %v4105
      %v4222 = vmax.f32 %v4102, %v4106
      %v4223 = vmax.f32 %v4103, %v4107
      %v4224 = vmax.f32 %v4104, %v4108
      %v4225 = vmax.f32 %v4105, %v4109
      %v4226 = vmax.f32 %v4106, %v4110
      %v4227 = vmax.f32 %v4107, %v4111
      %v4228 = vmax.f32 %v4108, %v4112
      %v4229 = vmax.f32 %v4109, %v4113
      %v4230 = vmax.f32 %v4110, %v4114
      %v4231 = vmax.f32 %v4111, %v4115
      %v4232 = vmax.f32 %v4112, %v4116
      %v4233 = vmax.f32 %v4113, %v4117
      %v4234 = vmax.f32 %v4114, %v4118
      %v4235 = vmax.f32 %v4115, %v4119
      %v4236 = vmax.f32 %v4116, %v4120
      %v4237 = vmax.f32 %v4117, %v4121
      %v4238 = vmax.f32 %v4118, %v4122
      %v4239 = vmax.f32 %v4119, %v4123
      %v4240 = vmax.f32 %v4120, %v4124
      %v4241 = vmax.f32 %v4121, %v4125
      %v4242 = vmax.f32 %v4122, %v4126
      %v4243 = vmax.f32 %v4123, %v4127
      %v4244 = vmax.f32 %v4124, %v4128
      %v4245 = vmax.f32 %v4125, %v4129
      %v4246 = vmax.f32 %v4126, %v4130
      %v4247 = vmax.f32 %v4127, %v4131
      %v4248 = vmax.f32 %v4128, %v4132
      %v4249 = vmax.f32 %v4129, %v4133
      %v4250 = vmax.f32 %v4130, %v4134
      %v4251 = vmax.f32 %v4131, %v4135
      %v4252 = vmax.f32 %v4132, %v4136
      %v4253 = vmax.f32 %v4133, %v4137
      %v4254 = vmax.f32 %v4134, %v4138
      %v4255 = vmax.f32 %v4135, %v4139
      %v4256 = vmax.f32 %v4136, %v4140
      %v4257 = vmax.f32 %v4137, %v4141
      %v4258 = vmax.f32 %v4138, %v4142
      %v4259 = vmax.f32 %v4139, %v4143
      %v4260 = vmax.f32 %v4140, %v4144
      %v4261 = vmax.f32 %v4141, %v4145
      %v4262 = vmax.f32 %v4142, %v4146
      %v4263 = vmax.f32 %v4143, %v4147
      %v4264 = vmax.f32 %v4144, %v4148
      %v4265 = vmax.f32 %v4145, %v4149
      %v4266 = vmax.f32 %v4146, %v4150
      %v4267 = vmax.f32 %v4147, %v4151
      %v4268 = vmax.f32 %v4148, %v4152
      %v4269 = vmax.f32 %v4149, %v4153
      %v4270 = vmax.f32 %v4150, %v4154
      %v4271 = vmax.f32 %v4151, %v4155
      %v4272 = vmax.f32 %v4152, %v4156
      %v4273 = vmax.f32 %v4153, %v4157
      %v4274 = vmax.f32 %v4154, %v4158
      %v4275 = vmax.f32 %v4155, %v4159
      %v4276 = vmax.f32 %v4156, %v4160
      %v4277 = vmax.f32 %v4157, %v4161
      %v4278 = vmax.f32 %v4158, %v4162
      %v4279 = vmax.f32 %v4159, %v4163
      %v4280 = vmax.f32 %v4160, %v4164
      %v4281 = vmax.f32 %v4161, %v4165
      %v4282 = vmax.f32 %v4162, %v4166
      %v4283 = vmax.f32 %v4163, %v4167
      %v4284 = vmax.f32 %v4164, %v4168
      %v4285 = vmax.f32 %v4165, %v4169
      %v4286 = vmax.f32 %v4166, %v4170
      %v4287 = vmax.f32 %v4167, %v4171
      %v4288 = vmax.f32 %v4168, %v4172
      %v4289 = vmax.f32 %v4169, %v4173
      %v4290 = vmax.f32 %v4170, %v4174
      %v4291 = vmax.f32 %v4171, %v4175
      %v4292 = vmax.f32 %v4172, %v4176
      %v4293 = vmax.f32 %v4173, %v4177
      %v4294 = vmax.f32 %v4174, %v4178
      %v4295 = vmax.f32 %v4175, %v4179
      %v4296 = vmax.f32 %v4176, %v4180
      %v4297 = vmax.f32 %v4177, %v4181
      %v4298 = vmax.f32 %v4178, %v4182
      %v4299 = vmax.f32 %v4179, %v4183
      %v4300 = vmax.f32 %v4180, %v4184
      %v4301 = vmax.f32 %v4181, %v4185
      %v4302 = vmax.f32 %v4182, %v4186
      %v4303 = vmax.f32 %v4183, %v4187
      %v4304 = vmax.f32 %v4184, %v4188
      %v4305 = vmax.f32 %v4185, %v4189
      %v4306 = vmax.f32 %v4186, %v4190
      %v4307 = vmax.f32 %v4187, %v4191
      %v4308 = vmax.f32 %v4188, %v4192
      %v4309 = vmax.f32 %v4189, %v4193
      %v4310 = vmax.f32 %v4190, %v4194
      %v4311 = vmax.f32 %v4191, %v4195
      %v4312 = vmax.f32 %v4192, %v4196
      %v4313 = vmax.f32 %v4193, %v4197
      %v4314 = vmax.f32 %v4194, %v4198
      %v4315 = vmax.f32 %v4195, %v4199
      %v4316 = vmax.f32 %v4196, %v4200
      %v4317 = vmax.f32 %v4197, %v4201
      %v4318 = vmax.f32 %v4198, %v4202
      %v4319 = vmax.f32 %v4199, %v4203
      %v4320 = vmax.f32 %v4200, %v4204
      %v4321 = vmax.f32 %v4201, %v4205
      %v4322 = vmax.f32 %v4202, %v4206
      %v4323 = vmax.f32 %v4203, %v4207
      %v4324 = vmax.f32 %v4204, %v4208
      %v4325 = vmax.f32 %v4205, %v4209
      %v4326 = vmax.f32 %v4206, %v4210
      %v4327 = vmax.f32 %v4207, %v4211
      %v4328 = vmax.f32 %v4208, %v4212
      %v4329 = vmax.f32 %v4209, %v4213
      %vm4446 = vcmask 1046528
      %v4447 = vrot.slane %v4214, 1
      %v4448 = vrot.slane %v4215, 1
      %v4449 = vsel %vm4446, %v4447, %v4448
      %v4450 = vrot.slane %v4216, 1
      %v4451 = vsel %vm4446, %v4448, %v4450
      %v4452 = vrot.slane %v4217, 1
      %v4453 = vsel %vm4446, %v4450, %v4452
      %v4454 = vrot.slane %v4218, 1
      %v4455 = vsel %vm4446, %v4452, %v4454
      %v4456 = vrot.slane %v4219, 1
      %v4457 = vsel %vm4446, %v4454, %v4456
      %v4458 = vrot.slane %v4220, 1
      %v4459 = vsel %vm4446, %v4456, %v4458
      %v4460 = vrot.slane %v4221, 1
      %v4461 = vsel %vm4446, %v4458, %v4460
      %v4462 = vrot.slane %v4222, 1
      %v4463 = vsel %vm4446, %v4460, %v4462
      %v4464 = vrot.slane %v4223, 1
      %v4465 = vsel %vm4446, %v4462, %v4464
      %v4466 = vrot.slane %v4224, 1
      %v4467 = vsel %vm4446, %v4464, %v4466
      %v4468 = vrot.slane %v4225, 1
      %v4469 = vsel %vm4446, %v4466, %v4468
      %v4470 = vrot.slane %v4226, 1
      %v4471 = vsel %vm4446, %v4468, %v4470
      %v4472 = vrot.slane %v4227, 1
      %v4473 = vsel %vm4446, %v4470, %v4472
      %v4474 = vrot.slane %v4228, 1
      %v4475 = vsel %vm4446, %v4472, %v4474
      %v4476 = vrot.slane %v4229, 1
      %v4477 = vsel %vm4446, %v4474, %v4476
      %v4478 = vrot.slane %v4230, 1
      %v4479 = vsel %vm4446, %v4476, %v4478
      %v4480 = vrot.slane %v4231, 1
      %v4481 = vsel %vm4446, %v4478, %v4480
      %v4482 = vrot.slane %v4232, 1
      %v4483 = vsel %vm4446, %v4480, %v4482
      %v4484 = vrot.slane %v4233, 1
      %v4485 = vsel %vm4446, %v4482, %v4484
      %v4486 = vrot.slane %v4234, 1
      %v4487 = vsel %vm4446, %v4484, %v4486
      %v4488 = vrot.slane %v4235, 1
      %v4489 = vsel %vm4446, %v4486, %v4488
      %v4490 = vrot.slane %v4236, 1
      %v4491 = vsel %vm4446, %v4488, %v4490
      %v4492 = vrot.slane %v4237, 1
      %v4493 = vsel %vm4446, %v4490, %v4492
      %v4494 = vrot.slane %v4238, 1
      %v4495 = vsel %vm4446, %v4492, %v4494
      %v4496 = vrot.slane %v4239, 1
      %v4497 = vsel %vm4446, %v4494, %v4496
      %v4498 = vrot.slane %v4240, 1
      %v4499 = vsel %vm4446, %v4496, %v4498
      %v4500 = vrot.slane %v4241, 1
      %v4501 = vsel %vm4446, %v4498, %v4500
      %v4502 = vrot.slane %v4242, 1
      %v4503 = vsel %vm4446, %v4500, %v4502
      %v4504 = vrot.slane %v4243, 1
      %v4505 = vsel %vm4446, %v4502, %v4504
      %v4506 = vrot.slane %v4244, 1
      %v4507 = vsel %vm4446, %v4504, %v4506
      %v4508 = vrot.slane %v4245, 1
      %v4509 = vsel %vm4446, %v4506, %v4508
      %v4510 = vrot.slane %v4246, 1
      %v4511 = vsel %vm4446, %v4508, %v4510
      %v4512 = vrot.slane %v4247, 1
      %v4513 = vsel %vm4446, %v4510, %v4512
      %v4514 = vrot.slane %v4248, 1
      %v4515 = vsel %vm4446, %v4512, %v4514
      %v4516 = vrot.slane %v4249, 1
      %v4517 = vsel %vm4446, %v4514, %v4516
      %v4518 = vrot.slane %v4250, 1
      %v4519 = vsel %vm4446, %v4516, %v4518
      %v4520 = vrot.slane %v4251, 1
      %v4521 = vsel %vm4446, %v4518, %v4520
      %v4522 = vrot.slane %v4252, 1
      %v4523 = vsel %vm4446, %v4520, %v4522
      %v4524 = vrot.slane %v4253, 1
      %v4525 = vsel %vm4446, %v4522, %v4524
      %v4526 = vrot.slane %v4254, 1
      %v4527 = vsel %vm4446, %v4524, %v4526
      %v4528 = vrot.slane %v4255, 1
      %v4529 = vsel %vm4446, %v4526, %v4528
      %v4530 = vrot.slane %v4256, 1
      %v4531 = vsel %vm4446, %v4528, %v4530
      %v4532 = vrot.slane %v4257, 1
      %v4533 = vsel %vm4446, %v4530, %v4532
      %v4534 = vrot.slane %v4258, 1
      %v4535 = vsel %vm4446, %v4532, %v4534
      %v4536 = vrot.slane %v4259, 1
      %v4537 = vsel %vm4446, %v4534, %v4536
      %v4538 = vrot.slane %v4260, 1
      %v4539 = vsel %vm4446, %v4536, %v4538
      %v4540 = vrot.slane %v4261, 1
      %v4541 = vsel %vm4446, %v4538, %v4540
      %v4542 = vrot.slane %v4262, 1
      %v4543 = vsel %vm4446, %v4540, %v4542
      %v4544 = vrot.slane %v4263, 1
      %v4545 = vsel %vm4446, %v4542, %v4544
      %v4546 = vrot.slane %v4264, 1
      %v4547 = vsel %vm4446, %v4544, %v4546
      %v4548 = vrot.slane %v4265, 1
      %v4549 = vsel %vm4446, %v4546, %v4548
      %v4550 = vrot.slane %v4266, 1
      %v4551 = vsel %vm4446, %v4548, %v4550
      %v4552 = vrot.slane %v4267, 1
      %v4553 = vsel %vm4446, %v4550, %v4552
      %v4554 = vrot.slane %v4268, 1
      %v4555 = vsel %vm4446, %v4552, %v4554
      %v4556 = vrot.slane %v4269, 1
      %v4557 = vsel %vm4446, %v4554, %v4556
      %v4558 = vrot.slane %v4270, 1
      %v4559 = vsel %vm4446, %v4556, %v4558
      %v4560 = vrot.slane %v4271, 1
      %v4561 = vsel %vm4446, %v4558, %v4560
      %v4562 = vrot.slane %v4272, 1
      %v4563 = vsel %vm4446, %v4560, %v4562
      %v4564 = vrot.slane %v4273, 1
      %v4565 = vsel %vm4446, %v4562, %v4564
      %v4566 = vrot.slane %v4274, 1
      %v4567 = vsel %vm4446, %v4564, %v4566
      %v4568 = vrot.slane %v4275, 1
      %v4569 = vsel %vm4446, %v4566, %v4568
      %v4570 = vrot.slane %v4276, 1
      %v4571 = vsel %vm4446, %v4568, %v4570
      %v4572 = vrot.slane %v4277, 1
      %v4573 = vsel %vm4446, %v4570, %v4572
      %v4574 = vrot.slane %v4278, 1
      %v4575 = vsel %vm4446, %v4572, %v4574
      %v4576 = vrot.slane %v4279, 1
      %v4577 = vsel %vm4446, %v4574, %v4576
      %v4578 = vrot.slane %v4280, 1
      %v4579 = vsel %vm4446, %v4576, %v4578
      %v4580 = vrot.slane %v4281, 1
      %v4581 = vsel %vm4446, %v4578, %v4580
      %v4582 = vrot.slane %v4282, 1
      %v4583 = vsel %vm4446, %v4580, %v4582
      %v4584 = vrot.slane %v4283, 1
      %v4585 = vsel %vm4446, %v4582, %v4584
      %v4586 = vrot.slane %v4284, 1
      %v4587 = vsel %vm4446, %v4584, %v4586
      %v4588 = vrot.slane %v4285, 1
      %v4589 = vsel %vm4446, %v4586, %v4588
      %v4590 = vrot.slane %v4286, 1
      %v4591 = vsel %vm4446, %v4588, %v4590
      %v4592 = vrot.slane %v4287, 1
      %v4593 = vsel %vm4446, %v4590, %v4592
      %v4594 = vrot.slane %v4288, 1
      %v4595 = vsel %vm4446, %v4592, %v4594
      %v4596 = vrot.slane %v4289, 1
      %v4597 = vsel %vm4446, %v4594, %v4596
      %v4598 = vrot.slane %v4290, 1
      %v4599 = vsel %vm4446, %v4596, %v4598
      %v4600 = vrot.slane %v4291, 1
      %v4601 = vsel %vm4446, %v4598, %v4600
      %v4602 = vrot.slane %v4292, 1
      %v4603 = vsel %vm4446, %v4600, %v4602
      %v4604 = vrot.slane %v4293, 1
      %v4605 = vsel %vm4446, %v4602, %v4604
      %v4606 = vrot.slane %v4294, 1
      %v4607 = vsel %vm4446, %v4604, %v4606
      %v4608 = vrot.slane %v4295, 1
      %v4609 = vsel %vm4446, %v4606, %v4608
      %v4610 = vrot.slane %v4296, 1
      %v4611 = vsel %vm4446, %v4608, %v4610
      %v4612 = vrot.slane %v4297, 1
      %v4613 = vsel %vm4446, %v4610, %v4612
      %v4614 = vrot.slane %v4298, 1
      %v4615 = vsel %vm4446, %v4612, %v4614
      %v4616 = vrot.slane %v4299, 1
      %v4617 = vsel %vm4446, %v4614, %v4616
      %v4618 = vrot.slane %v4300, 1
      %v4619 = vsel %vm4446, %v4616, %v4618
      %v4620 = vrot.slane %v4301, 1
      %v4621 = vsel %vm4446, %v4618, %v4620
      %v4622 = vrot.slane %v4302, 1
      %v4623 = vsel %vm4446, %v4620, %v4622
      %v4624 = vrot.slane %v4303, 1
      %v4625 = vsel %vm4446, %v4622, %v4624
      %v4626 = vrot.slane %v4304, 1
      %v4627 = vsel %vm4446, %v4624, %v4626
      %v4628 = vrot.slane %v4305, 1
      %v4629 = vsel %vm4446, %v4626, %v4628
      %v4630 = vrot.slane %v4306, 1
      %v4631 = vsel %vm4446, %v4628, %v4630
      %v4632 = vrot.slane %v4307, 1
      %v4633 = vsel %vm4446, %v4630, %v4632
      %v4634 = vrot.slane %v4308, 1
      %v4635 = vsel %vm4446, %v4632, %v4634
      %v4636 = vrot.slane %v4309, 1
      %v4637 = vsel %vm4446, %v4634, %v4636
      %v4638 = vrot.slane %v4310, 1
      %v4639 = vsel %vm4446, %v4636, %v4638
      %v4640 = vrot.slane %v4311, 1
      %v4641 = vsel %vm4446, %v4638, %v4640
      %v4642 = vrot.slane %v4312, 1
      %v4643 = vsel %vm4446, %v4640, %v4642
      %v4644 = vrot.slane %v4313, 1
      %v4645 = vsel %vm4446, %v4642, %v4644
      %v4646 = vrot.slane %v4314, 1
      %v4647 = vsel %vm4446, %v4644, %v4646
      %v4648 = vrot.slane %v4315, 1
      %v4649 = vsel %vm4446, %v4646, %v4648
      %v4650 = vrot.slane %v4316, 1
      %v4651 = vsel %vm4446, %v4648, %v4650
      %v4652 = vrot.slane %v4317, 1
      %v4653 = vsel %vm4446, %v4650, %v4652
      %v4654 = vrot.slane %v4318, 1
      %v4655 = vsel %vm4446, %v4652, %v4654
      %v4656 = vrot.slane %v4319, 1
      %v4657 = vsel %vm4446, %v4654, %v4656
      %v4658 = vrot.slane %v4320, 1
      %v4659 = vsel %vm4446, %v4656, %v4658
      %v4660 = vrot.slane %v4321, 1
      %v4661 = vsel %vm4446, %v4658, %v4660
      %v4662 = vrot.slane %v4322, 1
      %v4663 = vsel %vm4446, %v4660, %v4662
      %v4664 = vrot.slane %v4323, 1
      %v4665 = vsel %vm4446, %v4662, %v4664
      %v4666 = vrot.slane %v4324, 1
      %v4667 = vsel %vm4446, %v4664, %v4666
      %v4668 = vrot.slane %v4325, 1
      %v4669 = vsel %vm4446, %v4666, %v4668
      %v4670 = vrot.slane %v4326, 1
      %v4671 = vsel %vm4446, %v4668, %v4670
      %v4672 = vrot.slane %v4327, 1
      %v4673 = vsel %vm4446, %v4670, %v4672
      %v4674 = vrot.slane %v4328, 1
      %v4675 = vsel %vm4446, %v4672, %v4674
      %v4676 = vrot.slane %v4329, 1
      %v4677 = vsel %vm4446, %v4674, %v4676
      %v4794 = vmax.f32 %v4214, %v4449
      %v4795 = vmax.f32 %v4215, %v4451
      %v4796 = vmax.f32 %v4216, %v4453
      %v4797 = vmax.f32 %v4217, %v4455
      %v4798 = vmax.f32 %v4218, %v4457
      %v4799 = vmax.f32 %v4219, %v4459
      %v4800 = vmax.f32 %v4220, %v4461
      %v4801 = vmax.f32 %v4221, %v4463
      %v4802 = vmax.f32 %v4222, %v4465
      %v4803 = vmax.f32 %v4223, %v4467
      %v4804 = vmax.f32 %v4224, %v4469
      %v4805 = vmax.f32 %v4225, %v4471
      %v4806 = vmax.f32 %v4226, %v4473
      %v4807 = vmax.f32 %v4227, %v4475
      %v4808 = vmax.f32 %v4228, %v4477
      %v4809 = vmax.f32 %v4229, %v4479
      %v4810 = vmax.f32 %v4230, %v4481
      %v4811 = vmax.f32 %v4231, %v4483
      %v4812 = vmax.f32 %v4232, %v4485
      %v4813 = vmax.f32 %v4233, %v4487
      %v4814 = vmax.f32 %v4234, %v4489
      %v4815 = vmax.f32 %v4235, %v4491
      %v4816 = vmax.f32 %v4236, %v4493
      %v4817 = vmax.f32 %v4237, %v4495
      %v4818 = vmax.f32 %v4238, %v4497
      %v4819 = vmax.f32 %v4239, %v4499
      %v4820 = vmax.f32 %v4240, %v4501
      %v4821 = vmax.f32 %v4241, %v4503
      %v4822 = vmax.f32 %v4242, %v4505
      %v4823 = vmax.f32 %v4243, %v4507
      %v4824 = vmax.f32 %v4244, %v4509
      %v4825 = vmax.f32 %v4245, %v4511
      %v4826 = vmax.f32 %v4246, %v4513
      %v4827 = vmax.f32 %v4247, %v4515
      %v4828 = vmax.f32 %v4248, %v4517
      %v4829 = vmax.f32 %v4249, %v4519
      %v4830 = vmax.f32 %v4250, %v4521
      %v4831 = vmax.f32 %v4251, %v4523
      %v4832 = vmax.f32 %v4252, %v4525
      %v4833 = vmax.f32 %v4253, %v4527
      %v4834 = vmax.f32 %v4254, %v4529
      %v4835 = vmax.f32 %v4255, %v4531
      %v4836 = vmax.f32 %v4256, %v4533
      %v4837 = vmax.f32 %v4257, %v4535
      %v4838 = vmax.f32 %v4258, %v4537
      %v4839 = vmax.f32 %v4259, %v4539
      %v4840 = vmax.f32 %v4260, %v4541
      %v4841 = vmax.f32 %v4261, %v4543
      %v4842 = vmax.f32 %v4262, %v4545
      %v4843 = vmax.f32 %v4263, %v4547
      %v4844 = vmax.f32 %v4264, %v4549
      %v4845 = vmax.f32 %v4265, %v4551
      %v4846 = vmax.f32 %v4266, %v4553
      %v4847 = vmax.f32 %v4267, %v4555
      %v4848 = vmax.f32 %v4268, %v4557
      %v4849 = vmax.f32 %v4269, %v4559
      %v4850 = vmax.f32 %v4270, %v4561
      %v4851 = vmax.f32 %v4271, %v4563
      %v4852 = vmax.f32 %v4272, %v4565
      %v4853 = vmax.f32 %v4273, %v4567
      %v4854 = vmax.f32 %v4274, %v4569
      %v4855 = vmax.f32 %v4275, %v4571
      %v4856 = vmax.f32 %v4276, %v4573
      %v4857 = vmax.f32 %v4277, %v4575
      %v4858 = vmax.f32 %v4278, %v4577
      %v4859 = vmax.f32 %v4279, %v4579
      %v4860 = vmax.f32 %v4280, %v4581
      %v4861 = vmax.f32 %v4281, %v4583
      %v4862 = vmax.f32 %v4282, %v4585
      %v4863 = vmax.f32 %v4283, %v4587
      %v4864 = vmax.f32 %v4284, %v4589
      %v4865 = vmax.f32 %v4285, %v4591
      %v4866 = vmax.f32 %v4286, %v4593
      %v4867 = vmax.f32 %v4287, %v4595
      %v4868 = vmax.f32 %v4288, %v4597
      %v4869 = vmax.f32 %v4289, %v4599
      %v4870 = vmax.f32 %v4290, %v4601
      %v4871 = vmax.f32 %v4291, %v4603
      %v4872 = vmax.f32 %v4292, %v4605
      %v4873 = vmax.f32 %v4293, %v4607
      %v4874 = vmax.f32 %v4294, %v4609
      %v4875 = vmax.f32 %v4295, %v4611
      %v4876 = vmax.f32 %v4296, %v4613
      %v4877 = vmax.f32 %v4297, %v4615
      %v4878 = vmax.f32 %v4298, %v4617
      %v4879 = vmax.f32 %v4299, %v4619
      %v4880 = vmax.f32 %v4300, %v4621
      %v4881 = vmax.f32 %v4301, %v4623
      %v4882 = vmax.f32 %v4302, %v4625
      %v4883 = vmax.f32 %v4303, %v4627
      %v4884 = vmax.f32 %v4304, %v4629
      %v4885 = vmax.f32 %v4305, %v4631
      %v4886 = vmax.f32 %v4306, %v4633
      %v4887 = vmax.f32 %v4307, %v4635
      %v4888 = vmax.f32 %v4308, %v4637
      %v4889 = vmax.f32 %v4309, %v4639
      %v4890 = vmax.f32 %v4310, %v4641
      %v4891 = vmax.f32 %v4311, %v4643
      %v4892 = vmax.f32 %v4312, %v4645
      %v4893 = vmax.f32 %v4313, %v4647
      %v4894 = vmax.f32 %v4314, %v4649
      %v4895 = vmax.f32 %v4315, %v4651
      %v4896 = vmax.f32 %v4316, %v4653
      %v4897 = vmax.f32 %v4317, %v4655
      %v4898 = vmax.f32 %v4318, %v4657
      %v4899 = vmax.f32 %v4319, %v4659
      %v4900 = vmax.f32 %v4320, %v4661
      %v4901 = vmax.f32 %v4321, %v4663
      %v4902 = vmax.f32 %v4322, %v4665
      %v4903 = vmax.f32 %v4323, %v4667
      %v4904 = vmax.f32 %v4324, %v4669
      %v4905 = vmax.f32 %v4325, %v4671
      %v4906 = vmax.f32 %v4326, %v4673
      %v4907 = vmax.f32 %v4327, %v4675
      %v4908 = vmax.f32 %v4328, %v4677
      %v4909 = vmax.f32 %v4329, %v4676
      %v4910 = vpack.c.bf16 %v4795, %v4794
      %v4911 = vpack.c.bf16 %v4797, %v4796
      %v4912 = vpack.c.bf16 %v4799, %v4798
      %v4913 = vpack.c.bf16 %v4801, %v4800
      %v4914 = vpack.c.bf16 %v4803, %v4802
      %v4915 = vpack.c.bf16 %v4805, %v4804
      %v4916 = vpack.c.bf16 %v4807, %v4806
      %v4917 = vpack.c.bf16 %v4809, %v4808
      %v4918 = vpack.c.bf16 %v4811, %v4810
      %v4919 = vpack.c.bf16 %v4813, %v4812
      %v4920 = vpack.c.bf16 %v4815, %v4814
      %v4921 = vpack.c.bf16 %v4817, %v4816
      %v4922 = vpack.c.bf16 %v4819, %v4818
      %v4923 = vpack.c.bf16 %v4821, %v4820
      %v4924 = vpack.c.bf16 %v4823, %v4822
      %v4925 = vpack.c.bf16 %v4825, %v4824
      %v4926 = vpack.c.bf16 %v4827, %v4826
      %v4927 = vpack.c.bf16 %v4829, %v4828
      %v4928 = vpack.c.bf16 %v4831, %v4830
      %v4929 = vpack.c.bf16 %v4833, %v4832
      %v4930 = vpack.c.bf16 %v4835, %v4834
      %v4931 = vpack.c.bf16 %v4837, %v4836
      %v4932 = vpack.c.bf16 %v4839, %v4838
      %v4933 = vpack.c.bf16 %v4841, %v4840
      %v4934 = vpack.c.bf16 %v4843, %v4842
      %v4935 = vpack.c.bf16 %v4845, %v4844
      %v4936 = vpack.c.bf16 %v4847, %v4846
      %v4937 = vpack.c.bf16 %v4849, %v4848
      %v4938 = vpack.c.bf16 %v4851, %v4850
      %v4939 = vpack.c.bf16 %v4853, %v4852
      %v4940 = vpack.c.bf16 %v4855, %v4854
      %v4941 = vpack.c.bf16 %v4857, %v4856
      %v4942 = vpack.c.bf16 %v4859, %v4858
      %v4943 = vpack.c.bf16 %v4861, %v4860
      %v4944 = vpack.c.bf16 %v4863, %v4862
      %v4945 = vpack.c.bf16 %v4865, %v4864
      %v4946 = vpack.c.bf16 %v4867, %v4866
      %v4947 = vpack.c.bf16 %v4869, %v4868
      %v4948 = vpack.c.bf16 %v4871, %v4870
      %v4949 = vpack.c.bf16 %v4873, %v4872
      %v4950 = vpack.c.bf16 %v4875, %v4874
      %v4951 = vpack.c.bf16 %v4877, %v4876
      %v4952 = vpack.c.bf16 %v4879, %v4878
      %v4953 = vpack.c.bf16 %v4881, %v4880
      %v4954 = vpack.c.bf16 %v4883, %v4882
      %v4955 = vpack.c.bf16 %v4885, %v4884
      %v4956 = vpack.c.bf16 %v4887, %v4886
      %v4957 = vpack.c.bf16 %v4889, %v4888
      %v4958 = vpack.c.bf16 %v4891, %v4890
      %v4959 = vpack.c.bf16 %v4893, %v4892
      %v4960 = vpack.c.bf16 %v4895, %v4894
      %v4961 = vpack.c.bf16 %v4897, %v4896
      %v4962 = vpack.c.bf16 %v4899, %v4898
      %v4963 = vpack.c.bf16 %v4901, %v4900
      %v4964 = vpack.c.bf16 %v4903, %v4902
      %v4965 = vpack.c.bf16 %v4905, %v4904
      %v4966 = vpack.c.bf16 %v4907, %v4906
      %v4967 = vpack.c.bf16 %v4909, %v4908
      %v4968 = vld [vmem:[%s5] sm:$0xff]
      %v4969 = vld [vmem:[%s5 + $0x8] sm:$0xff]
      %v4970 = vld [vmem:[%s5 + $0x10] sm:$0xff]
      %v4971 = vld [vmem:[%s5 + $0x18] sm:$0xff]
      %v4972 = vld [vmem:[%s5 + $0x20] sm:$0xff]
      %v4973 = vld [vmem:[%s5 + $0x28] sm:$0xff]
      %v4974 = vld [vmem:[%s5 + $0x30] sm:$0xff]
      %v4975 = vld [vmem:[%s5 + $0x38] sm:$0xff]
      %v4976 = vld [vmem:[%s5 + $0x40] sm:$0xff]
      %v4977 = vld [vmem:[%s5 + $0x48] sm:$0xff]
      %v4978 = vld [vmem:[%s5 + $0x50] sm:$0xff]
      %v4979 = vld [vmem:[%s5 + $0x58] sm:$0xff]
      %v4980 = vld [vmem:[%s5 + $0x60] sm:$0xff]
      %v4981 = vld [vmem:[%s5 + $0x68] sm:$0xff]
      %v4982 = vld [vmem:[%s5 + $0x70] sm:$0xff]
      %v4983 = vld [vmem:[%s5 + $0x78] sm:$0xff]
      %v4984 = vld [vmem:[%s5 + $0x80] sm:$0xff]
      %v4985 = vld [vmem:[%s5 + $0x88] sm:$0xff]
      %v4986 = vld [vmem:[%s5 + $0x90] sm:$0xff]
      %v4987 = vld [vmem:[%s5 + $0x98] sm:$0xff]
      %v4988 = vld [vmem:[%s5 + $0xa0] sm:$0xff]
      %v4989 = vld [vmem:[%s5 + $0xa8] sm:$0xff]
      %v4990 = vld [vmem:[%s5 + $0xb0] sm:$0xff]
      %v4991 = vld [vmem:[%s5 + $0xb8] sm:$0xff]
      %v4992 = vld [vmem:[%s5 + $0xc0] sm:$0xff]
      %v4993 = vld [vmem:[%s5 + $0xc8] sm:$0xff]
      %v4994 = vld [vmem:[%s5 + $0xd0] sm:$0xff]
      %v4995 = vld [vmem:[%s5 + $0xd8] sm:$0xff]
      %v4996 = vld [vmem:[%s5 + $0xe0] sm:$0xff]
      %v4997 = vld [vmem:[%s5 + $0xe8] sm:$0xff]
      %v4998 = vld [vmem:[%s5 + $0xf0] sm:$0xff]
      %v4999 = vld [vmem:[%s5 + $0xf8] sm:$0xff]
      %v5000 = vld [vmem:[%s5 + $0x100] sm:$0xff]
      %v5001 = vld [vmem:[%s5 + $0x108] sm:$0xff]
      %v5002 = vld [vmem:[%s5 + $0x110] sm:$0xff]
      %v5003 = vld [vmem:[%s5 + $0x118] sm:$0xff]
      %v5004 = vld [vmem:[%s5 + $0x120] sm:$0xff]
      %v5005 = vld [vmem:[%s5 + $0x128] sm:$0xff]
      %v5006 = vld [vmem:[%s5 + $0x130] sm:$0xff]
      %v5007 = vld [vmem:[%s5 + $0x138] sm:$0xff]
      %v5008 = vld [vmem:[%s5 + $0x140] sm:$0xff]
      %v5009 = vld [vmem:[%s5 + $0x148] sm:$0xff]
      %v5010 = vld [vmem:[%s5 + $0x150] sm:$0xff]
      %v5011 = vld [vmem:[%s5 + $0x158] sm:$0xff]
      %v5012 = vld [vmem:[%s5 + $0x160] sm:$0xff]
      %v5013 = vld [vmem:[%s5 + $0x168] sm:$0xff]
      %v5014 = vld [vmem:[%s5 + $0x170] sm:$0xff]
      %v5015 = vld [vmem:[%s5 + $0x178] sm:$0xff]
      %v5016 = vld [vmem:[%s5 + $0x180] sm:$0xff]
      %v5017 = vld [vmem:[%s5 + $0x188] sm:$0xff]
      %v5018 = vld [vmem:[%s5 + $0x190] sm:$0xff]
      %v5019 = vld [vmem:[%s5 + $0x198] sm:$0xff]
      %v5020 = vld [vmem:[%s5 + $0x1a0] sm:$0xff]
      %v5021 = vld [vmem:[%s5 + $0x1a8] sm:$0xff]
      %v5022 = vld [vmem:[%s5 + $0x1b0] sm:$0xff]
      %v5023 = vld [vmem:[%s5 + $0x1b8] sm:$0xff]
      %v5024 = vld [vmem:[%s5 + $0x1c0] sm:$0xff]
      %v5025 = vld [vmem:[%s5 + $0x1c8] sm:$0xff]
      %v5026 = vld [vmem:[%s5 + $0x1d0] sm:$0xff]
      %v5027 = vld [vmem:[%s5 + $0x1d8] sm:$0xff]
      %v5028 = vld [vmem:[%s5 + $0x1e0] sm:$0xff]
      %v5029 = vld [vmem:[%s5 + $0x1e8] sm:$0xff]
      %v5030 = vld [vmem:[%s5 + $0x1f0] sm:$0xff]
      %v5031 = vld [vmem:[%s5 + $0x1f8] sm:$0xff]
      %v5032 = vld [vmem:[%s5 + $0x200] sm:$0xff]
      %v5033 = vld [vmem:[%s5 + $0x208] sm:$0xff]
      %v5034 = vld [vmem:[%s5 + $0x210] sm:$0xff]
      %v5035 = vld [vmem:[%s5 + $0x218] sm:$0xff]
      %v5036 = vld [vmem:[%s5 + $0x220] sm:$0xff]
      %v5037 = vld [vmem:[%s5 + $0x228] sm:$0xff]
      %v5038 = vld [vmem:[%s5 + $0x230] sm:$0xff]
      %v5039 = vld [vmem:[%s5 + $0x238] sm:$0xff]
      %v5040 = vld [vmem:[%s5 + $0x240] sm:$0xff]
      %v5041 = vld [vmem:[%s5 + $0x248] sm:$0xff]
      %v5042 = vld [vmem:[%s5 + $0x250] sm:$0xff]
      %v5043 = vld [vmem:[%s5 + $0x258] sm:$0xff]
      %v5044 = vld [vmem:[%s5 + $0x260] sm:$0xff]
      %v5045 = vld [vmem:[%s5 + $0x268] sm:$0xff]
      %v5046 = vld [vmem:[%s5 + $0x270] sm:$0xff]
      %v5047 = vld [vmem:[%s5 + $0x278] sm:$0xff]
      %v5048 = vld [vmem:[%s5 + $0x280] sm:$0xff]
      %v5049 = vld [vmem:[%s5 + $0x288] sm:$0xff]
      %v5050 = vld [vmem:[%s5 + $0x290] sm:$0xff]
      %v5051 = vld [vmem:[%s5 + $0x298] sm:$0xff]
      %v5052 = vld [vmem:[%s5 + $0x2a0] sm:$0xff]
      %v5053 = vld [vmem:[%s5 + $0x2a8] sm:$0xff]
      %v5054 = vld [vmem:[%s5 + $0x2b0] sm:$0xff]
      %v5055 = vld [vmem:[%s5 + $0x2b8] sm:$0xff]
      %v5056 = vld [vmem:[%s5 + $0x2c0] sm:$0xff]
      %v5057 = vld [vmem:[%s5 + $0x2c8] sm:$0xff]
      %v5058 = vld [vmem:[%s5 + $0x2d0] sm:$0xff]
      %v5059 = vld [vmem:[%s5 + $0x2d8] sm:$0xff]
      %v5060 = vld [vmem:[%s5 + $0x2e0] sm:$0xff]
      %v5061 = vld [vmem:[%s5 + $0x2e8] sm:$0xff]
      %v5062 = vld [vmem:[%s5 + $0x2f0] sm:$0xff]
      %v5063 = vld [vmem:[%s5 + $0x2f8] sm:$0xff]
      %v5064 = vld [vmem:[%s5 + $0x300] sm:$0xff]
      %v5065 = vld [vmem:[%s5 + $0x308] sm:$0xff]
      %v5066 = vld [vmem:[%s5 + $0x310] sm:$0xff]
      %v5067 = vld [vmem:[%s5 + $0x318] sm:$0xff]
      %v5068 = vld [vmem:[%s5 + $0x320] sm:$0xff]
      %v5069 = vld [vmem:[%s5 + $0x328] sm:$0xff]
      %v5070 = vld [vmem:[%s5 + $0x330] sm:$0xff]
      %v5071 = vld [vmem:[%s5 + $0x338] sm:$0xff]
      %v5072 = vld [vmem:[%s5 + $0x340] sm:$0xff]
      %v5073 = vld [vmem:[%s5 + $0x348] sm:$0xff]
      %v5074 = vld [vmem:[%s5 + $0x350] sm:$0xff]
      %v5075 = vld [vmem:[%s5 + $0x358] sm:$0xff]
      %v5076 = vld [vmem:[%s5 + $0x360] sm:$0xff]
      %v5077 = vld [vmem:[%s5 + $0x368] sm:$0xff]
      %v5078 = vld [vmem:[%s5 + $0x370] sm:$0xff]
      %v5079 = vld [vmem:[%s5 + $0x378] sm:$0xff]
      %v5080 = vld [vmem:[%s5 + $0x380] sm:$0xff]
      %v5081 = vld [vmem:[%s5 + $0x388] sm:$0xff]
      %v5082 = vld [vmem:[%s5 + $0x390] sm:$0xff]
      %v5083 = vld [vmem:[%s5 + $0x398] sm:$0xff]
      %v5084 = vld [vmem:[%s5 + $0x3a0] sm:$0xff]
      %v5085 = vld [vmem:[%s5 + $0x3a8] sm:$0xff]
      %v5086 = vld [vmem:[%s5 + $0x3b0] sm:$0xff]
      %v5087 = vld [vmem:[%s5 + $0x3b8] sm:$0xff]
      %v5208 = vunpack.c.l.b16 %v4968
      %v5209 = vunpack.c.h.b16 %v4968
      %v5210 = vunpack.c.l.b16 %v4969
      %v5211 = vunpack.c.h.b16 %v4969
      %v5212 = vunpack.c.l.b16 %v4970
      %v5213 = vunpack.c.h.b16 %v4970
      %v5214 = vunpack.c.l.b16 %v4971
      %v5215 = vunpack.c.h.b16 %v4971
      %v5216 = vunpack.c.l.b16 %v4972
      %v5217 = vunpack.c.h.b16 %v4972
      %v5218 = vunpack.c.l.b16 %v4973
      %v5219 = vunpack.c.h.b16 %v4973
      %v5220 = vunpack.c.l.b16 %v4974
      %v5221 = vunpack.c.h.b16 %v4974
      %v5222 = vunpack.c.l.b16 %v4975
      %v5223 = vunpack.c.h.b16 %v4975
      %v5224 = vunpack.c.l.b16 %v4976
      %v5225 = vunpack.c.h.b16 %v4976
      %v5226 = vunpack.c.l.b16 %v4977
      %v5227 = vunpack.c.h.b16 %v4977
      %v5228 = vunpack.c.l.b16 %v4978
      %v5229 = vunpack.c.h.b16 %v4978
      %v5230 = vunpack.c.l.b16 %v4979
      %v5231 = vunpack.c.h.b16 %v4979
      %v5232 = vunpack.c.l.b16 %v4980
      %v5233 = vunpack.c.h.b16 %v4980
      %v5234 = vunpack.c.l.b16 %v4981
      %v5235 = vunpack.c.h.b16 %v4981
      %v5236 = vunpack.c.l.b16 %v4982
      %v5237 = vunpack.c.h.b16 %v4982
      %v5238 = vunpack.c.l.b16 %v4983
      %v5239 = vunpack.c.h.b16 %v4983
      %v5240 = vunpack.c.l.b16 %v4984
      %v5241 = vunpack.c.h.b16 %v4984
      %v5242 = vunpack.c.l.b16 %v4985
      %v5243 = vunpack.c.h.b16 %v4985
      %v5244 = vunpack.c.l.b16 %v4986
      %v5245 = vunpack.c.h.b16 %v4986
      %v5246 = vunpack.c.l.b16 %v4987
      %v5247 = vunpack.c.h.b16 %v4987
      %v5248 = vunpack.c.l.b16 %v4988
      %v5249 = vunpack.c.h.b16 %v4988
      %v5250 = vunpack.c.l.b16 %v4989
      %v5251 = vunpack.c.h.b16 %v4989
      %v5252 = vunpack.c.l.b16 %v4990
      %v5253 = vunpack.c.h.b16 %v4990
      %v5254 = vunpack.c.l.b16 %v4991
      %v5255 = vunpack.c.h.b16 %v4991
      %v5256 = vunpack.c.l.b16 %v4992
      %v5257 = vunpack.c.h.b16 %v4992
      %v5258 = vunpack.c.l.b16 %v4993
      %v5259 = vunpack.c.h.b16 %v4993
      %v5260 = vunpack.c.l.b16 %v4994
      %v5261 = vunpack.c.h.b16 %v4994
      %v5262 = vunpack.c.l.b16 %v4995
      %v5263 = vunpack.c.h.b16 %v4995
      %v5264 = vunpack.c.l.b16 %v4996
      %v5265 = vunpack.c.h.b16 %v4996
      %v5266 = vunpack.c.l.b16 %v4997
      %v5267 = vunpack.c.h.b16 %v4997
      %v5268 = vunpack.c.l.b16 %v4998
      %v5269 = vunpack.c.h.b16 %v4998
      %v5270 = vunpack.c.l.b16 %v4999
      %v5271 = vunpack.c.h.b16 %v4999
      %v5272 = vunpack.c.l.b16 %v5000
      %v5273 = vunpack.c.h.b16 %v5000
      %v5274 = vunpack.c.l.b16 %v5001
      %v5275 = vunpack.c.h.b16 %v5001
      %v5276 = vunpack.c.l.b16 %v5002
      %v5277 = vunpack.c.h.b16 %v5002
      %v5278 = vunpack.c.l.b16 %v5003
      %v5279 = vunpack.c.h.b16 %v5003
      %v5280 = vunpack.c.l.b16 %v5004
      %v5281 = vunpack.c.h.b16 %v5004
      %v5282 = vunpack.c.l.b16 %v5005
      %v5283 = vunpack.c.h.b16 %v5005
      %v5284 = vunpack.c.l.b16 %v5006
      %v5285 = vunpack.c.h.b16 %v5006
      %v5286 = vunpack.c.l.b16 %v5007
      %v5287 = vunpack.c.h.b16 %v5007
      %v5288 = vunpack.c.l.b16 %v5008
      %v5289 = vunpack.c.h.b16 %v5008
      %v5290 = vunpack.c.l.b16 %v5009
      %v5291 = vunpack.c.h.b16 %v5009
      %v5292 = vunpack.c.l.b16 %v5010
      %v5293 = vunpack.c.h.b16 %v5010
      %v5294 = vunpack.c.l.b16 %v5011
      %v5295 = vunpack.c.h.b16 %v5011
      %v5296 = vunpack.c.l.b16 %v5012
      %v5297 = vunpack.c.h.b16 %v5012
      %v5298 = vunpack.c.l.b16 %v5013
      %v5299 = vunpack.c.h.b16 %v5013
      %v5300 = vunpack.c.l.b16 %v5014
      %v5301 = vunpack.c.h.b16 %v5014
      %v5302 = vunpack.c.l.b16 %v5015
      %v5303 = vunpack.c.h.b16 %v5015
      %v5304 = vunpack.c.l.b16 %v5016
      %v5305 = vunpack.c.h.b16 %v5016
      %v5306 = vunpack.c.l.b16 %v5017
      %v5307 = vunpack.c.h.b16 %v5017
      %v5308 = vunpack.c.l.b16 %v5018
      %v5309 = vunpack.c.h.b16 %v5018
      %v5310 = vunpack.c.l.b16 %v5019
      %v5311 = vunpack.c.h.b16 %v5019
      %v5312 = vunpack.c.l.b16 %v5020
      %v5313 = vunpack.c.h.b16 %v5020
      %v5314 = vunpack.c.l.b16 %v5021
      %v5315 = vunpack.c.h.b16 %v5021
      %v5316 = vunpack.c.l.b16 %v5022
      %v5317 = vunpack.c.h.b16 %v5022
      %v5318 = vunpack.c.l.b16 %v5023
      %v5319 = vunpack.c.h.b16 %v5023
      %v5320 = vunpack.c.l.b16 %v5024
      %v5321 = vunpack.c.h.b16 %v5024
      %v5322 = vunpack.c.l.b16 %v5025
      %v5323 = vunpack.c.h.b16 %v5025
      %v5324 = vunpack.c.l.b16 %v5026
      %v5325 = vunpack.c.h.b16 %v5026
      %v5326 = vunpack.c.l.b16 %v5027
      %v5327 = vunpack.c.h.b16 %v5027
      %v5328 = vunpack.c.l.b16 %v5028
      %v5329 = vunpack.c.h.b16 %v5028
      %v5330 = vunpack.c.l.b16 %v5029
      %v5331 = vunpack.c.h.b16 %v5029
      %v5332 = vunpack.c.l.b16 %v5030
      %v5333 = vunpack.c.h.b16 %v5030
      %v5334 = vunpack.c.l.b16 %v5031
      %v5335 = vunpack.c.h.b16 %v5031
      %v5336 = vunpack.c.l.b16 %v5032
      %v5337 = vunpack.c.h.b16 %v5032
      %v5338 = vunpack.c.l.b16 %v5033
      %v5339 = vunpack.c.h.b16 %v5033
      %v5340 = vunpack.c.l.b16 %v5034
      %v5341 = vunpack.c.h.b16 %v5034
      %v5342 = vunpack.c.l.b16 %v5035
      %v5343 = vunpack.c.h.b16 %v5035
      %v5344 = vunpack.c.l.b16 %v5036
      %v5345 = vunpack.c.h.b16 %v5036
      %v5346 = vunpack.c.l.b16 %v5037
      %v5347 = vunpack.c.h.b16 %v5037
      %v5348 = vunpack.c.l.b16 %v5038
      %v5349 = vunpack.c.h.b16 %v5038
      %v5350 = vunpack.c.l.b16 %v5039
      %v5351 = vunpack.c.h.b16 %v5039
      %v5352 = vunpack.c.l.b16 %v5040
      %v5353 = vunpack.c.h.b16 %v5040
      %v5354 = vunpack.c.l.b16 %v5041
      %v5355 = vunpack.c.h.b16 %v5041
      %v5356 = vunpack.c.l.b16 %v5042
      %v5357 = vunpack.c.h.b16 %v5042
      %v5358 = vunpack.c.l.b16 %v5043
      %v5359 = vunpack.c.h.b16 %v5043
      %v5360 = vunpack.c.l.b16 %v5044
      %v5361 = vunpack.c.h.b16 %v5044
      %v5362 = vunpack.c.l.b16 %v5045
      %v5363 = vunpack.c.h.b16 %v5045
      %v5364 = vunpack.c.l.b16 %v5046
      %v5365 = vunpack.c.h.b16 %v5046
      %v5366 = vunpack.c.l.b16 %v5047
      %v5367 = vunpack.c.h.b16 %v5047
      %v5368 = vunpack.c.l.b16 %v5048
      %v5369 = vunpack.c.h.b16 %v5048
      %v5370 = vunpack.c.l.b16 %v5049
      %v5371 = vunpack.c.h.b16 %v5049
      %v5372 = vunpack.c.l.b16 %v5050
      %v5373 = vunpack.c.h.b16 %v5050
      %v5374 = vunpack.c.l.b16 %v5051
      %v5375 = vunpack.c.h.b16 %v5051
      %v5376 = vunpack.c.l.b16 %v5052
      %v5377 = vunpack.c.h.b16 %v5052
      %v5378 = vunpack.c.l.b16 %v5053
      %v5379 = vunpack.c.h.b16 %v5053
      %v5380 = vunpack.c.l.b16 %v5054
      %v5381 = vunpack.c.h.b16 %v5054
      %v5382 = vunpack.c.l.b16 %v5055
      %v5383 = vunpack.c.h.b16 %v5055
      %v5384 = vunpack.c.l.b16 %v5056
      %v5385 = vunpack.c.h.b16 %v5056
      %v5386 = vunpack.c.l.b16 %v5057
      %v5387 = vunpack.c.h.b16 %v5057
      %v5388 = vunpack.c.l.b16 %v5058
      %v5389 = vunpack.c.h.b16 %v5058
      %v5390 = vunpack.c.l.b16 %v5059
      %v5391 = vunpack.c.h.b16 %v5059
      %v5392 = vunpack.c.l.b16 %v5060
      %v5393 = vunpack.c.h.b16 %v5060
      %v5394 = vunpack.c.l.b16 %v5061
      %v5395 = vunpack.c.h.b16 %v5061
      %v5396 = vunpack.c.l.b16 %v5062
      %v5397 = vunpack.c.h.b16 %v5062
      %v5398 = vunpack.c.l.b16 %v5063
      %v5399 = vunpack.c.h.b16 %v5063
      %v5400 = vunpack.c.l.b16 %v5064
      %v5401 = vunpack.c.h.b16 %v5064
      %v5402 = vunpack.c.l.b16 %v5065
      %v5403 = vunpack.c.h.b16 %v5065
      %v5404 = vunpack.c.l.b16 %v5066
      %v5405 = vunpack.c.h.b16 %v5066
      %v5406 = vunpack.c.l.b16 %v5067
      %v5407 = vunpack.c.h.b16 %v5067
      %v5408 = vunpack.c.l.b16 %v5068
      %v5409 = vunpack.c.h.b16 %v5068
      %v5410 = vunpack.c.l.b16 %v5069
      %v5411 = vunpack.c.h.b16 %v5069
      %v5412 = vunpack.c.l.b16 %v5070
      %v5413 = vunpack.c.h.b16 %v5070
      %v5414 = vunpack.c.l.b16 %v5071
      %v5415 = vunpack.c.h.b16 %v5071
      %v5416 = vunpack.c.l.b16 %v5072
      %v5417 = vunpack.c.h.b16 %v5072
      %v5418 = vunpack.c.l.b16 %v5073
      %v5419 = vunpack.c.h.b16 %v5073
      %v5420 = vunpack.c.l.b16 %v5074
      %v5421 = vunpack.c.h.b16 %v5074
      %v5422 = vunpack.c.l.b16 %v5075
      %v5423 = vunpack.c.h.b16 %v5075
      %v5424 = vunpack.c.l.b16 %v5076
      %v5425 = vunpack.c.h.b16 %v5076
      %v5426 = vunpack.c.l.b16 %v5077
      %v5427 = vunpack.c.h.b16 %v5077
      %v5428 = vunpack.c.l.b16 %v5078
      %v5429 = vunpack.c.h.b16 %v5078
      %v5430 = vunpack.c.l.b16 %v5079
      %v5431 = vunpack.c.h.b16 %v5079
      %v5432 = vunpack.c.l.b16 %v5080
      %v5433 = vunpack.c.h.b16 %v5080
      %v5434 = vunpack.c.l.b16 %v5081
      %v5435 = vunpack.c.h.b16 %v5081
      %v5436 = vunpack.c.l.b16 %v5082
      %v5437 = vunpack.c.h.b16 %v5082
      %v5438 = vunpack.c.l.b16 %v5083
      %v5439 = vunpack.c.h.b16 %v5083
      %v5440 = vunpack.c.l.b16 %v5084
      %v5441 = vunpack.c.h.b16 %v5084
      %v5442 = vunpack.c.l.b16 %v5085
      %v5443 = vunpack.c.h.b16 %v5085
      %v5444 = vunpack.c.l.b16 %v5086
      %v5445 = vunpack.c.h.b16 %v5086
      %v5446 = vunpack.c.l.b16 %v5087
      %v5447 = vunpack.c.h.b16 %v5087
      %v5448 = vpack.c.b16 %v5216, %v5208
      %v5449 = vpack.c.b16 %v5217, %v5209
      %v5450 = vpack.c.b16 %v5218, %v5210
      %v5451 = vpack.c.b16 %v5219, %v5211
      %v5452 = vpack.c.b16 %v5220, %v5212
      %v5453 = vpack.c.b16 %v5221, %v5213
      %v5454 = vpack.c.b16 %v5222, %v5214
      %v5455 = vpack.c.b16 %v5223, %v5215
      %v5456 = vpack.c.b16 %v5232, %v5224
      %v5457 = vpack.c.b16 %v5233, %v5225
      %v5458 = vpack.c.b16 %v5234, %v5226
      %v5459 = vpack.c.b16 %v5235, %v5227
      %v5460 = vpack.c.b16 %v5236, %v5228
      %v5461 = vpack.c.b16 %v5237, %v5229
      %v5462 = vpack.c.b16 %v5238, %v5230
      %v5463 = vpack.c.b16 %v5239, %v5231
      %v5464 = vpack.c.b16 %v5248, %v5240
      %v5465 = vpack.c.b16 %v5249, %v5241
      %v5466 = vpack.c.b16 %v5250, %v5242
      %v5467 = vpack.c.b16 %v5251, %v5243
      %v5468 = vpack.c.b16 %v5252, %v5244
      %v5469 = vpack.c.b16 %v5253, %v5245
      %v5470 = vpack.c.b16 %v5254, %v5246
      %v5471 = vpack.c.b16 %v5255, %v5247
      %v5472 = vpack.c.b16 %v5264, %v5256
      %v5473 = vpack.c.b16 %v5265, %v5257
      %v5474 = vpack.c.b16 %v5266, %v5258
      %v5475 = vpack.c.b16 %v5267, %v5259
      %v5476 = vpack.c.b16 %v5268, %v5260
      %v5477 = vpack.c.b16 %v5269, %v5261
      %v5478 = vpack.c.b16 %v5270, %v5262
      %v5479 = vpack.c.b16 %v5271, %v5263
      %v5480 = vpack.c.b16 %v5280, %v5272
      %v5481 = vpack.c.b16 %v5281, %v5273
      %v5482 = vpack.c.b16 %v5282, %v5274
      %v5483 = vpack.c.b16 %v5283, %v5275
      %v5484 = vpack.c.b16 %v5284, %v5276
      %v5485 = vpack.c.b16 %v5285, %v5277
      %v5486 = vpack.c.b16 %v5286, %v5278
      %v5487 = vpack.c.b16 %v5287, %v5279
      %v5488 = vpack.c.b16 %v5296, %v5288
      %v5489 = vpack.c.b16 %v5297, %v5289
      %v5490 = vpack.c.b16 %v5298, %v5290
      %v5491 = vpack.c.b16 %v5299, %v5291
      %v5492 = vpack.c.b16 %v5300, %v5292
      %v5493 = vpack.c.b16 %v5301, %v5293
      %v5494 = vpack.c.b16 %v5302, %v5294
      %v5495 = vpack.c.b16 %v5303, %v5295
      %v5496 = vpack.c.b16 %v5312, %v5304
      %v5497 = vpack.c.b16 %v5313, %v5305
      %v5498 = vpack.c.b16 %v5314, %v5306
      %v5499 = vpack.c.b16 %v5315, %v5307
      %v5500 = vpack.c.b16 %v5316, %v5308
      %v5501 = vpack.c.b16 %v5317, %v5309
      %v5502 = vpack.c.b16 %v5318, %v5310
      %v5503 = vpack.c.b16 %v5319, %v5311
      %v5504 = vpack.c.b16 %v5328, %v5320
      %v5505 = vpack.c.b16 %v5329, %v5321
      %v5506 = vpack.c.b16 %v5330, %v5322
      %v5507 = vpack.c.b16 %v5331, %v5323
      %v5508 = vpack.c.b16 %v5332, %v5324
      %v5509 = vpack.c.b16 %v5333, %v5325
      %v5510 = vpack.c.b16 %v5334, %v5326
      %v5511 = vpack.c.b16 %v5335, %v5327
      %v5512 = vpack.c.b16 %v5344, %v5336
      %v5513 = vpack.c.b16 %v5345, %v5337
      %v5514 = vpack.c.b16 %v5346, %v5338
      %v5515 = vpack.c.b16 %v5347, %v5339
      %v5516 = vpack.c.b16 %v5348, %v5340
      %v5517 = vpack.c.b16 %v5349, %v5341
      %v5518 = vpack.c.b16 %v5350, %v5342
      %v5519 = vpack.c.b16 %v5351, %v5343
      %v5520 = vpack.c.b16 %v5360, %v5352
      %v5521 = vpack.c.b16 %v5361, %v5353
      %v5522 = vpack.c.b16 %v5362, %v5354
      %v5523 = vpack.c.b16 %v5363, %v5355
      %v5524 = vpack.c.b16 %v5364, %v5356
      %v5525 = vpack.c.b16 %v5365, %v5357
      %v5526 = vpack.c.b16 %v5366, %v5358
      %v5527 = vpack.c.b16 %v5367, %v5359
      %v5528 = vpack.c.b16 %v5376, %v5368
      %v5529 = vpack.c.b16 %v5377, %v5369
      %v5530 = vpack.c.b16 %v5378, %v5370
      %v5531 = vpack.c.b16 %v5379, %v5371
      %v5532 = vpack.c.b16 %v5380, %v5372
      %v5533 = vpack.c.b16 %v5381, %v5373
      %v5534 = vpack.c.b16 %v5382, %v5374
      %v5535 = vpack.c.b16 %v5383, %v5375
      %v5536 = vpack.c.b16 %v5392, %v5384
      %v5537 = vpack.c.b16 %v5393, %v5385
      %v5538 = vpack.c.b16 %v5394, %v5386
      %v5539 = vpack.c.b16 %v5395, %v5387
      %v5540 = vpack.c.b16 %v5396, %v5388
      %v5541 = vpack.c.b16 %v5397, %v5389
      %v5542 = vpack.c.b16 %v5398, %v5390
      %v5543 = vpack.c.b16 %v5399, %v5391
      %v5544 = vpack.c.b16 %v5408, %v5400
      %v5545 = vpack.c.b16 %v5409, %v5401
      %v5546 = vpack.c.b16 %v5410, %v5402
      %v5547 = vpack.c.b16 %v5411, %v5403
      %v5548 = vpack.c.b16 %v5412, %v5404
      %v5549 = vpack.c.b16 %v5413, %v5405
      %v5550 = vpack.c.b16 %v5414, %v5406
      %v5551 = vpack.c.b16 %v5415, %v5407
      %v5552 = vpack.c.b16 %v5424, %v5416
      %v5553 = vpack.c.b16 %v5425, %v5417
      %v5554 = vpack.c.b16 %v5426, %v5418
      %v5555 = vpack.c.b16 %v5427, %v5419
      %v5556 = vpack.c.b16 %v5428, %v5420
      %v5557 = vpack.c.b16 %v5429, %v5421
      %v5558 = vpack.c.b16 %v5430, %v5422
      %v5559 = vpack.c.b16 %v5431, %v5423
      %v5560 = vpack.c.b16 %v5440, %v5432
      %v5561 = vpack.c.b16 %v5441, %v5433
      %v5562 = vpack.c.b16 %v5442, %v5434
      %v5563 = vpack.c.b16 %v5443, %v5435
      %v5564 = vpack.c.b16 %v5444, %v5436
      %v5565 = vpack.c.b16 %v5445, %v5437
      %v5566 = vpack.c.b16 %v5446, %v5438
      %v5567 = vpack.c.b16 %v5447, %v5439
      %vm5673 = vcmask 252928
      %v5675 = vsel %vm5673, %v5455, 0
      %v5678 = vsel %vm5673, %v5463, 0
      %v5681 = vsel %vm5673, %v5471, 0
      %v5684 = vsel %vm5673, %v5479, 0
      %v5687 = vsel %vm5673, %v5487, 0
      %v5690 = vsel %vm5673, %v5495, 0
      %v5693 = vsel %vm5673, %v5503, 0
      %v5696 = vsel %vm5673, %v5511, 0
      %v5699 = vsel %vm5673, %v5519, 0
      %v5702 = vsel %vm5673, %v5527, 0
      %v5705 = vsel %vm5673, %v5535, 0
      %v5708 = vsel %vm5673, %v5543, 0
      %v5711 = vsel %vm5673, %v5551, 0
      %v5714 = vsel %vm5673, %v5559, 0
      %v5717 = vsel %vm5673, %v5567, 0
      %vm5719 = vcmask 1047552
      %v5720 = vsel %vm4446, 4294967295, 65535
      %v5721 = vsel %vm5719, %v5720, 0
      %v5723 = vand.u32 %v4967, %v5721
      %5725 = vmatprep.subr.bf16.mxu0 0
      %5726 = vmatpush1.bf16.msra.mxu0 %v4910
      %5727 = vmatprep.subr.bf16.mxu0 0
      %5728 = vmatpush1.bf16.msra.mxu0 %v4911
      %5729 = vmatprep.subr.bf16.mxu0 0
      %5730 = vmatpush1.bf16.msra.mxu0 %v4912
      %5731 = vmatprep.subr.bf16.mxu0 0
      %5732 = vmatpush1.bf16.msra.mxu0 %v4913
      %5733 = vmatprep.subr.bf16.mxu0 0
      %5734 = vmatpush1.bf16.msra.mxu0 %v4914
      %5735 = vmatprep.subr.bf16.mxu0 0
      %5736 = vmatpush1.bf16.msra.mxu0 %v4915
      %5737 = vmatprep.subr.bf16.mxu0 0
      %5738 = vmatpush1.bf16.msra.mxu0 %v4916
      %5739 = vmatprep.subr.bf16.mxu0 0
      %5740 = vmatpush1.bf16.msra.mxu0 %v4917
      %5741 = vmatprep.subr.bf16.mxu0 0
      %5742 = vmatpush1.bf16.msra.mxu0 %v4918
      %5743 = vmatprep.subr.bf16.mxu0 0
      %5744 = vmatpush1.bf16.msra.mxu0 %v4919
      %5745 = vmatprep.subr.bf16.mxu0 0
      %5746 = vmatpush1.bf16.msra.mxu0 %v4920
      %5747 = vmatprep.subr.bf16.mxu0 0
      %5748 = vmatpush1.bf16.msra.mxu0 %v4921
      %5749 = vmatprep.subr.bf16.mxu0 0
      %5750 = vmatpush1.bf16.msra.mxu0 %v4922
      %5751 = vmatprep.subr.bf16.mxu0 0
      %5752 = vmatpush1.bf16.msra.mxu0 %v4923
      %5753 = vmatprep.subr.bf16.mxu0 0
      %5754 = vmatpush1.bf16.msra.mxu0 %v4924
      %5755 = vmatprep.subr.bf16.mxu0 0
      %5756 = vmatpush1.bf16.msra.mxu0 %v4925
      %5757 = vmatprep.mubr.bf16.mxu0 %v5449
      %5758 = vmatmul.mubr.bf16.gmra.mrb[0].mxu0 %v5448
      %v5759 = vpop.f32.mrb[0].mxu0
      %v5760 = vadd.f32 0.0, %v5759
      %v5761 = vpop.f32.mrb[0].mxu0
      %v5762 = vpop.f32.mrb[0].mxu0
      %v5763 = vadd.f32 0.0, %v5762
      %v5764 = vpop.f32.mrb[0].mxu0
      %5765 = vmatprep.mubr.bf16.mxu0 %v5457
      %5766 = vmatmul.mubr.bf16.gmra.mrb[0].mxu0 %v5456
      %v5767 = vpop.f32.mrb[0].mxu0
      %v5768 = vadd.f32 0.0, %v5767
      %v5769 = vpop.f32.mrb[0].mxu0
      %v5770 = vpop.f32.mrb[0].mxu0
      %v5771 = vadd.f32 0.0, %v5770
      %v5772 = vpop.f32.mrb[0].mxu0
      %5773 = vmatprep.mubr.bf16.mxu0 %v5465
      %5774 = vmatmul.mubr.bf16.gmra.mrb[0].mxu0 %v5464
      %v5775 = vpop.f32.mrb[0].mxu0
      %v5776 = vadd.f32 0.0, %v5775
      %v5777 = vpop.f32.mrb[0].mxu0
      %v5778 = vpop.f32.mrb[0].mxu0
      %v5779 = vadd.f32 0.0, %v5778
      %v5780 = vpop.f32.mrb[0].mxu0
      %5781 = vmatprep.mubr.bf16.mxu0 %v5473
      %5782 = vmatmul.mubr.bf16.gmra.mrb[0].mxu0 %v5472
      %v5783 = vpop.f32.mrb[0].mxu0
      %v5784 = vadd.f32 0.0, %v5783
      %v5785 = vpop.f32.mrb[0].mxu0
      %v5786 = vpop.f32.mrb[0].mxu0
      %v5787 = vadd.f32 0.0, %v5786
      %v5788 = vpop.f32.mrb[0].mxu0
      %5789 = vmatprep.mubr.bf16.mxu0 %v5481
      %5790 = vmatmul.mubr.bf16.gmra.mrb[0].mxu0 %v5480
      %v5791 = vpop.f32.mrb[0].mxu0
      %v5792 = vadd.f32 0.0, %v5791
      %v5793 = vpop.f32.mrb[0].mxu0
      %v5794 = vpop.f32.mrb[0].mxu0
      %v5795 = vadd.f32 0.0, %v5794
      %v5796 = vpop.f32.mrb[0].mxu0
      %5797 = vmatprep.mubr.bf16.mxu0 %v5489
      %5798 = vmatmul.mubr.bf16.gmra.mrb[0].mxu0 %v5488
      %v5799 = vpop.f32.mrb[0].mxu0
      %v5800 = vadd.f32 0.0, %v5799
      %v5801 = vpop.f32.mrb[0].mxu0
      %v5802 = vpop.f32.mrb[0].mxu0
      %v5803 = vadd.f32 0.0, %v5802
      %v5804 = vpop.f32.mrb[0].mxu0
      %5805 = vmatprep.mubr.bf16.mxu0 %v5497
      %5806 = vmatmul.mubr.bf16.gmra.mrb[0].mxu0 %v5496
      %v5807 = vpop.f32.mrb[0].mxu0
      %v5808 = vadd.f32 0.0, %v5807
      %v5809 = vpop.f32.mrb[0].mxu0
      %v5810 = vpop.f32.mrb[0].mxu0
      %v5811 = vadd.f32 0.0, %v5810
      %v5812 = vpop.f32.mrb[0].mxu0
      %5813 = vmatprep.mubr.bf16.mxu0 %v5505
      %5814 = vmatmul.mubr.bf16.gmra.mrb[0].mxu0 %v5504
      %v5815 = vpop.f32.mrb[0].mxu0
      %v5816 = vadd.f32 0.0, %v5815
      %v5817 = vpop.f32.mrb[0].mxu0
      %v5818 = vpop.f32.mrb[0].mxu0
      %v5819 = vadd.f32 0.0, %v5818
      %v5820 = vpop.f32.mrb[0].mxu0
      %5821 = vmatprep.mubr.bf16.mxu0 %v5513
      %5822 = vmatmul.mubr.bf16.gmra.mrb[0].mxu0 %v5512
      %v5823 = vpop.f32.mrb[0].mxu0
      %v5824 = vadd.f32 0.0, %v5823
      %v5825 = vpop.f32.mrb[0].mxu0
      %v5826 = vpop.f32.mrb[0].mxu0
      %v5827 = vadd.f32 0.0, %v5826
      %v5828 = vpop.f32.mrb[0].mxu0
      %5829 = vmatprep.mubr.bf16.mxu0 %v5521
      %5830 = vmatmul.mubr.bf16.gmra.mrb[0].mxu0 %v5520
      %v5831 = vpop.f32.mrb[0].mxu0
      %v5832 = vadd.f32 0.0, %v5831
      %v5833 = vpop.f32.mrb[0].mxu0
      %v5834 = vpop.f32.mrb[0].mxu0
      %v5835 = vadd.f32 0.0, %v5834
      %v5836 = vpop.f32.mrb[0].mxu0
      %5837 = vmatprep.mubr.bf16.mxu0 %v5529
      %5838 = vmatmul.mubr.bf16.gmra.mrb[0].mxu0 %v5528
      %v5839 = vpop.f32.mrb[0].mxu0
      %v5840 = vadd.f32 0.0, %v5839
      %v5841 = vpop.f32.mrb[0].mxu0
      %v5842 = vpop.f32.mrb[0].mxu0
      %v5843 = vadd.f32 0.0, %v5842
      %v5844 = vpop.f32.mrb[0].mxu0
      %5845 = vmatprep.mubr.bf16.mxu0 %v5537
      %5846 = vmatmul.mubr.bf16.gmra.mrb[0].mxu0 %v5536
      %v5847 = vpop.f32.mrb[0].mxu0
      %v5848 = vadd.f32 0.0, %v5847
      %v5849 = vpop.f32.mrb[0].mxu0
      %v5850 = vpop.f32.mrb[0].mxu0
      %v5851 = vadd.f32 0.0, %v5850
      %v5852 = vpop.f32.mrb[0].mxu0
      %5853 = vmatprep.mubr.bf16.mxu0 %v5545
      %5854 = vmatmul.mubr.bf16.gmra.mrb[0].mxu0 %v5544
      %v5855 = vpop.f32.mrb[0].mxu0
      %v5856 = vadd.f32 0.0, %v5855
      %v5857 = vpop.f32.mrb[0].mxu0
      %v5858 = vpop.f32.mrb[0].mxu0
      %v5859 = vadd.f32 0.0, %v5858
      %v5860 = vpop.f32.mrb[0].mxu0
      %5861 = vmatprep.mubr.bf16.mxu0 %v5553
      %5862 = vmatmul.mubr.bf16.gmra.mrb[0].mxu0 %v5552
      %v5863 = vpop.f32.mrb[0].mxu0
      %v5864 = vadd.f32 0.0, %v5863
      %v5865 = vpop.f32.mrb[0].mxu0
      %v5866 = vpop.f32.mrb[0].mxu0
      %v5867 = vadd.f32 0.0, %v5866
      %v5868 = vpop.f32.mrb[0].mxu0
      %5869 = vmatprep.mubr.bf16.mxu0 %v5561
      %5870 = vmatmul.mubr.bf16.gmra.mrb[0].mxu0 %v5560
      %v5871 = vpop.f32.mrb[0].mxu0
      %v5872 = vadd.f32 0.0, %v5871
      %v5873 = vpop.f32.mrb[0].mxu0
      %v5874 = vpop.f32.mrb[0].mxu0
      %v5875 = vadd.f32 0.0, %v5874
      %v5876 = vpop.f32.mrb[0].mxu0
      %5877 = vdwg.mxu0
      %5878 = vmatprep.subr.bf16.mxu0 0
      %5879 = vmatpush1.bf16.msra.mxu0 %v4926
      %5880 = vmatprep.subr.bf16.mxu0 0
      %5881 = vmatpush1.bf16.msra.mxu0 %v4927
      %5882 = vmatprep.subr.bf16.mxu0 0
      %5883 = vmatpush1.bf16.msra.mxu0 %v4928
      %5884 = vmatprep.subr.bf16.mxu0 0
      %5885 = vmatpush1.bf16.msra.mxu0 %v4929
      %5886 = vmatprep.subr.bf16.mxu0 0
      %5887 = vmatpush1.bf16.msra.mxu0 %v4930
      %5888 = vmatprep.subr.bf16.mxu0 0
      %5889 = vmatpush1.bf16.msra.mxu0 %v4931
      %5890 = vmatprep.subr.bf16.mxu0 0
      %5891 = vmatpush1.bf16.msra.mxu0 %v4932
      %5892 = vmatprep.subr.bf16.mxu0 0
      %5893 = vmatpush1.bf16.msra.mxu0 %v4933
      %5894 = vmatprep.subr.bf16.mxu0 0
      %5895 = vmatpush1.bf16.msra.mxu0 %v4934
      %5896 = vmatprep.subr.bf16.mxu0 0
      %5897 = vmatpush1.bf16.msra.mxu0 %v4935
      %5898 = vmatprep.subr.bf16.mxu0 0
      %5899 = vmatpush1.bf16.msra.mxu0 %v4936
      %5900 = vmatprep.subr.bf16.mxu0 0
      %5901 = vmatpush1.bf16.msra.mxu0 %v4937
      %5902 = vmatprep.subr.bf16.mxu0 0
      %5903 = vmatpush1.bf16.msra.mxu0 %v4938
      %5904 = vmatprep.subr.bf16.mxu0 0
      %5905 = vmatpush1.bf16.msra.mxu0 %v4939
      %5906 = vmatprep.subr.bf16.mxu0 0
      %5907 = vmatpush1.bf16.msra.mxu0 %v4940
      %5908 = vmatprep.subr.bf16.mxu0 0
      %5909 = vmatpush1.bf16.msra.mxu0 %v4941
      %5910 = vmatprep.mubr.bf16.mxu0 %v5451
      %5911 = vmatmul.mubr.bf16.gmra.mrb[0].mxu0 %v5450
      %v5912 = vpop.f32.mrb[0].mxu0
      %v5913 = vadd.f32 %v5760, %v5912
      %v5914 = vpop.f32.mrb[0].mxu0
      %v5915 = vpop.f32.mrb[0].mxu0
      %v5916 = vadd.f32 %v5763, %v5915
      %v5917 = vpop.f32.mrb[0].mxu0
      %5918 = vmatprep.mubr.bf16.mxu0 %v5459
      %5919 = vmatmul.mubr.bf16.gmra.mrb[0].mxu0 %v5458
      %v5920 = vpop.f32.mrb[0].mxu0
      %v5921 = vadd.f32 %v5768, %v5920
      %v5922 = vpop.f32.mrb[0].mxu0
      %v5923 = vpop.f32.mrb[0].mxu0
      %v5924 = vadd.f32 %v5771, %v5923
      %v5925 = vpop.f32.mrb[0].mxu0
      %5926 = vmatprep.mubr.bf16.mxu0 %v5467
      %5927 = vmatmul.mubr.bf16.gmra.mrb[0].mxu0 %v5466
      %v5928 = vpop.f32.mrb[0].mxu0
      %v5929 = vadd.f32 %v5776, %v5928
      %v5930 = vpop.f32.mrb[0].mxu0
      %v5931 = vpop.f32.mrb[0].mxu0
      %v5932 = vadd.f32 %v5779, %v5931
      %v5933 = vpop.f32.mrb[0].mxu0
      %5934 = vmatprep.mubr.bf16.mxu0 %v5475
      %5935 = vmatmul.mubr.bf16.gmra.mrb[0].mxu0 %v5474
      %v5936 = vpop.f32.mrb[0].mxu0
      %v5937 = vadd.f32 %v5784, %v5936
      %v5938 = vpop.f32.mrb[0].mxu0
      %v5939 = vpop.f32.mrb[0].mxu0
      %v5940 = vadd.f32 %v5787, %v5939
      %v5941 = vpop.f32.mrb[0].mxu0
      %5942 = vmatprep.mubr.bf16.mxu0 %v5483
      %5943 = vmatmul.mubr.bf16.gmra.mrb[0].mxu0 %v5482
      %v5944 = vpop.f32.mrb[0].mxu0
      %v5945 = vadd.f32 %v5792, %v5944
      %v5946 = vpop.f32.mrb[0].mxu0
      %v5947 = vpop.f32.mrb[0].mxu0
      %v5948 = vadd.f32 %v5795, %v5947
      %v5949 = vpop.f32.mrb[0].mxu0
      %5950 = vmatprep.mubr.bf16.mxu0 %v5491
      %5951 = vmatmul.mubr.bf16.gmra.mrb[0].mxu0 %v5490
      %v5952 = vpop.f32.mrb[0].mxu0
      %v5953 = vadd.f32 %v5800, %v5952
      %v5954 = vpop.f32.mrb[0].mxu0
      %v5955 = vpop.f32.mrb[0].mxu0
      %v5956 = vadd.f32 %v5803, %v5955
      %v5957 = vpop.f32.mrb[0].mxu0
      %5958 = vmatprep.mubr.bf16.mxu0 %v5499
      %5959 = vmatmul.mubr.bf16.gmra.mrb[0].mxu0 %v5498
      %v5960 = vpop.f32.mrb[0].mxu0
      %v5961 = vadd.f32 %v5808, %v5960
      %v5962 = vpop.f32.mrb[0].mxu0
      %v5963 = vpop.f32.mrb[0].mxu0
      %v5964 = vadd.f32 %v5811, %v5963
      %v5965 = vpop.f32.mrb[0].mxu0
      %5966 = vmatprep.mubr.bf16.mxu0 %v5507
      %5967 = vmatmul.mubr.bf16.gmra.mrb[0].mxu0 %v5506
      %v5968 = vpop.f32.mrb[0].mxu0
      %v5969 = vadd.f32 %v5816, %v5968
      %v5970 = vpop.f32.mrb[0].mxu0
      %v5971 = vpop.f32.mrb[0].mxu0
      %v5972 = vadd.f32 %v5819, %v5971
      %v5973 = vpop.f32.mrb[0].mxu0
      %5974 = vmatprep.mubr.bf16.mxu0 %v5515
      %5975 = vmatmul.mubr.bf16.gmra.mrb[0].mxu0 %v5514
      %v5976 = vpop.f32.mrb[0].mxu0
      %v5977 = vadd.f32 %v5824, %v5976
      %v5978 = vpop.f32.mrb[0].mxu0
      %v5979 = vpop.f32.mrb[0].mxu0
      %v5980 = vadd.f32 %v5827, %v5979
      %v5981 = vpop.f32.mrb[0].mxu0
      %5982 = vmatprep.mubr.bf16.mxu0 %v5523
      %5983 = vmatmul.mubr.bf16.gmra.mrb[0].mxu0 %v5522
      %v5984 = vpop.f32.mrb[0].mxu0
      %v5985 = vadd.f32 %v5832, %v5984
      %v5986 = vpop.f32.mrb[0].mxu0
      %v5987 = vpop.f32.mrb[0].mxu0
      %v5988 = vadd.f32 %v5835, %v5987
      %v5989 = vpop.f32.mrb[0].mxu0
      %5990 = vmatprep.mubr.bf16.mxu0 %v5531
      %5991 = vmatmul.mubr.bf16.gmra.mrb[0].mxu0 %v5530
      %v5992 = vpop.f32.mrb[0].mxu0
      %v5993 = vadd.f32 %v5840, %v5992
      %v5994 = vpop.f32.mrb[0].mxu0
      %v5995 = vpop.f32.mrb[0].mxu0
      %v5996 = vadd.f32 %v5843, %v5995
      %v5997 = vpop.f32.mrb[0].mxu0
      %5998 = vmatprep.mubr.bf16.mxu0 %v5539
      %5999 = vmatmul.mubr.bf16.gmra.mrb[0].mxu0 %v5538
      %v6000 = vpop.f32.mrb[0].mxu0
      %v6001 = vadd.f32 %v5848, %v6000
      %v6002 = vpop.f32.mrb[0].mxu0
      %v6003 = vpop.f32.mrb[0].mxu0
      %v6004 = vadd.f32 %v5851, %v6003
      %v6005 = vpop.f32.mrb[0].mxu0
      %6006 = vmatprep.mubr.bf16.mxu0 %v5547
      %6007 = vmatmul.mubr.bf16.gmra.mrb[0].mxu0 %v5546
      %v6008 = vpop.f32.mrb[0].mxu0
      %v6009 = vadd.f32 %v5856, %v6008
      %v6010 = vpop.f32.mrb[0].mxu0
      %v6011 = vpop.f32.mrb[0].mxu0
      %v6012 = vadd.f32 %v5859, %v6011
      %v6013 = vpop.f32.mrb[0].mxu0
      %6014 = vmatprep.mubr.bf16.mxu0 %v5555
      %6015 = vmatmul.mubr.bf16.gmra.mrb[0].mxu0 %v5554
      %v6016 = vpop.f32.mrb[0].mxu0
      %v6017 = vadd.f32 %v5864, %v6016
      %v6018 = vpop.f32.mrb[0].mxu0
      %v6019 = vpop.f32.mrb[0].mxu0
      %v6020 = vadd.f32 %v5867, %v6019
      %v6021 = vpop.f32.mrb[0].mxu0
      %6022 = vmatprep.mubr.bf16.mxu0 %v5563
      %6023 = vmatmul.mubr.bf16.gmra.mrb[0].mxu0 %v5562
      %v6024 = vpop.f32.mrb[0].mxu0
      %v6025 = vadd.f32 %v5872, %v6024
      %v6026 = vpop.f32.mrb[0].mxu0
      %v6027 = vpop.f32.mrb[0].mxu0
      %v6028 = vadd.f32 %v5875, %v6027
      %v6029 = vpop.f32.mrb[0].mxu0
      %6030 = vdwg.mxu0
      %6031 = vmatprep.subr.bf16.mxu0 0
      %6032 = vmatpush1.bf16.msra.mxu0 %v4942
      %6033 = vmatprep.subr.bf16.mxu0 0
      %6034 = vmatpush1.bf16.msra.mxu0 %v4943
      %6035 = vmatprep.subr.bf16.mxu0 0
      %6036 = vmatpush1.bf16.msra.mxu0 %v4944
      %6037 = vmatprep.subr.bf16.mxu0 0
      %6038 = vmatpush1.bf16.msra.mxu0 %v4945
      %6039 = vmatprep.subr.bf16.mxu0 0
      %6040 = vmatpush1.bf16.msra.mxu0 %v4946
      %6041 = vmatprep.subr.bf16.mxu0 0
      %6042 = vmatpush1.bf16.msra.mxu0 %v4947
      %6043 = vmatprep.subr.bf16.mxu0 0
      %6044 = vmatpush1.bf16.msra.mxu0 %v4948
      %6045 = vmatprep.subr.bf16.mxu0 0
      %6046 = vmatpush1.bf16.msra.mxu0 %v4949
      %6047 = vmatprep.subr.bf16.mxu0 0
      %6048 = vmatpush1.bf16.msra.mxu0 %v4950
      %6049 = vmatprep.subr.bf16.mxu0 0
      %6050 = vmatpush1.bf16.msra.mxu0 %v4951
      %6051 = vmatprep.subr.bf16.mxu0 0
      %6052 = vmatpush1.bf16.msra.mxu0 %v4952
      %6053 = vmatprep.subr.bf16.mxu0 0
      %6054 = vmatpush1.bf16.msra.mxu0 %v4953
      %6055 = vmatprep.subr.bf16.mxu0 0
      %6056 = vmatpush1.bf16.msra.mxu0 %v4954
      %6057 = vmatprep.subr.bf16.mxu0 0
      %6058 = vmatpush1.bf16.msra.mxu0 %v4955
      %6059 = vmatprep.subr.bf16.mxu0 0
      %6060 = vmatpush1.bf16.msra.mxu0 %v4956
      %6061 = vmatprep.subr.bf16.mxu0 0
      %6062 = vmatpush1.bf16.msra.mxu0 %v4957
      %6063 = vmatprep.mubr.bf16.mxu0 %v5453
      %6064 = vmatmul.mubr.bf16.gmra.mrb[0].mxu0 %v5452
      %v6065 = vpop.f32.mrb[0].mxu0
      %v6066 = vadd.f32 %v5913, %v6065
      %v6067 = vpop.f32.mrb[0].mxu0
      %v6068 = vpop.f32.mrb[0].mxu0
      %v6069 = vadd.f32 %v5916, %v6068
      %v6070 = vpop.f32.mrb[0].mxu0
      %6071 = vmatprep.mubr.bf16.mxu0 %v5461
      %6072 = vmatmul.mubr.bf16.gmra.mrb[0].mxu0 %v5460
      %v6073 = vpop.f32.mrb[0].mxu0
      %v6074 = vadd.f32 %v5921, %v6073
      %v6075 = vpop.f32.mrb[0].mxu0
      %v6076 = vpop.f32.mrb[0].mxu0
      %v6077 = vadd.f32 %v5924, %v6076
      %v6078 = vpop.f32.mrb[0].mxu0
      %6079 = vmatprep.mubr.bf16.mxu0 %v5469
      %6080 = vmatmul.mubr.bf16.gmra.mrb[0].mxu0 %v5468
      %v6081 = vpop.f32.mrb[0].mxu0
      %v6082 = vadd.f32 %v5929, %v6081
      %v6083 = vpop.f32.mrb[0].mxu0
      %v6084 = vpop.f32.mrb[0].mxu0
      %v6085 = vadd.f32 %v5932, %v6084
      %v6086 = vpop.f32.mrb[0].mxu0
      %6087 = vmatprep.mubr.bf16.mxu0 %v5477
      %6088 = vmatmul.mubr.bf16.gmra.mrb[0].mxu0 %v5476
      %v6089 = vpop.f32.mrb[0].mxu0
      %v6090 = vadd.f32 %v5937, %v6089
      %v6091 = vpop.f32.mrb[0].mxu0
      %v6092 = vpop.f32.mrb[0].mxu0
      %v6093 = vadd.f32 %v5940, %v6092
      %v6094 = vpop.f32.mrb[0].mxu0
      %6095 = vmatprep.mubr.bf16.mxu0 %v5485
      %6096 = vmatmul.mubr.bf16.gmra.mrb[0].mxu0 %v5484
      %v6097 = vpop.f32.mrb[0].mxu0
      %v6098 = vadd.f32 %v5945, %v6097
      %v6099 = vpop.f32.mrb[0].mxu0
      %v6100 = vpop.f32.mrb[0].mxu0
      %v6101 = vadd.f32 %v5948, %v6100
      %v6102 = vpop.f32.mrb[0].mxu0
      %6103 = vmatprep.mubr.bf16.mxu0 %v5493
      %6104 = vmatmul.mubr.bf16.gmra.mrb[0].mxu0 %v5492
      %v6105 = vpop.f32.mrb[0].mxu0
      %v6106 = vadd.f32 %v5953, %v6105
      %v6107 = vpop.f32.mrb[0].mxu0
      %v6108 = vpop.f32.mrb[0].mxu0
      %v6109 = vadd.f32 %v5956, %v6108
      %v6110 = vpop.f32.mrb[0].mxu0
      %6111 = vmatprep.mubr.bf16.mxu0 %v5501
      %6112 = vmatmul.mubr.bf16.gmra.mrb[0].mxu0 %v5500
      %v6113 = vpop.f32.mrb[0].mxu0
      %v6114 = vadd.f32 %v5961, %v6113
      %v6115 = vpop.f32.mrb[0].mxu0
      %v6116 = vpop.f32.mrb[0].mxu0
      %v6117 = vadd.f32 %v5964, %v6116
      %v6118 = vpop.f32.mrb[0].mxu0
      %6119 = vmatprep.mubr.bf16.mxu0 %v5509
      %6120 = vmatmul.mubr.bf16.gmra.mrb[0].mxu0 %v5508
      %v6121 = vpop.f32.mrb[0].mxu0
      %v6122 = vadd.f32 %v5969, %v6121
      %v6123 = vpop.f32.mrb[0].mxu0
      %v6124 = vpop.f32.mrb[0].mxu0
      %v6125 = vadd.f32 %v5972, %v6124
      %v6126 = vpop.f32.mrb[0].mxu0
      %6127 = vmatprep.mubr.bf16.mxu0 %v5517
      %6128 = vmatmul.mubr.bf16.gmra.mrb[0].mxu0 %v5516
      %v6129 = vpop.f32.mrb[0].mxu0
      %v6130 = vadd.f32 %v5977, %v6129
      %v6131 = vpop.f32.mrb[0].mxu0
      %v6132 = vpop.f32.mrb[0].mxu0
      %v6133 = vadd.f32 %v5980, %v6132
      %v6134 = vpop.f32.mrb[0].mxu0
      %6135 = vmatprep.mubr.bf16.mxu0 %v5525
      %6136 = vmatmul.mubr.bf16.gmra.mrb[0].mxu0 %v5524
      %v6137 = vpop.f32.mrb[0].mxu0
      %v6138 = vadd.f32 %v5985, %v6137
      %v6139 = vpop.f32.mrb[0].mxu0
      %v6140 = vpop.f32.mrb[0].mxu0
      %v6141 = vadd.f32 %v5988, %v6140
      %v6142 = vpop.f32.mrb[0].mxu0
      %6143 = vmatprep.mubr.bf16.mxu0 %v5533
      %6144 = vmatmul.mubr.bf16.gmra.mrb[0].mxu0 %v5532
      %v6145 = vpop.f32.mrb[0].mxu0
      %v6146 = vadd.f32 %v5993, %v6145
      %v6147 = vpop.f32.mrb[0].mxu0
      %v6148 = vpop.f32.mrb[0].mxu0
      %v6149 = vadd.f32 %v5996, %v6148
      %v6150 = vpop.f32.mrb[0].mxu0
      %6151 = vmatprep.mubr.bf16.mxu0 %v5541
      %6152 = vmatmul.mubr.bf16.gmra.mrb[0].mxu0 %v5540
      %v6153 = vpop.f32.mrb[0].mxu0
      %v6154 = vadd.f32 %v6001, %v6153
      %v6155 = vpop.f32.mrb[0].mxu0
      %v6156 = vpop.f32.mrb[0].mxu0
      %v6157 = vadd.f32 %v6004, %v6156
      %v6158 = vpop.f32.mrb[0].mxu0
      %6159 = vmatprep.mubr.bf16.mxu0 %v5549
      %6160 = vmatmul.mubr.bf16.gmra.mrb[0].mxu0 %v5548
      %v6161 = vpop.f32.mrb[0].mxu0
      %v6162 = vadd.f32 %v6009, %v6161
      %v6163 = vpop.f32.mrb[0].mxu0
      %v6164 = vpop.f32.mrb[0].mxu0
      %v6165 = vadd.f32 %v6012, %v6164
      %v6166 = vpop.f32.mrb[0].mxu0
      %6167 = vmatprep.mubr.bf16.mxu0 %v5557
      %6168 = vmatmul.mubr.bf16.gmra.mrb[0].mxu0 %v5556
      %v6169 = vpop.f32.mrb[0].mxu0
      %v6170 = vadd.f32 %v6017, %v6169
      %v6171 = vpop.f32.mrb[0].mxu0
      %v6172 = vpop.f32.mrb[0].mxu0
      %v6173 = vadd.f32 %v6020, %v6172
      %v6174 = vpop.f32.mrb[0].mxu0
      %6175 = vmatprep.mubr.bf16.mxu0 %v5565
      %6176 = vmatmul.mubr.bf16.gmra.mrb[0].mxu0 %v5564
      %v6177 = vpop.f32.mrb[0].mxu0
      %v6178 = vadd.f32 %v6025, %v6177
      %v6179 = vpop.f32.mrb[0].mxu0
      %v6180 = vpop.f32.mrb[0].mxu0
      %v6181 = vadd.f32 %v6028, %v6180
      %v6182 = vpop.f32.mrb[0].mxu0
      %6183 = vdwg.mxu0
      %6184 = vmatprep.subr.bf16.mxu0 0
      %6185 = vmatpush1.bf16.msra.mxu0 %v4958
      %6186 = vmatprep.subr.bf16.mxu0 0
      %6187 = vmatpush1.bf16.msra.mxu0 %v4959
      %6188 = vmatprep.subr.bf16.mxu0 0
      %6189 = vmatpush1.bf16.msra.mxu0 %v4960
      %6190 = vmatprep.subr.bf16.mxu0 0
      %6191 = vmatpush1.bf16.msra.mxu0 %v4961
      %6192 = vmatprep.subr.bf16.mxu0 0
      %6193 = vmatpush1.bf16.msra.mxu0 %v4962
      %6194 = vmatprep.subr.bf16.mxu0 0
      %6195 = vmatpush1.bf16.msra.mxu0 %v4963
      %6196 = vmatprep.subr.bf16.mxu0 0
      %6197 = vmatpush1.bf16.msra.mxu0 %v4964
      %6198 = vmatprep.subr.bf16.mxu0 0
      %6199 = vmatpush1.bf16.msra.mxu0 %v4965
      %6200 = vmatprep.subr.bf16.mxu0 0
      %6201 = vmatpush1.bf16.msra.mxu0 %v4966
      %6202 = vmatprep.subr.bf16.mxu0 0
      %6203 = vmatpush1.bf16.msra.mxu0 %v5723
      %6204 = vmatprep.subr.bf16.mxu0 0
      %6205 = vmatpush1.bf16.msra.mxu0 0
      %6206 = vmatprep.subr.bf16.mxu0 0
      %6207 = vmatpush1.bf16.msra.mxu0 0
      %6208 = vmatprep.subr.bf16.mxu0 0
      %6209 = vmatpush1.bf16.msra.mxu0 0
      %6210 = vmatprep.subr.bf16.mxu0 0
      %6211 = vmatpush1.bf16.msra.mxu0 0
      %6212 = vmatprep.subr.bf16.mxu0 0
      %6213 = vmatpush1.bf16.msra.mxu0 0
      %6214 = vmatprep.subr.bf16.mxu0 0
      %6215 = vmatpush1.bf16.msra.mxu0 0
      %6216 = vmatprep.mubr.bf16.mxu0 %v5675
      %6217 = vmatmul.mubr.bf16.gmra.mrb[0].mxu0 %v5454
      %v6218 = vpop.f32.mrb[0].mxu0
      %v6219 = vadd.f32 %v6066, %v6218
      %v6220 = vpop.f32.mrb[0].mxu0
      %v6221 = vpop.f32.mrb[0].mxu0
      %v6222 = vadd.f32 %v6069, %v6221
      %v6223 = vpop.f32.mrb[0].mxu0
      %6224 = vmatprep.mubr.bf16.mxu0 %v5678
      %6225 = vmatmul.mubr.bf16.gmra.mrb[0].mxu0 %v5462
      %v6226 = vpop.f32.mrb[0].mxu0
      %v6227 = vadd.f32 %v6074, %v6226
      %v6228 = vpop.f32.mrb[0].mxu0
      %v6229 = vpop.f32.mrb[0].mxu0
      %v6230 = vadd.f32 %v6077, %v6229
      %v6231 = vpop.f32.mrb[0].mxu0
      %6232 = vmatprep.mubr.bf16.mxu0 %v5681
      %6233 = vmatmul.mubr.bf16.gmra.mrb[0].mxu0 %v5470
      %v6234 = vpop.f32.mrb[0].mxu0
      %v6235 = vadd.f32 %v6082, %v6234
      %v6236 = vpop.f32.mrb[0].mxu0
      %v6237 = vpop.f32.mrb[0].mxu0
      %v6238 = vadd.f32 %v6085, %v6237
      %v6239 = vpop.f32.mrb[0].mxu0
      %6240 = vmatprep.mubr.bf16.mxu0 %v5684
      %6241 = vmatmul.mubr.bf16.gmra.mrb[0].mxu0 %v5478
      %v6242 = vpop.f32.mrb[0].mxu0
      %v6243 = vadd.f32 %v6090, %v6242
      %v6244 = vpop.f32.mrb[0].mxu0
      %v6245 = vpop.f32.mrb[0].mxu0
      %v6246 = vadd.f32 %v6093, %v6245
      %v6247 = vpop.f32.mrb[0].mxu0
      %6248 = vmatprep.mubr.bf16.mxu0 %v5687
      %6249 = vmatmul.mubr.bf16.gmra.mrb[0].mxu0 %v5486
      %v6250 = vpop.f32.mrb[0].mxu0
      %v6251 = vadd.f32 %v6098, %v6250
      %v6252 = vpop.f32.mrb[0].mxu0
      %v6253 = vpop.f32.mrb[0].mxu0
      %v6254 = vadd.f32 %v6101, %v6253
      %v6255 = vpop.f32.mrb[0].mxu0
      %6256 = vmatprep.mubr.bf16.mxu0 %v5690
      %6257 = vmatmul.mubr.bf16.gmra.mrb[0].mxu0 %v5494
      %v6258 = vpop.f32.mrb[0].mxu0
      %v6259 = vadd.f32 %v6106, %v6258
      %v6260 = vpop.f32.mrb[0].mxu0
      %v6261 = vpop.f32.mrb[0].mxu0
      %v6262 = vadd.f32 %v6109, %v6261
      %v6263 = vpop.f32.mrb[0].mxu0
      %6264 = vmatprep.mubr.bf16.mxu0 %v5693
      %6265 = vmatmul.mubr.bf16.gmra.mrb[0].mxu0 %v5502
      %v6266 = vpop.f32.mrb[0].mxu0
      %v6267 = vadd.f32 %v6114, %v6266
      %v6268 = vpop.f32.mrb[0].mxu0
      %v6269 = vpop.f32.mrb[0].mxu0
      %v6270 = vadd.f32 %v6117, %v6269
      %v6271 = vpop.f32.mrb[0].mxu0
      %6272 = vmatprep.mubr.bf16.mxu0 %v5696
      %6273 = vmatmul.mubr.bf16.gmra.mrb[0].mxu0 %v5510
      %v6274 = vpop.f32.mrb[0].mxu0
      %v6275 = vadd.f32 %v6122, %v6274
      %v6276 = vpop.f32.mrb[0].mxu0
      %v6277 = vpop.f32.mrb[0].mxu0
      %v6278 = vadd.f32 %v6125, %v6277
      %v6279 = vpop.f32.mrb[0].mxu0
      %6280 = vmatprep.mubr.bf16.mxu0 %v5699
      %6281 = vmatmul.mubr.bf16.gmra.mrb[0].mxu0 %v5518
      %v6282 = vpop.f32.mrb[0].mxu0
      %v6283 = vadd.f32 %v6130, %v6282
      %v6284 = vpop.f32.mrb[0].mxu0
      %v6285 = vpop.f32.mrb[0].mxu0
      %v6286 = vadd.f32 %v6133, %v6285
      %v6287 = vpop.f32.mrb[0].mxu0
      %6288 = vmatprep.mubr.bf16.mxu0 %v5702
      %6289 = vmatmul.mubr.bf16.gmra.mrb[0].mxu0 %v5526
      %v6290 = vpop.f32.mrb[0].mxu0
      %v6291 = vadd.f32 %v6138, %v6290
      %v6292 = vpop.f32.mrb[0].mxu0
      %v6293 = vpop.f32.mrb[0].mxu0
      %v6294 = vadd.f32 %v6141, %v6293
      %v6295 = vpop.f32.mrb[0].mxu0
      %6296 = vmatprep.mubr.bf16.mxu0 %v5705
      %6297 = vmatmul.mubr.bf16.gmra.mrb[0].mxu0 %v5534
      %v6298 = vpop.f32.mrb[0].mxu0
      %v6299 = vadd.f32 %v6146, %v6298
      %v6300 = vpop.f32.mrb[0].mxu0
      %v6301 = vpop.f32.mrb[0].mxu0
      %v6302 = vadd.f32 %v6149, %v6301
      %v6303 = vpop.f32.mrb[0].mxu0
      %6304 = vmatprep.mubr.bf16.mxu0 %v5708
      %6305 = vmatmul.mubr.bf16.gmra.mrb[0].mxu0 %v5542
      %v6306 = vpop.f32.mrb[0].mxu0
      %v6307 = vadd.f32 %v6154, %v6306
      %v6308 = vpop.f32.mrb[0].mxu0
      %v6309 = vpop.f32.mrb[0].mxu0
      %v6310 = vadd.f32 %v6157, %v6309
      %v6311 = vpop.f32.mrb[0].mxu0
      %6312 = vmatprep.mubr.bf16.mxu0 %v5711
      %6313 = vmatmul.mubr.bf16.gmra.mrb[0].mxu0 %v5550
      %v6314 = vpop.f32.mrb[0].mxu0
      %v6315 = vadd.f32 %v6162, %v6314
      %v6316 = vpop.f32.mrb[0].mxu0
      %v6317 = vpop.f32.mrb[0].mxu0
      %v6318 = vadd.f32 %v6165, %v6317
      %v6319 = vpop.f32.mrb[0].mxu0
      %6320 = vmatprep.mubr.bf16.mxu0 %v5714
      %6321 = vmatmul.mubr.bf16.gmra.mrb[0].mxu0 %v5558
      %v6322 = vpop.f32.mrb[0].mxu0
      %v6323 = vadd.f32 %v6170, %v6322
      %v6324 = vpop.f32.mrb[0].mxu0
      %v6325 = vpop.f32.mrb[0].mxu0
      %v6326 = vadd.f32 %v6173, %v6325
      %v6327 = vpop.f32.mrb[0].mxu0
      %6328 = vmatprep.mubr.bf16.mxu0 %v5717
      %6329 = vmatmul.mubr.bf16.gmra.mrb[0].mxu0 %v5566
      %v6330 = vpop.f32.mrb[0].mxu0
      %v6331 = vadd.f32 %v6178, %v6330
      %v6332 = vpop.f32.mrb[0].mxu0
      %v6333 = vpop.f32.mrb[0].mxu0
      %v6334 = vadd.f32 %v6181, %v6333
      %v6335 = vpop.f32.mrb[0].mxu0
      %6336 = vdwg.mxu0
      %v6337 = vld [vmem:[%s3] sm:$0x1]
      %v6339 = vlaneseq
      %v6340 = vshrl.u32 %v6339, 7
      %v6341 = vsub.s32 0, %v6340
      %v6342 = vrot.slane %v6337, %v6341
      %v6344 = vmul.f32 %v6219, %v6342
      %v6345 = vmul.f32 %v6222, %v6342
      %v6346 = vmul.f32 %v6227, %v6342
      %v6347 = vmul.f32 %v6230, %v6342
      %v6348 = vmul.f32 %v6235, %v6342
      %v6349 = vmul.f32 %v6238, %v6342
      %v6350 = vmul.f32 %v6243, %v6342
      %v6351 = vmul.f32 %v6246, %v6342
      %v6352 = vmul.f32 %v6251, %v6342
      %v6353 = vmul.f32 %v6254, %v6342
      %v6354 = vmul.f32 %v6259, %v6342
      %v6355 = vmul.f32 %v6262, %v6342
      %v6356 = vmul.f32 %v6267, %v6342
      %v6357 = vmul.f32 %v6270, %v6342
      %v6358 = vmul.f32 %v6275, %v6342
      %v6359 = vmul.f32 %v6278, %v6342
      %v6360 = vmul.f32 %v6283, %v6342
      %v6361 = vmul.f32 %v6286, %v6342
      %v6362 = vmul.f32 %v6291, %v6342
      %v6363 = vmul.f32 %v6294, %v6342
      %v6364 = vmul.f32 %v6299, %v6342
      %v6365 = vmul.f32 %v6302, %v6342
      %v6366 = vmul.f32 %v6307, %v6342
      %v6367 = vmul.f32 %v6310, %v6342
      %v6368 = vmul.f32 %v6315, %v6342
      %v6369 = vmul.f32 %v6318, %v6342
      %v6370 = vmul.f32 %v6323, %v6342
      %v6371 = vmul.f32 %v6326, %v6342
      %v6372 = vmul.f32 %v6331, %v6342
      %v6373 = vmul.f32 %v6334, %v6342
      %v6374 = vld [vmem:[%s4] sm:$0x1]
      %v6376 = vlaneseq
      %v6377 = vshrl.u32 %v6376, 7
      %v6378 = vsub.s32 0, %v6377
      %v6379 = vrot.slane %v6374, %v6378
      %v6381 = vadd.f32 %v6344, %v6379
      %v6382 = vadd.f32 %v6345, %v6379
      %v6383 = vadd.f32 %v6346, %v6379
      %v6384 = vadd.f32 %v6347, %v6379
      %v6385 = vadd.f32 %v6348, %v6379
      %v6386 = vadd.f32 %v6349, %v6379
      %v6387 = vadd.f32 %v6350, %v6379
      %v6388 = vadd.f32 %v6351, %v6379
      %v6389 = vadd.f32 %v6352, %v6379
      %v6390 = vadd.f32 %v6353, %v6379
      %v6391 = vadd.f32 %v6354, %v6379
      %v6392 = vadd.f32 %v6355, %v6379
      %v6393 = vadd.f32 %v6356, %v6379
      %v6394 = vadd.f32 %v6357, %v6379
      %v6395 = vadd.f32 %v6358, %v6379
      %v6396 = vadd.f32 %v6359, %v6379
      %v6397 = vadd.f32 %v6360, %v6379
      %v6398 = vadd.f32 %v6361, %v6379
      %v6399 = vadd.f32 %v6362, %v6379
      %v6400 = vadd.f32 %v6363, %v6379
      %v6401 = vadd.f32 %v6364, %v6379
      %v6402 = vadd.f32 %v6365, %v6379
      %v6403 = vadd.f32 %v6366, %v6379
      %v6404 = vadd.f32 %v6367, %v6379
      %v6405 = vadd.f32 %v6368, %v6379
      %v6406 = vadd.f32 %v6369, %v6379
      %v6407 = vadd.f32 %v6370, %v6379
      %v6408 = vadd.f32 %v6371, %v6379
      %v6409 = vadd.f32 %v6372, %v6379
      %v6410 = vadd.f32 %v6373, %v6379
      %v6411 = vpack.c.bf16 %v6382, %v6381
      %v6412 = vpack.c.bf16 %v6384, %v6383
      %v6413 = vpack.c.bf16 %v6386, %v6385
      %v6414 = vpack.c.bf16 %v6388, %v6387
      %v6415 = vpack.c.bf16 %v6390, %v6389
      %v6416 = vpack.c.bf16 %v6392, %v6391
      %v6417 = vpack.c.bf16 %v6394, %v6393
      %v6418 = vpack.c.bf16 %v6396, %v6395
      %v6419 = vpack.c.bf16 %v6398, %v6397
      %v6420 = vpack.c.bf16 %v6400, %v6399
      %v6421 = vpack.c.bf16 %v6402, %v6401
      %v6422 = vpack.c.bf16 %v6404, %v6403
      %v6423 = vpack.c.bf16 %v6406, %v6405
      %v6424 = vpack.c.bf16 %v6408, %v6407
      %v6425 = vpack.c.bf16 %v6410, %v6409
      %v6427 = vshrl.u32 %v6411, 16
      %v6429 = vshll.u32 %v6411, 16
      %v6431 = vrot.slane %v6429, 1
      %v6432 = vor.u32 %v6427, %v6431
      %v6434 = vshll.u32 %v6412, 16
      %v6436 = vrot.slane %v6434, 1
      %v6437 = vsel %vm820, %v6432, %v6436
      %v6438 = vshrl.u32 %v6412, 16
      %v6440 = vor.u32 %v6438, %v6436
      %v6442 = vshll.u32 %v6413, 16
      %v6444 = vrot.slane %v6442, 1
      %v6445 = vsel %vm820, %v6440, %v6444
      %v6446 = vshrl.u32 %v6413, 16
      %v6448 = vor.u32 %v6446, %v6444
      %v6450 = vshll.u32 %v6414, 16
      %v6452 = vrot.slane %v6450, 1
      %v6453 = vsel %vm820, %v6448, %v6452
      %v6454 = vshrl.u32 %v6414, 16
      %v6456 = vor.u32 %v6454, %v6452
      %v6458 = vshll.u32 %v6415, 16
      %v6460 = vrot.slane %v6458, 1
      %v6461 = vsel %vm820, %v6456, %v6460
      %v6462 = vshrl.u32 %v6415, 16
      %v6464 = vor.u32 %v6462, %v6460
      %v6466 = vshll.u32 %v6416, 16
      %v6468 = vrot.slane %v6466, 1
      %v6469 = vsel %vm820, %v6464, %v6468
      %v6470 = vshrl.u32 %v6416, 16
      %v6472 = vor.u32 %v6470, %v6468
      %v6474 = vshll.u32 %v6417, 16
      %v6476 = vrot.slane %v6474, 1
      %v6477 = vsel %vm820, %v6472, %v6476
      %v6478 = vshrl.u32 %v6417, 16
      %v6480 = vor.u32 %v6478, %v6476
      %v6482 = vshll.u32 %v6418, 16
      %v6484 = vrot.slane %v6482, 1
      %v6485 = vsel %vm820, %v6480, %v6484
      %v6486 = vshrl.u32 %v6418, 16
      %v6488 = vor.u32 %v6486, %v6484
      %v6490 = vshll.u32 %v6419, 16
      %v6492 = vrot.slane %v6490, 1
      %v6493 = vsel %vm820, %v6488, %v6492
      %v6494 = vshrl.u32 %v6419, 16
      %v6496 = vor.u32 %v6494, %v6492
      %v6498 = vshll.u32 %v6420, 16
      %v6500 = vrot.slane %v6498, 1
      %v6501 = vsel %vm820, %v6496, %v6500
      %v6502 = vshrl.u32 %v6420, 16
      %v6504 = vor.u32 %v6502, %v6500
      %v6506 = vshll.u32 %v6421, 16
      %v6508 = vrot.slane %v6506, 1
      %v6509 = vsel %vm820, %v6504, %v6508
      %v6510 = vshrl.u32 %v6421, 16
      %v6512 = vor.u32 %v6510, %v6508
      %v6514 = vshll.u32 %v6422, 16
      %v6516 = vrot.slane %v6514, 1
      %v6517 = vsel %vm820, %v6512, %v6516
      %v6518 = vshrl.u32 %v6422, 16
      %v6520 = vor.u32 %v6518, %v6516
      %v6522 = vshll.u32 %v6423, 16
      %v6524 = vrot.slane %v6522, 1
      %v6525 = vsel %vm820, %v6520, %v6524
      %6526 = vrot.lane.b32.xlu0 %v6437, 16
      %v6527 = vpop.permute.xlu0 %6526
      %6528 = vrot.lane.b32.xlu0 %v6445, 16
      %v6529 = vpop.permute.xlu0 %6528
      %6530 = vrot.lane.b32.xlu0 %v6453, 16
      %v6531 = vpop.permute.xlu0 %6530
      %6532 = vrot.lane.b32.xlu0 %v6461, 16
      %v6533 = vpop.permute.xlu0 %6532
      %6534 = vrot.lane.b32.xlu0 %v6469, 16
      %v6535 = vpop.permute.xlu0 %6534
      %6536 = vrot.lane.b32.xlu0 %v6477, 16
      %v6537 = vpop.permute.xlu0 %6536
      %6538 = vrot.lane.b32.xlu0 %v6485, 16
      %v6539 = vpop.permute.xlu0 %6538
      %6540 = vrot.lane.b32.xlu0 %v6493, 16
      %v6541 = vpop.permute.xlu0 %6540
      %6542 = vrot.lane.b32.xlu0 %v6501, 16
      %v6543 = vpop.permute.xlu0 %6542
      %6544 = vrot.lane.b32.xlu0 %v6509, 16
      %v6545 = vpop.permute.xlu0 %6544
      %6546 = vrot.lane.b32.xlu0 %v6517, 16
      %v6547 = vpop.permute.xlu0 %6546
      %6548 = vrot.lane.b32.xlu0 %v6525, 16
      %v6549 = vpop.permute.xlu0 %6548
      %v6563 = vrot.slane %v6411, 1
      %v6564 = vrot.slane %v6412, 1
      %v6565 = vsel %vm1425, %v6563, %v6564
      %v6566 = vrot.slane %v6413, 1
      %v6567 = vsel %vm1425, %v6564, %v6566
      %v6568 = vrot.slane %v6414, 1
      %v6569 = vsel %vm1425, %v6566, %v6568
      %v6570 = vrot.slane %v6415, 1
      %v6571 = vsel %vm1425, %v6568, %v6570
      %v6572 = vrot.slane %v6416, 1
      %v6573 = vsel %vm1425, %v6570, %v6572
      %v6574 = vrot.slane %v6417, 1
      %v6575 = vsel %vm1425, %v6572, %v6574
      %v6576 = vrot.slane %v6418, 1
      %v6577 = vsel %vm1425, %v6574, %v6576
      %v6578 = vrot.slane %v6419, 1
      %v6579 = vsel %vm1425, %v6576, %v6578
      %v6580 = vrot.slane %v6420, 1
      %v6581 = vsel %vm1425, %v6578, %v6580
      %v6582 = vrot.slane %v6421, 1
      %v6583 = vsel %vm1425, %v6580, %v6582
      %v6584 = vrot.slane %v6422, 1
      %v6585 = vsel %vm1425, %v6582, %v6584
      %v6586 = vrot.slane %v6423, 1
      %v6587 = vsel %vm1425, %v6584, %v6586
      %6588 = vrot.lane.b32.xlu0 %v6565, 32
      %v6589 = vpop.permute.xlu0 %6588
      %6590 = vrot.lane.b32.xlu0 %v6567, 32
      %v6591 = vpop.permute.xlu0 %6590
      %6592 = vrot.lane.b32.xlu0 %v6569, 32
      %v6593 = vpop.permute.xlu0 %6592
      %6594 = vrot.lane.b32.xlu0 %v6571, 32
      %v6595 = vpop.permute.xlu0 %6594
      %6596 = vrot.lane.b32.xlu0 %v6573, 32
      %v6597 = vpop.permute.xlu0 %6596
      %6598 = vrot.lane.b32.xlu0 %v6575, 32
      %v6599 = vpop.permute.xlu0 %6598
      %6600 = vrot.lane.b32.xlu0 %v6577, 32
      %v6601 = vpop.permute.xlu0 %6600
      %6602 = vrot.lane.b32.xlu0 %v6579, 32
      %v6603 = vpop.permute.xlu0 %6602
      %6604 = vrot.lane.b32.xlu0 %v6581, 32
      %v6605 = vpop.permute.xlu0 %6604
      %6606 = vrot.lane.b32.xlu0 %v6583, 32
      %v6607 = vpop.permute.xlu0 %6606
      %6608 = vrot.lane.b32.xlu0 %v6585, 32
      %v6609 = vpop.permute.xlu0 %6608
      %6610 = vrot.lane.b32.xlu0 %v6587, 32
      %v6611 = vpop.permute.xlu0 %6610
      %6612 = vrot.lane.b32.xlu0 %v6412, 48
      %v6613 = vpop.permute.xlu0 %6612
      %6614 = vrot.lane.b32.xlu0 %v6413, 48
      %v6615 = vpop.permute.xlu0 %6614
      %6616 = vrot.lane.b32.xlu0 %v6414, 48
      %v6617 = vpop.permute.xlu0 %6616
      %6618 = vrot.lane.b32.xlu0 %v6415, 48
      %v6619 = vpop.permute.xlu0 %6618
      %6620 = vrot.lane.b32.xlu0 %v6416, 48
      %v6621 = vpop.permute.xlu0 %6620
      %6622 = vrot.lane.b32.xlu0 %v6417, 48
      %v6623 = vpop.permute.xlu0 %6622
      %6624 = vrot.lane.b32.xlu0 %v6418, 48
      %v6625 = vpop.permute.xlu0 %6624
      %6626 = vrot.lane.b32.xlu0 %v6419, 48
      %v6627 = vpop.permute.xlu0 %6626
      %6628 = vrot.lane.b32.xlu0 %v6420, 48
      %v6629 = vpop.permute.xlu0 %6628
      %6630 = vrot.lane.b32.xlu0 %v6421, 48
      %v6631 = vpop.permute.xlu0 %6630
      %6632 = vrot.lane.b32.xlu0 %v6422, 48
      %v6633 = vpop.permute.xlu0 %6632
      %6634 = vrot.lane.b32.xlu0 %v6423, 48
      %v6635 = vpop.permute.xlu0 %6634
      %v6636 = vshrl.u32 %v6423, 16
      %v6638 = vor.u32 %v6636, %v6524
      %v6640 = vshll.u32 %v6424, 16
      %v6642 = vrot.slane %v6640, 1
      %v6643 = vsel %vm820, %v6638, %v6642
      %6644 = vrot.lane.b32.xlu0 %v6445, 64
      %v6645 = vpop.permute.xlu0 %6644
      %6646 = vrot.lane.b32.xlu0 %v6453, 64
      %v6647 = vpop.permute.xlu0 %6646
      %6648 = vrot.lane.b32.xlu0 %v6461, 64
      %v6649 = vpop.permute.xlu0 %6648
      %6650 = vrot.lane.b32.xlu0 %v6469, 64
      %v6651 = vpop.permute.xlu0 %6650
      %6652 = vrot.lane.b32.xlu0 %v6477, 64
      %v6653 = vpop.permute.xlu0 %6652
      %6654 = vrot.lane.b32.xlu0 %v6485, 64
      %v6655 = vpop.permute.xlu0 %6654
      %6656 = vrot.lane.b32.xlu0 %v6493, 64
      %v6657 = vpop.permute.xlu0 %6656
      %6658 = vrot.lane.b32.xlu0 %v6501, 64
      %v6659 = vpop.permute.xlu0 %6658
      %6660 = vrot.lane.b32.xlu0 %v6509, 64
      %v6661 = vpop.permute.xlu0 %6660
      %6662 = vrot.lane.b32.xlu0 %v6517, 64
      %v6663 = vpop.permute.xlu0 %6662
      %6664 = vrot.lane.b32.xlu0 %v6525, 64
      %v6665 = vpop.permute.xlu0 %6664
      %6666 = vrot.lane.b32.xlu0 %v6643, 64
      %v6667 = vpop.permute.xlu0 %6666
      %v6669 = vrot.slane %v6424, 1
      %v6670 = vsel %vm1425, %v6586, %v6669
      %6671 = vrot.lane.b32.xlu0 %v6567, 80
      %v6672 = vpop.permute.xlu0 %6671
      %6673 = vrot.lane.b32.xlu0 %v6569, 80
      %v6674 = vpop.permute.xlu0 %6673
      %6675 = vrot.lane.b32.xlu0 %v6571, 80
      %v6676 = vpop.permute.xlu0 %6675
      %6677 = vrot.lane.b32.xlu0 %v6573, 80
      %v6678 = vpop.permute.xlu0 %6677
      %6679 = vrot.lane.b32.xlu0 %v6575, 80
      %v6680 = vpop.permute.xlu0 %6679
      %6681 = vrot.lane.b32.xlu0 %v6577, 80
      %v6682 = vpop.permute.xlu0 %6681
      %6683 = vrot.lane.b32.xlu0 %v6579, 80
      %v6684 = vpop.permute.xlu0 %6683
      %6685 = vrot.lane.b32.xlu0 %v6581, 80
      %v6686 = vpop.permute.xlu0 %6685
      %6687 = vrot.lane.b32.xlu0 %v6583, 80
      %v6688 = vpop.permute.xlu0 %6687
      %6689 = vrot.lane.b32.xlu0 %v6585, 80
      %v6690 = vpop.permute.xlu0 %6689
      %6691 = vrot.lane.b32.xlu0 %v6587, 80
      %v6692 = vpop.permute.xlu0 %6691
      %6693 = vrot.lane.b32.xlu0 %v6670, 80
      %v6694 = vpop.permute.xlu0 %6693
      %6695 = vrot.lane.b32.xlu0 %v6413, 96
      %v6696 = vpop.permute.xlu0 %6695
      %6697 = vrot.lane.b32.xlu0 %v6414, 96
      %v6698 = vpop.permute.xlu0 %6697
      %6699 = vrot.lane.b32.xlu0 %v6415, 96
      %v6700 = vpop.permute.xlu0 %6699
      %6701 = vrot.lane.b32.xlu0 %v6416, 96
      %v6702 = vpop.permute.xlu0 %6701
      %6703 = vrot.lane.b32.xlu0 %v6417, 96
      %v6704 = vpop.permute.xlu0 %6703
      %6705 = vrot.lane.b32.xlu0 %v6418, 96
      %v6706 = vpop.permute.xlu0 %6705
      %6707 = vrot.lane.b32.xlu0 %v6419, 96
      %v6708 = vpop.permute.xlu0 %6707
      %6709 = vrot.lane.b32.xlu0 %v6420, 96
      %v6710 = vpop.permute.xlu0 %6709
      %6711 = vrot.lane.b32.xlu0 %v6421, 96
      %v6712 = vpop.permute.xlu0 %6711
      %6713 = vrot.lane.b32.xlu0 %v6422, 96
      %v6714 = vpop.permute.xlu0 %6713
      %6715 = vrot.lane.b32.xlu0 %v6423, 96
      %v6716 = vpop.permute.xlu0 %6715
      %6717 = vrot.lane.b32.xlu0 %v6424, 96
      %v6718 = vpop.permute.xlu0 %6717
      %v6719 = vshrl.u32 %v6424, 16
      %v6721 = vor.u32 %v6719, %v6642
      %v6723 = vshll.u32 %v6425, 16
      %v6725 = vrot.slane %v6723, 1
      %v6726 = vsel %vm820, %v6721, %v6725
      %6727 = vrot.lane.b32.xlu0 %v6453, 112
      %v6728 = vpop.permute.xlu0 %6727
      %6729 = vrot.lane.b32.xlu0 %v6461, 112
      %v6730 = vpop.permute.xlu0 %6729
      %6731 = vrot.lane.b32.xlu0 %v6469, 112
      %v6732 = vpop.permute.xlu0 %6731
      %6733 = vrot.lane.b32.xlu0 %v6477, 112
      %v6734 = vpop.permute.xlu0 %6733
      %6735 = vrot.lane.b32.xlu0 %v6485, 112
      %v6736 = vpop.permute.xlu0 %6735
      %6737 = vrot.lane.b32.xlu0 %v6493, 112
      %v6738 = vpop.permute.xlu0 %6737
      %6739 = vrot.lane.b32.xlu0 %v6501, 112
      %v6740 = vpop.permute.xlu0 %6739
      %6741 = vrot.lane.b32.xlu0 %v6509, 112
      %v6742 = vpop.permute.xlu0 %6741
      %6743 = vrot.lane.b32.xlu0 %v6517, 112
      %v6744 = vpop.permute.xlu0 %6743
      %6745 = vrot.lane.b32.xlu0 %v6525, 112
      %v6746 = vpop.permute.xlu0 %6745
      %6747 = vrot.lane.b32.xlu0 %v6643, 112
      %v6748 = vpop.permute.xlu0 %6747
      %6749 = vrot.lane.b32.xlu0 %v6726, 112
      %v6750 = vpop.permute.xlu0 %6749
      %v6752 = vrot.slane %v6425, 1
      %v6753 = vsel %vm1425, %v6669, %v6752
      %vm6754 = vcmask 130048
      %v6756 = vsel %vm6754, %v6411, %v6527
      %v6758 = vsel %vm6754, %v6412, %v6529
      %v6760 = vsel %vm6754, %v6413, %v6531
      %v6762 = vsel %vm6754, %v6414, %v6533
      %v6764 = vsel %vm6754, %v6415, %v6535
      %v6766 = vsel %vm6754, %v6416, %v6537
      %v6768 = vsel %vm6754, %v6417, %v6539
      %v6770 = vsel %vm6754, %v6418, %v6541
      %v6772 = vsel %vm6754, %v6419, %v6543
      %v6774 = vsel %vm6754, %v6420, %v6545
      %v6776 = vsel %vm6754, %v6421, %v6547
      %v6778 = vsel %vm6754, %v6422, %v6549
      %vm6779 = vcmask 261120
      %v6781 = vsel %vm6779, %v6756, %v6589
      %v6783 = vsel %vm6779, %v6758, %v6591
      %v6785 = vsel %vm6779, %v6760, %v6593
      %v6787 = vsel %vm6779, %v6762, %v6595
      %v6789 = vsel %vm6779, %v6764, %v6597
      %v6791 = vsel %vm6779, %v6766, %v6599
      %v6793 = vsel %vm6779, %v6768, %v6601
      %v6795 = vsel %vm6779, %v6770, %v6603
      %v6797 = vsel %vm6779, %v6772, %v6605
      %v6799 = vsel %vm6779, %v6774, %v6607
      %v6801 = vsel %vm6779, %v6776, %v6609
      %v6803 = vsel %vm6779, %v6778, %v6611
      %vm6804 = vcmask 392192
      %v6806 = vsel %vm6804, %v6781, %v6613
      %v6808 = vsel %vm6804, %v6783, %v6615
      %v6810 = vsel %vm6804, %v6785, %v6617
      %v6812 = vsel %vm6804, %v6787, %v6619
      %v6814 = vsel %vm6804, %v6789, %v6621
      %v6816 = vsel %vm6804, %v6791, %v6623
      %v6818 = vsel %vm6804, %v6793, %v6625
      %v6820 = vsel %vm6804, %v6795, %v6627
      %v6822 = vsel %vm6804, %v6797, %v6629
      %v6824 = vsel %vm6804, %v6799, %v6631
      %v6826 = vsel %vm6804, %v6801, %v6633
      %v6828 = vsel %vm6804, %v6803, %v6635
      %vm6829 = vcmask 523264
      %v6831 = vsel %vm6829, %v6806, %v6645
      %v6833 = vsel %vm6829, %v6808, %v6647
      %v6835 = vsel %vm6829, %v6810, %v6649
      %v6837 = vsel %vm6829, %v6812, %v6651
      %v6839 = vsel %vm6829, %v6814, %v6653
      %v6841 = vsel %vm6829, %v6816, %v6655
      %v6843 = vsel %vm6829, %v6818, %v6657
      %v6845 = vsel %vm6829, %v6820, %v6659
      %v6847 = vsel %vm6829, %v6822, %v6661
      %v6849 = vsel %vm6829, %v6824, %v6663
      %v6851 = vsel %vm6829, %v6826, %v6665
      %v6853 = vsel %vm6829, %v6828, %v6667
      %vm6854 = vcmask 654336
      %v6856 = vsel %vm6854, %v6831, %v6672
      %v6858 = vsel %vm6854, %v6833, %v6674
      %v6860 = vsel %vm6854, %v6835, %v6676
      %v6862 = vsel %vm6854, %v6837, %v6678
      %v6864 = vsel %vm6854, %v6839, %v6680
      %v6866 = vsel %vm6854, %v6841, %v6682
      %v6868 = vsel %vm6854, %v6843, %v6684
      %v6870 = vsel %vm6854, %v6845, %v6686
      %v6872 = vsel %vm6854, %v6847, %v6688
      %v6874 = vsel %vm6854, %v6849, %v6690
      %v6876 = vsel %vm6854, %v6851, %v6692
      %v6878 = vsel %vm6854, %v6853, %v6694
      %vm6879 = vcmask 785408
      %v6881 = vsel %vm6879, %v6856, %v6696
      %v6883 = vsel %vm6879, %v6858, %v6698
      %v6885 = vsel %vm6879, %v6860, %v6700
      %v6887 = vsel %vm6879, %v6862, %v6702
      %v6889 = vsel %vm6879, %v6864, %v6704
      %v6891 = vsel %vm6879, %v6866, %v6706
      %v6893 = vsel %vm6879, %v6868, %v6708
      %v6895 = vsel %vm6879, %v6870, %v6710
      %v6897 = vsel %vm6879, %v6872, %v6712
      %v6899 = vsel %vm6879, %v6874, %v6714
      %v6901 = vsel %vm6879, %v6876, %v6716
      %v6903 = vsel %vm6879, %v6878, %v6718
      %vm6904 = vcmask 916480
      %v6906 = vsel %vm6904, %v6881, %v6728
      %v6909 = vsel %vm6904, %v6883, %v6730
      %v6912 = vsel %vm6904, %v6885, %v6732
      %v6915 = vsel %vm6904, %v6887, %v6734
      %v6918 = vsel %vm6904, %v6889, %v6736
      %v6921 = vsel %vm6904, %v6891, %v6738
      %v6924 = vsel %vm6904, %v6893, %v6740
      %v6927 = vsel %vm6904, %v6895, %v6742
      %v6930 = vsel %vm6904, %v6897, %v6744
      %v6933 = vsel %vm6904, %v6899, %v6746
      %v6936 = vsel %vm6904, %v6901, %v6748
      %v6939 = vsel %vm6904, %v6903, %v6750
      %v6941 = vld [vmem:[%s6] sm:$0xf]
      %v6942 = vld [vmem:[%s6 + $0x4] sm:$0xf]
      %v6943 = vld [vmem:[%s6 + $0x8] sm:$0xf]
      %v6944 = vld [vmem:[%s6 + $0xc] sm:$0xf]
      %v6945 = vld [vmem:[%s6 + $0x10] sm:$0xf]
      %v6946 = vld [vmem:[%s6 + $0x14] sm:$0xf]
      %v6947 = vld [vmem:[%s6 + $0x18] sm:$0xf]
      %v6948 = vld [vmem:[%s6 + $0x1c] sm:$0xf]
      %v6949 = vld [vmem:[%s6 + $0x20] sm:$0xf]
      %v6950 = vld [vmem:[%s6 + $0x24] sm:$0xf]
      %v6951 = vld [vmem:[%s6 + $0x28] sm:$0xf]
      %v6952 = vld [vmem:[%s6 + $0x2c] sm:$0xf]
      %v6953 = vld [vmem:[%s6 + $0x30] sm:$0xf]
      %v6954 = vld [vmem:[%s6 + $0x34] sm:$0xf]
      %v6955 = vld [vmem:[%s6 + $0x38] sm:$0xf]
      %v6956 = vld [vmem:[%s6 + $0x3c] sm:$0xf]
      %v6957 = vld [vmem:[%s6 + $0x40] sm:$0xf]
      %v6958 = vld [vmem:[%s6 + $0x44] sm:$0xf]
      %v6959 = vld [vmem:[%s7] sm:$0x1]
      %v6961 = vlaneseq
      %v6962 = vshrl.u32 %v6961, 7
      %v6963 = vsub.s32 0, %v6962
      %v6964 = vrot.slane %v6959, %v6963
      %v6984 = vunpack.c.l.b16 %v6941
      %v6985 = vunpack.c.l.b16 %v6942
      %v6986 = vunpack.c.l.b16 %v6943
      %v6987 = vunpack.c.l.b16 %v6944
      %v6988 = vunpack.c.l.b16 %v6945
      %v6989 = vunpack.c.l.b16 %v6946
      %v6990 = vunpack.c.l.b16 %v6947
      %v6991 = vunpack.c.l.b16 %v6948
      %v6992 = vunpack.c.l.b16 %v6949
      %v6993 = vunpack.c.l.b16 %v6950
      %v6994 = vunpack.c.l.b16 %v6951
      %v6995 = vunpack.c.l.b16 %v6952
      %v6996 = vunpack.c.l.b16 %v6953
      %v6997 = vunpack.c.l.b16 %v6954
      %v6998 = vunpack.c.l.b16 %v6955
      %v6999 = vunpack.c.l.b16 %v6956
      %v7000 = vunpack.c.l.b16 %v6957
      %v7001 = vunpack.c.l.b16 %v6958
      %v7002 = vpack.c.b16 %v6985, %v6984
      %v7003 = vpack.c.b16 %v6987, %v6986
      %v7004 = vpack.c.b16 %v6989, %v6988
      %v7005 = vpack.c.b16 %v6991, %v6990
      %v7006 = vpack.c.b16 %v6993, %v6992
      %v7007 = vpack.c.b16 %v6995, %v6994
      %v7008 = vpack.c.b16 %v6997, %v6996
      %v7009 = vpack.c.b16 %v6999, %v6998
      %v7010 = vpack.c.b16 %v7001, %v7000
      %v7021 = vsel %vm6754, %v6569, 0
      %v7024 = vsel %vm6754, %v6571, 0
      %v7027 = vsel %vm6754, %v6573, 0
      %v7030 = vsel %vm6754, %v6575, 0
      %v7033 = vsel %vm6754, %v6577, 0
      %v7036 = vsel %vm6754, %v6579, 0
      %v7039 = vsel %vm6754, %v6581, 0
      %v7042 = vsel %vm6754, %v6583, 0
      %v7045 = vsel %vm6754, %v6585, 0
      %v7048 = vsel %vm6754, %v6587, 0
      %v7051 = vsel %vm6754, %v6670, 0
      %v7054 = vsel %vm6754, %v6753, 0
      %7056 = vmatprep.subr.bf16.mxu0 0
      %7057 = vmatpush1.bf16.msra.mxu0 %v7002
      %7058 = vmatprep.subr.bf16.mxu0 0
      %7059 = vmatpush1.bf16.msra.mxu0 %v7003
      %7060 = vmatprep.subr.bf16.mxu0 0
      %7061 = vmatpush1.bf16.msra.mxu0 %v7004
      %7062 = vmatprep.subr.bf16.mxu0 0
      %7063 = vmatpush1.bf16.msra.mxu0 %v7005
      %7064 = vmatprep.subr.bf16.mxu0 0
      %7065 = vmatpush1.bf16.msra.mxu0 %v7006
      %7066 = vmatprep.subr.bf16.mxu0 0
      %7067 = vmatpush1.bf16.msra.mxu0 %v7007
      %7068 = vmatprep.subr.bf16.mxu0 0
      %7069 = vmatpush1.bf16.msra.mxu0 %v7008
      %7070 = vmatprep.subr.bf16.mxu0 0
      %7071 = vmatpush1.bf16.msra.mxu0 %v7009
      %7072 = vmatprep.subr.bf16.mxu0 0
      %7073 = vmatpush1.bf16.msra.mxu0 %v7010
      %7074 = vmatprep.subr.bf16.mxu0 0
      %7075 = vmatpush1.bf16.msra.mxu0 0
      %7076 = vmatprep.subr.bf16.mxu0 0
      %7077 = vmatpush1.bf16.msra.mxu0 0
      %7078 = vmatprep.subr.bf16.mxu0 0
      %7079 = vmatpush1.bf16.msra.mxu0 0
      %7080 = vmatprep.subr.bf16.mxu0 0
      %7081 = vmatpush1.bf16.msra.mxu0 0
      %7082 = vmatprep.subr.bf16.mxu0 0
      %7083 = vmatpush1.bf16.msra.mxu0 0
      %7084 = vmatprep.subr.bf16.mxu0 0
      %7085 = vmatpush1.bf16.msra.mxu0 0
      %7086 = vmatprep.subr.bf16.mxu0 0
      %7087 = vmatpush1.bf16.msra.mxu0 0
      %7088 = vmatprep.mubr.bf16.mxu0 %v7021
      %7089 = vmatmul.mubr.bf16.gmra.mrb[0].mxu0 %v6906
      %v7090 = vpop.f32.mrb[0].mxu0
      %v7091 = vadd.f32 %v6964, %v7090
      %v7092 = vpop.f32.mrb[0].mxu0
      %v7093 = vpop.f32.mrb[0].mxu0
      %v7094 = vadd.f32 %v6964, %v7093
      %v7095 = vpop.f32.mrb[0].mxu0
      %7096 = vmatprep.mubr.bf16.mxu0 %v7024
      %7097 = vmatmul.mubr.bf16.gmra.mrb[0].mxu0 %v6909
      %v7098 = vpop.f32.mrb[0].mxu0
      %v7099 = vadd.f32 %v6964, %v7098
      %v7100 = vpop.f32.mrb[0].mxu0
      %v7101 = vpop.f32.mrb[0].mxu0
      %v7102 = vadd.f32 %v6964, %v7101
      %v7103 = vpop.f32.mrb[0].mxu0
      %7104 = vmatprep.mubr.bf16.mxu0 %v7027
      %7105 = vmatmul.mubr.bf16.gmra.mrb[0].mxu0 %v6912
      %v7106 = vpop.f32.mrb[0].mxu0
      %v7107 = vadd.f32 %v6964, %v7106
      %v7108 = vpop.f32.mrb[0].mxu0
      %v7109 = vpop.f32.mrb[0].mxu0
      %v7110 = vadd.f32 %v6964, %v7109
      %v7111 = vpop.f32.mrb[0].mxu0
      %7112 = vmatprep.mubr.bf16.mxu0 %v7030
      %7113 = vmatmul.mubr.bf16.gmra.mrb[0].mxu0 %v6915
      %v7114 = vpop.f32.mrb[0].mxu0
      %v7115 = vadd.f32 %v6964, %v7114
      %v7116 = vpop.f32.mrb[0].mxu0
      %v7117 = vpop.f32.mrb[0].mxu0
      %v7118 = vadd.f32 %v6964, %v7117
      %v7119 = vpop.f32.mrb[0].mxu0
      %7120 = vmatprep.mubr.bf16.mxu0 %v7033
      %7121 = vmatmul.mubr.bf16.gmra.mrb[0].mxu0 %v6918
      %v7122 = vpop.f32.mrb[0].mxu0
      %v7123 = vadd.f32 %v6964, %v7122
      %v7124 = vpop.f32.mrb[0].mxu0
      %v7125 = vpop.f32.mrb[0].mxu0
      %v7126 = vadd.f32 %v6964, %v7125
      %v7127 = vpop.f32.mrb[0].mxu0
      %7128 = vmatprep.mubr.bf16.mxu0 %v7036
      %7129 = vmatmul.mubr.bf16.gmra.mrb[0].mxu0 %v6921
      %v7130 = vpop.f32.mrb[0].mxu0
      %v7131 = vadd.f32 %v6964, %v7130
      %v7132 = vpop.f32.mrb[0].mxu0
      %v7133 = vpop.f32.mrb[0].mxu0
      %v7134 = vadd.f32 %v6964, %v7133
      %v7135 = vpop.f32.mrb[0].mxu0
      %7136 = vmatprep.mubr.bf16.mxu0 %v7039
      %7137 = vmatmul.mubr.bf16.gmra.mrb[0].mxu0 %v6924
      %v7138 = vpop.f32.mrb[0].mxu0
      %v7139 = vadd.f32 %v6964, %v7138
      %v7140 = vpop.f32.mrb[0].mxu0
      %v7141 = vpop.f32.mrb[0].mxu0
      %v7142 = vadd.f32 %v6964, %v7141
      %v7143 = vpop.f32.mrb[0].mxu0
      %7144 = vmatprep.mubr.bf16.mxu0 %v7042
      %7145 = vmatmul.mubr.bf16.gmra.mrb[0].mxu0 %v6927
      %v7146 = vpop.f32.mrb[0].mxu0
      %v7147 = vadd.f32 %v6964, %v7146
      %v7148 = vpop.f32.mrb[0].mxu0
      %v7149 = vpop.f32.mrb[0].mxu0
      %v7150 = vadd.f32 %v6964, %v7149
      %v7151 = vpop.f32.mrb[0].mxu0
      %7152 = vmatprep.mubr.bf16.mxu0 %v7045
      %7153 = vmatmul.mubr.bf16.gmra.mrb[0].mxu0 %v6930
      %v7154 = vpop.f32.mrb[0].mxu0
      %v7155 = vadd.f32 %v6964, %v7154
      %v7156 = vpop.f32.mrb[0].mxu0
      %v7157 = vpop.f32.mrb[0].mxu0
      %v7158 = vadd.f32 %v6964, %v7157
      %v7159 = vpop.f32.mrb[0].mxu0
      %7160 = vmatprep.mubr.bf16.mxu0 %v7048
      %7161 = vmatmul.mubr.bf16.gmra.mrb[0].mxu0 %v6933
      %v7162 = vpop.f32.mrb[0].mxu0
      %v7163 = vadd.f32 %v6964, %v7162
      %v7164 = vpop.f32.mrb[0].mxu0
      %v7165 = vpop.f32.mrb[0].mxu0
      %v7166 = vadd.f32 %v6964, %v7165
      %v7167 = vpop.f32.mrb[0].mxu0
      %7168 = vmatprep.mubr.bf16.mxu0 %v7051
      %7169 = vmatmul.mubr.bf16.gmra.mrb[0].mxu0 %v6936
      %v7170 = vpop.f32.mrb[0].mxu0
      %v7171 = vadd.f32 %v6964, %v7170
      %v7172 = vpop.f32.mrb[0].mxu0
      %v7173 = vpop.f32.mrb[0].mxu0
      %v7174 = vadd.f32 %v6964, %v7173
      %v7175 = vpop.f32.mrb[0].mxu0
      %7176 = vmatprep.mubr.bf16.mxu0 %v7054
      %7177 = vmatmul.mubr.bf16.gmra.mrb[0].mxu0 %v6939
      %v7178 = vpop.f32.mrb[0].mxu0
      %v7179 = vadd.f32 %v6964, %v7178
      %v7180 = vpop.f32.mrb[0].mxu0
      %v7181 = vpop.f32.mrb[0].mxu0
      %v7182 = vadd.f32 %v6964, %v7181
      %v7183 = vpop.f32.mrb[0].mxu0
      %7184 = vdwg.mxu0
      %v7185 = vmax.f32 %v7091, 0.0
      %v7186 = vmax.f32 %v7094, 0.0
      %v7187 = vmax.f32 %v7099, 0.0
      %v7188 = vmax.f32 %v7102, 0.0
      %v7189 = vmax.f32 %v7107, 0.0
      %v7190 = vmax.f32 %v7110, 0.0
      %v7191 = vmax.f32 %v7115, 0.0
      %v7192 = vmax.f32 %v7118, 0.0
      %v7193 = vmax.f32 %v7123, 0.0
      %v7194 = vmax.f32 %v7126, 0.0
      %v7195 = vmax.f32 %v7131, 0.0
      %v7196 = vmax.f32 %v7134, 0.0
      %v7197 = vmax.f32 %v7139, 0.0
      %v7198 = vmax.f32 %v7142, 0.0
      %v7199 = vmax.f32 %v7147, 0.0
      %v7200 = vmax.f32 %v7150, 0.0
      %v7201 = vmax.f32 %v7155, 0.0
      %v7202 = vmax.f32 %v7158, 0.0
      %v7203 = vmax.f32 %v7163, 0.0
      %v7204 = vmax.f32 %v7166, 0.0
      %v7205 = vmax.f32 %v7171, 0.0
      %v7206 = vmax.f32 %v7174, 0.0
      %v7207 = vmax.f32 %v7179, 0.0
      %v7208 = vmax.f32 %v7182, 0.0
      %v7209 = vmax.f32 %v7185, %v7187
      %v7210 = vmax.f32 %v7186, %v7188
      %v7211 = vmax.f32 %v7187, %v7189
      %v7212 = vmax.f32 %v7188, %v7190
      %v7213 = vmax.f32 %v7189, %v7191
      %v7214 = vmax.f32 %v7190, %v7192
      %v7215 = vmax.f32 %v7191, %v7193
      %v7216 = vmax.f32 %v7192, %v7194
      %v7217 = vmax.f32 %v7193, %v7195
      %v7218 = vmax.f32 %v7194, %v7196
      %v7219 = vmax.f32 %v7195, %v7197
      %v7220 = vmax.f32 %v7196, %v7198
      %v7221 = vmax.f32 %v7197, %v7199
      %v7222 = vmax.f32 %v7198, %v7200
      %v7223 = vmax.f32 %v7199, %v7201
      %v7224 = vmax.f32 %v7200, %v7202
      %v7225 = vmax.f32 %v7201, %v7203
      %v7226 = vmax.f32 %v7202, %v7204
      %v7227 = vmax.f32 %v7203, %v7205
      %v7228 = vmax.f32 %v7204, %v7206
      %v7229 = vmax.f32 %v7205, %v7207
      %v7230 = vmax.f32 %v7206, %v7208
      %v7253 = vrot.slane %v7209, 1
      %v7254 = vrot.slane %v7210, 1
      %v7255 = vsel %vm4446, %v7253, %v7254
      %v7256 = vrot.slane %v7211, 1
      %v7257 = vsel %vm4446, %v7254, %v7256
      %v7258 = vrot.slane %v7212, 1
      %v7259 = vsel %vm4446, %v7256, %v7258
      %v7260 = vrot.slane %v7213, 1
      %v7261 = vsel %vm4446, %v7258, %v7260
      %v7262 = vrot.slane %v7214, 1
      %v7263 = vsel %vm4446, %v7260, %v7262
      %v7264 = vrot.slane %v7215, 1
      %v7265 = vsel %vm4446, %v7262, %v7264
      %v7266 = vrot.slane %v7216, 1
      %v7267 = vsel %vm4446, %v7264, %v7266
      %v7268 = vrot.slane %v7217, 1
      %v7269 = vsel %vm4446, %v7266, %v7268
      %v7270 = vrot.slane %v7218, 1
      %v7271 = vsel %vm4446, %v7268, %v7270
      %v7272 = vrot.slane %v7219, 1
      %v7273 = vsel %vm4446, %v7270, %v7272
      %v7274 = vrot.slane %v7220, 1
      %v7275 = vsel %vm4446, %v7272, %v7274
      %v7276 = vrot.slane %v7221, 1
      %v7277 = vsel %vm4446, %v7274, %v7276
      %v7278 = vrot.slane %v7222, 1
      %v7279 = vsel %vm4446, %v7276, %v7278
      %v7280 = vrot.slane %v7223, 1
      %v7281 = vsel %vm4446, %v7278, %v7280
      %v7282 = vrot.slane %v7224, 1
      %v7283 = vsel %vm4446, %v7280, %v7282
      %v7284 = vrot.slane %v7225, 1
      %v7285 = vsel %vm4446, %v7282, %v7284
      %v7286 = vrot.slane %v7226, 1
      %v7287 = vsel %vm4446, %v7284, %v7286
      %v7288 = vrot.slane %v7227, 1
      %v7289 = vsel %vm4446, %v7286, %v7288
      %v7290 = vrot.slane %v7228, 1
      %v7291 = vsel %vm4446, %v7288, %v7290
      %v7292 = vrot.slane %v7229, 1
      %v7293 = vsel %vm4446, %v7290, %v7292
      %v7294 = vrot.slane %v7230, 1
      %v7295 = vsel %vm4446, %v7292, %v7294
      %v7318 = vmax.f32 %v7209, %v7255
      %v7319 = vmax.f32 %v7210, %v7257
      %v7320 = vmax.f32 %v7211, %v7259
      %v7321 = vmax.f32 %v7212, %v7261
      %v7322 = vmax.f32 %v7213, %v7263
      %v7323 = vmax.f32 %v7214, %v7265
      %v7324 = vmax.f32 %v7215, %v7267
      %v7325 = vmax.f32 %v7216, %v7269
      %v7326 = vmax.f32 %v7217, %v7271
      %v7327 = vmax.f32 %v7218, %v7273
      %v7328 = vmax.f32 %v7219, %v7275
      %v7329 = vmax.f32 %v7220, %v7277
      %v7330 = vmax.f32 %v7221, %v7279
      %v7331 = vmax.f32 %v7222, %v7281
      %v7332 = vmax.f32 %v7223, %v7283
      %v7333 = vmax.f32 %v7224, %v7285
      %v7334 = vmax.f32 %v7225, %v7287
      %v7335 = vmax.f32 %v7226, %v7289
      %v7336 = vmax.f32 %v7227, %v7291
      %v7337 = vmax.f32 %v7228, %v7293
      %v7338 = vmax.f32 %v7229, %v7295
      %v7339 = vmax.f32 %v7230, %v7294
      %v7340 = vpack.c.bf16 %v7319, %v7318
      %v7341 = vpack.c.bf16 %v7321, %v7320
      %v7342 = vpack.c.bf16 %v7323, %v7322
      %v7343 = vpack.c.bf16 %v7325, %v7324
      %v7344 = vpack.c.bf16 %v7327, %v7326
      %v7345 = vpack.c.bf16 %v7329, %v7328
      %v7346 = vpack.c.bf16 %v7331, %v7330
      %v7347 = vpack.c.bf16 %v7333, %v7332
      %v7348 = vpack.c.bf16 %v7335, %v7334
      %v7349 = vpack.c.bf16 %v7337, %v7336
      %v7350 = vpack.c.bf16 %v7339, %v7338
      %v7351 = vld [vmem:[%s10] sm:$0xff]
      %v7352 = vld [vmem:[%s10 + $0x8] sm:$0xff]
      %v7353 = vld [vmem:[%s10 + $0x10] sm:$0xff]
      %v7354 = vld [vmem:[%s10 + $0x18] sm:$0xff]
      %v7355 = vld [vmem:[%s10 + $0x20] sm:$0xff]
      %v7356 = vld [vmem:[%s10 + $0x28] sm:$0xff]
      %v7363 = vunpack.c.l.b16 %v7351
      %v7364 = vunpack.c.h.b16 %v7351
      %v7365 = vunpack.c.l.b16 %v7352
      %v7366 = vunpack.c.h.b16 %v7352
      %v7367 = vunpack.c.l.b16 %v7353
      %v7368 = vunpack.c.h.b16 %v7353
      %v7369 = vunpack.c.l.b16 %v7354
      %v7370 = vunpack.c.h.b16 %v7354
      %v7371 = vunpack.c.l.b16 %v7355
      %v7372 = vunpack.c.h.b16 %v7355
      %v7373 = vunpack.c.l.b16 %v7356
      %v7374 = vunpack.c.h.b16 %v7356
      %v7375 = vpack.c.b16 %v7365, %v7363
      %v7376 = vpack.c.b16 %v7366, %v7364
      %v7377 = vpack.c.b16 %v7369, %v7367
      %v7378 = vpack.c.b16 %v7370, %v7368
      %v7379 = vpack.c.b16 %v7373, %v7371
      %v7380 = vpack.c.b16 %v7374, %v7372
      %vm7384 = vcmask 384000
      %v7386 = vsel %vm7384, %v7376, 0
      %v7389 = vsel %vm7384, %v7378, 0
      %v7392 = vsel %vm7384, %v7380, 0
      %v7395 = vand.u32 %v7350, %v5721
      %7397 = vmatprep.subr.bf16.mxu0 0
      %7398 = vmatpush1.bf16.msra.mxu0 %v7340
      %7399 = vmatprep.subr.bf16.mxu0 0
      %7400 = vmatpush1.bf16.msra.mxu0 %v7341
      %7401 = vmatprep.subr.bf16.mxu0 0
      %7402 = vmatpush1.bf16.msra.mxu0 %v7342
      %7403 = vmatprep.subr.bf16.mxu0 0
      %7404 = vmatpush1.bf16.msra.mxu0 %v7343
      %7405 = vmatprep.subr.bf16.mxu0 0
      %7406 = vmatpush1.bf16.msra.mxu0 %v7344
      %7407 = vmatprep.subr.bf16.mxu0 0
      %7408 = vmatpush1.bf16.msra.mxu0 %v7345
      %7409 = vmatprep.subr.bf16.mxu0 0
      %7410 = vmatpush1.bf16.msra.mxu0 %v7346
      %7411 = vmatprep.subr.bf16.mxu0 0
      %7412 = vmatpush1.bf16.msra.mxu0 %v7347
      %7413 = vmatprep.subr.bf16.mxu0 0
      %7414 = vmatpush1.bf16.msra.mxu0 %v7348
      %7415 = vmatprep.subr.bf16.mxu0 0
      %7416 = vmatpush1.bf16.msra.mxu0 %v7349
      %7417 = vmatprep.subr.bf16.mxu0 0
      %7418 = vmatpush1.bf16.msra.mxu0 %v7395
      %7419 = vmatprep.subr.bf16.mxu0 0
      %7420 = vmatpush1.bf16.msra.mxu0 0
      %7421 = vmatprep.subr.bf16.mxu0 0
      %7422 = vmatpush1.bf16.msra.mxu0 0
      %7423 = vmatprep.subr.bf16.mxu0 0
      %7424 = vmatpush1.bf16.msra.mxu0 0
      %7425 = vmatprep.subr.bf16.mxu0 0
      %7426 = vmatpush1.bf16.msra.mxu0 0
      %7427 = vmatprep.subr.bf16.mxu0 0
      %7428 = vmatpush1.bf16.msra.mxu0 0
      %7429 = vmatprep.mubr.bf16.mxu0 %v7386
      %7430 = vmatmul.mubr.bf16.gmra.mrb[0].mxu0 %v7375
      %v7431 = vpop.f32.mrb[0].mxu0
      %v7432 = vadd.f32 0.0, %v7431
      %v7433 = vpop.f32.mrb[0].mxu0
      %v7434 = vpop.f32.mrb[0].mxu0
      %v7435 = vadd.f32 0.0, %v7434
      %v7436 = vpop.f32.mrb[0].mxu0
      %7437 = vmatprep.mubr.bf16.mxu0 %v7389
      %7438 = vmatmul.mubr.bf16.gmra.mrb[0].mxu0 %v7377
      %v7439 = vpop.f32.mrb[0].mxu0
      %v7440 = vadd.f32 0.0, %v7439
      %v7441 = vpop.f32.mrb[0].mxu0
      %v7442 = vpop.f32.mrb[0].mxu0
      %v7443 = vadd.f32 0.0, %v7442
      %v7444 = vpop.f32.mrb[0].mxu0
      %7445 = vmatprep.mubr.bf16.mxu0 %v7392
      %7446 = vmatmul.mubr.bf16.gmra.mrb[0].mxu0 %v7379
      %v7447 = vpop.f32.mrb[0].mxu0
      %v7448 = vadd.f32 0.0, %v7447
      %v7449 = vpop.f32.mrb[0].mxu0
      %v7450 = vpop.f32.mrb[0].mxu0
      %v7451 = vadd.f32 0.0, %v7450
      %v7452 = vpop.f32.mrb[0].mxu0
      %7453 = vdwg.mxu0
      %v7454 = vld [vmem:[%s8] sm:$0x1]
      %v7456 = vlaneseq
      %v7457 = vshrl.u32 %v7456, 7
      %v7458 = vsub.s32 0, %v7457
      %v7459 = vrot.slane %v7454, %v7458
      %v7461 = vmul.f32 %v7432, %v7459
      %v7462 = vmul.f32 %v7435, %v7459
      %v7463 = vmul.f32 %v7440, %v7459
      %v7464 = vmul.f32 %v7443, %v7459
      %v7465 = vmul.f32 %v7448, %v7459
      %v7466 = vmul.f32 %v7451, %v7459
      %v7467 = vld [vmem:[%s9] sm:$0x1]
      %v7469 = vlaneseq
      %v7470 = vshrl.u32 %v7469, 7
      %v7471 = vsub.s32 0, %v7470
      %v7472 = vrot.slane %v7467, %v7471
      %v7474 = vadd.f32 %v7461, %v7472
      %v7475 = vadd.f32 %v7462, %v7472
      %v7476 = vadd.f32 %v7463, %v7472
      %v7477 = vadd.f32 %v7464, %v7472
      %v7478 = vadd.f32 %v7465, %v7472
      %v7479 = vadd.f32 %v7466, %v7472
      %v7480 = vpack.c.bf16 %v7475, %v7474
      %v7481 = vpack.c.bf16 %v7477, %v7476
      %v7482 = vpack.c.bf16 %v7479, %v7478
      %v7486 = vunpack.c.l.b16 %v7480
      %v7487 = vunpack.c.h.b16 %v7480
      %v7488 = vunpack.c.l.b16 %v7481
      %v7489 = vunpack.c.h.b16 %v7481
      %v7490 = vunpack.c.l.b16 %v7482
      %v7491 = vunpack.c.h.b16 %v7482
      %v7492 = vpack.c.b16 %v7486, %v7486
      %v7493 = vpack.c.b16 %v7487, %v7487
      %v7494 = vpack.c.b16 %v7488, %v7488
      %v7495 = vpack.c.b16 %v7489, %v7489
      %v7496 = vpack.c.b16 %v7490, %v7490
      %v7497 = vpack.c.b16 %v7491, %v7491
      %vm7504 = vcmask 257024
      %7505 = vst.msk [vmem:[%s386] sm:$0xf] %vm7504, %v7492
      %7506 = vst.msk [vmem:[%s386 + $0x4] sm:$0xf] %vm7504, %v7493
      %7507 = vst.msk [vmem:[%s386 + $0x8] sm:$0xf] %vm7504, %v7494
      %7508 = vst.msk [vmem:[%s386 + $0xc] sm:$0xf] %vm7504, %v7495
      %7509 = vst.msk [vmem:[%s386 + $0x10] sm:$0xf] %vm7504, %v7496
      %7510 = vst.msk [vmem:[%s386 + $0x14] sm:$0xf] %vm7504, %v7497
      %p7511 = scmp.lt.s32.totalorder %s22, 1
      %s7512 = scalar_select %p7511, %s22, 1
      %s7513 = smul.addr %s7512, 6
      %s7514 = smul.addr %s7513, 4
      %s7515 = scalar_lea.vmem %s11, %s7514
      // Predicated region
      $region65: #{forward.2} parent=63 // pred_check
        %p7516 = pneg %p276
      $region66: #{forward.2} parent=63 // pred_check_branch
        %7518 = sbr.rel (%p7516) target = $region68
      $region67: #{forward.2} parent=63 // pred_region
        _
      $region68: #{forward.2} parent=63 // pred_fallthru
        _
    $region64: #{forward.2} parent=5 // pred_fallthru
      _
    %p7519 = scmp.le.s32.totalorder 2, %s17
    // Predicated region
    $region69: #{forward.2} parent=5 // pred_check
      %p7520 = pneg %p7519
    $region70: #{forward.2} parent=5 // pred_check_branch
      %7522 = sbr.rel (%p7520) target = $region72
    $region71: #{forward.2} parent=5 // pred_region
      %s7523 = ssub.s32 %s17, 2
      // Predicated region
      $region73: #{forward.2} parent=71 // pred_check
        %p7524 = pneg %p282
      $region74: #{forward.2} parent=71 // pred_check_branch
        %7526 = sbr.rel (%p7524) target = $region76
      $region75: #{forward.2} parent=71 // pred_region
        %p7527 = scmp.lt.s32.totalorder %s23, 1
        %s7528 = scalar_select %p7527, %s23, 1
        %s7529 = smul.addr %s7528, 6
        %s7530 = smul.addr %s7529, 4
        %s7531 = scalar_lea.vmem %s11, %s7530
      $region76: #{forward.2} parent=71 // pred_fallthru
        _
    $region72: #{forward.2} parent=5 // pred_fallthru
      _
  $region6: #{forward.2} parent=0 // loop_footer
    %s21 = sadd.s32 1, %s17
  $region7: #{forward.2} parent=0 // loop_footer_branch
    %16 = sbr.rel target = $region3
  $region8: #{forward.2} parent=0 // loop_exit
    _

</llo_original>
